<compile_context>
chip_gen: v6e
topology: v6e:2x2x1
jax: 0.10.0
libtpu: 0.0.40
codegen_flags: <defaults>
</compile_context>

<pallas_src>
import functools

import jax
import jax.numpy as jnp
from jax.experimental import pallas as pl
from jax.experimental.pallas import tpu as pltpu

EPS_LN = 1e-6


# --------------------------------------------------------------------------
# In-kernel helpers
# --------------------------------------------------------------------------
def _layernorm(x, g, b):
    # Two-pass (centered) variance: more robust than E[x^2]-E[x]^2.
    mean = jnp.mean(x, axis=-1, keepdims=True)
    xc = x - mean
    var = jnp.mean(xc * xc, axis=-1, keepdims=True)
    return xc * jax.lax.rsqrt(var + EPS_LN) * g + b


# --------------------------------------------------------------------------
# The single fused kernel
# --------------------------------------------------------------------------
def _fused_dino_kernel(*refs, depth, num_heads, batch, n_pad, n_tok, n_patches):
    xp_ref, pw_ref, pb_ref, cls_ref, pos_ref = refs[:5]
    idx = 5
    blk_refs = []
    for _ in range(depth):
        blk_refs.append(refs[idx:idx + 12])
        idx += 12
    ng_ref, nb_ref, fw_ref, fb_ref = refs[idx:idx + 4]
    o_ref = refs[idx + 4]

    C = pw_ref.shape[1]
    d = C // num_heads

    # ---- patch embed: (B*Np, Kp) @ (Kp, C) + bias + positional embedding ----
    pe = jnp.dot(xp_ref[...].astype(jnp.bfloat16), pw_ref[...],
                 preferred_element_type=jnp.float32)
    pos = pos_ref[...]                                        # (Np, C)
    pe = pe + pb_ref[...] + jnp.concatenate([pos] * batch, axis=0)

    # ---- build padded token slab: per batch [cls | patches | zero pad] ----
    cls_row = cls_ref[...]                                    # (1, C), pos pre-added
    pieces = []
    for b in range(batch):
        pieces.append(cls_row)
        pieces.append(pe[b * n_patches:(b + 1) * n_patches])
        if n_pad > n_tok:
            pieces.append(jnp.zeros((n_pad - n_tok, C), jnp.float32))
    x = jnp.concatenate(pieces, axis=0)                       # (B*n_pad, C)

    # Padded tokens must never contribute as attention keys.
    key_mask = None
    if n_pad > n_tok:
        col = jax.lax.broadcasted_iota(jnp.int32, (n_pad, n_pad), 1)
        key_mask = col < n_tok

    # ---- transformer blocks (static unroll over depth) ----
    for l in range(depth):
        (g1, bt1, wqkv, bqkv, wp, bp,
         g2, bt2, w1, fb1, w2, fb2) = blk_refs[l]

        # attention sub-layer: LN1 -> QKV -> masked softmax attn -> out-proj
        h = _layernorm(x, g1[...], bt1[...])
        qkv = jnp.dot(h.astype(jnp.bfloat16), wqkv[...],
                      preferred_element_type=jnp.float32) + bqkv[...]
        qkv = qkv.astype(jnp.bfloat16)                        # (B*n_pad, 3C)

        outs = []
        for b in range(batch):                                # static unroll
            qb = qkv[b * n_pad:(b + 1) * n_pad]               # (n_pad, 3C)
            acc = jnp.zeros((n_pad, C), jnp.float32)
            for hd in range(num_heads):                       # static unroll
                # 1/sqrt(d) already folded into the Q weights/bias.
                q = qb[:, hd * d:(hd + 1) * d]
                k = qb[:, C + hd * d:C + (hd + 1) * d]
                v = qb[:, 2 * C + hd * d:2 * C + (hd + 1) * d]
                s = jax.lax.dot_general(q, k, (((1,), (1,)), ((), ())),
                                        preferred_element_type=jnp.float32)
                if key_mask is not None:
                    s = jnp.where(key_mask, s, -1e30)
                s = s - jnp.max(s, axis=-1, keepdims=True)
                p = jnp.exp(s)
                p = p * pl.reciprocal(jnp.sum(p, axis=-1, keepdims=True),
                                      approx=True)
                hv = jnp.dot(p.astype(jnp.bfloat16), v,
                             preferred_element_type=jnp.float32)   # (n_pad, d)
                # accumulate through the out-projection (sublane slice of Wp)
                acc = acc + jnp.dot(hv.astype(jnp.bfloat16),
                                    wp[hd * d:(hd + 1) * d, :],
                                    preferred_element_type=jnp.float32)
            outs.append(acc)
        x = x + jnp.concatenate(outs, axis=0) + bp[...]       # residual

        # MLP sub-layer: LN2 -> fc1 -> GELU -> fc2 -> residual
        h = _layernorm(x, g2[...], bt2[...])
        h1 = jnp.dot(h.astype(jnp.bfloat16), w1[...],
                     preferred_element_type=jnp.float32) + fb1[...]
        # TODO(synk): PyTorch nn.GELU default is exact erf; tanh approximation used here.
        h1 = jax.nn.gelu(h1, approximate=True)
        h2 = jnp.dot(h1.astype(jnp.bfloat16), w2[...],
                     preferred_element_type=jnp.float32) + fb2[...]
        x = x + h2

    # ---- final LayerNorm + folded ((h - loc)/scale) front-end Linear ----
    h = _layernorm(x, ng_ref[...], nb_ref[...])
    o_ref[...] = jnp.dot(h.astype(jnp.bfloat16), fw_ref[...],
                         preferred_element_type=jnp.float32) + fb_ref[...]


# --------------------------------------------------------------------------
# Deterministic parameter construction (synthetic DINO backbone + front end)
# --------------------------------------------------------------------------
def init_params(key, *, in_ch=3, patch=8, img=16, embed_dim=128, depth=2,
                num_heads=4, mlp_ratio=4, out_dim=128):
    num_patches = (img // patch) ** 2
    n_tokens = num_patches + 1
    hidden = mlp_ratio * embed_dim
    head_dim = embed_dim // num_heads

    def nrm(k, shape, std=0.02):
        return std * jax.random.normal(k, shape, dtype=jnp.float32)

    keys = iter(jax.random.split(key, 8 + 4 * depth))
    cls_token = nrm(next(keys), (1, embed_dim))
    pos_embed = nrm(next(keys), (n_tokens, embed_dim))

    # DINOBasedModel loc / scale (non-trivial deterministic values).
    loc = 0.1 * jax.random.normal(next(keys), (embed_dim,), jnp.float32)
    scale = 1.0 + 0.05 * jnp.abs(
        jax.random.normal(next(keys), (embed_dim,), jnp.float32))

    # Front end: Linear(embed_dim -> out_dim), with the (h - loc)/scale
    # normalization folded in algebraically (exact, done in f32):
    #   ((h - loc)/scale) @ W + b == h @ (W/scale[:,None]) + (b - (loc/scale) @ W)
    proj_w = nrm(next(keys), (embed_dim, out_dim))
    proj_b = jnp.zeros((out_dim,), jnp.float32)
    inv_scale = 1.0 / scale
    proj_w_fold = (proj_w * inv_scale[:, None]).astype(jnp.bfloat16)
    proj_b_fold = (proj_b - (loc * inv_scale) @ proj_w).reshape(1, -1)

    p = {
        "patch": patch, "embed_dim": embed_dim, "num_heads": num_heads,
        # Matmul weights live in bf16 (MXU operands); biases / LN params f32.
        "patch_w": nrm(next(keys),
                       (in_ch * patch * patch, embed_dim)).astype(jnp.bfloat16),
        "patch_b": jnp.zeros((1, embed_dim), jnp.float32),
        "cls_pos": cls_token + pos_embed[:1, :],      # cls token + its pos embed
        "pos_patch": pos_embed[1:, :],                # (Np, C)
        "norm_g": jnp.ones((1, embed_dim), jnp.float32),
        "norm_b": jnp.zeros((1, embed_dim), jnp.float32),
        "loc": loc, "scale": scale,
        "proj_w_fold": proj_w_fold,
        "proj_b_fold": proj_b_fold,
        "blocks": [],
    }

    # Fold 1/sqrt(head_dim) into the Q columns of the QKV projection.
    q_scale = jnp.concatenate([
        jnp.full((embed_dim,), head_dim ** -0.5, jnp.float32),
        jnp.ones((2 * embed_dim,), jnp.float32)])
    for _ in range(depth):
        qkv_w = nrm(next(keys), (embed_dim, 3 * embed_dim))
        blk = {
            "ln1_g": jnp.ones((1, embed_dim), jnp.float32),
            "ln1_b": jnp.zeros((1, embed_dim), jnp.float32),
            "qkv_w": (qkv_w * q_scale[None, :]).astype(jnp.bfloat16),
            "qkv_b": jnp.zeros((1, 3 * embed_dim), jnp.float32) * q_scale[None, :],
            "attn_proj_w": nrm(next(keys),
                               (embed_dim, embed_dim)).astype(jnp.bfloat16),
            "attn_proj_b": jnp.zeros((1, embed_dim), jnp.float32),
            "ln2_g": jnp.ones((1, embed_dim), jnp.float32),
            "ln2_b": jnp.zeros((1, embed_dim), jnp.float32),
            "fc1_w": nrm(next(keys), (embed_dim, hidden)).astype(jnp.bfloat16),
            "fc1_b": jnp.zeros((1, hidden), jnp.float32),
            "fc2_w": nrm(next(keys), (hidden, embed_dim)).astype(jnp.bfloat16),
            "fc2_b": jnp.zeros((1, embed_dim), jnp.float32),
        }
        p["blocks"].append(blk)
    return p


# --------------------------------------------------------------------------
# Forward pass (mirrors DINOBasedModel.forward with default args)
# --------------------------------------------------------------------------
def dino_based_forward(params, x):
    B, Cin, H, W = x.shape
    ps = params["patch"]
    nh = params["num_heads"]
    depth = len(params["blocks"])
    Hp, Wp = H // ps, W // ps
    Np = Hp * Wp
    n_tok = Np + 1
    n_pad = ((n_tok + 7) // 8) * 8               # sublane-aligned token count
    Kp = Cin * ps * ps
    D = params["proj_w_fold"].shape[1]

    # Patchify: Conv2d(kernel=stride=patch) as a matmul over flattened patches.
    xp = x.reshape(B, Cin, Hp, ps, Wp, ps)
    xp = jnp.transpose(xp, (0, 2, 4, 1, 3, 5)).reshape(B * Np, Kp)

    args = [xp, params["patch_w"], params["patch_b"], params["cls_pos"],
            params["pos_patch"]]
    for blk in params["blocks"]:
        args += [blk["ln1_g"], blk["ln1_b"], blk["qkv_w"], blk["qkv_b"],
                 blk["attn_proj_w"], blk["attn_proj_b"],
                 blk["ln2_g"], blk["ln2_b"],
                 blk["fc1_w"], blk["fc1_b"], blk["fc2_w"], blk["fc2_b"]]
    args += [params["norm_g"], params["norm_b"],
             params["proj_w_fold"], params["proj_b_fold"]]

    kernel = functools.partial(
        _fused_dino_kernel, depth=depth, num_heads=nh, batch=B,
        n_pad=n_pad, n_tok=n_tok, n_patches=Np)

    out = pl.pallas_call(
        kernel,
        in_specs=[pl.BlockSpec(memory_space=pltpu.MemorySpace.VMEM)
                  for _ in args],
        out_specs=pl.BlockSpec(memory_space=pltpu.MemorySpace.VMEM),
        out_shape=jax.ShapeDtypeStruct((B * n_pad, D), jnp.float32),
    )(*args)

    # Drop the sublane padding rows (tokens n_tok..n_pad-1 per batch element).
    return out.reshape(B, n_pad, D)[:, :n_tok, :]


# --------------------------------------------------------------------------
if __name__ == "__main__":
    key = jax.random.PRNGKey(0)
    k_param, k_x = jax.random.split(key)

    params = init_params(k_param, in_ch=3, patch=8, img=16, embed_dim=128,
                         depth=2, num_heads=4, mlp_ratio=4, out_dim=128)
    x = jax.random.normal(k_x, (2, 3, 16, 16), dtype=jnp.float32)  # NCHW

    out = dino_based_forward(params, x)
    jax.block_until_ready(out)
    assert out.shape == (2, 5, 128), out.shape
    assert bool(jnp.all(jnp.isfinite(out))), "non-finite output"
    print("KERNEL_OK")
</pallas_src>

<mosaic_0001>
module attributes {stable_mosaic.version = 11 : i64} {
  func.func @_fused_dino_kernel(%arg0: memref<8x192xf32, #tpu.memory_space<vmem>>, %arg1: memref<192x128xbf16, #tpu.memory_space<vmem>>, %arg2: memref<1x128xf32, #tpu.memory_space<vmem>>, %arg3: memref<1x128xf32, #tpu.memory_space<vmem>>, %arg4: memref<4x128xf32, #tpu.memory_space<vmem>>, %arg5: memref<1x128xf32, #tpu.memory_space<vmem>>, %arg6: memref<1x128xf32, #tpu.memory_space<vmem>>, %arg7: memref<128x384xbf16, #tpu.memory_space<vmem>>, %arg8: memref<1x384xf32, #tpu.memory_space<vmem>>, %arg9: memref<128x128xbf16, #tpu.memory_space<vmem>>, %arg10: memref<1x128xf32, #tpu.memory_space<vmem>>, %arg11: memref<1x128xf32, #tpu.memory_space<vmem>>, %arg12: memref<1x128xf32, #tpu.memory_space<vmem>>, %arg13: memref<128x512xbf16, #tpu.memory_space<vmem>>, %arg14: memref<1x512xf32, #tpu.memory_space<vmem>>, %arg15: memref<512x128xbf16, #tpu.memory_space<vmem>>, %arg16: memref<1x128xf32, #tpu.memory_space<vmem>>, %arg17: memref<1x128xf32, #tpu.memory_space<vmem>>, %arg18: memref<1x128xf32, #tpu.memory_space<vmem>>, %arg19: memref<128x384xbf16, #tpu.memory_space<vmem>>, %arg20: memref<1x384xf32, #tpu.memory_space<vmem>>, %arg21: memref<128x128xbf16, #tpu.memory_space<vmem>>, %arg22: memref<1x128xf32, #tpu.memory_space<vmem>>, %arg23: memref<1x128xf32, #tpu.memory_space<vmem>>, %arg24: memref<1x128xf32, #tpu.memory_space<vmem>>, %arg25: memref<128x512xbf16, #tpu.memory_space<vmem>>, %arg26: memref<1x512xf32, #tpu.memory_space<vmem>>, %arg27: memref<512x128xbf16, #tpu.memory_space<vmem>>, %arg28: memref<1x128xf32, #tpu.memory_space<vmem>>, %arg29: memref<1x128xf32, #tpu.memory_space<vmem>>, %arg30: memref<1x128xf32, #tpu.memory_space<vmem>>, %arg31: memref<128x128xbf16, #tpu.memory_space<vmem>>, %arg32: memref<1x128xf32, #tpu.memory_space<vmem>>, %arg33: memref<16x128xf32, #tpu.memory_space<vmem>>) attributes {dimension_semantics = [], scalar_prefetch = 0 : i64, scratch_operands = 0 : i64, tpu.core_type = #tpu.core_type<tc>} {
    %c0 = arith.constant 0 : index
    %c0_0 = arith.constant 0 : index
    %0 = vector.load %arg0[%c0, %c0_0] : memref<8x192xf32, #tpu.memory_space<vmem>>, vector<8x192xf32>
    %1 = arith.truncf %0 : vector<8x192xf32> to vector<8x192xbf16>
    %c0_1 = arith.constant 0 : index
    %c0_2 = arith.constant 0 : index
    %2 = vector.load %arg1[%c0_1, %c0_2] : memref<192x128xbf16, #tpu.memory_space<vmem>>, vector<192x128xbf16>
    %cst = arith.constant dense<0.000000e+00> : vector<8x128xf32>
    %3 = tpu.matmul %1, %2, %cst {dimension_numbers = #tpu.dot_dimension_numbers<[1], [0], [0], [1], [0, 0, 1, 1], [], []>} : vector<8x192xbf16>, vector<192x128xbf16>, vector<8x128xf32> -> vector<8x128xf32>
    %c0_3 = arith.constant 0 : index
    %c0_4 = arith.constant 0 : index
    %4 = vector.load %arg4[%c0_3, %c0_4] : memref<4x128xf32, #tpu.memory_space<vmem>>, vector<4x128xf32>
    %c0_5 = arith.constant 0 : index
    %c0_6 = arith.constant 0 : index
    %5 = vector.load %arg2[%c0_5, %c0_6] : memref<1x128xf32, #tpu.memory_space<vmem>>, vector<1x128xf32>
    %6 = vector.broadcast %5 : vector<1x128xf32> to vector<8x128xf32>
    %7 = arith.addf %3, %6 : vector<8x128xf32>
    %8 = tpu.concatenate %4, %4 in 0 : vector<4x128xf32>, vector<4x128xf32> -> vector<8x128xf32>
    %9 = arith.addf %7, %8 : vector<8x128xf32>
    %c0_7 = arith.constant 0 : index
    %c0_8 = arith.constant 0 : index
    %10 = vector.load %arg3[%c0_7, %c0_8] : memref<1x128xf32, #tpu.memory_space<vmem>>, vector<1x128xf32>
    %11 = vector.extract_strided_slice %9 {offsets = [0, 0], sizes = [4, 128], strides = [1, 1]} : vector<8x128xf32> to vector<4x128xf32>
    %cst_9 = arith.constant 0.000000e+00 : f32
    %12 = vector.broadcast %cst_9 : f32 to vector<3x128xf32>
    %13 = vector.extract_strided_slice %9 {offsets = [4, 0], sizes = [4, 128], strides = [1, 1]} : vector<8x128xf32> to vector<4x128xf32>
    %cst_10 = arith.constant 0.000000e+00 : f32
    %14 = vector.broadcast %cst_10 : f32 to vector<3x128xf32>
    %15 = tpu.concatenate %10, %11, %12, %10, %13, %14 in 0 : vector<1x128xf32>, vector<4x128xf32>, vector<3x128xf32>, vector<1x128xf32>, vector<4x128xf32>, vector<3x128xf32> -> vector<16x128xf32>
    %16 = tpu.iota {dimensions = array<i32: 1>} : vector<8x8xi32>
    %c5_i32 = arith.constant 5 : i32
    %17 = vector.broadcast %c5_i32 : i32 to vector<8x8xi32>
    %18 = arith.cmpi slt, %16, %17 : vector<8x8xi32>
    %c0_11 = arith.constant 0 : index
    %c0_12 = arith.constant 0 : index
    %19 = vector.load %arg5[%c0_11, %c0_12] : memref<1x128xf32, #tpu.memory_space<vmem>>, vector<1x128xf32>
    %c0_13 = arith.constant 0 : index
    %c0_14 = arith.constant 0 : index
    %20 = vector.load %arg6[%c0_13, %c0_14] : memref<1x128xf32, #tpu.memory_space<vmem>>, vector<1x128xf32>
    %cst_15 = arith.constant dense<0.000000e+00> : vector<16xf32>
    %21 = vector.multi_reduction <add>, %15, %cst_15 [1] : vector<16x128xf32> to vector<16xf32>
    %22 = vector.shape_cast %21 : vector<16xf32> to vector<16x1xf32>
    %cst_16 = arith.constant 1.280000e+02 : f32
    %23 = vector.broadcast %cst_16 : f32 to vector<16x1xf32>
    %24 = arith.divf %22, %23 : vector<16x1xf32>
    %25 = vector.broadcast %24 : vector<16x1xf32> to vector<16x128xf32>
    %26 = arith.subf %15, %25 : vector<16x128xf32>
    %27 = arith.mulf %26, %26 : vector<16x128xf32>
    %cst_17 = arith.constant dense<0.000000e+00> : vector<16xf32>
    %28 = vector.multi_reduction <add>, %27, %cst_17 [1] : vector<16x128xf32> to vector<16xf32>
    %29 = vector.shape_cast %28 : vector<16xf32> to vector<16x1xf32>
    %cst_18 = arith.constant 1.280000e+02 : f32
    %30 = vector.broadcast %cst_18 : f32 to vector<16x1xf32>
    %31 = arith.divf %29, %30 : vector<16x1xf32>
    %cst_19 = arith.constant 9.99999997E-7 : f32
    %32 = vector.broadcast %cst_19 : f32 to vector<16x1xf32>
    %33 = arith.addf %31, %32 : vector<16x1xf32>
    %34 = math.rsqrt %33 : vector<16x1xf32>
    %35 = vector.broadcast %34 : vector<16x1xf32> to vector<16x128xf32>
    %36 = arith.mulf %26, %35 : vector<16x128xf32>
    %37 = vector.broadcast %19 : vector<1x128xf32> to vector<16x128xf32>
    %38 = arith.mulf %36, %37 : vector<16x128xf32>
    %39 = vector.broadcast %20 : vector<1x128xf32> to vector<16x128xf32>
    %40 = arith.addf %38, %39 : vector<16x128xf32>
    %41 = arith.truncf %40 : vector<16x128xf32> to vector<16x128xbf16>
    %c0_20 = arith.constant 0 : index
    %c0_21 = arith.constant 0 : index
    %42 = vector.load %arg7[%c0_20, %c0_21] : memref<128x384xbf16, #tpu.memory_space<vmem>>, vector<128x384xbf16>
    %cst_22 = arith.constant dense<0.000000e+00> : vector<16x384xf32>
    %43 = tpu.matmul %41, %42, %cst_22 {dimension_numbers = #tpu.dot_dimension_numbers<[1], [0], [0], [1], [0, 0, 1, 1], [], []>} : vector<16x128xbf16>, vector<128x384xbf16>, vector<16x384xf32> -> vector<16x384xf32>
    %c0_23 = arith.constant 0 : index
    %c0_24 = arith.constant 0 : index
    %44 = vector.load %arg8[%c0_23, %c0_24] : memref<1x384xf32, #tpu.memory_space<vmem>>, vector<1x384xf32>
    %45 = vector.broadcast %44 : vector<1x384xf32> to vector<16x384xf32>
    %46 = arith.addf %43, %45 : vector<16x384xf32>
    %47 = arith.truncf %46 : vector<16x384xf32> to vector<16x384xbf16>
    %48 = vector.extract_strided_slice %47 {offsets = [0, 0], sizes = [8, 384], strides = [1, 1]} : vector<16x384xbf16> to vector<8x384xbf16>
    %cst_25 = arith.constant 0.000000e+00 : f32
    %49 = vector.broadcast %cst_25 : f32 to vector<8x128xf32>
    %50 = vector.extract_strided_slice %48 {offsets = [0, 0], sizes = [8, 32], strides = [1, 1]} : vector<8x384xbf16> to vector<8x32xbf16>
    %51 = vector.extract_strided_slice %48 {offsets = [0, 128], sizes = [8, 32], strides = [1, 1]} : vector<8x384xbf16> to vector<8x32xbf16>
    %52 = vector.extract_strided_slice %48 {offsets = [0, 256], sizes = [8, 32], strides = [1, 1]} : vector<8x384xbf16> to vector<8x32xbf16>
    %cst_26 = arith.constant dense<0.000000e+00> : vector<8x8xf32>
    %53 = tpu.matmul %50, %51, %cst_26 {dimension_numbers = #tpu.dot_dimension_numbers<[1], [1], [0], [0], [0, 0, 1, 0], [], []>} : vector<8x32xbf16>, vector<8x32xbf16>, vector<8x8xf32> -> vector<8x8xf32>
    %cst_27 = arith.constant -1.000000e+30 : f32
    %54 = vector.broadcast %cst_27 : f32 to vector<8x8xf32>
    %55 = arith.select %18, %53, %54 : vector<8x8xi1>, vector<8x8xf32>
    %cst_28 = arith.constant dense<0xFF800000> : vector<8xf32>
    %56 = vector.multi_reduction <maximumf>, %55, %cst_28 [1] : vector<8x8xf32> to vector<8xf32>
    %57 = vector.shape_cast %56 : vector<8xf32> to vector<8x1xf32>
    %58 = vector.broadcast %57 : vector<8x1xf32> to vector<8x8xf32>
    %59 = arith.subf %55, %58 : vector<8x8xf32>
    %60 = math.exp %59 : vector<8x8xf32>
    %cst_29 = arith.constant dense<0.000000e+00> : vector<8xf32>
    %61 = vector.multi_reduction <add>, %60, %cst_29 [1] : vector<8x8xf32> to vector<8xf32>
    %62 = vector.shape_cast %61 : vector<8xf32> to vector<8x1xf32>
    %63 = tpu.reciprocal %62 {approx = true} : vector<8x1xf32> -> vector<8x1xf32>
    %64 = vector.broadcast %63 : vector<8x1xf32> to vector<8x8xf32>
    %65 = arith.mulf %60, %64 : vector<8x8xf32>
    %66 = arith.truncf %65 : vector<8x8xf32> to vector<8x8xbf16>
    %cst_30 = arith.constant dense<0.000000e+00> : vector<8x32xf32>
    %67 = tpu.matmul %66, %52, %cst_30 {dimension_numbers = #tpu.dot_dimension_numbers<[1], [0], [0], [1], [0, 0, 1, 1], [], []>} : vector<8x8xbf16>, vector<8x32xbf16>, vector<8x32xf32> -> vector<8x32xf32>
    %68 = arith.truncf %67 : vector<8x32xf32> to vector<8x32xbf16>
    %c0_31 = arith.constant 0 : index
    %c0_32 = arith.constant 0 : index
    %69 = vector.load %arg9[%c0_31, %c0_32] : memref<128x128xbf16, #tpu.memory_space<vmem>>, vector<32x128xbf16>
    %cst_33 = arith.constant dense<0.000000e+00> : vector<8x128xf32>
    %70 = tpu.matmul %68, %69, %cst_33 {dimension_numbers = #tpu.dot_dimension_numbers<[1], [0], [0], [1], [0, 0, 1, 1], [], []>} : vector<8x32xbf16>, vector<32x128xbf16>, vector<8x128xf32> -> vector<8x128xf32>
    %71 = arith.addf %49, %70 : vector<8x128xf32>
    %72 = vector.extract_strided_slice %48 {offsets = [0, 32], sizes = [8, 32], strides = [1, 1]} : vector<8x384xbf16> to vector<8x32xbf16>
    %73 = vector.extract_strided_slice %48 {offsets = [0, 160], sizes = [8, 32], strides = [1, 1]} : vector<8x384xbf16> to vector<8x32xbf16>
    %74 = vector.extract_strided_slice %48 {offsets = [0, 288], sizes = [8, 32], strides = [1, 1]} : vector<8x384xbf16> to vector<8x32xbf16>
    %cst_34 = arith.constant dense<0.000000e+00> : vector<8x8xf32>
    %75 = tpu.matmul %72, %73, %cst_34 {dimension_numbers = #tpu.dot_dimension_numbers<[1], [1], [0], [0], [0, 0, 1, 0], [], []>} : vector<8x32xbf16>, vector<8x32xbf16>, vector<8x8xf32> -> vector<8x8xf32>
    %cst_35 = arith.constant -1.000000e+30 : f32
    %76 = vector.broadcast %cst_35 : f32 to vector<8x8xf32>
    %77 = arith.select %18, %75, %76 : vector<8x8xi1>, vector<8x8xf32>
    %cst_36 = arith.constant dense<0xFF800000> : vector<8xf32>
    %78 = vector.multi_reduction <maximumf>, %77, %cst_36 [1] : vector<8x8xf32> to vector<8xf32>
    %79 = vector.shape_cast %78 : vector<8xf32> to vector<8x1xf32>
    %80 = vector.broadcast %79 : vector<8x1xf32> to vector<8x8xf32>
    %81 = arith.subf %77, %80 : vector<8x8xf32>
    %82 = math.exp %81 : vector<8x8xf32>
    %cst_37 = arith.constant dense<0.000000e+00> : vector<8xf32>
    %83 = vector.multi_reduction <add>, %82, %cst_37 [1] : vector<8x8xf32> to vector<8xf32>
    %84 = vector.shape_cast %83 : vector<8xf32> to vector<8x1xf32>
    %85 = tpu.reciprocal %84 {approx = true} : vector<8x1xf32> -> vector<8x1xf32>
    %86 = vector.broadcast %85 : vector<8x1xf32> to vector<8x8xf32>
    %87 = arith.mulf %82, %86 : vector<8x8xf32>
    %88 = arith.truncf %87 : vector<8x8xf32> to vector<8x8xbf16>
    %cst_38 = arith.constant dense<0.000000e+00> : vector<8x32xf32>
    %89 = tpu.matmul %88, %74, %cst_38 {dimension_numbers = #tpu.dot_dimension_numbers<[1], [0], [0], [1], [0, 0, 1, 1], [], []>} : vector<8x8xbf16>, vector<8x32xbf16>, vector<8x32xf32> -> vector<8x32xf32>
    %90 = arith.truncf %89 : vector<8x32xf32> to vector<8x32xbf16>
    %c32 = arith.constant 32 : index
    %c0_39 = arith.constant 0 : index
    %91 = vector.load %arg9[%c32, %c0_39] : memref<128x128xbf16, #tpu.memory_space<vmem>>, vector<32x128xbf16>
    %cst_40 = arith.constant dense<0.000000e+00> : vector<8x128xf32>
    %92 = tpu.matmul %90, %91, %cst_40 {dimension_numbers = #tpu.dot_dimension_numbers<[1], [0], [0], [1], [0, 0, 1, 1], [], []>} : vector<8x32xbf16>, vector<32x128xbf16>, vector<8x128xf32> -> vector<8x128xf32>
    %93 = arith.addf %71, %92 : vector<8x128xf32>
    %94 = vector.extract_strided_slice %48 {offsets = [0, 64], sizes = [8, 32], strides = [1, 1]} : vector<8x384xbf16> to vector<8x32xbf16>
    %95 = vector.extract_strided_slice %48 {offsets = [0, 192], sizes = [8, 32], strides = [1, 1]} : vector<8x384xbf16> to vector<8x32xbf16>
    %96 = vector.extract_strided_slice %48 {offsets = [0, 320], sizes = [8, 32], strides = [1, 1]} : vector<8x384xbf16> to vector<8x32xbf16>
    %cst_41 = arith.constant dense<0.000000e+00> : vector<8x8xf32>
    %97 = tpu.matmul %94, %95, %cst_41 {dimension_numbers = #tpu.dot_dimension_numbers<[1], [1], [0], [0], [0, 0, 1, 0], [], []>} : vector<8x32xbf16>, vector<8x32xbf16>, vector<8x8xf32> -> vector<8x8xf32>
    %cst_42 = arith.constant -1.000000e+30 : f32
    %98 = vector.broadcast %cst_42 : f32 to vector<8x8xf32>
    %99 = arith.select %18, %97, %98 : vector<8x8xi1>, vector<8x8xf32>
    %cst_43 = arith.constant dense<0xFF800000> : vector<8xf32>
    %100 = vector.multi_reduction <maximumf>, %99, %cst_43 [1] : vector<8x8xf32> to vector<8xf32>
    %101 = vector.shape_cast %100 : vector<8xf32> to vector<8x1xf32>
    %102 = vector.broadcast %101 : vector<8x1xf32> to vector<8x8xf32>
    %103 = arith.subf %99, %102 : vector<8x8xf32>
    %104 = math.exp %103 : vector<8x8xf32>
    %cst_44 = arith.constant dense<0.000000e+00> : vector<8xf32>
    %105 = vector.multi_reduction <add>, %104, %cst_44 [1] : vector<8x8xf32> to vector<8xf32>
    %106 = vector.shape_cast %105 : vector<8xf32> to vector<8x1xf32>
    %107 = tpu.reciprocal %106 {approx = true} : vector<8x1xf32> -> vector<8x1xf32>
    %108 = vector.broadcast %107 : vector<8x1xf32> to vector<8x8xf32>
    %109 = arith.mulf %104, %108 : vector<8x8xf32>
    %110 = arith.truncf %109 : vector<8x8xf32> to vector<8x8xbf16>
    %cst_45 = arith.constant dense<0.000000e+00> : vector<8x32xf32>
    %111 = tpu.matmul %110, %96, %cst_45 {dimension_numbers = #tpu.dot_dimension_numbers<[1], [0], [0], [1], [0, 0, 1, 1], [], []>} : vector<8x8xbf16>, vector<8x32xbf16>, vector<8x32xf32> -> vector<8x32xf32>
    %112 = arith.truncf %111 : vector<8x32xf32> to vector<8x32xbf16>
    %c64 = arith.constant 64 : index
    %c0_46 = arith.constant 0 : index
    %113 = vector.load %arg9[%c64, %c0_46] : memref<128x128xbf16, #tpu.memory_space<vmem>>, vector<32x128xbf16>
    %cst_47 = arith.constant dense<0.000000e+00> : vector<8x128xf32>
    %114 = tpu.matmul %112, %113, %cst_47 {dimension_numbers = #tpu.dot_dimension_numbers<[1], [0], [0], [1], [0, 0, 1, 1], [], []>} : vector<8x32xbf16>, vector<32x128xbf16>, vector<8x128xf32> -> vector<8x128xf32>
    %115 = arith.addf %93, %114 : vector<8x128xf32>
    %116 = vector.extract_strided_slice %48 {offsets = [0, 96], sizes = [8, 32], strides = [1, 1]} : vector<8x384xbf16> to vector<8x32xbf16>
    %117 = vector.extract_strided_slice %48 {offsets = [0, 224], sizes = [8, 32], strides = [1, 1]} : vector<8x384xbf16> to vector<8x32xbf16>
    %118 = vector.extract_strided_slice %48 {offsets = [0, 352], sizes = [8, 32], strides = [1, 1]} : vector<8x384xbf16> to vector<8x32xbf16>
    %cst_48 = arith.constant dense<0.000000e+00> : vector<8x8xf32>
    %119 = tpu.matmul %116, %117, %cst_48 {dimension_numbers = #tpu.dot_dimension_numbers<[1], [1], [0], [0], [0, 0, 1, 0], [], []>} : vector<8x32xbf16>, vector<8x32xbf16>, vector<8x8xf32> -> vector<8x8xf32>
    %cst_49 = arith.constant -1.000000e+30 : f32
    %120 = vector.broadcast %cst_49 : f32 to vector<8x8xf32>
    %121 = arith.select %18, %119, %120 : vector<8x8xi1>, vector<8x8xf32>
    %cst_50 = arith.constant dense<0xFF800000> : vector<8xf32>
    %122 = vector.multi_reduction <maximumf>, %121, %cst_50 [1] : vector<8x8xf32> to vector<8xf32>
    %123 = vector.shape_cast %122 : vector<8xf32> to vector<8x1xf32>
    %124 = vector.broadcast %123 : vector<8x1xf32> to vector<8x8xf32>
    %125 = arith.subf %121, %124 : vector<8x8xf32>
    %126 = math.exp %125 : vector<8x8xf32>
    %cst_51 = arith.constant dense<0.000000e+00> : vector<8xf32>
    %127 = vector.multi_reduction <add>, %126, %cst_51 [1] : vector<8x8xf32> to vector<8xf32>
    %128 = vector.shape_cast %127 : vector<8xf32> to vector<8x1xf32>
    %129 = tpu.reciprocal %128 {approx = true} : vector<8x1xf32> -> vector<8x1xf32>
    %130 = vector.broadcast %129 : vector<8x1xf32> to vector<8x8xf32>
    %131 = arith.mulf %126, %130 : vector<8x8xf32>
    %132 = arith.truncf %131 : vector<8x8xf32> to vector<8x8xbf16>
    %cst_52 = arith.constant dense<0.000000e+00> : vector<8x32xf32>
    %133 = tpu.matmul %132, %118, %cst_52 {dimension_numbers = #tpu.dot_dimension_numbers<[1], [0], [0], [1], [0, 0, 1, 1], [], []>} : vector<8x8xbf16>, vector<8x32xbf16>, vector<8x32xf32> -> vector<8x32xf32>
    %134 = arith.truncf %133 : vector<8x32xf32> to vector<8x32xbf16>
    %c96 = arith.constant 96 : index
    %c0_53 = arith.constant 0 : index
    %135 = vector.load %arg9[%c96, %c0_53] : memref<128x128xbf16, #tpu.memory_space<vmem>>, vector<32x128xbf16>
    %cst_54 = arith.constant dense<0.000000e+00> : vector<8x128xf32>
    %136 = tpu.matmul %134, %135, %cst_54 {dimension_numbers = #tpu.dot_dimension_numbers<[1], [0], [0], [1], [0, 0, 1, 1], [], []>} : vector<8x32xbf16>, vector<32x128xbf16>, vector<8x128xf32> -> vector<8x128xf32>
    %137 = arith.addf %115, %136 : vector<8x128xf32>
    %138 = vector.extract_strided_slice %47 {offsets = [8, 0], sizes = [8, 384], strides = [1, 1]} : vector<16x384xbf16> to vector<8x384xbf16>
    %cst_55 = arith.constant 0.000000e+00 : f32
    %139 = vector.broadcast %cst_55 : f32 to vector<8x128xf32>
    %140 = vector.extract_strided_slice %138 {offsets = [0, 0], sizes = [8, 32], strides = [1, 1]} : vector<8x384xbf16> to vector<8x32xbf16>
    %141 = vector.extract_strided_slice %138 {offsets = [0, 128], sizes = [8, 32], strides = [1, 1]} : vector<8x384xbf16> to vector<8x32xbf16>
    %142 = vector.extract_strided_slice %138 {offsets = [0, 256], sizes = [8, 32], strides = [1, 1]} : vector<8x384xbf16> to vector<8x32xbf16>
    %cst_56 = arith.constant dense<0.000000e+00> : vector<8x8xf32>
    %143 = tpu.matmul %140, %141, %cst_56 {dimension_numbers = #tpu.dot_dimension_numbers<[1], [1], [0], [0], [0, 0, 1, 0], [], []>} : vector<8x32xbf16>, vector<8x32xbf16>, vector<8x8xf32> -> vector<8x8xf32>
    %cst_57 = arith.constant -1.000000e+30 : f32
    %144 = vector.broadcast %cst_57 : f32 to vector<8x8xf32>
    %145 = arith.select %18, %143, %144 : vector<8x8xi1>, vector<8x8xf32>
    %cst_58 = arith.constant dense<0xFF800000> : vector<8xf32>
    %146 = vector.multi_reduction <maximumf>, %145, %cst_58 [1] : vector<8x8xf32> to vector<8xf32>
    %147 = vector.shape_cast %146 : vector<8xf32> to vector<8x1xf32>
    %148 = vector.broadcast %147 : vector<8x1xf32> to vector<8x8xf32>
    %149 = arith.subf %145, %148 : vector<8x8xf32>
    %150 = math.exp %149 : vector<8x8xf32>
    %cst_59 = arith.constant dense<0.000000e+00> : vector<8xf32>
    %151 = vector.multi_reduction <add>, %150, %cst_59 [1] : vector<8x8xf32> to vector<8xf32>
    %152 = vector.shape_cast %151 : vector<8xf32> to vector<8x1xf32>
    %153 = tpu.reciprocal %152 {approx = true} : vector<8x1xf32> -> vector<8x1xf32>
    %154 = vector.broadcast %153 : vector<8x1xf32> to vector<8x8xf32>
    %155 = arith.mulf %150, %154 : vector<8x8xf32>
    %156 = arith.truncf %155 : vector<8x8xf32> to vector<8x8xbf16>
    %cst_60 = arith.constant dense<0.000000e+00> : vector<8x32xf32>
    %157 = tpu.matmul %156, %142, %cst_60 {dimension_numbers = #tpu.dot_dimension_numbers<[1], [0], [0], [1], [0, 0, 1, 1], [], []>} : vector<8x8xbf16>, vector<8x32xbf16>, vector<8x32xf32> -> vector<8x32xf32>
    %158 = arith.truncf %157 : vector<8x32xf32> to vector<8x32xbf16>
    %c0_61 = arith.constant 0 : index
    %c0_62 = arith.constant 0 : index
    %159 = vector.load %arg9[%c0_61, %c0_62] : memref<128x128xbf16, #tpu.memory_space<vmem>>, vector<32x128xbf16>
    %cst_63 = arith.constant dense<0.000000e+00> : vector<8x128xf32>
    %160 = tpu.matmul %158, %159, %cst_63 {dimension_numbers = #tpu.dot_dimension_numbers<[1], [0], [0], [1], [0, 0, 1, 1], [], []>} : vector<8x32xbf16>, vector<32x128xbf16>, vector<8x128xf32> -> vector<8x128xf32>
    %161 = arith.addf %139, %160 : vector<8x128xf32>
    %162 = vector.extract_strided_slice %138 {offsets = [0, 32], sizes = [8, 32], strides = [1, 1]} : vector<8x384xbf16> to vector<8x32xbf16>
    %163 = vector.extract_strided_slice %138 {offsets = [0, 160], sizes = [8, 32], strides = [1, 1]} : vector<8x384xbf16> to vector<8x32xbf16>
    %164 = vector.extract_strided_slice %138 {offsets = [0, 288], sizes = [8, 32], strides = [1, 1]} : vector<8x384xbf16> to vector<8x32xbf16>
    %cst_64 = arith.constant dense<0.000000e+00> : vector<8x8xf32>
    %165 = tpu.matmul %162, %163, %cst_64 {dimension_numbers = #tpu.dot_dimension_numbers<[1], [1], [0], [0], [0, 0, 1, 0], [], []>} : vector<8x32xbf16>, vector<8x32xbf16>, vector<8x8xf32> -> vector<8x8xf32>
    %cst_65 = arith.constant -1.000000e+30 : f32
    %166 = vector.broadcast %cst_65 : f32 to vector<8x8xf32>
    %167 = arith.select %18, %165, %166 : vector<8x8xi1>, vector<8x8xf32>
    %cst_66 = arith.constant dense<0xFF800000> : vector<8xf32>
    %168 = vector.multi_reduction <maximumf>, %167, %cst_66 [1] : vector<8x8xf32> to vector<8xf32>
    %169 = vector.shape_cast %168 : vector<8xf32> to vector<8x1xf32>
    %170 = vector.broadcast %169 : vector<8x1xf32> to vector<8x8xf32>
    %171 = arith.subf %167, %170 : vector<8x8xf32>
    %172 = math.exp %171 : vector<8x8xf32>
    %cst_67 = arith.constant dense<0.000000e+00> : vector<8xf32>
    %173 = vector.multi_reduction <add>, %172, %cst_67 [1] : vector<8x8xf32> to vector<8xf32>
    %174 = vector.shape_cast %173 : vector<8xf32> to vector<8x1xf32>
    %175 = tpu.reciprocal %174 {approx = true} : vector<8x1xf32> -> vector<8x1xf32>
    %176 = vector.broadcast %175 : vector<8x1xf32> to vector<8x8xf32>
    %177 = arith.mulf %172, %176 : vector<8x8xf32>
    %178 = arith.truncf %177 : vector<8x8xf32> to vector<8x8xbf16>
    %cst_68 = arith.constant dense<0.000000e+00> : vector<8x32xf32>
    %179 = tpu.matmul %178, %164, %cst_68 {dimension_numbers = #tpu.dot_dimension_numbers<[1], [0], [0], [1], [0, 0, 1, 1], [], []>} : vector<8x8xbf16>, vector<8x32xbf16>, vector<8x32xf32> -> vector<8x32xf32>
    %180 = arith.truncf %179 : vector<8x32xf32> to vector<8x32xbf16>
    %c32_69 = arith.constant 32 : index
    %c0_70 = arith.constant 0 : index
    %181 = vector.load %arg9[%c32_69, %c0_70] : memref<128x128xbf16, #tpu.memory_space<vmem>>, vector<32x128xbf16>
    %cst_71 = arith.constant dense<0.000000e+00> : vector<8x128xf32>
    %182 = tpu.matmul %180, %181, %cst_71 {dimension_numbers = #tpu.dot_dimension_numbers<[1], [0], [0], [1], [0, 0, 1, 1], [], []>} : vector<8x32xbf16>, vector<32x128xbf16>, vector<8x128xf32> -> vector<8x128xf32>
    %183 = arith.addf %161, %182 : vector<8x128xf32>
    %184 = vector.extract_strided_slice %138 {offsets = [0, 64], sizes = [8, 32], strides = [1, 1]} : vector<8x384xbf16> to vector<8x32xbf16>
    %185 = vector.extract_strided_slice %138 {offsets = [0, 192], sizes = [8, 32], strides = [1, 1]} : vector<8x384xbf16> to vector<8x32xbf16>
    %186 = vector.extract_strided_slice %138 {offsets = [0, 320], sizes = [8, 32], strides = [1, 1]} : vector<8x384xbf16> to vector<8x32xbf16>
    %cst_72 = arith.constant dense<0.000000e+00> : vector<8x8xf32>
    %187 = tpu.matmul %184, %185, %cst_72 {dimension_numbers = #tpu.dot_dimension_numbers<[1], [1], [0], [0], [0, 0, 1, 0], [], []>} : vector<8x32xbf16>, vector<8x32xbf16>, vector<8x8xf32> -> vector<8x8xf32>
    %cst_73 = arith.constant -1.000000e+30 : f32
    %188 = vector.broadcast %cst_73 : f32 to vector<8x8xf32>
    %189 = arith.select %18, %187, %188 : vector<8x8xi1>, vector<8x8xf32>
    %cst_74 = arith.constant dense<0xFF800000> : vector<8xf32>
    %190 = vector.multi_reduction <maximumf>, %189, %cst_74 [1] : vector<8x8xf32> to vector<8xf32>
    %191 = vector.shape_cast %190 : vector<8xf32> to vector<8x1xf32>
    %192 = vector.broadcast %191 : vector<8x1xf32> to vector<8x8xf32>
    %193 = arith.subf %189, %192 : vector<8x8xf32>
    %194 = math.exp %193 : vector<8x8xf32>
    %cst_75 = arith.constant dense<0.000000e+00> : vector<8xf32>
    %195 = vector.multi_reduction <add>, %194, %cst_75 [1] : vector<8x8xf32> to vector<8xf32>
    %196 = vector.shape_cast %195 : vector<8xf32> to vector<8x1xf32>
    %197 = tpu.reciprocal %196 {approx = true} : vector<8x1xf32> -> vector<8x1xf32>
    %198 = vector.broadcast %197 : vector<8x1xf32> to vector<8x8xf32>
    %199 = arith.mulf %194, %198 : vector<8x8xf32>
    %200 = arith.truncf %199 : vector<8x8xf32> to vector<8x8xbf16>
    %cst_76 = arith.constant dense<0.000000e+00> : vector<8x32xf32>
    %201 = tpu.matmul %200, %186, %cst_76 {dimension_numbers = #tpu.dot_dimension_numbers<[1], [0], [0], [1], [0, 0, 1, 1], [], []>} : vector<8x8xbf16>, vector<8x32xbf16>, vector<8x32xf32> -> vector<8x32xf32>
    %202 = arith.truncf %201 : vector<8x32xf32> to vector<8x32xbf16>
    %c64_77 = arith.constant 64 : index
    %c0_78 = arith.constant 0 : index
    %203 = vector.load %arg9[%c64_77, %c0_78] : memref<128x128xbf16, #tpu.memory_space<vmem>>, vector<32x128xbf16>
    %cst_79 = arith.constant dense<0.000000e+00> : vector<8x128xf32>
    %204 = tpu.matmul %202, %203, %cst_79 {dimension_numbers = #tpu.dot_dimension_numbers<[1], [0], [0], [1], [0, 0, 1, 1], [], []>} : vector<8x32xbf16>, vector<32x128xbf16>, vector<8x128xf32> -> vector<8x128xf32>
    %205 = arith.addf %183, %204 : vector<8x128xf32>
    %206 = vector.extract_strided_slice %138 {offsets = [0, 96], sizes = [8, 32], strides = [1, 1]} : vector<8x384xbf16> to vector<8x32xbf16>
    %207 = vector.extract_strided_slice %138 {offsets = [0, 224], sizes = [8, 32], strides = [1, 1]} : vector<8x384xbf16> to vector<8x32xbf16>
    %208 = vector.extract_strided_slice %138 {offsets = [0, 352], sizes = [8, 32], strides = [1, 1]} : vector<8x384xbf16> to vector<8x32xbf16>
    %cst_80 = arith.constant dense<0.000000e+00> : vector<8x8xf32>
    %209 = tpu.matmul %206, %207, %cst_80 {dimension_numbers = #tpu.dot_dimension_numbers<[1], [1], [0], [0], [0, 0, 1, 0], [], []>} : vector<8x32xbf16>, vector<8x32xbf16>, vector<8x8xf32> -> vector<8x8xf32>
    %cst_81 = arith.constant -1.000000e+30 : f32
    %210 = vector.broadcast %cst_81 : f32 to vector<8x8xf32>
    %211 = arith.select %18, %209, %210 : vector<8x8xi1>, vector<8x8xf32>
    %cst_82 = arith.constant dense<0xFF800000> : vector<8xf32>
    %212 = vector.multi_reduction <maximumf>, %211, %cst_82 [1] : vector<8x8xf32> to vector<8xf32>
    %213 = vector.shape_cast %212 : vector<8xf32> to vector<8x1xf32>
    %214 = vector.broadcast %213 : vector<8x1xf32> to vector<8x8xf32>
    %215 = arith.subf %211, %214 : vector<8x8xf32>
    %216 = math.exp %215 : vector<8x8xf32>
    %cst_83 = arith.constant dense<0.000000e+00> : vector<8xf32>
    %217 = vector.multi_reduction <add>, %216, %cst_83 [1] : vector<8x8xf32> to vector<8xf32>
    %218 = vector.shape_cast %217 : vector<8xf32> to vector<8x1xf32>
    %219 = tpu.reciprocal %218 {approx = true} : vector<8x1xf32> -> vector<8x1xf32>
    %220 = vector.broadcast %219 : vector<8x1xf32> to vector<8x8xf32>
    %221 = arith.mulf %216, %220 : vector<8x8xf32>
    %222 = arith.truncf %221 : vector<8x8xf32> to vector<8x8xbf16>
    %cst_84 = arith.constant dense<0.000000e+00> : vector<8x32xf32>
    %223 = tpu.matmul %222, %208, %cst_84 {dimension_numbers = #tpu.dot_dimension_numbers<[1], [0], [0], [1], [0, 0, 1, 1], [], []>} : vector<8x8xbf16>, vector<8x32xbf16>, vector<8x32xf32> -> vector<8x32xf32>
    %224 = arith.truncf %223 : vector<8x32xf32> to vector<8x32xbf16>
    %c96_85 = arith.constant 96 : index
    %c0_86 = arith.constant 0 : index
    %225 = vector.load %arg9[%c96_85, %c0_86] : memref<128x128xbf16, #tpu.memory_space<vmem>>, vector<32x128xbf16>
    %cst_87 = arith.constant dense<0.000000e+00> : vector<8x128xf32>
    %226 = tpu.matmul %224, %225, %cst_87 {dimension_numbers = #tpu.dot_dimension_numbers<[1], [0], [0], [1], [0, 0, 1, 1], [], []>} : vector<8x32xbf16>, vector<32x128xbf16>, vector<8x128xf32> -> vector<8x128xf32>
    %227 = arith.addf %205, %226 : vector<8x128xf32>
    %228 = tpu.concatenate %137, %227 in 0 : vector<8x128xf32>, vector<8x128xf32> -> vector<16x128xf32>
    %229 = arith.addf %15, %228 : vector<16x128xf32>
    %c0_88 = arith.constant 0 : index
    %c0_89 = arith.constant 0 : index
    %230 = vector.load %arg10[%c0_88, %c0_89] : memref<1x128xf32, #tpu.memory_space<vmem>>, vector<1x128xf32>
    %231 = vector.broadcast %230 : vector<1x128xf32> to vector<16x128xf32>
    %232 = arith.addf %229, %231 : vector<16x128xf32>
    %c0_90 = arith.constant 0 : index
    %c0_91 = arith.constant 0 : index
    %233 = vector.load %arg11[%c0_90, %c0_91] : memref<1x128xf32, #tpu.memory_space<vmem>>, vector<1x128xf32>
    %c0_92 = arith.constant 0 : index
    %c0_93 = arith.constant 0 : index
    %234 = vector.load %arg12[%c0_92, %c0_93] : memref<1x128xf32, #tpu.memory_space<vmem>>, vector<1x128xf32>
    %cst_94 = arith.constant dense<0.000000e+00> : vector<16xf32>
    %235 = vector.multi_reduction <add>, %232, %cst_94 [1] : vector<16x128xf32> to vector<16xf32>
    %236 = vector.shape_cast %235 : vector<16xf32> to vector<16x1xf32>
    %cst_95 = arith.constant 1.280000e+02 : f32
    %237 = vector.broadcast %cst_95 : f32 to vector<16x1xf32>
    %238 = arith.divf %236, %237 : vector<16x1xf32>
    %239 = vector.broadcast %238 : vector<16x1xf32> to vector<16x128xf32>
    %240 = arith.subf %232, %239 : vector<16x128xf32>
    %241 = arith.mulf %240, %240 : vector<16x128xf32>
    %cst_96 = arith.constant dense<0.000000e+00> : vector<16xf32>
    %242 = vector.multi_reduction <add>, %241, %cst_96 [1] : vector<16x128xf32> to vector<16xf32>
    %243 = vector.shape_cast %242 : vector<16xf32> to vector<16x1xf32>
    %cst_97 = arith.constant 1.280000e+02 : f32
    %244 = vector.broadcast %cst_97 : f32 to vector<16x1xf32>
    %245 = arith.divf %243, %244 : vector<16x1xf32>
    %cst_98 = arith.constant 9.99999997E-7 : f32
    %246 = vector.broadcast %cst_98 : f32 to vector<16x1xf32>
    %247 = arith.addf %245, %246 : vector<16x1xf32>
    %248 = math.rsqrt %247 : vector<16x1xf32>
    %249 = vector.broadcast %248 : vector<16x1xf32> to vector<16x128xf32>
    %250 = arith.mulf %240, %249 : vector<16x128xf32>
    %251 = vector.broadcast %233 : vector<1x128xf32> to vector<16x128xf32>
    %252 = arith.mulf %250, %251 : vector<16x128xf32>
    %253 = vector.broadcast %234 : vector<1x128xf32> to vector<16x128xf32>
    %254 = arith.addf %252, %253 : vector<16x128xf32>
    %255 = arith.truncf %254 : vector<16x128xf32> to vector<16x128xbf16>
    %c0_99 = arith.constant 0 : index
    %c0_100 = arith.constant 0 : index
    %256 = vector.load %arg13[%c0_99, %c0_100] : memref<128x512xbf16, #tpu.memory_space<vmem>>, vector<128x512xbf16>
    %cst_101 = arith.constant dense<0.000000e+00> : vector<16x512xf32>
    %257 = tpu.matmul %255, %256, %cst_101 {dimension_numbers = #tpu.dot_dimension_numbers<[1], [0], [0], [1], [0, 0, 1, 1], [], []>} : vector<16x128xbf16>, vector<128x512xbf16>, vector<16x512xf32> -> vector<16x512xf32>
    %c0_102 = arith.constant 0 : index
    %c0_103 = arith.constant 0 : index
    %258 = vector.load %arg14[%c0_102, %c0_103] : memref<1x512xf32, #tpu.memory_space<vmem>>, vector<1x512xf32>
    %259 = vector.broadcast %258 : vector<1x512xf32> to vector<16x512xf32>
    %260 = arith.addf %257, %259 : vector<16x512xf32>
    %261 = arith.mulf %260, %260 : vector<16x512xf32>
    %262 = arith.mulf %260, %261 : vector<16x512xf32>
    %cst_104 = arith.constant 4.471500e-02 : f32
    %263 = vector.broadcast %cst_104 : f32 to vector<16x512xf32>
    %264 = arith.mulf %263, %262 : vector<16x512xf32>
    %265 = arith.addf %260, %264 : vector<16x512xf32>
    %cst_105 = arith.constant 0.797884583 : f32
    %266 = vector.broadcast %cst_105 : f32 to vector<16x512xf32>
    %267 = arith.mulf %266, %265 : vector<16x512xf32>
    %268 = math.tanh %267 : vector<16x512xf32>
    %cst_106 = arith.constant 1.000000e+00 : f32
    %269 = vector.broadcast %cst_106 : f32 to vector<16x512xf32>
    %270 = arith.addf %269, %268 : vector<16x512xf32>
    %cst_107 = arith.constant 5.000000e-01 : f32
    %271 = vector.broadcast %cst_107 : f32 to vector<16x512xf32>
    %272 = arith.mulf %271, %270 : vector<16x512xf32>
    %273 = arith.mulf %260, %272 : vector<16x512xf32>
    %274 = arith.truncf %273 : vector<16x512xf32> to vector<16x512xbf16>
    %c0_108 = arith.constant 0 : index
    %c0_109 = arith.constant 0 : index
    %275 = vector.load %arg15[%c0_108, %c0_109] : memref<512x128xbf16, #tpu.memory_space<vmem>>, vector<512x128xbf16>
    %cst_110 = arith.constant dense<0.000000e+00> : vector<16x128xf32>
    %276 = tpu.matmul %274, %275, %cst_110 {dimension_numbers = #tpu.dot_dimension_numbers<[1], [0], [0], [1], [0, 0, 1, 1], [], []>} : vector<16x512xbf16>, vector<512x128xbf16>, vector<16x128xf32> -> vector<16x128xf32>
    %c0_111 = arith.constant 0 : index
    %c0_112 = arith.constant 0 : index
    %277 = vector.load %arg16[%c0_111, %c0_112] : memref<1x128xf32, #tpu.memory_space<vmem>>, vector<1x128xf32>
    %278 = vector.broadcast %277 : vector<1x128xf32> to vector<16x128xf32>
    %279 = arith.addf %276, %278 : vector<16x128xf32>
    %280 = arith.addf %232, %279 : vector<16x128xf32>
    %c0_113 = arith.constant 0 : index
    %c0_114 = arith.constant 0 : index
    %281 = vector.load %arg17[%c0_113, %c0_114] : memref<1x128xf32, #tpu.memory_space<vmem>>, vector<1x128xf32>
    %c0_115 = arith.constant 0 : index
    %c0_116 = arith.constant 0 : index
    %282 = vector.load %arg18[%c0_115, %c0_116] : memref<1x128xf32, #tpu.memory_space<vmem>>, vector<1x128xf32>
    %cst_117 = arith.constant dense<0.000000e+00> : vector<16xf32>
    %283 = vector.multi_reduction <add>, %280, %cst_117 [1] : vector<16x128xf32> to vector<16xf32>
    %284 = vector.shape_cast %283 : vector<16xf32> to vector<16x1xf32>
    %cst_118 = arith.constant 1.280000e+02 : f32
    %285 = vector.broadcast %cst_118 : f32 to vector<16x1xf32>
    %286 = arith.divf %284, %285 : vector<16x1xf32>
    %287 = vector.broadcast %286 : vector<16x1xf32> to vector<16x128xf32>
    %288 = arith.subf %280, %287 : vector<16x128xf32>
    %289 = arith.mulf %288, %288 : vector<16x128xf32>
    %cst_119 = arith.constant dense<0.000000e+00> : vector<16xf32>
    %290 = vector.multi_reduction <add>, %289, %cst_119 [1] : vector<16x128xf32> to vector<16xf32>
    %291 = vector.shape_cast %290 : vector<16xf32> to vector<16x1xf32>
    %cst_120 = arith.constant 1.280000e+02 : f32
    %292 = vector.broadcast %cst_120 : f32 to vector<16x1xf32>
    %293 = arith.divf %291, %292 : vector<16x1xf32>
    %cst_121 = arith.constant 9.99999997E-7 : f32
    %294 = vector.broadcast %cst_121 : f32 to vector<16x1xf32>
    %295 = arith.addf %293, %294 : vector<16x1xf32>
    %296 = math.rsqrt %295 : vector<16x1xf32>
    %297 = vector.broadcast %296 : vector<16x1xf32> to vector<16x128xf32>
    %298 = arith.mulf %288, %297 : vector<16x128xf32>
    %299 = vector.broadcast %281 : vector<1x128xf32> to vector<16x128xf32>
    %300 = arith.mulf %298, %299 : vector<16x128xf32>
    %301 = vector.broadcast %282 : vector<1x128xf32> to vector<16x128xf32>
    %302 = arith.addf %300, %301 : vector<16x128xf32>
    %303 = arith.truncf %302 : vector<16x128xf32> to vector<16x128xbf16>
    %c0_122 = arith.constant 0 : index
    %c0_123 = arith.constant 0 : index
    %304 = vector.load %arg19[%c0_122, %c0_123] : memref<128x384xbf16, #tpu.memory_space<vmem>>, vector<128x384xbf16>
    %cst_124 = arith.constant dense<0.000000e+00> : vector<16x384xf32>
    %305 = tpu.matmul %303, %304, %cst_124 {dimension_numbers = #tpu.dot_dimension_numbers<[1], [0], [0], [1], [0, 0, 1, 1], [], []>} : vector<16x128xbf16>, vector<128x384xbf16>, vector<16x384xf32> -> vector<16x384xf32>
    %c0_125 = arith.constant 0 : index
    %c0_126 = arith.constant 0 : index
    %306 = vector.load %arg20[%c0_125, %c0_126] : memref<1x384xf32, #tpu.memory_space<vmem>>, vector<1x384xf32>
    %307 = vector.broadcast %306 : vector<1x384xf32> to vector<16x384xf32>
    %308 = arith.addf %305, %307 : vector<16x384xf32>
    %309 = arith.truncf %308 : vector<16x384xf32> to vector<16x384xbf16>
    %310 = vector.extract_strided_slice %309 {offsets = [0, 0], sizes = [8, 384], strides = [1, 1]} : vector<16x384xbf16> to vector<8x384xbf16>
    %cst_127 = arith.constant 0.000000e+00 : f32
    %311 = vector.broadcast %cst_127 : f32 to vector<8x128xf32>
    %312 = vector.extract_strided_slice %310 {offsets = [0, 0], sizes = [8, 32], strides = [1, 1]} : vector<8x384xbf16> to vector<8x32xbf16>
    %313 = vector.extract_strided_slice %310 {offsets = [0, 128], sizes = [8, 32], strides = [1, 1]} : vector<8x384xbf16> to vector<8x32xbf16>
    %314 = vector.extract_strided_slice %310 {offsets = [0, 256], sizes = [8, 32], strides = [1, 1]} : vector<8x384xbf16> to vector<8x32xbf16>
    %cst_128 = arith.constant dense<0.000000e+00> : vector<8x8xf32>
    %315 = tpu.matmul %312, %313, %cst_128 {dimension_numbers = #tpu.dot_dimension_numbers<[1], [1], [0], [0], [0, 0, 1, 0], [], []>} : vector<8x32xbf16>, vector<8x32xbf16>, vector<8x8xf32> -> vector<8x8xf32>
    %cst_129 = arith.constant -1.000000e+30 : f32
    %316 = vector.broadcast %cst_129 : f32 to vector<8x8xf32>
    %317 = arith.select %18, %315, %316 : vector<8x8xi1>, vector<8x8xf32>
    %cst_130 = arith.constant dense<0xFF800000> : vector<8xf32>
    %318 = vector.multi_reduction <maximumf>, %317, %cst_130 [1] : vector<8x8xf32> to vector<8xf32>
    %319 = vector.shape_cast %318 : vector<8xf32> to vector<8x1xf32>
    %320 = vector.broadcast %319 : vector<8x1xf32> to vector<8x8xf32>
    %321 = arith.subf %317, %320 : vector<8x8xf32>
    %322 = math.exp %321 : vector<8x8xf32>
    %cst_131 = arith.constant dense<0.000000e+00> : vector<8xf32>
    %323 = vector.multi_reduction <add>, %322, %cst_131 [1] : vector<8x8xf32> to vector<8xf32>
    %324 = vector.shape_cast %323 : vector<8xf32> to vector<8x1xf32>
    %325 = tpu.reciprocal %324 {approx = true} : vector<8x1xf32> -> vector<8x1xf32>
    %326 = vector.broadcast %325 : vector<8x1xf32> to vector<8x8xf32>
    %327 = arith.mulf %322, %326 : vector<8x8xf32>
    %328 = arith.truncf %327 : vector<8x8xf32> to vector<8x8xbf16>
    %cst_132 = arith.constant dense<0.000000e+00> : vector<8x32xf32>
    %329 = tpu.matmul %328, %314, %cst_132 {dimension_numbers = #tpu.dot_dimension_numbers<[1], [0], [0], [1], [0, 0, 1, 1], [], []>} : vector<8x8xbf16>, vector<8x32xbf16>, vector<8x32xf32> -> vector<8x32xf32>
    %330 = arith.truncf %329 : vector<8x32xf32> to vector<8x32xbf16>
    %c0_133 = arith.constant 0 : index
    %c0_134 = arith.constant 0 : index
    %331 = vector.load %arg21[%c0_133, %c0_134] : memref<128x128xbf16, #tpu.memory_space<vmem>>, vector<32x128xbf16>
    %cst_135 = arith.constant dense<0.000000e+00> : vector<8x128xf32>
    %332 = tpu.matmul %330, %331, %cst_135 {dimension_numbers = #tpu.dot_dimension_numbers<[1], [0], [0], [1], [0, 0, 1, 1], [], []>} : vector<8x32xbf16>, vector<32x128xbf16>, vector<8x128xf32> -> vector<8x128xf32>
    %333 = arith.addf %311, %332 : vector<8x128xf32>
    %334 = vector.extract_strided_slice %310 {offsets = [0, 32], sizes = [8, 32], strides = [1, 1]} : vector<8x384xbf16> to vector<8x32xbf16>
    %335 = vector.extract_strided_slice %310 {offsets = [0, 160], sizes = [8, 32], strides = [1, 1]} : vector<8x384xbf16> to vector<8x32xbf16>
    %336 = vector.extract_strided_slice %310 {offsets = [0, 288], sizes = [8, 32], strides = [1, 1]} : vector<8x384xbf16> to vector<8x32xbf16>
    %cst_136 = arith.constant dense<0.000000e+00> : vector<8x8xf32>
    %337 = tpu.matmul %334, %335, %cst_136 {dimension_numbers = #tpu.dot_dimension_numbers<[1], [1], [0], [0], [0, 0, 1, 0], [], []>} : vector<8x32xbf16>, vector<8x32xbf16>, vector<8x8xf32> -> vector<8x8xf32>
    %cst_137 = arith.constant -1.000000e+30 : f32
    %338 = vector.broadcast %cst_137 : f32 to vector<8x8xf32>
    %339 = arith.select %18, %337, %338 : vector<8x8xi1>, vector<8x8xf32>
    %cst_138 = arith.constant dense<0xFF800000> : vector<8xf32>
    %340 = vector.multi_reduction <maximumf>, %339, %cst_138 [1] : vector<8x8xf32> to vector<8xf32>
    %341 = vector.shape_cast %340 : vector<8xf32> to vector<8x1xf32>
    %342 = vector.broadcast %341 : vector<8x1xf32> to vector<8x8xf32>
    %343 = arith.subf %339, %342 : vector<8x8xf32>
    %344 = math.exp %343 : vector<8x8xf32>
    %cst_139 = arith.constant dense<0.000000e+00> : vector<8xf32>
    %345 = vector.multi_reduction <add>, %344, %cst_139 [1] : vector<8x8xf32> to vector<8xf32>
    %346 = vector.shape_cast %345 : vector<8xf32> to vector<8x1xf32>
    %347 = tpu.reciprocal %346 {approx = true} : vector<8x1xf32> -> vector<8x1xf32>
    %348 = vector.broadcast %347 : vector<8x1xf32> to vector<8x8xf32>
    %349 = arith.mulf %344, %348 : vector<8x8xf32>
    %350 = arith.truncf %349 : vector<8x8xf32> to vector<8x8xbf16>
    %cst_140 = arith.constant dense<0.000000e+00> : vector<8x32xf32>
    %351 = tpu.matmul %350, %336, %cst_140 {dimension_numbers = #tpu.dot_dimension_numbers<[1], [0], [0], [1], [0, 0, 1, 1], [], []>} : vector<8x8xbf16>, vector<8x32xbf16>, vector<8x32xf32> -> vector<8x32xf32>
    %352 = arith.truncf %351 : vector<8x32xf32> to vector<8x32xbf16>
    %c32_141 = arith.constant 32 : index
    %c0_142 = arith.constant 0 : index
    %353 = vector.load %arg21[%c32_141, %c0_142] : memref<128x128xbf16, #tpu.memory_space<vmem>>, vector<32x128xbf16>
    %cst_143 = arith.constant dense<0.000000e+00> : vector<8x128xf32>
    %354 = tpu.matmul %352, %353, %cst_143 {dimension_numbers = #tpu.dot_dimension_numbers<[1], [0], [0], [1], [0, 0, 1, 1], [], []>} : vector<8x32xbf16>, vector<32x128xbf16>, vector<8x128xf32> -> vector<8x128xf32>
    %355 = arith.addf %333, %354 : vector<8x128xf32>
    %356 = vector.extract_strided_slice %310 {offsets = [0, 64], sizes = [8, 32], strides = [1, 1]} : vector<8x384xbf16> to vector<8x32xbf16>
    %357 = vector.extract_strided_slice %310 {offsets = [0, 192], sizes = [8, 32], strides = [1, 1]} : vector<8x384xbf16> to vector<8x32xbf16>
    %358 = vector.extract_strided_slice %310 {offsets = [0, 320], sizes = [8, 32], strides = [1, 1]} : vector<8x384xbf16> to vector<8x32xbf16>
    %cst_144 = arith.constant dense<0.000000e+00> : vector<8x8xf32>
    %359 = tpu.matmul %356, %357, %cst_144 {dimension_numbers = #tpu.dot_dimension_numbers<[1], [1], [0], [0], [0, 0, 1, 0], [], []>} : vector<8x32xbf16>, vector<8x32xbf16>, vector<8x8xf32> -> vector<8x8xf32>
    %cst_145 = arith.constant -1.000000e+30 : f32
    %360 = vector.broadcast %cst_145 : f32 to vector<8x8xf32>
    %361 = arith.select %18, %359, %360 : vector<8x8xi1>, vector<8x8xf32>
    %cst_146 = arith.constant dense<0xFF800000> : vector<8xf32>
    %362 = vector.multi_reduction <maximumf>, %361, %cst_146 [1] : vector<8x8xf32> to vector<8xf32>
    %363 = vector.shape_cast %362 : vector<8xf32> to vector<8x1xf32>
    %364 = vector.broadcast %363 : vector<8x1xf32> to vector<8x8xf32>
    %365 = arith.subf %361, %364 : vector<8x8xf32>
    %366 = math.exp %365 : vector<8x8xf32>
    %cst_147 = arith.constant dense<0.000000e+00> : vector<8xf32>
    %367 = vector.multi_reduction <add>, %366, %cst_147 [1] : vector<8x8xf32> to vector<8xf32>
    %368 = vector.shape_cast %367 : vector<8xf32> to vector<8x1xf32>
    %369 = tpu.reciprocal %368 {approx = true} : vector<8x1xf32> -> vector<8x1xf32>
    %370 = vector.broadcast %369 : vector<8x1xf32> to vector<8x8xf32>
    %371 = arith.mulf %366, %370 : vector<8x8xf32>
    %372 = arith.truncf %371 : vector<8x8xf32> to vector<8x8xbf16>
    %cst_148 = arith.constant dense<0.000000e+00> : vector<8x32xf32>
    %373 = tpu.matmul %372, %358, %cst_148 {dimension_numbers = #tpu.dot_dimension_numbers<[1], [0], [0], [1], [0, 0, 1, 1], [], []>} : vector<8x8xbf16>, vector<8x32xbf16>, vector<8x32xf32> -> vector<8x32xf32>
    %374 = arith.truncf %373 : vector<8x32xf32> to vector<8x32xbf16>
    %c64_149 = arith.constant 64 : index
    %c0_150 = arith.constant 0 : index
    %375 = vector.load %arg21[%c64_149, %c0_150] : memref<128x128xbf16, #tpu.memory_space<vmem>>, vector<32x128xbf16>
    %cst_151 = arith.constant dense<0.000000e+00> : vector<8x128xf32>
    %376 = tpu.matmul %374, %375, %cst_151 {dimension_numbers = #tpu.dot_dimension_numbers<[1], [0], [0], [1], [0, 0, 1, 1], [], []>} : vector<8x32xbf16>, vector<32x128xbf16>, vector<8x128xf32> -> vector<8x128xf32>
    %377 = arith.addf %355, %376 : vector<8x128xf32>
    %378 = vector.extract_strided_slice %310 {offsets = [0, 96], sizes = [8, 32], strides = [1, 1]} : vector<8x384xbf16> to vector<8x32xbf16>
    %379 = vector.extract_strided_slice %310 {offsets = [0, 224], sizes = [8, 32], strides = [1, 1]} : vector<8x384xbf16> to vector<8x32xbf16>
    %380 = vector.extract_strided_slice %310 {offsets = [0, 352], sizes = [8, 32], strides = [1, 1]} : vector<8x384xbf16> to vector<8x32xbf16>
    %cst_152 = arith.constant dense<0.000000e+00> : vector<8x8xf32>
    %381 = tpu.matmul %378, %379, %cst_152 {dimension_numbers = #tpu.dot_dimension_numbers<[1], [1], [0], [0], [0, 0, 1, 0], [], []>} : vector<8x32xbf16>, vector<8x32xbf16>, vector<8x8xf32> -> vector<8x8xf32>
    %cst_153 = arith.constant -1.000000e+30 : f32
    %382 = vector.broadcast %cst_153 : f32 to vector<8x8xf32>
    %383 = arith.select %18, %381, %382 : vector<8x8xi1>, vector<8x8xf32>
    %cst_154 = arith.constant dense<0xFF800000> : vector<8xf32>
    %384 = vector.multi_reduction <maximumf>, %383, %cst_154 [1] : vector<8x8xf32> to vector<8xf32>
    %385 = vector.shape_cast %384 : vector<8xf32> to vector<8x1xf32>
    %386 = vector.broadcast %385 : vector<8x1xf32> to vector<8x8xf32>
    %387 = arith.subf %383, %386 : vector<8x8xf32>
    %388 = math.exp %387 : vector<8x8xf32>
    %cst_155 = arith.constant dense<0.000000e+00> : vector<8xf32>
    %389 = vector.multi_reduction <add>, %388, %cst_155 [1] : vector<8x8xf32> to vector<8xf32>
    %390 = vector.shape_cast %389 : vector<8xf32> to vector<8x1xf32>
    %391 = tpu.reciprocal %390 {approx = true} : vector<8x1xf32> -> vector<8x1xf32>
    %392 = vector.broadcast %391 : vector<8x1xf32> to vector<8x8xf32>
    %393 = arith.mulf %388, %392 : vector<8x8xf32>
    %394 = arith.truncf %393 : vector<8x8xf32> to vector<8x8xbf16>
    %cst_156 = arith.constant dense<0.000000e+00> : vector<8x32xf32>
    %395 = tpu.matmul %394, %380, %cst_156 {dimension_numbers = #tpu.dot_dimension_numbers<[1], [0], [0], [1], [0, 0, 1, 1], [], []>} : vector<8x8xbf16>, vector<8x32xbf16>, vector<8x32xf32> -> vector<8x32xf32>
    %396 = arith.truncf %395 : vector<8x32xf32> to vector<8x32xbf16>
    %c96_157 = arith.constant 96 : index
    %c0_158 = arith.constant 0 : index
    %397 = vector.load %arg21[%c96_157, %c0_158] : memref<128x128xbf16, #tpu.memory_space<vmem>>, vector<32x128xbf16>
    %cst_159 = arith.constant dense<0.000000e+00> : vector<8x128xf32>
    %398 = tpu.matmul %396, %397, %cst_159 {dimension_numbers = #tpu.dot_dimension_numbers<[1], [0], [0], [1], [0, 0, 1, 1], [], []>} : vector<8x32xbf16>, vector<32x128xbf16>, vector<8x128xf32> -> vector<8x128xf32>
    %399 = arith.addf %377, %398 : vector<8x128xf32>
    %400 = vector.extract_strided_slice %309 {offsets = [8, 0], sizes = [8, 384], strides = [1, 1]} : vector<16x384xbf16> to vector<8x384xbf16>
    %cst_160 = arith.constant 0.000000e+00 : f32
    %401 = vector.broadcast %cst_160 : f32 to vector<8x128xf32>
    %402 = vector.extract_strided_slice %400 {offsets = [0, 0], sizes = [8, 32], strides = [1, 1]} : vector<8x384xbf16> to vector<8x32xbf16>
    %403 = vector.extract_strided_slice %400 {offsets = [0, 128], sizes = [8, 32], strides = [1, 1]} : vector<8x384xbf16> to vector<8x32xbf16>
    %404 = vector.extract_strided_slice %400 {offsets = [0, 256], sizes = [8, 32], strides = [1, 1]} : vector<8x384xbf16> to vector<8x32xbf16>
    %cst_161 = arith.constant dense<0.000000e+00> : vector<8x8xf32>
    %405 = tpu.matmul %402, %403, %cst_161 {dimension_numbers = #tpu.dot_dimension_numbers<[1], [1], [0], [0], [0, 0, 1, 0], [], []>} : vector<8x32xbf16>, vector<8x32xbf16>, vector<8x8xf32> -> vector<8x8xf32>
    %cst_162 = arith.constant -1.000000e+30 : f32
    %406 = vector.broadcast %cst_162 : f32 to vector<8x8xf32>
    %407 = arith.select %18, %405, %406 : vector<8x8xi1>, vector<8x8xf32>
    %cst_163 = arith.constant dense<0xFF800000> : vector<8xf32>
    %408 = vector.multi_reduction <maximumf>, %407, %cst_163 [1] : vector<8x8xf32> to vector<8xf32>
    %409 = vector.shape_cast %408 : vector<8xf32> to vector<8x1xf32>
    %410 = vector.broadcast %409 : vector<8x1xf32> to vector<8x8xf32>
    %411 = arith.subf %407, %410 : vector<8x8xf32>
    %412 = math.exp %411 : vector<8x8xf32>
    %cst_164 = arith.constant dense<0.000000e+00> : vector<8xf32>
    %413 = vector.multi_reduction <add>, %412, %cst_164 [1] : vector<8x8xf32> to vector<8xf32>
    %414 = vector.shape_cast %413 : vector<8xf32> to vector<8x1xf32>
    %415 = tpu.reciprocal %414 {approx = true} : vector<8x1xf32> -> vector<8x1xf32>
    %416 = vector.broadcast %415 : vector<8x1xf32> to vector<8x8xf32>
    %417 = arith.mulf %412, %416 : vector<8x8xf32>
    %418 = arith.truncf %417 : vector<8x8xf32> to vector<8x8xbf16>
    %cst_165 = arith.constant dense<0.000000e+00> : vector<8x32xf32>
    %419 = tpu.matmul %418, %404, %cst_165 {dimension_numbers = #tpu.dot_dimension_numbers<[1], [0], [0], [1], [0, 0, 1, 1], [], []>} : vector<8x8xbf16>, vector<8x32xbf16>, vector<8x32xf32> -> vector<8x32xf32>
    %420 = arith.truncf %419 : vector<8x32xf32> to vector<8x32xbf16>
    %c0_166 = arith.constant 0 : index
    %c0_167 = arith.constant 0 : index
    %421 = vector.load %arg21[%c0_166, %c0_167] : memref<128x128xbf16, #tpu.memory_space<vmem>>, vector<32x128xbf16>
    %cst_168 = arith.constant dense<0.000000e+00> : vector<8x128xf32>
    %422 = tpu.matmul %420, %421, %cst_168 {dimension_numbers = #tpu.dot_dimension_numbers<[1], [0], [0], [1], [0, 0, 1, 1], [], []>} : vector<8x32xbf16>, vector<32x128xbf16>, vector<8x128xf32> -> vector<8x128xf32>
    %423 = arith.addf %401, %422 : vector<8x128xf32>
    %424 = vector.extract_strided_slice %400 {offsets = [0, 32], sizes = [8, 32], strides = [1, 1]} : vector<8x384xbf16> to vector<8x32xbf16>
    %425 = vector.extract_strided_slice %400 {offsets = [0, 160], sizes = [8, 32], strides = [1, 1]} : vector<8x384xbf16> to vector<8x32xbf16>
    %426 = vector.extract_strided_slice %400 {offsets = [0, 288], sizes = [8, 32], strides = [1, 1]} : vector<8x384xbf16> to vector<8x32xbf16>
    %cst_169 = arith.constant dense<0.000000e+00> : vector<8x8xf32>
    %427 = tpu.matmul %424, %425, %cst_169 {dimension_numbers = #tpu.dot_dimension_numbers<[1], [1], [0], [0], [0, 0, 1, 0], [], []>} : vector<8x32xbf16>, vector<8x32xbf16>, vector<8x8xf32> -> vector<8x8xf32>
    %cst_170 = arith.constant -1.000000e+30 : f32
    %428 = vector.broadcast %cst_170 : f32 to vector<8x8xf32>
    %429 = arith.select %18, %427, %428 : vector<8x8xi1>, vector<8x8xf32>
    %cst_171 = arith.constant dense<0xFF800000> : vector<8xf32>
    %430 = vector.multi_reduction <maximumf>, %429, %cst_171 [1] : vector<8x8xf32> to vector<8xf32>
    %431 = vector.shape_cast %430 : vector<8xf32> to vector<8x1xf32>
    %432 = vector.broadcast %431 : vector<8x1xf32> to vector<8x8xf32>
    %433 = arith.subf %429, %432 : vector<8x8xf32>
    %434 = math.exp %433 : vector<8x8xf32>
    %cst_172 = arith.constant dense<0.000000e+00> : vector<8xf32>
    %435 = vector.multi_reduction <add>, %434, %cst_172 [1] : vector<8x8xf32> to vector<8xf32>
    %436 = vector.shape_cast %435 : vector<8xf32> to vector<8x1xf32>
    %437 = tpu.reciprocal %436 {approx = true} : vector<8x1xf32> -> vector<8x1xf32>
    %438 = vector.broadcast %437 : vector<8x1xf32> to vector<8x8xf32>
    %439 = arith.mulf %434, %438 : vector<8x8xf32>
    %440 = arith.truncf %439 : vector<8x8xf32> to vector<8x8xbf16>
    %cst_173 = arith.constant dense<0.000000e+00> : vector<8x32xf32>
    %441 = tpu.matmul %440, %426, %cst_173 {dimension_numbers = #tpu.dot_dimension_numbers<[1], [0], [0], [1], [0, 0, 1, 1], [], []>} : vector<8x8xbf16>, vector<8x32xbf16>, vector<8x32xf32> -> vector<8x32xf32>
    %442 = arith.truncf %441 : vector<8x32xf32> to vector<8x32xbf16>
    %c32_174 = arith.constant 32 : index
    %c0_175 = arith.constant 0 : index
    %443 = vector.load %arg21[%c32_174, %c0_175] : memref<128x128xbf16, #tpu.memory_space<vmem>>, vector<32x128xbf16>
    %cst_176 = arith.constant dense<0.000000e+00> : vector<8x128xf32>
    %444 = tpu.matmul %442, %443, %cst_176 {dimension_numbers = #tpu.dot_dimension_numbers<[1], [0], [0], [1], [0, 0, 1, 1], [], []>} : vector<8x32xbf16>, vector<32x128xbf16>, vector<8x128xf32> -> vector<8x128xf32>
    %445 = arith.addf %423, %444 : vector<8x128xf32>
    %446 = vector.extract_strided_slice %400 {offsets = [0, 64], sizes = [8, 32], strides = [1, 1]} : vector<8x384xbf16> to vector<8x32xbf16>
    %447 = vector.extract_strided_slice %400 {offsets = [0, 192], sizes = [8, 32], strides = [1, 1]} : vector<8x384xbf16> to vector<8x32xbf16>
    %448 = vector.extract_strided_slice %400 {offsets = [0, 320], sizes = [8, 32], strides = [1, 1]} : vector<8x384xbf16> to vector<8x32xbf16>
    %cst_177 = arith.constant dense<0.000000e+00> : vector<8x8xf32>
    %449 = tpu.matmul %446, %447, %cst_177 {dimension_numbers = #tpu.dot_dimension_numbers<[1], [1], [0], [0], [0, 0, 1, 0], [], []>} : vector<8x32xbf16>, vector<8x32xbf16>, vector<8x8xf32> -> vector<8x8xf32>
    %cst_178 = arith.constant -1.000000e+30 : f32
    %450 = vector.broadcast %cst_178 : f32 to vector<8x8xf32>
    %451 = arith.select %18, %449, %450 : vector<8x8xi1>, vector<8x8xf32>
    %cst_179 = arith.constant dense<0xFF800000> : vector<8xf32>
    %452 = vector.multi_reduction <maximumf>, %451, %cst_179 [1] : vector<8x8xf32> to vector<8xf32>
    %453 = vector.shape_cast %452 : vector<8xf32> to vector<8x1xf32>
    %454 = vector.broadcast %453 : vector<8x1xf32> to vector<8x8xf32>
    %455 = arith.subf %451, %454 : vector<8x8xf32>
    %456 = math.exp %455 : vector<8x8xf32>
    %cst_180 = arith.constant dense<0.000000e+00> : vector<8xf32>
    %457 = vector.multi_reduction <add>, %456, %cst_180 [1] : vector<8x8xf32> to vector<8xf32>
    %458 = vector.shape_cast %457 : vector<8xf32> to vector<8x1xf32>
    %459 = tpu.reciprocal %458 {approx = true} : vector<8x1xf32> -> vector<8x1xf32>
    %460 = vector.broadcast %459 : vector<8x1xf32> to vector<8x8xf32>
    %461 = arith.mulf %456, %460 : vector<8x8xf32>
    %462 = arith.truncf %461 : vector<8x8xf32> to vector<8x8xbf16>
    %cst_181 = arith.constant dense<0.000000e+00> : vector<8x32xf32>
    %463 = tpu.matmul %462, %448, %cst_181 {dimension_numbers = #tpu.dot_dimension_numbers<[1], [0], [0], [1], [0, 0, 1, 1], [], []>} : vector<8x8xbf16>, vector<8x32xbf16>, vector<8x32xf32> -> vector<8x32xf32>
    %464 = arith.truncf %463 : vector<8x32xf32> to vector<8x32xbf16>
    %c64_182 = arith.constant 64 : index
    %c0_183 = arith.constant 0 : index
    %465 = vector.load %arg21[%c64_182, %c0_183] : memref<128x128xbf16, #tpu.memory_space<vmem>>, vector<32x128xbf16>
    %cst_184 = arith.constant dense<0.000000e+00> : vector<8x128xf32>
    %466 = tpu.matmul %464, %465, %cst_184 {dimension_numbers = #tpu.dot_dimension_numbers<[1], [0], [0], [1], [0, 0, 1, 1], [], []>} : vector<8x32xbf16>, vector<32x128xbf16>, vector<8x128xf32> -> vector<8x128xf32>
    %467 = arith.addf %445, %466 : vector<8x128xf32>
    %468 = vector.extract_strided_slice %400 {offsets = [0, 96], sizes = [8, 32], strides = [1, 1]} : vector<8x384xbf16> to vector<8x32xbf16>
    %469 = vector.extract_strided_slice %400 {offsets = [0, 224], sizes = [8, 32], strides = [1, 1]} : vector<8x384xbf16> to vector<8x32xbf16>
    %470 = vector.extract_strided_slice %400 {offsets = [0, 352], sizes = [8, 32], strides = [1, 1]} : vector<8x384xbf16> to vector<8x32xbf16>
    %cst_185 = arith.constant dense<0.000000e+00> : vector<8x8xf32>
    %471 = tpu.matmul %468, %469, %cst_185 {dimension_numbers = #tpu.dot_dimension_numbers<[1], [1], [0], [0], [0, 0, 1, 0], [], []>} : vector<8x32xbf16>, vector<8x32xbf16>, vector<8x8xf32> -> vector<8x8xf32>
    %cst_186 = arith.constant -1.000000e+30 : f32
    %472 = vector.broadcast %cst_186 : f32 to vector<8x8xf32>
    %473 = arith.select %18, %471, %472 : vector<8x8xi1>, vector<8x8xf32>
    %cst_187 = arith.constant dense<0xFF800000> : vector<8xf32>
    %474 = vector.multi_reduction <maximumf>, %473, %cst_187 [1] : vector<8x8xf32> to vector<8xf32>
    %475 = vector.shape_cast %474 : vector<8xf32> to vector<8x1xf32>
    %476 = vector.broadcast %475 : vector<8x1xf32> to vector<8x8xf32>
    %477 = arith.subf %473, %476 : vector<8x8xf32>
    %478 = math.exp %477 : vector<8x8xf32>
    %cst_188 = arith.constant dense<0.000000e+00> : vector<8xf32>
    %479 = vector.multi_reduction <add>, %478, %cst_188 [1] : vector<8x8xf32> to vector<8xf32>
    %480 = vector.shape_cast %479 : vector<8xf32> to vector<8x1xf32>
    %481 = tpu.reciprocal %480 {approx = true} : vector<8x1xf32> -> vector<8x1xf32>
    %482 = vector.broadcast %481 : vector<8x1xf32> to vector<8x8xf32>
    %483 = arith.mulf %478, %482 : vector<8x8xf32>
    %484 = arith.truncf %483 : vector<8x8xf32> to vector<8x8xbf16>
    %cst_189 = arith.constant dense<0.000000e+00> : vector<8x32xf32>
    %485 = tpu.matmul %484, %470, %cst_189 {dimension_numbers = #tpu.dot_dimension_numbers<[1], [0], [0], [1], [0, 0, 1, 1], [], []>} : vector<8x8xbf16>, vector<8x32xbf16>, vector<8x32xf32> -> vector<8x32xf32>
    %486 = arith.truncf %485 : vector<8x32xf32> to vector<8x32xbf16>
    %c96_190 = arith.constant 96 : index
    %c0_191 = arith.constant 0 : index
    %487 = vector.load %arg21[%c96_190, %c0_191] : memref<128x128xbf16, #tpu.memory_space<vmem>>, vector<32x128xbf16>
    %cst_192 = arith.constant dense<0.000000e+00> : vector<8x128xf32>
    %488 = tpu.matmul %486, %487, %cst_192 {dimension_numbers = #tpu.dot_dimension_numbers<[1], [0], [0], [1], [0, 0, 1, 1], [], []>} : vector<8x32xbf16>, vector<32x128xbf16>, vector<8x128xf32> -> vector<8x128xf32>
    %489 = arith.addf %467, %488 : vector<8x128xf32>
    %490 = tpu.concatenate %399, %489 in 0 : vector<8x128xf32>, vector<8x128xf32> -> vector<16x128xf32>
    %491 = arith.addf %280, %490 : vector<16x128xf32>
    %c0_193 = arith.constant 0 : index
    %c0_194 = arith.constant 0 : index
    %492 = vector.load %arg22[%c0_193, %c0_194] : memref<1x128xf32, #tpu.memory_space<vmem>>, vector<1x128xf32>
    %493 = vector.broadcast %492 : vector<1x128xf32> to vector<16x128xf32>
    %494 = arith.addf %491, %493 : vector<16x128xf32>
    %c0_195 = arith.constant 0 : index
    %c0_196 = arith.constant 0 : index
    %495 = vector.load %arg23[%c0_195, %c0_196] : memref<1x128xf32, #tpu.memory_space<vmem>>, vector<1x128xf32>
    %c0_197 = arith.constant 0 : index
    %c0_198 = arith.constant 0 : index
    %496 = vector.load %arg24[%c0_197, %c0_198] : memref<1x128xf32, #tpu.memory_space<vmem>>, vector<1x128xf32>
    %cst_199 = arith.constant dense<0.000000e+00> : vector<16xf32>
    %497 = vector.multi_reduction <add>, %494, %cst_199 [1] : vector<16x128xf32> to vector<16xf32>
    %498 = vector.shape_cast %497 : vector<16xf32> to vector<16x1xf32>
    %cst_200 = arith.constant 1.280000e+02 : f32
    %499 = vector.broadcast %cst_200 : f32 to vector<16x1xf32>
    %500 = arith.divf %498, %499 : vector<16x1xf32>
    %501 = vector.broadcast %500 : vector<16x1xf32> to vector<16x128xf32>
    %502 = arith.subf %494, %501 : vector<16x128xf32>
    %503 = arith.mulf %502, %502 : vector<16x128xf32>
    %cst_201 = arith.constant dense<0.000000e+00> : vector<16xf32>
    %504 = vector.multi_reduction <add>, %503, %cst_201 [1] : vector<16x128xf32> to vector<16xf32>
    %505 = vector.shape_cast %504 : vector<16xf32> to vector<16x1xf32>
    %cst_202 = arith.constant 1.280000e+02 : f32
    %506 = vector.broadcast %cst_202 : f32 to vector<16x1xf32>
    %507 = arith.divf %505, %506 : vector<16x1xf32>
    %cst_203 = arith.constant 9.99999997E-7 : f32
    %508 = vector.broadcast %cst_203 : f32 to vector<16x1xf32>
    %509 = arith.addf %507, %508 : vector<16x1xf32>
    %510 = math.rsqrt %509 : vector<16x1xf32>
    %511 = vector.broadcast %510 : vector<16x1xf32> to vector<16x128xf32>
    %512 = arith.mulf %502, %511 : vector<16x128xf32>
    %513 = vector.broadcast %495 : vector<1x128xf32> to vector<16x128xf32>
    %514 = arith.mulf %512, %513 : vector<16x128xf32>
    %515 = vector.broadcast %496 : vector<1x128xf32> to vector<16x128xf32>
    %516 = arith.addf %514, %515 : vector<16x128xf32>
    %517 = arith.truncf %516 : vector<16x128xf32> to vector<16x128xbf16>
    %c0_204 = arith.constant 0 : index
    %c0_205 = arith.constant 0 : index
    %518 = vector.load %arg25[%c0_204, %c0_205] : memref<128x512xbf16, #tpu.memory_space<vmem>>, vector<128x512xbf16>
    %cst_206 = arith.constant dense<0.000000e+00> : vector<16x512xf32>
    %519 = tpu.matmul %517, %518, %cst_206 {dimension_numbers = #tpu.dot_dimension_numbers<[1], [0], [0], [1], [0, 0, 1, 1], [], []>} : vector<16x128xbf16>, vector<128x512xbf16>, vector<16x512xf32> -> vector<16x512xf32>
    %c0_207 = arith.constant 0 : index
    %c0_208 = arith.constant 0 : index
    %520 = vector.load %arg26[%c0_207, %c0_208] : memref<1x512xf32, #tpu.memory_space<vmem>>, vector<1x512xf32>
    %521 = vector.broadcast %520 : vector<1x512xf32> to vector<16x512xf32>
    %522 = arith.addf %519, %521 : vector<16x512xf32>
    %523 = arith.mulf %522, %522 : vector<16x512xf32>
    %524 = arith.mulf %522, %523 : vector<16x512xf32>
    %cst_209 = arith.constant 4.471500e-02 : f32
    %525 = vector.broadcast %cst_209 : f32 to vector<16x512xf32>
    %526 = arith.mulf %525, %524 : vector<16x512xf32>
    %527 = arith.addf %522, %526 : vector<16x512xf32>
    %cst_210 = arith.constant 0.797884583 : f32
    %528 = vector.broadcast %cst_210 : f32 to vector<16x512xf32>
    %529 = arith.mulf %528, %527 : vector<16x512xf32>
    %530 = math.tanh %529 : vector<16x512xf32>
    %cst_211 = arith.constant 1.000000e+00 : f32
    %531 = vector.broadcast %cst_211 : f32 to vector<16x512xf32>
    %532 = arith.addf %531, %530 : vector<16x512xf32>
    %cst_212 = arith.constant 5.000000e-01 : f32
    %533 = vector.broadcast %cst_212 : f32 to vector<16x512xf32>
    %534 = arith.mulf %533, %532 : vector<16x512xf32>
    %535 = arith.mulf %522, %534 : vector<16x512xf32>
    %536 = arith.truncf %535 : vector<16x512xf32> to vector<16x512xbf16>
    %c0_213 = arith.constant 0 : index
    %c0_214 = arith.constant 0 : index
    %537 = vector.load %arg27[%c0_213, %c0_214] : memref<512x128xbf16, #tpu.memory_space<vmem>>, vector<512x128xbf16>
    %cst_215 = arith.constant dense<0.000000e+00> : vector<16x128xf32>
    %538 = tpu.matmul %536, %537, %cst_215 {dimension_numbers = #tpu.dot_dimension_numbers<[1], [0], [0], [1], [0, 0, 1, 1], [], []>} : vector<16x512xbf16>, vector<512x128xbf16>, vector<16x128xf32> -> vector<16x128xf32>
    %c0_216 = arith.constant 0 : index
    %c0_217 = arith.constant 0 : index
    %539 = vector.load %arg28[%c0_216, %c0_217] : memref<1x128xf32, #tpu.memory_space<vmem>>, vector<1x128xf32>
    %540 = vector.broadcast %539 : vector<1x128xf32> to vector<16x128xf32>
    %541 = arith.addf %538, %540 : vector<16x128xf32>
    %542 = arith.addf %494, %541 : vector<16x128xf32>
    %c0_218 = arith.constant 0 : index
    %c0_219 = arith.constant 0 : index
    %543 = vector.load %arg29[%c0_218, %c0_219] : memref<1x128xf32, #tpu.memory_space<vmem>>, vector<1x128xf32>
    %c0_220 = arith.constant 0 : index
    %c0_221 = arith.constant 0 : index
    %544 = vector.load %arg30[%c0_220, %c0_221] : memref<1x128xf32, #tpu.memory_space<vmem>>, vector<1x128xf32>
    %cst_222 = arith.constant dense<0.000000e+00> : vector<16xf32>
    %545 = vector.multi_reduction <add>, %542, %cst_222 [1] : vector<16x128xf32> to vector<16xf32>
    %546 = vector.shape_cast %545 : vector<16xf32> to vector<16x1xf32>
    %cst_223 = arith.constant 1.280000e+02 : f32
    %547 = vector.broadcast %cst_223 : f32 to vector<16x1xf32>
    %548 = arith.divf %546, %547 : vector<16x1xf32>
    %549 = vector.broadcast %548 : vector<16x1xf32> to vector<16x128xf32>
    %550 = arith.subf %542, %549 : vector<16x128xf32>
    %551 = arith.mulf %550, %550 : vector<16x128xf32>
    %cst_224 = arith.constant dense<0.000000e+00> : vector<16xf32>
    %552 = vector.multi_reduction <add>, %551, %cst_224 [1] : vector<16x128xf32> to vector<16xf32>
    %553 = vector.shape_cast %552 : vector<16xf32> to vector<16x1xf32>
    %cst_225 = arith.constant 1.280000e+02 : f32
    %554 = vector.broadcast %cst_225 : f32 to vector<16x1xf32>
    %555 = arith.divf %553, %554 : vector<16x1xf32>
    %cst_226 = arith.constant 9.99999997E-7 : f32
    %556 = vector.broadcast %cst_226 : f32 to vector<16x1xf32>
    %557 = arith.addf %555, %556 : vector<16x1xf32>
    %558 = math.rsqrt %557 : vector<16x1xf32>
    %559 = vector.broadcast %558 : vector<16x1xf32> to vector<16x128xf32>
    %560 = arith.mulf %550, %559 : vector<16x128xf32>
    %561 = vector.broadcast %543 : vector<1x128xf32> to vector<16x128xf32>
    %562 = arith.mulf %560, %561 : vector<16x128xf32>
    %563 = vector.broadcast %544 : vector<1x128xf32> to vector<16x128xf32>
    %564 = arith.addf %562, %563 : vector<16x128xf32>
    %565 = arith.truncf %564 : vector<16x128xf32> to vector<16x128xbf16>
    %c0_227 = arith.constant 0 : index
    %c0_228 = arith.constant 0 : index
    %566 = vector.load %arg31[%c0_227, %c0_228] : memref<128x128xbf16, #tpu.memory_space<vmem>>, vector<128x128xbf16>
    %cst_229 = arith.constant dense<0.000000e+00> : vector<16x128xf32>
    %567 = tpu.matmul %565, %566, %cst_229 {dimension_numbers = #tpu.dot_dimension_numbers<[1], [0], [0], [1], [0, 0, 1, 1], [], []>} : vector<16x128xbf16>, vector<128x128xbf16>, vector<16x128xf32> -> vector<16x128xf32>
    %c0_230 = arith.constant 0 : index
    %c0_231 = arith.constant 0 : index
    %568 = vector.load %arg32[%c0_230, %c0_231] : memref<1x128xf32, #tpu.memory_space<vmem>>, vector<1x128xf32>
    %569 = vector.broadcast %568 : vector<1x128xf32> to vector<16x128xf32>
    %570 = arith.addf %567, %569 : vector<16x128xf32>
    %c0_232 = arith.constant 0 : index
    %c0_233 = arith.constant 0 : index
    %571 = vector.load %arg33[%c0_232, %c0_233] : memref<16x128xf32, #tpu.memory_space<vmem>>, vector<16x128xf32>
    tpu.vector_store %arg33[%c0_232, %c0_233], %570 {strides = array<i32>} : memref<16x128xf32, #tpu.memory_space<vmem>>, vector<16x128xf32>,
    return
  }
}

</mosaic_0001>

<llo_original>
// kernel: tpu_custom_call.1
$region0: #{tpu_custom_call.1}
  #allocation0 [shape = 'u32[]', space=smem, size = 0x4, offset = 0x4, fixed_abs, tag = 'smem constant byte address 0x4 - core index']
  #allocation1 [shape = 'u32[144,128]{1,0:T(1,128)}', space=vmem, size = 0x12000, scoped, tag = 'internal scratch']
  %s0 = inlined_call_operand.smem [shape: u32[34], index: -1, kind: input, shape index: {}]
  %s1 = sld [smem:[%s0]]
  %s2 = scalar_lea.smem %s0, 1
  %s3 = sld [smem:[%s2]]
  %s4 = scalar_lea.smem %s0, 2
  %s5 = sld [smem:[%s4]]
  %s6 = scalar_lea.smem %s0, 3
  %s7 = sld [smem:[%s6]]
  %s8 = scalar_lea.smem %s0, 4
  %s9 = sld [smem:[%s8]]
  %s10 = scalar_lea.smem %s0, 5
  %s11 = sld [smem:[%s10]]
  %s12 = scalar_lea.smem %s0, 6
  %s13 = sld [smem:[%s12]]
  %s14 = scalar_lea.smem %s0, 7
  %s15 = sld [smem:[%s14]]
  %s16 = scalar_lea.smem %s0, 8
  %s17 = sld [smem:[%s16]]
  %s18 = scalar_lea.smem %s0, 9
  %s19 = sld [smem:[%s18]]
  %s20 = scalar_lea.smem %s0, 10
  %s21 = sld [smem:[%s20]]
  %s22 = scalar_lea.smem %s0, 11
  %s23 = sld [smem:[%s22]]
  %s24 = scalar_lea.smem %s0, 12
  %s25 = sld [smem:[%s24]]
  %s26 = scalar_lea.smem %s0, 13
  %s27 = sld [smem:[%s26]]
  %s28 = scalar_lea.smem %s0, 14
  %s29 = sld [smem:[%s28]]
  %s30 = scalar_lea.smem %s0, 15
  %s31 = sld [smem:[%s30]]
  %s32 = scalar_lea.smem %s0, 16
  %s33 = sld [smem:[%s32]]
  %s34 = scalar_lea.smem %s0, 17
  %s35 = sld [smem:[%s34]]
  %s36 = scalar_lea.smem %s0, 18
  %s37 = sld [smem:[%s36]]
  %s38 = scalar_lea.smem %s0, 19
  %s39 = sld [smem:[%s38]]
  %s40 = scalar_lea.smem %s0, 20
  %s41 = sld [smem:[%s40]]
  %s42 = scalar_lea.smem %s0, 21
  %s43 = sld [smem:[%s42]]
  %s44 = scalar_lea.smem %s0, 22
  %s45 = sld [smem:[%s44]]
  %s46 = scalar_lea.smem %s0, 23
  %s47 = sld [smem:[%s46]]
  %s48 = scalar_lea.smem %s0, 24
  %s49 = sld [smem:[%s48]]
  %s50 = scalar_lea.smem %s0, 25
  %s51 = sld [smem:[%s50]]
  %s52 = scalar_lea.smem %s0, 26
  %s53 = sld [smem:[%s52]]
  %s54 = scalar_lea.smem %s0, 27
  %s55 = sld [smem:[%s54]]
  %s56 = scalar_lea.smem %s0, 28
  %s57 = sld [smem:[%s56]]
  %s58 = scalar_lea.smem %s0, 29
  %s59 = sld [smem:[%s58]]
  %s60 = scalar_lea.smem %s0, 30
  %s61 = sld [smem:[%s60]]
  %s62 = scalar_lea.smem %s0, 31
  %s63 = sld [smem:[%s62]]
  %s64 = scalar_lea.smem %s0, 32
  %s65 = sld [smem:[%s64]]
  %s66 = scalar_lea.smem %s0, 33
  %s67 = sld [smem:[%s66]]
  %s68 = sld [smem:[#allocation0]]
  $region206: #{tpu_custom_call.1} parent=0
    _
  %s70 = ssub.s32 1, %s68
  %s71 = scalar_select 0, %s70, %s68
  $region1: #{tpu_custom_call.1} parent=0
    #allocation2 [shape = 'u8[8192]{0}', space=vmem, size = 0x2000, scoped, tag = 'input window, operand 0, single buffered']
    #allocation3 [shape = 's32[1]{0}', space=sflag, size = 0x4, scoped, tag = 'scoped memory for tpu_custom_call.1']
    #allocation4 [shape = 's32[1]{0}', space=sflag, size = 0x4, scoped, tag = 'scoped memory for tpu_custom_call.1']
    #allocation5 [shape = 'u8[49152]{0}', space=vmem, size = 0xc000, scoped, tag = 'input window, operand 1, single buffered']
    #allocation6 [shape = 's32[1]{0}', space=sflag, size = 0x4, scoped, tag = 'scoped memory for tpu_custom_call.1']
    #allocation7 [shape = 'u8[512]{0}', space=vmem, size = 0x400, scoped, tag = 'input window, operand 2, single buffered']
    #allocation8 [shape = 'u8[512]{0}', space=vmem, size = 0x400, scoped, tag = 'input window, operand 3, single buffered']
    #allocation9 [shape = 's32[1]{0}', space=sflag, size = 0x4, scoped, tag = 'scoped memory for tpu_custom_call.1']
    #allocation10 [shape = 'u8[512]{0}', space=vmem, size = 0x400, scoped, tag = 'input window, operand 5, single buffered']
    #allocation11 [shape = 'u8[512]{0}', space=vmem, size = 0x400, scoped, tag = 'input window, operand 6, single buffered']
    #allocation12 [shape = 's32[1]{0}', space=sflag, size = 0x4, scoped, tag = 'scoped memory for tpu_custom_call.1']
    #allocation13 [shape = 'u8[98304]{0}', space=vmem, size = 0x18000, scoped, tag = 'input window, operand 7, single buffered']
    #allocation14 [shape = 'u8[1536]{0}', space=vmem, size = 0x800, scoped, tag = 'input window, operand 8, single buffered']
    #allocation15 [shape = 's32[1]{0}', space=sflag, size = 0x4, scoped, tag = 'scoped memory for tpu_custom_call.1']
    #allocation16 [shape = 'u8[32768]{0}', space=vmem, size = 0x8000, scoped, tag = 'input window, operand 9, single buffered']
    #allocation17 [shape = 'u8[131072]{0}', space=vmem, size = 0x20000, scoped, tag = 'input window, operand 13, single buffered']
    #allocation18 [shape = 's32[1]{0}', space=sflag, size = 0x4, scoped, tag = 'scoped memory for tpu_custom_call.1']
    #allocation19 [shape = 'u8[131072]{0}', space=vmem, size = 0x20000, scoped, tag = 'input window, operand 15, single buffered']
    #allocation20 [shape = 'u8[98304]{0}', space=vmem, size = 0x18000, scoped, tag = 'input window, operand 19, single buffered']
    #allocation21 [shape = 's32[1]{0}', space=sflag, size = 0x4, scoped, tag = 'scoped memory for tpu_custom_call.1']
    #allocation22 [shape = 'u8[32768]{0}', space=vmem, size = 0x8000, scoped, tag = 'input window, operand 21, single buffered']
    #allocation23 [shape = 'u8[131072]{0}', space=vmem, size = 0x20000, scoped, tag = 'input window, operand 25, single buffered']
    #allocation24 [shape = 's32[1]{0}', space=sflag, size = 0x4, scoped, tag = 'scoped memory for tpu_custom_call.1']
    #allocation25 [shape = 'u8[131072]{0}', space=vmem, size = 0x20000, scoped, tag = 'input window, operand 27, single buffered']
    #allocation26 [shape = 'u8[32768]{0}', space=vmem, size = 0x8000, scoped, tag = 'input window, operand 31, single buffered']
    #allocation27 [shape = 's32[1]{0}', space=sflag, size = 0x4, scoped, tag = 'scoped memory for tpu_custom_call.1']
    #allocation28 [shape = 'u8[8192]{0}', space=vmem, size = 0x2000, scoped, tag = 'output window, operand 0, single buffered']
    %72 = vsyncpa [#allocation3], 0
    %73 = vsyncpa [#allocation6], 0
    %74 = vsyncpa [#allocation9], 0
    %75 = vsyncpa [#allocation12], 0
    %76 = vsyncpa [#allocation15], 0
    %77 = vsyncpa [#allocation18], 0
    %78 = vsyncpa [#allocation21], 0
    %79 = vsyncpa [#allocation24], 0
    %80 = vsyncpa [#allocation27], 0
    %81 = vsyncpa [#allocation4], 0
    // Predicated region
    $region2: #{tpu_custom_call.1} parent=1 // pred_check
      _
    $region3: #{tpu_custom_call.1} parent=1 // pred_check_branch
      %83 = sbr.rel (0) target = $region5
    $region4: #{tpu_custom_call.1} parent=1 // pred_region
      %s85 = ssub.s32 256, 256
      %86 = vsyncadd [#allocation3], %s85
      %s88 = sshll.u32 [#allocation2], 4
      %s89 = int_to_ptr.vmem [resolvable:$true] %s88
      %91 = dma.hbm_to_vmem [thread:$0]  %s1, 256, %s89, [#allocation3]
    $region5: #{tpu_custom_call.1} parent=1 // pred_fallthru
      _
    // Predicated region
    $region6: #{tpu_custom_call.1} parent=1 // pred_check
      _
    $region7: #{tpu_custom_call.1} parent=1 // pred_check_branch
      %93 = sbr.rel (0) target = $region9
    $region8: #{tpu_custom_call.1} parent=1 // pred_region
      %s95 = ssub.s32 1536, 1536
      %96 = vsyncadd [#allocation6], %s95
      %s97 = sshll.u32 [#allocation5], 4
      %s98 = int_to_ptr.vmem [resolvable:$true] %s97
      %103 = dma.hbm_to_vmem [thread:$0]  %s3, 1536, %s98, [#allocation6], 64, 64, 4
    $region9: #{tpu_custom_call.1} parent=1 // pred_fallthru
      _
    // Predicated region
    $region10: #{tpu_custom_call.1} parent=1 // pred_check
      _
    $region11: #{tpu_custom_call.1} parent=1 // pred_check_branch
      %105 = sbr.rel (0) target = $region13
    $region12: #{tpu_custom_call.1} parent=1 // pred_region
      %s107 = ssub.s32 16, 16
      %108 = vsyncadd [#allocation6], %s107
      %s110 = sshll.u32 [#allocation7], 4
      %s111 = int_to_ptr.vmem [resolvable:$true] %s110
      %113 = dma.hbm_to_vmem [thread:$0]  %s5, 16, %s111, [#allocation6]
    $region13: #{tpu_custom_call.1} parent=1 // pred_fallthru
      _
    // Predicated region
    $region14: #{tpu_custom_call.1} parent=1 // pred_check
      _
    $region15: #{tpu_custom_call.1} parent=1 // pred_check_branch
      %115 = sbr.rel (0) target = $region17
    $region16: #{tpu_custom_call.1} parent=1 // pred_region
      %s117 = ssub.s32 16, 16
      %118 = vsyncadd [#allocation9], %s117
      %s120 = sshll.u32 [#allocation8], 4
      %s121 = int_to_ptr.vmem [resolvable:$true] %s120
      %123 = dma.hbm_to_vmem [thread:$0]  %s7, 16, %s121, [#allocation9]
    $region17: #{tpu_custom_call.1} parent=1 // pred_fallthru
      _
    // Predicated region
    $region18: #{tpu_custom_call.1} parent=1 // pred_check
      _
    $region19: #{tpu_custom_call.1} parent=1 // pred_check_branch
      %125 = sbr.rel (0) target = $region21
    $region20: #{tpu_custom_call.1} parent=1 // pred_region
      _
    $region21: #{tpu_custom_call.1} parent=1 // pred_fallthru
      _
    // Predicated region
    $region22: #{tpu_custom_call.1} parent=1 // pred_check
      _
    $region23: #{tpu_custom_call.1} parent=1 // pred_check_branch
      %127 = sbr.rel (0) target = $region25
    $region24: #{tpu_custom_call.1} parent=1 // pred_region
      %s129 = ssub.s32 16, 16
      %130 = vsyncadd [#allocation9], %s129
      %s132 = sshll.u32 [#allocation10], 4
      %s133 = int_to_ptr.vmem [resolvable:$true] %s132
      %135 = dma.hbm_to_vmem [thread:$0]  %s11, 16, %s133, [#allocation9]
    $region25: #{tpu_custom_call.1} parent=1 // pred_fallthru
      _
    // Predicated region
    $region26: #{tpu_custom_call.1} parent=1 // pred_check
      _
    $region27: #{tpu_custom_call.1} parent=1 // pred_check_branch
      %137 = sbr.rel (0) target = $region29
    $region28: #{tpu_custom_call.1} parent=1 // pred_region
      %s139 = ssub.s32 16, 16
      %140 = vsyncadd [#allocation12], %s139
      %s142 = sshll.u32 [#allocation11], 4
      %s143 = int_to_ptr.vmem [resolvable:$true] %s142
      %145 = dma.hbm_to_vmem [thread:$0]  %s13, 16, %s143, [#allocation12]
    $region29: #{tpu_custom_call.1} parent=1 // pred_fallthru
      _
    // Predicated region
    $region30: #{tpu_custom_call.1} parent=1 // pred_check
      _
    $region31: #{tpu_custom_call.1} parent=1 // pred_check_branch
      %147 = sbr.rel (0) target = $region33
    $region32: #{tpu_custom_call.1} parent=1 // pred_region
      %s149 = ssub.s32 3072, 3072
      %150 = vsyncadd [#allocation12], %s149
      %s151 = sshll.u32 [#allocation13], 4
      %s152 = int_to_ptr.vmem [resolvable:$true] %s151
      %157 = dma.hbm_to_vmem [thread:$0]  %s15, 3072, %s152, [#allocation12], 192, 192, 12
    $region33: #{tpu_custom_call.1} parent=1 // pred_fallthru
      _
    // Predicated region
    $region34: #{tpu_custom_call.1} parent=1 // pred_check
      _
    $region35: #{tpu_custom_call.1} parent=1 // pred_check_branch
      %159 = sbr.rel (0) target = $region37
    $region36: #{tpu_custom_call.1} parent=1 // pred_region
      %s161 = ssub.s32 48, 48
      %162 = vsyncadd [#allocation15], %s161
      %s164 = sshll.u32 [#allocation14], 4
      %s165 = int_to_ptr.vmem [resolvable:$true] %s164
      %167 = dma.hbm_to_vmem [thread:$0]  %s17, 48, %s165, [#allocation15]
    $region37: #{tpu_custom_call.1} parent=1 // pred_fallthru
      _
    // Predicated region
    $region38: #{tpu_custom_call.1} parent=1 // pred_check
      _
    $region39: #{tpu_custom_call.1} parent=1 // pred_check_branch
      %169 = sbr.rel (0) target = $region41
    $region40: #{tpu_custom_call.1} parent=1 // pred_region
      %s171 = ssub.s32 1024, 1024
      %172 = vsyncadd [#allocation15], %s171
      %s173 = sshll.u32 [#allocation16], 4
      %s174 = int_to_ptr.vmem [resolvable:$true] %s173
      %179 = dma.hbm_to_vmem [thread:$0]  %s19, 1024, %s174, [#allocation15], 64, 64, 4
    $region41: #{tpu_custom_call.1} parent=1 // pred_fallthru
      _
    // Predicated region
    $region42: #{tpu_custom_call.1} parent=1 // pred_check
      _
    $region43: #{tpu_custom_call.1} parent=1 // pred_check_branch
      %181 = sbr.rel (0) target = $region45
    $region44: #{tpu_custom_call.1} parent=1 // pred_region
      _
    $region45: #{tpu_custom_call.1} parent=1 // pred_fallthru
      _
    // Predicated region
    $region46: #{tpu_custom_call.1} parent=1 // pred_check
      _
    $region47: #{tpu_custom_call.1} parent=1 // pred_check_branch
      %183 = sbr.rel (0) target = $region49
    $region48: #{tpu_custom_call.1} parent=1 // pred_region
      _
    $region49: #{tpu_custom_call.1} parent=1 // pred_fallthru
      _
    // Predicated region
    $region50: #{tpu_custom_call.1} parent=1 // pred_check
      _
    $region51: #{tpu_custom_call.1} parent=1 // pred_check_branch
      %185 = sbr.rel (0) target = $region53
    $region52: #{tpu_custom_call.1} parent=1 // pred_region
      _
    $region53: #{tpu_custom_call.1} parent=1 // pred_fallthru
      _
    // Predicated region
    $region54: #{tpu_custom_call.1} parent=1 // pred_check
      _
    $region55: #{tpu_custom_call.1} parent=1 // pred_check_branch
      %187 = sbr.rel (0) target = $region57
    $region56: #{tpu_custom_call.1} parent=1 // pred_region
      %s189 = ssub.s32 4096, 4096
      %190 = vsyncadd [#allocation18], %s189
      %s191 = sshll.u32 [#allocation17], 4
      %s192 = int_to_ptr.vmem [resolvable:$true] %s191
      %197 = dma.hbm_to_vmem [thread:$0]  %s27, 4096, %s192, [#allocation18], 256, 256, 16
    $region57: #{tpu_custom_call.1} parent=1 // pred_fallthru
      _
    // Predicated region
    $region58: #{tpu_custom_call.1} parent=1 // pred_check
      _
    $region59: #{tpu_custom_call.1} parent=1 // pred_check_branch
      %199 = sbr.rel (0) target = $region61
    $region60: #{tpu_custom_call.1} parent=1 // pred_region
      _
    $region61: #{tpu_custom_call.1} parent=1 // pred_fallthru
      _
    // Predicated region
    $region62: #{tpu_custom_call.1} parent=1 // pred_check
      _
    $region63: #{tpu_custom_call.1} parent=1 // pred_check_branch
      %201 = sbr.rel (0) target = $region65
    $region64: #{tpu_custom_call.1} parent=1 // pred_region
      %s203 = ssub.s32 4096, 4096
      %204 = vsyncadd [#allocation18], %s203
      %s205 = sshll.u32 [#allocation19], 4
      %s206 = int_to_ptr.vmem [resolvable:$true] %s205
      %211 = dma.hbm_to_vmem [thread:$0]  %s31, 4096, %s206, [#allocation18], 64, 64, 4
    $region65: #{tpu_custom_call.1} parent=1 // pred_fallthru
      _
    // Predicated region
    $region66: #{tpu_custom_call.1} parent=1 // pred_check
      _
    $region67: #{tpu_custom_call.1} parent=1 // pred_check_branch
      %213 = sbr.rel (0) target = $region69
    $region68: #{tpu_custom_call.1} parent=1 // pred_region
      _
    $region69: #{tpu_custom_call.1} parent=1 // pred_fallthru
      _
    // Predicated region
    $region70: #{tpu_custom_call.1} parent=1 // pred_check
      _
    $region71: #{tpu_custom_call.1} parent=1 // pred_check_branch
      %215 = sbr.rel (0) target = $region73
    $region72: #{tpu_custom_call.1} parent=1 // pred_region
      _
    $region73: #{tpu_custom_call.1} parent=1 // pred_fallthru
      _
    // Predicated region
    $region74: #{tpu_custom_call.1} parent=1 // pred_check
      _
    $region75: #{tpu_custom_call.1} parent=1 // pred_check_branch
      %217 = sbr.rel (0) target = $region77
    $region76: #{tpu_custom_call.1} parent=1 // pred_region
      _
    $region77: #{tpu_custom_call.1} parent=1 // pred_fallthru
      _
    // Predicated region
    $region78: #{tpu_custom_call.1} parent=1 // pred_check
      _
    $region79: #{tpu_custom_call.1} parent=1 // pred_check_branch
      %219 = sbr.rel (0) target = $region81
    $region80: #{tpu_custom_call.1} parent=1 // pred_region
      %s221 = ssub.s32 3072, 3072
      %222 = vsyncadd [#allocation21], %s221
      %s223 = sshll.u32 [#allocation20], 4
      %s224 = int_to_ptr.vmem [resolvable:$true] %s223
      %229 = dma.hbm_to_vmem [thread:$0]  %s39, 3072, %s224, [#allocation21], 192, 192, 12
    $region81: #{tpu_custom_call.1} parent=1 // pred_fallthru
      _
    // Predicated region
    $region82: #{tpu_custom_call.1} parent=1 // pred_check
      _
    $region83: #{tpu_custom_call.1} parent=1 // pred_check_branch
      %231 = sbr.rel (0) target = $region85
    $region84: #{tpu_custom_call.1} parent=1 // pred_region
      _
    $region85: #{tpu_custom_call.1} parent=1 // pred_fallthru
      _
    // Predicated region
    $region86: #{tpu_custom_call.1} parent=1 // pred_check
      _
    $region87: #{tpu_custom_call.1} parent=1 // pred_check_branch
      %233 = sbr.rel (0) target = $region89
    $region88: #{tpu_custom_call.1} parent=1 // pred_region
      %s235 = ssub.s32 1024, 1024
      %236 = vsyncadd [#allocation21], %s235
      %s237 = sshll.u32 [#allocation22], 4
      %s238 = int_to_ptr.vmem [resolvable:$true] %s237
      %243 = dma.hbm_to_vmem [thread:$0]  %s43, 1024, %s238, [#allocation21], 64, 64, 4
    $region89: #{tpu_custom_call.1} parent=1 // pred_fallthru
      _
    // Predicated region
    $region90: #{tpu_custom_call.1} parent=1 // pred_check
      _
    $region91: #{tpu_custom_call.1} parent=1 // pred_check_branch
      %245 = sbr.rel (0) target = $region93
    $region92: #{tpu_custom_call.1} parent=1 // pred_region
      _
    $region93: #{tpu_custom_call.1} parent=1 // pred_fallthru
      _
    // Predicated region
    $region94: #{tpu_custom_call.1} parent=1 // pred_check
      _
    $region95: #{tpu_custom_call.1} parent=1 // pred_check_branch
      %247 = sbr.rel (0) target = $region97
    $region96: #{tpu_custom_call.1} parent=1 // pred_region
      _
    $region97: #{tpu_custom_call.1} parent=1 // pred_fallthru
      _
    // Predicated region
    $region98: #{tpu_custom_call.1} parent=1 // pred_check
      _
    $region99: #{tpu_custom_call.1} parent=1 // pred_check_branch
      %249 = sbr.rel (0) target = $region101
    $region100: #{tpu_custom_call.1} parent=1 // pred_region
      _
    $region101: #{tpu_custom_call.1} parent=1 // pred_fallthru
      _
    // Predicated region
    $region102: #{tpu_custom_call.1} parent=1 // pred_check
      _
    $region103: #{tpu_custom_call.1} parent=1 // pred_check_branch
      %251 = sbr.rel (0) target = $region105
    $region104: #{tpu_custom_call.1} parent=1 // pred_region
      %s253 = ssub.s32 4096, 4096
      %254 = vsyncadd [#allocation24], %s253
      %s255 = sshll.u32 [#allocation23], 4
      %s256 = int_to_ptr.vmem [resolvable:$true] %s255
      %261 = dma.hbm_to_vmem [thread:$0]  %s51, 4096, %s256, [#allocation24], 256, 256, 16
    $region105: #{tpu_custom_call.1} parent=1 // pred_fallthru
      _
    // Predicated region
    $region106: #{tpu_custom_call.1} parent=1 // pred_check
      _
    $region107: #{tpu_custom_call.1} parent=1 // pred_check_branch
      %263 = sbr.rel (0) target = $region109
    $region108: #{tpu_custom_call.1} parent=1 // pred_region
      _
    $region109: #{tpu_custom_call.1} parent=1 // pred_fallthru
      _
    // Predicated region
    $region110: #{tpu_custom_call.1} parent=1 // pred_check
      _
    $region111: #{tpu_custom_call.1} parent=1 // pred_check_branch
      %265 = sbr.rel (0) target = $region113
    $region112: #{tpu_custom_call.1} parent=1 // pred_region
      %s267 = ssub.s32 4096, 4096
      %268 = vsyncadd [#allocation24], %s267
      %s269 = sshll.u32 [#allocation25], 4
      %s270 = int_to_ptr.vmem [resolvable:$true] %s269
      %275 = dma.hbm_to_vmem [thread:$0]  %s55, 4096, %s270, [#allocation24], 64, 64, 4
    $region113: #{tpu_custom_call.1} parent=1 // pred_fallthru
      _
    // Predicated region
    $region114: #{tpu_custom_call.1} parent=1 // pred_check
      _
    $region115: #{tpu_custom_call.1} parent=1 // pred_check_branch
      %277 = sbr.rel (0) target = $region117
    $region116: #{tpu_custom_call.1} parent=1 // pred_region
      _
    $region117: #{tpu_custom_call.1} parent=1 // pred_fallthru
      _
    // Predicated region
    $region118: #{tpu_custom_call.1} parent=1 // pred_check
      _
    $region119: #{tpu_custom_call.1} parent=1 // pred_check_branch
      %279 = sbr.rel (0) target = $region121
    $region120: #{tpu_custom_call.1} parent=1 // pred_region
      _
    $region121: #{tpu_custom_call.1} parent=1 // pred_fallthru
      _
    // Predicated region
    $region122: #{tpu_custom_call.1} parent=1 // pred_check
      _
    $region123: #{tpu_custom_call.1} parent=1 // pred_check_branch
      %281 = sbr.rel (0) target = $region125
    $region124: #{tpu_custom_call.1} parent=1 // pred_region
      _
    $region125: #{tpu_custom_call.1} parent=1 // pred_fallthru
      _
    // Predicated region
    $region126: #{tpu_custom_call.1} parent=1 // pred_check
      _
    $region127: #{tpu_custom_call.1} parent=1 // pred_check_branch
      %283 = sbr.rel (0) target = $region129
    $region128: #{tpu_custom_call.1} parent=1 // pred_region
      %s285 = ssub.s32 1024, 1024
      %286 = vsyncadd [#allocation27], %s285
      %s287 = sshll.u32 [#allocation26], 4
      %s288 = int_to_ptr.vmem [resolvable:$true] %s287
      %293 = dma.hbm_to_vmem [thread:$0]  %s63, 1024, %s288, [#allocation27], 64, 64, 4
    $region129: #{tpu_custom_call.1} parent=1 // pred_fallthru
      _
    // Predicated region
    $region130: #{tpu_custom_call.1} parent=1 // pred_check
      _
    $region131: #{tpu_custom_call.1} parent=1 // pred_check_branch
      %295 = sbr.rel (0) target = $region133
    $region132: #{tpu_custom_call.1} parent=1 // pred_region
      _
    $region133: #{tpu_custom_call.1} parent=1 // pred_fallthru
      _
    // Predicated region
    $region134: #{tpu_custom_call.1} parent=1 // pred_check
      _
    $region135: #{tpu_custom_call.1} parent=1 // pred_check_branch
      %297 = sbr.rel (0) target = $region137
    $region136: #{tpu_custom_call.1} parent=1 // pred_region
      %298 = dma.done [#allocation3], 256
    $region137: #{tpu_custom_call.1} parent=1 // pred_fallthru
      _
    // Predicated region
    $region138: #{tpu_custom_call.1} parent=1 // pred_check
      _
    $region139: #{tpu_custom_call.1} parent=1 // pred_check_branch
      %300 = sbr.rel (0) target = $region141
    $region140: #{tpu_custom_call.1} parent=1 // pred_region
      %301 = dma.done [#allocation6], 1536
    $region141: #{tpu_custom_call.1} parent=1 // pred_fallthru
      _
    // Predicated region
    $region142: #{tpu_custom_call.1} parent=1 // pred_check
      _
    $region143: #{tpu_custom_call.1} parent=1 // pred_check_branch
      %303 = sbr.rel (0) target = $region145
    $region144: #{tpu_custom_call.1} parent=1 // pred_region
      %304 = dma.done [#allocation6], 16
    $region145: #{tpu_custom_call.1} parent=1 // pred_fallthru
      _
    // Predicated region
    $region146: #{tpu_custom_call.1} parent=1 // pred_check
      _
    $region147: #{tpu_custom_call.1} parent=1 // pred_check_branch
      %306 = sbr.rel (0) target = $region149
    $region148: #{tpu_custom_call.1} parent=1 // pred_region
      %307 = dma.done [#allocation9], 16
    $region149: #{tpu_custom_call.1} parent=1 // pred_fallthru
      _
    // Predicated region
    $region150: #{tpu_custom_call.1} parent=1 // pred_check
      _
    $region151: #{tpu_custom_call.1} parent=1 // pred_check_branch
      %309 = sbr.rel (0) target = $region153
    $region152: #{tpu_custom_call.1} parent=1 // pred_region
      %310 = dma.done [#allocation9], 16
    $region153: #{tpu_custom_call.1} parent=1 // pred_fallthru
      _
    // Predicated region
    $region154: #{tpu_custom_call.1} parent=1 // pred_check
      _
    $region155: #{tpu_custom_call.1} parent=1 // pred_check_branch
      %312 = sbr.rel (0) target = $region157
    $region156: #{tpu_custom_call.1} parent=1 // pred_region
      %313 = dma.done [#allocation12], 16
    $region157: #{tpu_custom_call.1} parent=1 // pred_fallthru
      _
    // Predicated region
    $region158: #{tpu_custom_call.1} parent=1 // pred_check
      _
    $region159: #{tpu_custom_call.1} parent=1 // pred_check_branch
      %315 = sbr.rel (0) target = $region161
    $region160: #{tpu_custom_call.1} parent=1 // pred_region
      %316 = dma.done [#allocation12], 3072
    $region161: #{tpu_custom_call.1} parent=1 // pred_fallthru
      _
    // Predicated region
    $region162: #{tpu_custom_call.1} parent=1 // pred_check
      _
    $region163: #{tpu_custom_call.1} parent=1 // pred_check_branch
      %318 = sbr.rel (0) target = $region165
    $region164: #{tpu_custom_call.1} parent=1 // pred_region
      %319 = dma.done [#allocation15], 48
    $region165: #{tpu_custom_call.1} parent=1 // pred_fallthru
      _
    // Predicated region
    $region166: #{tpu_custom_call.1} parent=1 // pred_check
      _
    $region167: #{tpu_custom_call.1} parent=1 // pred_check_branch
      %321 = sbr.rel (0) target = $region169
    $region168: #{tpu_custom_call.1} parent=1 // pred_region
      %322 = dma.done [#allocation15], 1024
    $region169: #{tpu_custom_call.1} parent=1 // pred_fallthru
      _
    // Predicated region
    $region170: #{tpu_custom_call.1} parent=1 // pred_check
      _
    $region171: #{tpu_custom_call.1} parent=1 // pred_check_branch
      %324 = sbr.rel (0) target = $region173
    $region172: #{tpu_custom_call.1} parent=1 // pred_region
      %325 = dma.done [#allocation18], 4096
    $region173: #{tpu_custom_call.1} parent=1 // pred_fallthru
      _
    // Predicated region
    $region174: #{tpu_custom_call.1} parent=1 // pred_check
      _
    $region175: #{tpu_custom_call.1} parent=1 // pred_check_branch
      %327 = sbr.rel (0) target = $region177
    $region176: #{tpu_custom_call.1} parent=1 // pred_region
      %328 = dma.done [#allocation18], 4096
    $region177: #{tpu_custom_call.1} parent=1 // pred_fallthru
      _
    // Predicated region
    $region178: #{tpu_custom_call.1} parent=1 // pred_check
      _
    $region179: #{tpu_custom_call.1} parent=1 // pred_check_branch
      %330 = sbr.rel (0) target = $region181
    $region180: #{tpu_custom_call.1} parent=1 // pred_region
      %331 = dma.done [#allocation21], 3072
    $region181: #{tpu_custom_call.1} parent=1 // pred_fallthru
      _
    // Predicated region
    $region182: #{tpu_custom_call.1} parent=1 // pred_check
      _
    $region183: #{tpu_custom_call.1} parent=1 // pred_check_branch
      %333 = sbr.rel (0) target = $region185
    $region184: #{tpu_custom_call.1} parent=1 // pred_region
      %334 = dma.done [#allocation21], 1024
    $region185: #{tpu_custom_call.1} parent=1 // pred_fallthru
      _
    // Predicated region
    $region186: #{tpu_custom_call.1} parent=1 // pred_check
      _
    $region187: #{tpu_custom_call.1} parent=1 // pred_check_branch
      %336 = sbr.rel (0) target = $region189
    $region188: #{tpu_custom_call.1} parent=1 // pred_region
      %337 = dma.done [#allocation24], 4096
    $region189: #{tpu_custom_call.1} parent=1 // pred_fallthru
      _
    // Predicated region
    $region190: #{tpu_custom_call.1} parent=1 // pred_check
      _
    $region191: #{tpu_custom_call.1} parent=1 // pred_check_branch
      %339 = sbr.rel (0) target = $region193
    $region192: #{tpu_custom_call.1} parent=1 // pred_region
      %340 = dma.done [#allocation24], 4096
    $region193: #{tpu_custom_call.1} parent=1 // pred_fallthru
      _
    // Predicated region
    $region194: #{tpu_custom_call.1} parent=1 // pred_check
      _
    $region195: #{tpu_custom_call.1} parent=1 // pred_check_branch
      %342 = sbr.rel (0) target = $region197
    $region196: #{tpu_custom_call.1} parent=1 // pred_region
      %343 = dma.done [#allocation27], 1024
    $region197: #{tpu_custom_call.1} parent=1 // pred_fallthru
      _
    %v345 = vld [vmem:[#allocation2] sm:$0xff]
    %v346 = vld [vmem:[#allocation2 + $0x8] sm:$0xff]
    %v347 = vpack.c.bf16 %v345, %v345
    %v348 = vpack.c.bf16 %v346, %v346
    %v349 = vld [vmem:[#allocation5] sm:$0xf]
    %v350 = vld [vmem:[#allocation5 + $0x4] sm:$0xf]
    %v351 = vld [vmem:[#allocation5 + $0x8] sm:$0xf]
    %v352 = vld [vmem:[#allocation5 + $0xc] sm:$0xf]
    %v353 = vld [vmem:[#allocation5 + $0x10] sm:$0xf]
    %v354 = vld [vmem:[#allocation5 + $0x14] sm:$0xf]
    %v355 = vld [vmem:[#allocation5 + $0x18] sm:$0xf]
    %v356 = vld [vmem:[#allocation5 + $0x1c] sm:$0xf]
    %v357 = vld [vmem:[#allocation5 + $0x20] sm:$0xf]
    %v358 = vld [vmem:[#allocation5 + $0x24] sm:$0xf]
    %v359 = vld [vmem:[#allocation5 + $0x28] sm:$0xf]
    %v360 = vld [vmem:[#allocation5 + $0x2c] sm:$0xf]
    %v361 = vld [vmem:[#allocation5 + $0x30] sm:$0xf]
    %v362 = vld [vmem:[#allocation5 + $0x34] sm:$0xf]
    %v363 = vld [vmem:[#allocation5 + $0x38] sm:$0xf]
    %v364 = vld [vmem:[#allocation5 + $0x3c] sm:$0xf]
    %v365 = vld [vmem:[#allocation5 + $0x40] sm:$0xf]
    %v366 = vld [vmem:[#allocation5 + $0x44] sm:$0xf]
    %v367 = vld [vmem:[#allocation5 + $0x48] sm:$0xf]
    %v368 = vld [vmem:[#allocation5 + $0x4c] sm:$0xf]
    %v369 = vld [vmem:[#allocation5 + $0x50] sm:$0xf]
    %v370 = vld [vmem:[#allocation5 + $0x54] sm:$0xf]
    %v371 = vld [vmem:[#allocation5 + $0x58] sm:$0xf]
    %v372 = vld [vmem:[#allocation5 + $0x5c] sm:$0xf]
    %v373 = vld [vmem:[%s9] sm:$0xf]
    %v374 = vld [vmem:[#allocation7] sm:$0x1]
    %v376 = vlaneseq
    %v377 = vshrl.u32 %v376, 7
    %v378 = vsub.s32 0, %v377
    %v379 = vrot.slane %v374, %v378
    %v405 = vunpack.c.l.b16 %v349
    %v406 = vunpack.c.l.b16 %v350
    %v407 = vunpack.c.l.b16 %v351
    %v408 = vunpack.c.l.b16 %v352
    %v409 = vunpack.c.l.b16 %v353
    %v410 = vunpack.c.l.b16 %v354
    %v411 = vunpack.c.l.b16 %v355
    %v412 = vunpack.c.l.b16 %v356
    %v413 = vunpack.c.l.b16 %v357
    %v414 = vunpack.c.l.b16 %v358
    %v415 = vunpack.c.l.b16 %v359
    %v416 = vunpack.c.l.b16 %v360
    %v417 = vunpack.c.l.b16 %v361
    %v418 = vunpack.c.l.b16 %v362
    %v419 = vunpack.c.l.b16 %v363
    %v420 = vunpack.c.l.b16 %v364
    %v421 = vunpack.c.l.b16 %v365
    %v422 = vunpack.c.l.b16 %v366
    %v423 = vunpack.c.l.b16 %v367
    %v424 = vunpack.c.l.b16 %v368
    %v425 = vunpack.c.l.b16 %v369
    %v426 = vunpack.c.l.b16 %v370
    %v427 = vunpack.c.l.b16 %v371
    %v428 = vunpack.c.l.b16 %v372
    %v429 = vpack.c.b16 %v406, %v405
    %v430 = vpack.c.b16 %v408, %v407
    %v431 = vpack.c.b16 %v410, %v409
    %v432 = vpack.c.b16 %v412, %v411
    %v433 = vpack.c.b16 %v414, %v413
    %v434 = vpack.c.b16 %v416, %v415
    %v435 = vpack.c.b16 %v418, %v417
    %v436 = vpack.c.b16 %v420, %v419
    %v437 = vpack.c.b16 %v422, %v421
    %v438 = vpack.c.b16 %v424, %v423
    %v439 = vpack.c.b16 %v426, %v425
    %v440 = vpack.c.b16 %v428, %v427
    %vm453 = vcmask 523264
    %v455 = vsel %vm453, %v348, 0
    %457 = vmatprep.subr.bf16.mxu0 0
    %458 = vmatpush1.bf16.msra.mxu0 %v436
    %459 = vmatprep.subr.bf16.mxu0 0
    %460 = vmatpush1.bf16.msra.mxu0 %v435
    %461 = vmatprep.subr.bf16.mxu0 0
    %462 = vmatpush1.bf16.msra.mxu0 %v434
    %463 = vmatprep.subr.bf16.mxu0 0
    %464 = vmatpush1.bf16.msra.mxu0 %v433
    %465 = vmatprep.subr.bf16.mxu0 0
    %466 = vmatpush1.bf16.msra.mxu0 %v432
    %467 = vmatprep.subr.bf16.mxu0 0
    %468 = vmatpush1.bf16.msra.mxu0 %v431
    %469 = vmatprep.subr.bf16.mxu0 0
    %470 = vmatpush1.bf16.msra.mxu0 %v430
    %471 = vmatprep.subr.bf16.mxu0 0
    %472 = vmatpush1.bf16.msra.mxu0 %v429
    %473 = vmatprep.subr.bf16.mxu0 0
    %474 = vmatpush2.bf16.msra.mxu0 0
    %475 = vmatprep.subr.bf16.mxu0 0
    %476 = vmatpush2.bf16.msra.mxu0 0
    %477 = vmatprep.subr.bf16.mxu0 0
    %478 = vmatpush2.bf16.msra.mxu0 0
    %479 = vmatprep.subr.bf16.mxu0 0
    %480 = vmatpush2.bf16.msra.mxu0 0
    %481 = vmatprep.subr.bf16.mxu0 0
    %482 = vmatpush2.bf16.msra.mxu0 %v440
    %483 = vmatprep.subr.bf16.mxu0 0
    %484 = vmatpush2.bf16.msra.mxu0 %v439
    %485 = vmatprep.subr.bf16.mxu0 0
    %486 = vmatpush2.bf16.msra.mxu0 %v438
    %487 = vmatprep.subr.bf16.mxu0 0
    %488 = vmatpush2.bf16.msra.mxu0 %v437
    %489 = vmatprep.mubr.bf16.mxu0 %v455
    %490 = vmatmul.mubr.bf16.gmra.mxu0 %v347
    %v491 = vpop.f32.mrf.mxu0
    %v492 = vadd.f32 %v379, %v491
    %v493 = vpop.f32.mrf.mxu0
    %v494 = vpop.f32.mrf.mxu0
    %v495 = vpop.f32.mrf.mxu0
    %496 = vdwg.mxu0
    %v498 = vrot.slane %v373, 4
    %vm500 = vcmask 1043456
    %v501 = vsel %vm500, %v373, %v498
    %v502 = vadd.f32 %v492, %v501
    %v503 = vld [vmem:[#allocation8] sm:$0x1]
    %v505 = vrot.slane %v502, 7
    %v507 = vrot.slane %v502, 3
    %vm509 = vcmask 1040384
    %v510 = vsel %vm509, %v503, %v505
    %vm511 = vcmask 1044480
    %v512 = vsel %vm511, %v510, 0.0
    %v513 = vsel %vm509, %v503, %v507
    %v514 = vsel %vm511, %v513, 0.0
    %v515 = vlaneseq
    %v516 = vand.u32 %v515, 127
    %vm517 = vcmp.lt.s32.totalorder %v516, 5
    %v518 = vld [vmem:[#allocation10] sm:$0x1]
    %v519 = vld [vmem:[#allocation11] sm:$0x1]
    %520 = vadd.xlane.f32.xlu0 %v512
    %v521 = vpop.xlane.xlu0 %520
    %522 = vadd.xlane.f32.xlu0 %v514
    %v523 = vpop.xlane.xlu0 %522
    %v524 = vrcp.pop 128.0
    %v525 = vmul.f32 %v521, %v524
    %v526 = vmul.f32 %v523, %v524
    %v527 = vsub.f32 %v512, %v525
    %v528 = vsub.f32 %v514, %v526
    %v529 = vmul.f32 %v527, %v527
    %v530 = vmul.f32 %v528, %v528
    %531 = vadd.xlane.f32.xlu0 %v529
    %v532 = vpop.xlane.xlu0 %531
    %533 = vadd.xlane.f32.xlu0 %v530
    %v534 = vpop.xlane.xlu0 %533
    %v535 = vmul.f32 %v532, %v524
    %v536 = vmul.f32 %v534, %v524
    %v537 = vadd.f32 %v535, 1e-06
    %v538 = vadd.f32 %v536, 1e-06
    %v539 = vrsqrt.pop %v537
    %v540 = vrsqrt.pop %v538
    %v541 = vmul.f32 %v527, %v539
    %v542 = vmul.f32 %v528, %v540
    %v544 = vlaneseq
    %v545 = vshrl.u32 %v544, 7
    %v546 = vsub.s32 0, %v545
    %v547 = vrot.slane %v518, %v546
    %v549 = vmul.f32 %v541, %v547
    %v550 = vmul.f32 %v542, %v547
    %v552 = vlaneseq
    %v553 = vshrl.u32 %v552, 7
    %v554 = vsub.s32 0, %v553
    %v555 = vrot.slane %v519, %v554
    %v557 = vadd.f32 %v549, %v555
    %v558 = vadd.f32 %v550, %v555
    %v559 = vpack.c.bf16 %v558, %v557
    %v560 = vld [vmem:[#allocation13] sm:$0xff]
    %v561 = vld [vmem:[#allocation13 + $0x8] sm:$0xf]
    %v562 = vld [vmem:[#allocation13 + $0xc] sm:$0xff]
    %v563 = vld [vmem:[#allocation13 + $0x14] sm:$0xf]
    %v564 = vld [vmem:[#allocation13 + $0x18] sm:$0xff]
    %v565 = vld [vmem:[#allocation13 + $0x20] sm:$0xf]
    %v566 = vld [vmem:[#allocation13 + $0x24] sm:$0xff]
    %v567 = vld [vmem:[#allocation13 + $0x2c] sm:$0xf]
    %v568 = vld [vmem:[#allocation13 + $0x30] sm:$0xff]
    %v569 = vld [vmem:[#allocation13 + $0x38] sm:$0xf]
    %v570 = vld [vmem:[#allocation13 + $0x3c] sm:$0xff]
    %v571 = vld [vmem:[#allocation13 + $0x44] sm:$0xf]
    %v572 = vld [vmem:[#allocation13 + $0x48] sm:$0xff]
    %v573 = vld [vmem:[#allocation13 + $0x50] sm:$0xf]
    %v574 = vld [vmem:[#allocation13 + $0x54] sm:$0xff]
    %v575 = vld [vmem:[#allocation13 + $0x5c] sm:$0xf]
    %v576 = vld [vmem:[#allocation13 + $0x60] sm:$0xff]
    %v577 = vld [vmem:[#allocation13 + $0x68] sm:$0xf]
    %v578 = vld [vmem:[#allocation13 + $0x6c] sm:$0xff]
    %v579 = vld [vmem:[#allocation13 + $0x74] sm:$0xf]
    %v580 = vld [vmem:[#allocation13 + $0x78] sm:$0xff]
    %v581 = vld [vmem:[#allocation13 + $0x80] sm:$0xf]
    %v582 = vld [vmem:[#allocation13 + $0x84] sm:$0xff]
    %v583 = vld [vmem:[#allocation13 + $0x8c] sm:$0xf]
    %v584 = vld [vmem:[#allocation13 + $0x90] sm:$0xff]
    %v585 = vld [vmem:[#allocation13 + $0x98] sm:$0xf]
    %v586 = vld [vmem:[#allocation13 + $0x9c] sm:$0xff]
    %v587 = vld [vmem:[#allocation13 + $0xa4] sm:$0xf]
    %v588 = vld [vmem:[#allocation13 + $0xa8] sm:$0xff]
    %v589 = vld [vmem:[#allocation13 + $0xb0] sm:$0xf]
    %v590 = vld [vmem:[#allocation13 + $0xb4] sm:$0xff]
    %v591 = vld [vmem:[#allocation13 + $0xbc] sm:$0xf]
    %v592 = vld [vmem:[#allocation14] sm:$0x7]
    %v594 = vlaneseq
    %v595 = vshrl.u32 %v594, 7
    %v596 = vsub.s32 0, %v595
    %v597 = vrot.slane %v592, %v596
    %v598 = vlaneseq
    %v599 = vshrl.u32 %v598, 7
    %v600 = vsub.s32 1, %v599
    %v601 = vrot.slane %v592, %v600
    %v602 = vlaneseq
    %v603 = vshrl.u32 %v602, 7
    %v604 = vsub.s32 2, %v603
    %v605 = vrot.slane %v592, %v604
    %v641 = vunpack.c.l.b16 %v560
    %v642 = vunpack.c.h.b16 %v560
    %v643 = vunpack.c.l.b16 %v561
    %v644 = vunpack.c.l.b16 %v562
    %v645 = vunpack.c.h.b16 %v562
    %v646 = vunpack.c.l.b16 %v563
    %v647 = vunpack.c.l.b16 %v564
    %v648 = vunpack.c.h.b16 %v564
    %v649 = vunpack.c.l.b16 %v565
    %v650 = vunpack.c.l.b16 %v566
    %v651 = vunpack.c.h.b16 %v566
    %v652 = vunpack.c.l.b16 %v567
    %v653 = vunpack.c.l.b16 %v568
    %v654 = vunpack.c.h.b16 %v568
    %v655 = vunpack.c.l.b16 %v569
    %v656 = vunpack.c.l.b16 %v570
    %v657 = vunpack.c.h.b16 %v570
    %v658 = vunpack.c.l.b16 %v571
    %v659 = vunpack.c.l.b16 %v572
    %v660 = vunpack.c.h.b16 %v572
    %v661 = vunpack.c.l.b16 %v573
    %v662 = vunpack.c.l.b16 %v574
    %v663 = vunpack.c.h.b16 %v574
    %v664 = vunpack.c.l.b16 %v575
    %v665 = vunpack.c.l.b16 %v576
    %v666 = vunpack.c.h.b16 %v576
    %v667 = vunpack.c.l.b16 %v577
    %v668 = vunpack.c.l.b16 %v578
    %v669 = vunpack.c.h.b16 %v578
    %v670 = vunpack.c.l.b16 %v579
    %v671 = vunpack.c.l.b16 %v580
    %v672 = vunpack.c.h.b16 %v580
    %v673 = vunpack.c.l.b16 %v581
    %v674 = vunpack.c.l.b16 %v582
    %v675 = vunpack.c.h.b16 %v582
    %v676 = vunpack.c.l.b16 %v583
    %v677 = vunpack.c.l.b16 %v584
    %v678 = vunpack.c.h.b16 %v584
    %v679 = vunpack.c.l.b16 %v585
    %v680 = vunpack.c.l.b16 %v586
    %v681 = vunpack.c.h.b16 %v586
    %v682 = vunpack.c.l.b16 %v587
    %v683 = vunpack.c.l.b16 %v588
    %v684 = vunpack.c.h.b16 %v588
    %v685 = vunpack.c.l.b16 %v589
    %v686 = vunpack.c.l.b16 %v590
    %v687 = vunpack.c.h.b16 %v590
    %v688 = vunpack.c.l.b16 %v591
    %v689 = vpack.c.b16 %v644, %v641
    %v690 = vpack.c.b16 %v645, %v642
    %v691 = vpack.c.b16 %v646, %v643
    %v692 = vpack.c.b16 %v650, %v647
    %v693 = vpack.c.b16 %v651, %v648
    %v694 = vpack.c.b16 %v652, %v649
    %v695 = vpack.c.b16 %v656, %v653
    %v696 = vpack.c.b16 %v657, %v654
    %v697 = vpack.c.b16 %v658, %v655
    %v698 = vpack.c.b16 %v662, %v659
    %v699 = vpack.c.b16 %v663, %v660
    %v700 = vpack.c.b16 %v664, %v661
    %v701 = vpack.c.b16 %v668, %v665
    %v702 = vpack.c.b16 %v669, %v666
    %v703 = vpack.c.b16 %v670, %v667
    %v704 = vpack.c.b16 %v674, %v671
    %v705 = vpack.c.b16 %v675, %v672
    %v706 = vpack.c.b16 %v676, %v673
    %v707 = vpack.c.b16 %v680, %v677
    %v708 = vpack.c.b16 %v681, %v678
    %v709 = vpack.c.b16 %v682, %v679
    %v710 = vpack.c.b16 %v686, %v683
    %v711 = vpack.c.b16 %v687, %v684
    %v712 = vpack.c.b16 %v688, %v685
    %737 = vmatprep.subr.bf16.mxu0 %v711
    %738 = vmatpush1.bf16.msra.mxu0 %v710
    %739 = vmatprep.subr.bf16.mxu0 %v708
    %740 = vmatpush1.bf16.msra.mxu0 %v707
    %741 = vmatprep.subr.bf16.mxu0 %v705
    %742 = vmatpush1.bf16.msra.mxu0 %v704
    %743 = vmatprep.subr.bf16.mxu0 %v702
    %744 = vmatpush1.bf16.msra.mxu0 %v701
    %745 = vmatprep.subr.bf16.mxu0 %v699
    %746 = vmatpush1.bf16.msra.mxu0 %v698
    %747 = vmatprep.subr.bf16.mxu0 %v696
    %748 = vmatpush1.bf16.msra.mxu0 %v695
    %749 = vmatprep.subr.bf16.mxu0 %v693
    %750 = vmatpush1.bf16.msra.mxu0 %v692
    %751 = vmatprep.subr.bf16.mxu0 %v690
    %752 = vmatpush1.bf16.msra.mxu0 %v689
    %753 = vmatprep.subr.bf16.mxu0 0
    %754 = vmatpush2.bf16.msra.mxu0 0
    %755 = vmatprep.subr.bf16.mxu0 0
    %756 = vmatpush2.bf16.msra.mxu0 0
    %757 = vmatprep.subr.bf16.mxu0 0
    %758 = vmatpush2.bf16.msra.mxu0 0
    %759 = vmatprep.subr.bf16.mxu0 0
    %760 = vmatpush2.bf16.msra.mxu0 0
    %761 = vmatprep.subr.bf16.mxu0 0
    %762 = vmatpush2.bf16.msra.mxu0 0
    %763 = vmatprep.subr.bf16.mxu0 0
    %764 = vmatpush2.bf16.msra.mxu0 0
    %765 = vmatprep.subr.bf16.mxu0 0
    %766 = vmatpush2.bf16.msra.mxu0 0
    %767 = vmatprep.subr.bf16.mxu0 0
    %768 = vmatpush2.bf16.msra.mxu0 0
    %769 = vmatprep.mubr.bf16.mxu0 0
    %770 = vmatmul.mubr.bf16.gmra.mxu0 %v559
    %v771 = vpop.f32.mrf.mxu0
    %v772 = vadd.f32 %v597, %v771
    %v773 = vpop.f32.mrf.mxu0
    %v774 = vadd.f32 %v601, %v773
    %v775 = vpop.f32.mrf.mxu0
    %v776 = vadd.f32 %v597, %v775
    %v777 = vpop.f32.mrf.mxu0
    %v778 = vadd.f32 %v601, %v777
    %779 = vdwg.mxu0
    %780 = vmatprep.subr.bf16.mxu0 0
    %781 = vmatpush1.bf16.msra.mxu0 %v712
    %782 = vmatprep.subr.bf16.mxu0 0
    %783 = vmatpush1.bf16.msra.mxu0 %v709
    %784 = vmatprep.subr.bf16.mxu0 0
    %785 = vmatpush1.bf16.msra.mxu0 %v706
    %786 = vmatprep.subr.bf16.mxu0 0
    %787 = vmatpush1.bf16.msra.mxu0 %v703
    %788 = vmatprep.subr.bf16.mxu0 0
    %789 = vmatpush1.bf16.msra.mxu0 %v700
    %790 = vmatprep.subr.bf16.mxu0 0
    %791 = vmatpush1.bf16.msra.mxu0 %v697
    %792 = vmatprep.subr.bf16.mxu0 0
    %793 = vmatpush1.bf16.msra.mxu0 %v694
    %794 = vmatprep.subr.bf16.mxu0 0
    %795 = vmatpush1.bf16.msra.mxu0 %v691
    %796 = vmatprep.subr.bf16.mxu0 0
    %797 = vmatpush2.bf16.msra.mxu0 0
    %798 = vmatprep.subr.bf16.mxu0 0
    %799 = vmatpush2.bf16.msra.mxu0 0
    %800 = vmatprep.subr.bf16.mxu0 0
    %801 = vmatpush2.bf16.msra.mxu0 0
    %802 = vmatprep.subr.bf16.mxu0 0
    %803 = vmatpush2.bf16.msra.mxu0 0
    %804 = vmatprep.subr.bf16.mxu0 0
    %805 = vmatpush2.bf16.msra.mxu0 0
    %806 = vmatprep.subr.bf16.mxu0 0
    %807 = vmatpush2.bf16.msra.mxu0 0
    %808 = vmatprep.subr.bf16.mxu0 0
    %809 = vmatpush2.bf16.msra.mxu0 0
    %810 = vmatprep.subr.bf16.mxu0 0
    %811 = vmatpush2.bf16.msra.mxu0 0
    %812 = vmatprep.mubr.bf16.mxu0 0
    %813 = vmatmul.mubr.bf16.gmra.mxu0 %v559
    %v814 = vpop.f32.mrf.mxu0
    %v815 = vadd.f32 %v605, %v814
    %v816 = vpop.f32.mrf.mxu0
    %v817 = vpop.f32.mrf.mxu0
    %v818 = vadd.f32 %v605, %v817
    %v819 = vpop.f32.mrf.mxu0
    %820 = vdwg.mxu0
    %v821 = vpack.c.bf16 %v776, %v772
    %v822 = vpack.c.bf16 %v778, %v774
    %v823 = vpack.c.bf16 %v818, %v815
    %vm824 = vcmask 261120
    %v826 = vsel %vm824, %v821, 0
    %v829 = vsel %vm824, %v822, 0
    %831 = vmatprep.subr.bf16.mxu0 0
    %832 = vmatpush1.bf16.xpose.msra.mxu0 0
    %833 = vmatprep.subr.bf16.mxu0 0
    %834 = vmatpush1.bf16.xpose.msra.mxu0 0
    %835 = vmatprep.subr.bf16.mxu0 0
    %836 = vmatpush1.bf16.xpose.msra.mxu0 0
    %837 = vmatprep.subr.bf16.mxu0 0
    %838 = vmatpush1.bf16.xpose.msra.mxu0 0
    %839 = vmatprep.subr.bf16.mxu0 0
    %840 = vmatpush1.bf16.xpose.msra.mxu0 0
    %841 = vmatprep.subr.bf16.mxu0 0
    %842 = vmatpush1.bf16.xpose.msra.mxu0 0
    %843 = vmatprep.subr.bf16.mxu0 0
    %844 = vmatpush1.bf16.xpose.msra.mxu0 0
    %845 = vmatprep.subr.bf16.mxu0 0
    %846 = vmatpush1.bf16.xpose.msra.mxu0 %v829
    %847 = vmatprep.subr.bf16.mxu0 0
    %848 = vmatpush2.bf16.xpose.msra.mxu0 0
    %849 = vmatprep.subr.bf16.mxu0 0
    %850 = vmatpush2.bf16.xpose.msra.mxu0 0
    %851 = vmatprep.subr.bf16.mxu0 0
    %852 = vmatpush2.bf16.xpose.msra.mxu0 0
    %853 = vmatprep.subr.bf16.mxu0 0
    %854 = vmatpush2.bf16.xpose.msra.mxu0 0
    %855 = vmatprep.subr.bf16.mxu0 0
    %856 = vmatpush2.bf16.xpose.msra.mxu0 0
    %857 = vmatprep.subr.bf16.mxu0 0
    %858 = vmatpush2.bf16.xpose.msra.mxu0 0
    %859 = vmatprep.subr.bf16.mxu0 0
    %860 = vmatpush2.bf16.xpose.msra.mxu0 0
    %861 = vmatprep.subr.bf16.mxu0 0
    %862 = vmatpush2.bf16.xpose.msra.mxu0 0
    %863 = vmatprep.mubr.bf16.mxu0 0
    %864 = vmatmul.mubr.bf16.gmra.mxu0 %v826
    %v865 = vpop.f32.mrf.mxu0
    %v866 = vadd.f32 0.0, %v865
    %v867 = vpop.f32.mrf.mxu0
    %v868 = vpop.f32.mrf.mxu0
    %v869 = vpop.f32.mrf.mxu0
    %870 = vdwg.mxu0
    %v871 = vsel %vm517, %v866, -1e+30
    %vm872 = vcmask 64512
    %v873 = vsel %vm872, %v871, -inf
    %874 = vmax.xlane.f32.xlu0 %v873
    %v875 = vpop.xlane.xlu0 %874
    %v876 = vsub.f32 %v871, %v875
    %v877 = vmul.f32 %v876, 1.442695
    %v878 = vpow.pop %v877
    %v879 = vsel %vm872, %v878, 0.0
    %880 = vadd.xlane.f32.xlu0 %v879
    %v881 = vpop.xlane.xlu0 %880
    %v882 = vrcp.pop %v881
    %v883 = vmul.f32 %v878, %v882
    %v884 = vpack.c.bf16 %v883, %v883
    %v886 = vsel %vm872, %v884, 0
    %v889 = vsel %vm500, %v823, 0
    %891 = vmatprep.subr.bf16.mxu0 0
    %892 = vmatpush1.bf16.msra.mxu0 0
    %893 = vmatprep.subr.bf16.mxu0 0
    %894 = vmatpush1.bf16.msra.mxu0 0
    %895 = vmatprep.subr.bf16.mxu0 0
    %896 = vmatpush1.bf16.msra.mxu0 0
    %897 = vmatprep.subr.bf16.mxu0 0
    %898 = vmatpush1.bf16.msra.mxu0 0
    %899 = vmatprep.subr.bf16.mxu0 0
    %900 = vmatpush1.bf16.msra.mxu0 0
    %901 = vmatprep.subr.bf16.mxu0 0
    %902 = vmatpush1.bf16.msra.mxu0 0
    %903 = vmatprep.subr.bf16.mxu0 0
    %904 = vmatpush1.bf16.msra.mxu0 0
    %905 = vmatprep.subr.bf16.mxu0 0
    %906 = vmatpush1.bf16.msra.mxu0 %v889
    %907 = vmatprep.subr.bf16.mxu0 0
    %908 = vmatpush2.bf16.msra.mxu0 0
    %909 = vmatprep.subr.bf16.mxu0 0
    %910 = vmatpush2.bf16.msra.mxu0 0
    %911 = vmatprep.subr.bf16.mxu0 0
    %912 = vmatpush2.bf16.msra.mxu0 0
    %913 = vmatprep.subr.bf16.mxu0 0
    %914 = vmatpush2.bf16.msra.mxu0 0
    %915 = vmatprep.subr.bf16.mxu0 0
    %916 = vmatpush2.bf16.msra.mxu0 0
    %917 = vmatprep.subr.bf16.mxu0 0
    %918 = vmatpush2.bf16.msra.mxu0 0
    %919 = vmatprep.subr.bf16.mxu0 0
    %920 = vmatpush2.bf16.msra.mxu0 0
    %921 = vmatprep.subr.bf16.mxu0 0
    %922 = vmatpush2.bf16.msra.mxu0 0
    %923 = vmatprep.mubr.bf16.mxu0 0
    %924 = vmatmul.mubr.bf16.gmra.mxu0 %v886
    %v925 = vpop.f32.mrf.mxu0
    %v926 = vadd.f32 0.0, %v925
    %v927 = vpop.f32.mrf.mxu0
    %v928 = vpop.f32.mrf.mxu0
    %v929 = vpop.f32.mrf.mxu0
    %930 = vdwg.mxu0
    %v931 = vpack.c.bf16 %v926, %v926
    %v932 = vld [vmem:[#allocation16] sm:$0xf]
    %v933 = vld [vmem:[#allocation16 + $0x4] sm:$0xf]
    %v934 = vld [vmem:[#allocation16 + $0x8] sm:$0xf]
    %v935 = vld [vmem:[#allocation16 + $0xc] sm:$0xf]
    %937 = vrot.lane.b32.xlu0 %v821, 96
    %v938 = vpop.permute.xlu0 %937
    %940 = vrot.lane.b32.xlu0 %v822, 96
    %v941 = vpop.permute.xlu0 %940
    %v943 = vsel %vm824, %v938, 0
    %v946 = vsel %vm824, %v941, 0
    %948 = vmatprep.subr.bf16.mxu0 0
    %949 = vmatpush1.bf16.xpose.msra.mxu0 0
    %950 = vmatprep.subr.bf16.mxu0 0
    %951 = vmatpush1.bf16.xpose.msra.mxu0 0
    %952 = vmatprep.subr.bf16.mxu0 0
    %953 = vmatpush1.bf16.xpose.msra.mxu0 0
    %954 = vmatprep.subr.bf16.mxu0 0
    %955 = vmatpush1.bf16.xpose.msra.mxu0 0
    %956 = vmatprep.subr.bf16.mxu0 0
    %957 = vmatpush1.bf16.xpose.msra.mxu0 0
    %958 = vmatprep.subr.bf16.mxu0 0
    %959 = vmatpush1.bf16.xpose.msra.mxu0 0
    %960 = vmatprep.subr.bf16.mxu0 0
    %961 = vmatpush1.bf16.xpose.msra.mxu0 0
    %962 = vmatprep.subr.bf16.mxu0 0
    %963 = vmatpush1.bf16.xpose.msra.mxu0 %v946
    %964 = vmatprep.subr.bf16.mxu0 0
    %965 = vmatpush2.bf16.xpose.msra.mxu0 0
    %966 = vmatprep.subr.bf16.mxu0 0
    %967 = vmatpush2.bf16.xpose.msra.mxu0 0
    %968 = vmatprep.subr.bf16.mxu0 0
    %969 = vmatpush2.bf16.xpose.msra.mxu0 0
    %970 = vmatprep.subr.bf16.mxu0 0
    %971 = vmatpush2.bf16.xpose.msra.mxu0 0
    %972 = vmatprep.subr.bf16.mxu0 0
    %973 = vmatpush2.bf16.xpose.msra.mxu0 0
    %974 = vmatprep.subr.bf16.mxu0 0
    %975 = vmatpush2.bf16.xpose.msra.mxu0 0
    %976 = vmatprep.subr.bf16.mxu0 0
    %977 = vmatpush2.bf16.xpose.msra.mxu0 0
    %978 = vmatprep.subr.bf16.mxu0 0
    %979 = vmatpush2.bf16.xpose.msra.mxu0 0
    %980 = vmatprep.mubr.bf16.mxu0 0
    %981 = vmatmul.mubr.bf16.gmra.mxu0 %v943
    %v982 = vpop.f32.mrf.mxu0
    %v983 = vadd.f32 0.0, %v982
    %v984 = vpop.f32.mrf.mxu0
    %v985 = vpop.f32.mrf.mxu0
    %v986 = vpop.f32.mrf.mxu0
    %987 = vdwg.mxu0
    %v988 = vsel %vm517, %v983, -1e+30
    %v989 = vsel %vm872, %v988, -inf
    %990 = vmax.xlane.f32.xlu0 %v989
    %v991 = vpop.xlane.xlu0 %990
    %v992 = vsub.f32 %v988, %v991
    %v993 = vmul.f32 %v992, 1.442695
    %v994 = vpow.pop %v993
    %v995 = vsel %vm872, %v994, 0.0
    %996 = vadd.xlane.f32.xlu0 %v995
    %v997 = vpop.xlane.xlu0 %996
    %v998 = vrcp.pop %v997
    %v999 = vmul.f32 %v994, %v998
    %v1000 = vpack.c.bf16 %v999, %v999
    %1002 = vrot.lane.b32.xlu0 %v823, 96
    %v1003 = vpop.permute.xlu0 %1002
    %v1005 = vsel %vm872, %v1000, 0
    %v1008 = vsel %vm500, %v1003, 0
    %1010 = vmatprep.subr.bf16.mxu0 0
    %1011 = vmatpush1.bf16.msra.mxu0 0
    %1012 = vmatprep.subr.bf16.mxu0 0
    %1013 = vmatpush1.bf16.msra.mxu0 0
    %1014 = vmatprep.subr.bf16.mxu0 0
    %1015 = vmatpush1.bf16.msra.mxu0 0
    %1016 = vmatprep.subr.bf16.mxu0 0
    %1017 = vmatpush1.bf16.msra.mxu0 0
    %1018 = vmatprep.subr.bf16.mxu0 0
    %1019 = vmatpush1.bf16.msra.mxu0 0
    %1020 = vmatprep.subr.bf16.mxu0 0
    %1021 = vmatpush1.bf16.msra.mxu0 0
    %1022 = vmatprep.subr.bf16.mxu0 0
    %1023 = vmatpush1.bf16.msra.mxu0 0
    %1024 = vmatprep.subr.bf16.mxu0 0
    %1025 = vmatpush1.bf16.msra.mxu0 %v1008
    %1026 = vmatprep.subr.bf16.mxu0 0
    %1027 = vmatpush2.bf16.msra.mxu0 0
    %1028 = vmatprep.subr.bf16.mxu0 0
    %1029 = vmatpush2.bf16.msra.mxu0 0
    %1030 = vmatprep.subr.bf16.mxu0 0
    %1031 = vmatpush2.bf16.msra.mxu0 0
    %1032 = vmatprep.subr.bf16.mxu0 0
    %1033 = vmatpush2.bf16.msra.mxu0 0
    %1034 = vmatprep.subr.bf16.mxu0 0
    %1035 = vmatpush2.bf16.msra.mxu0 0
    %1036 = vmatprep.subr.bf16.mxu0 0
    %1037 = vmatpush2.bf16.msra.mxu0 0
    %1038 = vmatprep.subr.bf16.mxu0 0
    %1039 = vmatpush2.bf16.msra.mxu0 0
    %1040 = vmatprep.subr.bf16.mxu0 0
    %1041 = vmatpush2.bf16.msra.mxu0 0
    %1042 = vmatprep.mubr.bf16.mxu0 0
    %1043 = vmatmul.mubr.bf16.gmra.mxu0 %v1005
    %v1044 = vpop.f32.mrf.mxu0
    %v1045 = vadd.f32 0.0, %v1044
    %v1046 = vpop.f32.mrf.mxu0
    %v1047 = vpop.f32.mrf.mxu0
    %v1048 = vpop.f32.mrf.mxu0
    %1049 = vdwg.mxu0
    %v1050 = vpack.c.bf16 %v1045, %v1045
    %v1051 = vld [vmem:[#allocation16 + $0x10] sm:$0xf]
    %v1052 = vld [vmem:[#allocation16 + $0x14] sm:$0xf]
    %v1053 = vld [vmem:[#allocation16 + $0x18] sm:$0xf]
    %v1054 = vld [vmem:[#allocation16 + $0x1c] sm:$0xf]
    %v1059 = vunpack.c.l.b16 %v1051
    %v1060 = vunpack.c.l.b16 %v1052
    %v1061 = vunpack.c.l.b16 %v1053
    %v1062 = vunpack.c.l.b16 %v1054
    %v1063 = vpack.c.b16 %v1060, %v1059
    %v1064 = vpack.c.b16 %v1062, %v1061
    %v1068 = vsel %vm824, %v1050, 0
    %1070 = vmatprep.subr.bf16.mxu0 0
    %1071 = vmatpush1.bf16.msra.mxu0 0
    %1072 = vmatprep.subr.bf16.mxu0 0
    %1073 = vmatpush1.bf16.msra.mxu0 0
    %1074 = vmatprep.subr.bf16.mxu0 0
    %1075 = vmatpush1.bf16.msra.mxu0 0
    %1076 = vmatprep.subr.bf16.mxu0 0
    %1077 = vmatpush1.bf16.msra.mxu0 0
    %1078 = vmatprep.subr.bf16.mxu0 0
    %1079 = vmatpush1.bf16.msra.mxu0 0
    %1080 = vmatprep.subr.bf16.mxu0 0
    %1081 = vmatpush1.bf16.msra.mxu0 0
    %1082 = vmatprep.subr.bf16.mxu0 0
    %1083 = vmatpush1.bf16.msra.mxu0 %v1064
    %1084 = vmatprep.subr.bf16.mxu0 0
    %1085 = vmatpush1.bf16.msra.mxu0 %v1063
    %1086 = vmatprep.subr.bf16.mxu0 0
    %1087 = vmatpush2.bf16.msra.mxu0 0
    %1088 = vmatprep.subr.bf16.mxu0 0
    %1089 = vmatpush2.bf16.msra.mxu0 0
    %1090 = vmatprep.subr.bf16.mxu0 0
    %1091 = vmatpush2.bf16.msra.mxu0 0
    %1092 = vmatprep.subr.bf16.mxu0 0
    %1093 = vmatpush2.bf16.msra.mxu0 0
    %1094 = vmatprep.subr.bf16.mxu0 0
    %1095 = vmatpush2.bf16.msra.mxu0 0
    %1096 = vmatprep.subr.bf16.mxu0 0
    %1097 = vmatpush2.bf16.msra.mxu0 0
    %1098 = vmatprep.subr.bf16.mxu0 0
    %1099 = vmatpush2.bf16.msra.mxu0 0
    %1100 = vmatprep.subr.bf16.mxu0 0
    %1101 = vmatpush2.bf16.msra.mxu0 0
    %1102 = vmatprep.mubr.bf16.mxu0 0
    %1103 = vmatmul.mubr.bf16.gmra.mxu0 %v1068
    %v1104 = vpop.f32.mrf.mxu0
    %v1105 = vadd.f32 0.0, %v1104
    %v1106 = vpop.f32.mrf.mxu0
    %v1107 = vpop.f32.mrf.mxu0
    %v1108 = vpop.f32.mrf.mxu0
    %1109 = vdwg.mxu0
    %v1114 = vunpack.c.l.b16 %v932
    %v1115 = vunpack.c.l.b16 %v933
    %v1116 = vunpack.c.l.b16 %v934
    %v1117 = vunpack.c.l.b16 %v935
    %v1118 = vpack.c.b16 %v1115, %v1114
    %v1119 = vpack.c.b16 %v1117, %v1116
    %v1123 = vsel %vm824, %v931, 0
    %1125 = vmatprep.subr.bf16.mxu0 0
    %1126 = vmatpush1.bf16.msra.mxu0 0
    %1127 = vmatprep.subr.bf16.mxu0 0
    %1128 = vmatpush1.bf16.msra.mxu0 0
    %1129 = vmatprep.subr.bf16.mxu0 0
    %1130 = vmatpush1.bf16.msra.mxu0 0
    %1131 = vmatprep.subr.bf16.mxu0 0
    %1132 = vmatpush1.bf16.msra.mxu0 0
    %1133 = vmatprep.subr.bf16.mxu0 0
    %1134 = vmatpush1.bf16.msra.mxu0 0
    %1135 = vmatprep.subr.bf16.mxu0 0
    %1136 = vmatpush1.bf16.msra.mxu0 0
    %1137 = vmatprep.subr.bf16.mxu0 0
    %1138 = vmatpush1.bf16.msra.mxu0 %v1119
    %1139 = vmatprep.subr.bf16.mxu0 0
    %1140 = vmatpush1.bf16.msra.mxu0 %v1118
    %1141 = vmatprep.subr.bf16.mxu0 0
    %1142 = vmatpush2.bf16.msra.mxu0 0
    %1143 = vmatprep.subr.bf16.mxu0 0
    %1144 = vmatpush2.bf16.msra.mxu0 0
    %1145 = vmatprep.subr.bf16.mxu0 0
    %1146 = vmatpush2.bf16.msra.mxu0 0
    %1147 = vmatprep.subr.bf16.mxu0 0
    %1148 = vmatpush2.bf16.msra.mxu0 0
    %1149 = vmatprep.subr.bf16.mxu0 0
    %1150 = vmatpush2.bf16.msra.mxu0 0
    %1151 = vmatprep.subr.bf16.mxu0 0
    %1152 = vmatpush2.bf16.msra.mxu0 0
    %1153 = vmatprep.subr.bf16.mxu0 0
    %1154 = vmatpush2.bf16.msra.mxu0 0
    %1155 = vmatprep.subr.bf16.mxu0 0
    %1156 = vmatpush2.bf16.msra.mxu0 0
    %1157 = vmatprep.mubr.bf16.mxu0 0
    %1158 = vmatmul.mubr.bf16.gmra.mxu0 %v1123
    %v1159 = vpop.f32.mrf.mxu0
    %v1160 = vadd.f32 %v1105, %v1159
    %v1161 = vpop.f32.mrf.mxu0
    %v1162 = vpop.f32.mrf.mxu0
    %v1163 = vpop.f32.mrf.mxu0
    %1164 = vdwg.mxu0
    %1165 = vrot.lane.b32.xlu0 %v821, 64
    %v1166 = vpop.permute.xlu0 %1165
    %1167 = vrot.lane.b32.xlu0 %v822, 64
    %v1168 = vpop.permute.xlu0 %1167
    %v1170 = vsel %vm824, %v1166, 0
    %v1173 = vsel %vm824, %v1168, 0
    %1175 = vmatprep.subr.bf16.mxu0 0
    %1176 = vmatpush1.bf16.xpose.msra.mxu0 0
    %1177 = vmatprep.subr.bf16.mxu0 0
    %1178 = vmatpush1.bf16.xpose.msra.mxu0 0
    %1179 = vmatprep.subr.bf16.mxu0 0
    %1180 = vmatpush1.bf16.xpose.msra.mxu0 0
    %1181 = vmatprep.subr.bf16.mxu0 0
    %1182 = vmatpush1.bf16.xpose.msra.mxu0 0
    %1183 = vmatprep.subr.bf16.mxu0 0
    %1184 = vmatpush1.bf16.xpose.msra.mxu0 0
    %1185 = vmatprep.subr.bf16.mxu0 0
    %1186 = vmatpush1.bf16.xpose.msra.mxu0 0
    %1187 = vmatprep.subr.bf16.mxu0 0
    %1188 = vmatpush1.bf16.xpose.msra.mxu0 0
    %1189 = vmatprep.subr.bf16.mxu0 0
    %1190 = vmatpush1.bf16.xpose.msra.mxu0 %v1173
    %1191 = vmatprep.subr.bf16.mxu0 0
    %1192 = vmatpush2.bf16.xpose.msra.mxu0 0
    %1193 = vmatprep.subr.bf16.mxu0 0
    %1194 = vmatpush2.bf16.xpose.msra.mxu0 0
    %1195 = vmatprep.subr.bf16.mxu0 0
    %1196 = vmatpush2.bf16.xpose.msra.mxu0 0
    %1197 = vmatprep.subr.bf16.mxu0 0
    %1198 = vmatpush2.bf16.xpose.msra.mxu0 0
    %1199 = vmatprep.subr.bf16.mxu0 0
    %1200 = vmatpush2.bf16.xpose.msra.mxu0 0
    %1201 = vmatprep.subr.bf16.mxu0 0
    %1202 = vmatpush2.bf16.xpose.msra.mxu0 0
    %1203 = vmatprep.subr.bf16.mxu0 0
    %1204 = vmatpush2.bf16.xpose.msra.mxu0 0
    %1205 = vmatprep.subr.bf16.mxu0 0
    %1206 = vmatpush2.bf16.xpose.msra.mxu0 0
    %1207 = vmatprep.mubr.bf16.mxu0 0
    %1208 = vmatmul.mubr.bf16.gmra.mxu0 %v1170
    %v1209 = vpop.f32.mrf.mxu0
    %v1210 = vadd.f32 0.0, %v1209
    %v1211 = vpop.f32.mrf.mxu0
    %v1212 = vpop.f32.mrf.mxu0
    %v1213 = vpop.f32.mrf.mxu0
    %1214 = vdwg.mxu0
    %v1215 = vsel %vm517, %v1210, -1e+30
    %v1216 = vsel %vm872, %v1215, -inf
    %1217 = vmax.xlane.f32.xlu0 %v1216
    %v1218 = vpop.xlane.xlu0 %1217
    %v1219 = vsub.f32 %v1215, %v1218
    %v1220 = vmul.f32 %v1219, 1.442695
    %v1221 = vpow.pop %v1220
    %v1222 = vsel %vm872, %v1221, 0.0
    %1223 = vadd.xlane.f32.xlu0 %v1222
    %v1224 = vpop.xlane.xlu0 %1223
    %v1225 = vrcp.pop %v1224
    %v1226 = vmul.f32 %v1221, %v1225
    %v1227 = vpack.c.bf16 %v1226, %v1226
    %1228 = vrot.lane.b32.xlu0 %v823, 64
    %v1229 = vpop.permute.xlu0 %1228
    %v1231 = vsel %vm872, %v1227, 0
    %v1234 = vsel %vm500, %v1229, 0
    %1236 = vmatprep.subr.bf16.mxu0 0
    %1237 = vmatpush1.bf16.msra.mxu0 0
    %1238 = vmatprep.subr.bf16.mxu0 0
    %1239 = vmatpush1.bf16.msra.mxu0 0
    %1240 = vmatprep.subr.bf16.mxu0 0
    %1241 = vmatpush1.bf16.msra.mxu0 0
    %1242 = vmatprep.subr.bf16.mxu0 0
    %1243 = vmatpush1.bf16.msra.mxu0 0
    %1244 = vmatprep.subr.bf16.mxu0 0
    %1245 = vmatpush1.bf16.msra.mxu0 0
    %1246 = vmatprep.subr.bf16.mxu0 0
    %1247 = vmatpush1.bf16.msra.mxu0 0
    %1248 = vmatprep.subr.bf16.mxu0 0
    %1249 = vmatpush1.bf16.msra.mxu0 0
    %1250 = vmatprep.subr.bf16.mxu0 0
    %1251 = vmatpush1.bf16.msra.mxu0 %v1234
    %1252 = vmatprep.subr.bf16.mxu0 0
    %1253 = vmatpush2.bf16.msra.mxu0 0
    %1254 = vmatprep.subr.bf16.mxu0 0
    %1255 = vmatpush2.bf16.msra.mxu0 0
    %1256 = vmatprep.subr.bf16.mxu0 0
    %1257 = vmatpush2.bf16.msra.mxu0 0
    %1258 = vmatprep.subr.bf16.mxu0 0
    %1259 = vmatpush2.bf16.msra.mxu0 0
    %1260 = vmatprep.subr.bf16.mxu0 0
    %1261 = vmatpush2.bf16.msra.mxu0 0
    %1262 = vmatprep.subr.bf16.mxu0 0
    %1263 = vmatpush2.bf16.msra.mxu0 0
    %1264 = vmatprep.subr.bf16.mxu0 0
    %1265 = vmatpush2.bf16.msra.mxu0 0
    %1266 = vmatprep.subr.bf16.mxu0 0
    %1267 = vmatpush2.bf16.msra.mxu0 0
    %1268 = vmatprep.mubr.bf16.mxu0 0
    %1269 = vmatmul.mubr.bf16.gmra.mxu0 %v1231
    %v1270 = vpop.f32.mrf.mxu0
    %v1271 = vadd.f32 0.0, %v1270
    %v1272 = vpop.f32.mrf.mxu0
    %v1273 = vpop.f32.mrf.mxu0
    %v1274 = vpop.f32.mrf.mxu0
    %1275 = vdwg.mxu0
    %v1276 = vpack.c.bf16 %v1271, %v1271
    %v1277 = vld [vmem:[#allocation16 + $0x20] sm:$0xf]
    %v1278 = vld [vmem:[#allocation16 + $0x24] sm:$0xf]
    %v1279 = vld [vmem:[#allocation16 + $0x28] sm:$0xf]
    %v1280 = vld [vmem:[#allocation16 + $0x2c] sm:$0xf]
    %v1285 = vunpack.c.l.b16 %v1277
    %v1286 = vunpack.c.l.b16 %v1278
    %v1287 = vunpack.c.l.b16 %v1279
    %v1288 = vunpack.c.l.b16 %v1280
    %v1289 = vpack.c.b16 %v1286, %v1285
    %v1290 = vpack.c.b16 %v1288, %v1287
    %v1294 = vsel %vm824, %v1276, 0
    %1296 = vmatprep.subr.bf16.mxu0 0
    %1297 = vmatpush1.bf16.msra.mxu0 0
    %1298 = vmatprep.subr.bf16.mxu0 0
    %1299 = vmatpush1.bf16.msra.mxu0 0
    %1300 = vmatprep.subr.bf16.mxu0 0
    %1301 = vmatpush1.bf16.msra.mxu0 0
    %1302 = vmatprep.subr.bf16.mxu0 0
    %1303 = vmatpush1.bf16.msra.mxu0 0
    %1304 = vmatprep.subr.bf16.mxu0 0
    %1305 = vmatpush1.bf16.msra.mxu0 0
    %1306 = vmatprep.subr.bf16.mxu0 0
    %1307 = vmatpush1.bf16.msra.mxu0 0
    %1308 = vmatprep.subr.bf16.mxu0 0
    %1309 = vmatpush1.bf16.msra.mxu0 %v1290
    %1310 = vmatprep.subr.bf16.mxu0 0
    %1311 = vmatpush1.bf16.msra.mxu0 %v1289
    %1312 = vmatprep.subr.bf16.mxu0 0
    %1313 = vmatpush2.bf16.msra.mxu0 0
    %1314 = vmatprep.subr.bf16.mxu0 0
    %1315 = vmatpush2.bf16.msra.mxu0 0
    %1316 = vmatprep.subr.bf16.mxu0 0
    %1317 = vmatpush2.bf16.msra.mxu0 0
    %1318 = vmatprep.subr.bf16.mxu0 0
    %1319 = vmatpush2.bf16.msra.mxu0 0
    %1320 = vmatprep.subr.bf16.mxu0 0
    %1321 = vmatpush2.bf16.msra.mxu0 0
    %1322 = vmatprep.subr.bf16.mxu0 0
    %1323 = vmatpush2.bf16.msra.mxu0 0
    %1324 = vmatprep.subr.bf16.mxu0 0
    %1325 = vmatpush2.bf16.msra.mxu0 0
    %1326 = vmatprep.subr.bf16.mxu0 0
    %1327 = vmatpush2.bf16.msra.mxu0 0
    %1328 = vmatprep.mubr.bf16.mxu0 0
    %1329 = vmatmul.mubr.bf16.gmra.mxu0 %v1294
    %v1330 = vpop.f32.mrf.mxu0
    %v1331 = vadd.f32 0.0, %v1330
    %v1332 = vpop.f32.mrf.mxu0
    %v1333 = vpop.f32.mrf.mxu0
    %v1334 = vpop.f32.mrf.mxu0
    %1335 = vdwg.mxu0
    %v1336 = vadd.f32 %v1160, %v1331
    %1337 = vrot.lane.b32.xlu0 %v821, 32
    %v1338 = vpop.permute.xlu0 %1337
    %1339 = vrot.lane.b32.xlu0 %v822, 32
    %v1340 = vpop.permute.xlu0 %1339
    %v1342 = vsel %vm824, %v1338, 0
    %v1345 = vsel %vm824, %v1340, 0
    %1347 = vmatprep.subr.bf16.mxu0 0
    %1348 = vmatpush1.bf16.xpose.msra.mxu0 0
    %1349 = vmatprep.subr.bf16.mxu0 0
    %1350 = vmatpush1.bf16.xpose.msra.mxu0 0
    %1351 = vmatprep.subr.bf16.mxu0 0
    %1352 = vmatpush1.bf16.xpose.msra.mxu0 0
    %1353 = vmatprep.subr.bf16.mxu0 0
    %1354 = vmatpush1.bf16.xpose.msra.mxu0 0
    %1355 = vmatprep.subr.bf16.mxu0 0
    %1356 = vmatpush1.bf16.xpose.msra.mxu0 0
    %1357 = vmatprep.subr.bf16.mxu0 0
    %1358 = vmatpush1.bf16.xpose.msra.mxu0 0
    %1359 = vmatprep.subr.bf16.mxu0 0
    %1360 = vmatpush1.bf16.xpose.msra.mxu0 0
    %1361 = vmatprep.subr.bf16.mxu0 0
    %1362 = vmatpush1.bf16.xpose.msra.mxu0 %v1345
    %1363 = vmatprep.subr.bf16.mxu0 0
    %1364 = vmatpush2.bf16.xpose.msra.mxu0 0
    %1365 = vmatprep.subr.bf16.mxu0 0
    %1366 = vmatpush2.bf16.xpose.msra.mxu0 0
    %1367 = vmatprep.subr.bf16.mxu0 0
    %1368 = vmatpush2.bf16.xpose.msra.mxu0 0
    %1369 = vmatprep.subr.bf16.mxu0 0
    %1370 = vmatpush2.bf16.xpose.msra.mxu0 0
    %1371 = vmatprep.subr.bf16.mxu0 0
    %1372 = vmatpush2.bf16.xpose.msra.mxu0 0
    %1373 = vmatprep.subr.bf16.mxu0 0
    %1374 = vmatpush2.bf16.xpose.msra.mxu0 0
    %1375 = vmatprep.subr.bf16.mxu0 0
    %1376 = vmatpush2.bf16.xpose.msra.mxu0 0
    %1377 = vmatprep.subr.bf16.mxu0 0
    %1378 = vmatpush2.bf16.xpose.msra.mxu0 0
    %1379 = vmatprep.mubr.bf16.mxu0 0
    %1380 = vmatmul.mubr.bf16.gmra.mxu0 %v1342
    %v1381 = vpop.f32.mrf.mxu0
    %v1382 = vadd.f32 0.0, %v1381
    %v1383 = vpop.f32.mrf.mxu0
    %v1384 = vpop.f32.mrf.mxu0
    %v1385 = vpop.f32.mrf.mxu0
    %1386 = vdwg.mxu0
    %v1387 = vsel %vm517, %v1382, -1e+30
    %v1388 = vsel %vm872, %v1387, -inf
    %1389 = vmax.xlane.f32.xlu0 %v1388
    %v1390 = vpop.xlane.xlu0 %1389
    %v1391 = vsub.f32 %v1387, %v1390
    %v1392 = vmul.f32 %v1391, 1.442695
    %v1393 = vpow.pop %v1392
    %v1394 = vsel %vm872, %v1393, 0.0
    %1395 = vadd.xlane.f32.xlu0 %v1394
    %v1396 = vpop.xlane.xlu0 %1395
    %v1397 = vrcp.pop %v1396
    %v1398 = vmul.f32 %v1393, %v1397
    %v1399 = vpack.c.bf16 %v1398, %v1398
    %1400 = vrot.lane.b32.xlu0 %v823, 32
    %v1401 = vpop.permute.xlu0 %1400
    %v1403 = vsel %vm872, %v1399, 0
    %v1406 = vsel %vm500, %v1401, 0
    %1408 = vmatprep.subr.bf16.mxu0 0
    %1409 = vmatpush1.bf16.msra.mxu0 0
    %1410 = vmatprep.subr.bf16.mxu0 0
    %1411 = vmatpush1.bf16.msra.mxu0 0
    %1412 = vmatprep.subr.bf16.mxu0 0
    %1413 = vmatpush1.bf16.msra.mxu0 0
    %1414 = vmatprep.subr.bf16.mxu0 0
    %1415 = vmatpush1.bf16.msra.mxu0 0
    %1416 = vmatprep.subr.bf16.mxu0 0
    %1417 = vmatpush1.bf16.msra.mxu0 0
    %1418 = vmatprep.subr.bf16.mxu0 0
    %1419 = vmatpush1.bf16.msra.mxu0 0
    %1420 = vmatprep.subr.bf16.mxu0 0
    %1421 = vmatpush1.bf16.msra.mxu0 0
    %1422 = vmatprep.subr.bf16.mxu0 0
    %1423 = vmatpush1.bf16.msra.mxu0 %v1406
    %1424 = vmatprep.subr.bf16.mxu0 0
    %1425 = vmatpush2.bf16.msra.mxu0 0
    %1426 = vmatprep.subr.bf16.mxu0 0
    %1427 = vmatpush2.bf16.msra.mxu0 0
    %1428 = vmatprep.subr.bf16.mxu0 0
    %1429 = vmatpush2.bf16.msra.mxu0 0
    %1430 = vmatprep.subr.bf16.mxu0 0
    %1431 = vmatpush2.bf16.msra.mxu0 0
    %1432 = vmatprep.subr.bf16.mxu0 0
    %1433 = vmatpush2.bf16.msra.mxu0 0
    %1434 = vmatprep.subr.bf16.mxu0 0
    %1435 = vmatpush2.bf16.msra.mxu0 0
    %1436 = vmatprep.subr.bf16.mxu0 0
    %1437 = vmatpush2.bf16.msra.mxu0 0
    %1438 = vmatprep.subr.bf16.mxu0 0
    %1439 = vmatpush2.bf16.msra.mxu0 0
    %1440 = vmatprep.mubr.bf16.mxu0 0
    %1441 = vmatmul.mubr.bf16.gmra.mxu0 %v1403
    %v1442 = vpop.f32.mrf.mxu0
    %v1443 = vadd.f32 0.0, %v1442
    %v1444 = vpop.f32.mrf.mxu0
    %v1445 = vpop.f32.mrf.mxu0
    %v1446 = vpop.f32.mrf.mxu0
    %1447 = vdwg.mxu0
    %v1448 = vpack.c.bf16 %v1443, %v1443
    %v1449 = vld [vmem:[#allocation16 + $0x30] sm:$0xf]
    %v1450 = vld [vmem:[#allocation16 + $0x34] sm:$0xf]
    %v1451 = vld [vmem:[#allocation16 + $0x38] sm:$0xf]
    %v1452 = vld [vmem:[#allocation16 + $0x3c] sm:$0xf]
    %v1457 = vunpack.c.l.b16 %v1449
    %v1458 = vunpack.c.l.b16 %v1450
    %v1459 = vunpack.c.l.b16 %v1451
    %v1460 = vunpack.c.l.b16 %v1452
    %v1461 = vpack.c.b16 %v1458, %v1457
    %v1462 = vpack.c.b16 %v1460, %v1459
    %v1466 = vsel %vm824, %v1448, 0
    %1468 = vmatprep.subr.bf16.mxu0 0
    %1469 = vmatpush1.bf16.msra.mxu0 0
    %1470 = vmatprep.subr.bf16.mxu0 0
    %1471 = vmatpush1.bf16.msra.mxu0 0
    %1472 = vmatprep.subr.bf16.mxu0 0
    %1473 = vmatpush1.bf16.msra.mxu0 0
    %1474 = vmatprep.subr.bf16.mxu0 0
    %1475 = vmatpush1.bf16.msra.mxu0 0
    %1476 = vmatprep.subr.bf16.mxu0 0
    %1477 = vmatpush1.bf16.msra.mxu0 0
    %1478 = vmatprep.subr.bf16.mxu0 0
    %1479 = vmatpush1.bf16.msra.mxu0 0
    %1480 = vmatprep.subr.bf16.mxu0 0
    %1481 = vmatpush1.bf16.msra.mxu0 %v1462
    %1482 = vmatprep.subr.bf16.mxu0 0
    %1483 = vmatpush1.bf16.msra.mxu0 %v1461
    %1484 = vmatprep.subr.bf16.mxu0 0
    %1485 = vmatpush2.bf16.msra.mxu0 0
    %1486 = vmatprep.subr.bf16.mxu0 0
    %1487 = vmatpush2.bf16.msra.mxu0 0
    %1488 = vmatprep.subr.bf16.mxu0 0
    %1489 = vmatpush2.bf16.msra.mxu0 0
    %1490 = vmatprep.subr.bf16.mxu0 0
    %1491 = vmatpush2.bf16.msra.mxu0 0
    %1492 = vmatprep.subr.bf16.mxu0 0
    %1493 = vmatpush2.bf16.msra.mxu0 0
    %1494 = vmatprep.subr.bf16.mxu0 0
    %1495 = vmatpush2.bf16.msra.mxu0 0
    %1496 = vmatprep.subr.bf16.mxu0 0
    %1497 = vmatpush2.bf16.msra.mxu0 0
    %1498 = vmatprep.subr.bf16.mxu0 0
    %1499 = vmatpush2.bf16.msra.mxu0 0
    %1500 = vmatprep.mubr.bf16.mxu0 0
    %1501 = vmatmul.mubr.bf16.gmra.mxu0 %v1466
    %v1502 = vpop.f32.mrf.mxu0
    %v1503 = vadd.f32 0.0, %v1502
    %v1504 = vpop.f32.mrf.mxu0
    %v1505 = vpop.f32.mrf.mxu0
    %v1506 = vpop.f32.mrf.mxu0
    %1507 = vdwg.mxu0
    %v1508 = vadd.f32 %v1336, %v1503
    %v1509 = vrot.slane %v821, 4
    %v1510 = vrot.slane %v822, 4
    %v1512 = vsel %vm824, %v1509, 0
    %v1515 = vsel %vm824, %v1510, 0
    %1517 = vmatprep.subr.bf16.mxu0 0
    %1518 = vmatpush1.bf16.xpose.msra.mxu0 0
    %1519 = vmatprep.subr.bf16.mxu0 0
    %1520 = vmatpush1.bf16.xpose.msra.mxu0 0
    %1521 = vmatprep.subr.bf16.mxu0 0
    %1522 = vmatpush1.bf16.xpose.msra.mxu0 0
    %1523 = vmatprep.subr.bf16.mxu0 0
    %1524 = vmatpush1.bf16.xpose.msra.mxu0 0
    %1525 = vmatprep.subr.bf16.mxu0 0
    %1526 = vmatpush1.bf16.xpose.msra.mxu0 0
    %1527 = vmatprep.subr.bf16.mxu0 0
    %1528 = vmatpush1.bf16.xpose.msra.mxu0 0
    %1529 = vmatprep.subr.bf16.mxu0 0
    %1530 = vmatpush1.bf16.xpose.msra.mxu0 0
    %1531 = vmatprep.subr.bf16.mxu0 0
    %1532 = vmatpush1.bf16.xpose.msra.mxu0 %v1515
    %1533 = vmatprep.subr.bf16.mxu0 0
    %1534 = vmatpush2.bf16.xpose.msra.mxu0 0
    %1535 = vmatprep.subr.bf16.mxu0 0
    %1536 = vmatpush2.bf16.xpose.msra.mxu0 0
    %1537 = vmatprep.subr.bf16.mxu0 0
    %1538 = vmatpush2.bf16.xpose.msra.mxu0 0
    %1539 = vmatprep.subr.bf16.mxu0 0
    %1540 = vmatpush2.bf16.xpose.msra.mxu0 0
    %1541 = vmatprep.subr.bf16.mxu0 0
    %1542 = vmatpush2.bf16.xpose.msra.mxu0 0
    %1543 = vmatprep.subr.bf16.mxu0 0
    %1544 = vmatpush2.bf16.xpose.msra.mxu0 0
    %1545 = vmatprep.subr.bf16.mxu0 0
    %1546 = vmatpush2.bf16.xpose.msra.mxu0 0
    %1547 = vmatprep.subr.bf16.mxu0 0
    %1548 = vmatpush2.bf16.xpose.msra.mxu0 0
    %1549 = vmatprep.mubr.bf16.mxu0 0
    %1550 = vmatmul.mubr.bf16.gmra.mxu0 %v1512
    %v1551 = vpop.f32.mrf.mxu0
    %v1552 = vadd.f32 0.0, %v1551
    %v1553 = vpop.f32.mrf.mxu0
    %v1554 = vpop.f32.mrf.mxu0
    %v1555 = vpop.f32.mrf.mxu0
    %1556 = vdwg.mxu0
    %v1557 = vsel %vm517, %v1552, -1e+30
    %v1558 = vsel %vm872, %v1557, -inf
    %1559 = vmax.xlane.f32.xlu0 %v1558
    %v1560 = vpop.xlane.xlu0 %1559
    %v1561 = vsub.f32 %v1557, %v1560
    %v1562 = vmul.f32 %v1561, 1.442695
    %v1563 = vpow.pop %v1562
    %v1564 = vsel %vm872, %v1563, 0.0
    %1565 = vadd.xlane.f32.xlu0 %v1564
    %v1566 = vpop.xlane.xlu0 %1565
    %v1567 = vrcp.pop %v1566
    %v1568 = vmul.f32 %v1563, %v1567
    %v1569 = vpack.c.bf16 %v1568, %v1568
    %v1570 = vrot.slane %v823, 4
    %v1572 = vsel %vm872, %v1569, 0
    %v1575 = vsel %vm500, %v1570, 0
    %1577 = vmatprep.subr.bf16.mxu0 0
    %1578 = vmatpush1.bf16.msra.mxu0 0
    %1579 = vmatprep.subr.bf16.mxu0 0
    %1580 = vmatpush1.bf16.msra.mxu0 0
    %1581 = vmatprep.subr.bf16.mxu0 0
    %1582 = vmatpush1.bf16.msra.mxu0 0
    %1583 = vmatprep.subr.bf16.mxu0 0
    %1584 = vmatpush1.bf16.msra.mxu0 0
    %1585 = vmatprep.subr.bf16.mxu0 0
    %1586 = vmatpush1.bf16.msra.mxu0 0
    %1587 = vmatprep.subr.bf16.mxu0 0
    %1588 = vmatpush1.bf16.msra.mxu0 0
    %1589 = vmatprep.subr.bf16.mxu0 0
    %1590 = vmatpush1.bf16.msra.mxu0 0
    %1591 = vmatprep.subr.bf16.mxu0 0
    %1592 = vmatpush1.bf16.msra.mxu0 %v1575
    %1593 = vmatprep.subr.bf16.mxu0 0
    %1594 = vmatpush2.bf16.msra.mxu0 0
    %1595 = vmatprep.subr.bf16.mxu0 0
    %1596 = vmatpush2.bf16.msra.mxu0 0
    %1597 = vmatprep.subr.bf16.mxu0 0
    %1598 = vmatpush2.bf16.msra.mxu0 0
    %1599 = vmatprep.subr.bf16.mxu0 0
    %1600 = vmatpush2.bf16.msra.mxu0 0
    %1601 = vmatprep.subr.bf16.mxu0 0
    %1602 = vmatpush2.bf16.msra.mxu0 0
    %1603 = vmatprep.subr.bf16.mxu0 0
    %1604 = vmatpush2.bf16.msra.mxu0 0
    %1605 = vmatprep.subr.bf16.mxu0 0
    %1606 = vmatpush2.bf16.msra.mxu0 0
    %1607 = vmatprep.subr.bf16.mxu0 0
    %1608 = vmatpush2.bf16.msra.mxu0 0
    %1609 = vmatprep.mubr.bf16.mxu0 0
    %1610 = vmatmul.mubr.bf16.gmra.mxu0 %v1572
    %v1611 = vpop.f32.mrf.mxu0
    %v1612 = vadd.f32 0.0, %v1611
    %v1613 = vpop.f32.mrf.mxu0
    %v1614 = vpop.f32.mrf.mxu0
    %v1615 = vpop.f32.mrf.mxu0
    %1616 = vdwg.mxu0
    %v1617 = vpack.c.bf16 %v1612, %v1612
    %1618 = vrot.lane.b32.xlu0 %v1509, 96
    %v1619 = vpop.permute.xlu0 %1618
    %1620 = vrot.lane.b32.xlu0 %v1510, 96
    %v1621 = vpop.permute.xlu0 %1620
    %v1623 = vsel %vm824, %v1619, 0
    %v1626 = vsel %vm824, %v1621, 0
    %1628 = vmatprep.subr.bf16.mxu0 0
    %1629 = vmatpush1.bf16.xpose.msra.mxu0 0
    %1630 = vmatprep.subr.bf16.mxu0 0
    %1631 = vmatpush1.bf16.xpose.msra.mxu0 0
    %1632 = vmatprep.subr.bf16.mxu0 0
    %1633 = vmatpush1.bf16.xpose.msra.mxu0 0
    %1634 = vmatprep.subr.bf16.mxu0 0
    %1635 = vmatpush1.bf16.xpose.msra.mxu0 0
    %1636 = vmatprep.subr.bf16.mxu0 0
    %1637 = vmatpush1.bf16.xpose.msra.mxu0 0
    %1638 = vmatprep.subr.bf16.mxu0 0
    %1639 = vmatpush1.bf16.xpose.msra.mxu0 0
    %1640 = vmatprep.subr.bf16.mxu0 0
    %1641 = vmatpush1.bf16.xpose.msra.mxu0 0
    %1642 = vmatprep.subr.bf16.mxu0 0
    %1643 = vmatpush1.bf16.xpose.msra.mxu0 %v1626
    %1644 = vmatprep.subr.bf16.mxu0 0
    %1645 = vmatpush2.bf16.xpose.msra.mxu0 0
    %1646 = vmatprep.subr.bf16.mxu0 0
    %1647 = vmatpush2.bf16.xpose.msra.mxu0 0
    %1648 = vmatprep.subr.bf16.mxu0 0
    %1649 = vmatpush2.bf16.xpose.msra.mxu0 0
    %1650 = vmatprep.subr.bf16.mxu0 0
    %1651 = vmatpush2.bf16.xpose.msra.mxu0 0
    %1652 = vmatprep.subr.bf16.mxu0 0
    %1653 = vmatpush2.bf16.xpose.msra.mxu0 0
    %1654 = vmatprep.subr.bf16.mxu0 0
    %1655 = vmatpush2.bf16.xpose.msra.mxu0 0
    %1656 = vmatprep.subr.bf16.mxu0 0
    %1657 = vmatpush2.bf16.xpose.msra.mxu0 0
    %1658 = vmatprep.subr.bf16.mxu0 0
    %1659 = vmatpush2.bf16.xpose.msra.mxu0 0
    %1660 = vmatprep.mubr.bf16.mxu0 0
    %1661 = vmatmul.mubr.bf16.gmra.mxu0 %v1623
    %v1662 = vpop.f32.mrf.mxu0
    %v1663 = vadd.f32 0.0, %v1662
    %v1664 = vpop.f32.mrf.mxu0
    %v1665 = vpop.f32.mrf.mxu0
    %v1666 = vpop.f32.mrf.mxu0
    %1667 = vdwg.mxu0
    %v1668 = vsel %vm517, %v1663, -1e+30
    %v1669 = vsel %vm872, %v1668, -inf
    %1670 = vmax.xlane.f32.xlu0 %v1669
    %v1671 = vpop.xlane.xlu0 %1670
    %v1672 = vsub.f32 %v1668, %v1671
    %v1673 = vmul.f32 %v1672, 1.442695
    %v1674 = vpow.pop %v1673
    %v1675 = vsel %vm872, %v1674, 0.0
    %1676 = vadd.xlane.f32.xlu0 %v1675
    %v1677 = vpop.xlane.xlu0 %1676
    %v1678 = vrcp.pop %v1677
    %v1679 = vmul.f32 %v1674, %v1678
    %v1680 = vpack.c.bf16 %v1679, %v1679
    %1681 = vrot.lane.b32.xlu0 %v1570, 96
    %v1682 = vpop.permute.xlu0 %1681
    %v1684 = vsel %vm872, %v1680, 0
    %v1687 = vsel %vm500, %v1682, 0
    %1689 = vmatprep.subr.bf16.mxu0 0
    %1690 = vmatpush1.bf16.msra.mxu0 0
    %1691 = vmatprep.subr.bf16.mxu0 0
    %1692 = vmatpush1.bf16.msra.mxu0 0
    %1693 = vmatprep.subr.bf16.mxu0 0
    %1694 = vmatpush1.bf16.msra.mxu0 0
    %1695 = vmatprep.subr.bf16.mxu0 0
    %1696 = vmatpush1.bf16.msra.mxu0 0
    %1697 = vmatprep.subr.bf16.mxu0 0
    %1698 = vmatpush1.bf16.msra.mxu0 0
    %1699 = vmatprep.subr.bf16.mxu0 0
    %1700 = vmatpush1.bf16.msra.mxu0 0
    %1701 = vmatprep.subr.bf16.mxu0 0
    %1702 = vmatpush1.bf16.msra.mxu0 0
    %1703 = vmatprep.subr.bf16.mxu0 0
    %1704 = vmatpush1.bf16.msra.mxu0 %v1687
    %1705 = vmatprep.subr.bf16.mxu0 0
    %1706 = vmatpush2.bf16.msra.mxu0 0
    %1707 = vmatprep.subr.bf16.mxu0 0
    %1708 = vmatpush2.bf16.msra.mxu0 0
    %1709 = vmatprep.subr.bf16.mxu0 0
    %1710 = vmatpush2.bf16.msra.mxu0 0
    %1711 = vmatprep.subr.bf16.mxu0 0
    %1712 = vmatpush2.bf16.msra.mxu0 0
    %1713 = vmatprep.subr.bf16.mxu0 0
    %1714 = vmatpush2.bf16.msra.mxu0 0
    %1715 = vmatprep.subr.bf16.mxu0 0
    %1716 = vmatpush2.bf16.msra.mxu0 0
    %1717 = vmatprep.subr.bf16.mxu0 0
    %1718 = vmatpush2.bf16.msra.mxu0 0
    %1719 = vmatprep.subr.bf16.mxu0 0
    %1720 = vmatpush2.bf16.msra.mxu0 0
    %1721 = vmatprep.mubr.bf16.mxu0 0
    %1722 = vmatmul.mubr.bf16.gmra.mxu0 %v1684
    %v1723 = vpop.f32.mrf.mxu0
    %v1724 = vadd.f32 0.0, %v1723
    %v1725 = vpop.f32.mrf.mxu0
    %v1726 = vpop.f32.mrf.mxu0
    %v1727 = vpop.f32.mrf.mxu0
    %1728 = vdwg.mxu0
    %v1729 = vpack.c.bf16 %v1724, %v1724
    %v1731 = vsel %vm824, %v1729, 0
    %1733 = vmatprep.subr.bf16.mxu0 0
    %1734 = vmatpush1.bf16.msra.mxu0 0
    %1735 = vmatprep.subr.bf16.mxu0 0
    %1736 = vmatpush1.bf16.msra.mxu0 0
    %1737 = vmatprep.subr.bf16.mxu0 0
    %1738 = vmatpush1.bf16.msra.mxu0 0
    %1739 = vmatprep.subr.bf16.mxu0 0
    %1740 = vmatpush1.bf16.msra.mxu0 0
    %1741 = vmatprep.subr.bf16.mxu0 0
    %1742 = vmatpush1.bf16.msra.mxu0 0
    %1743 = vmatprep.subr.bf16.mxu0 0
    %1744 = vmatpush1.bf16.msra.mxu0 0
    %1745 = vmatprep.subr.bf16.mxu0 0
    %1746 = vmatpush1.bf16.msra.mxu0 %v1064
    %1747 = vmatprep.subr.bf16.mxu0 0
    %1748 = vmatpush1.bf16.msra.mxu0 %v1063
    %1749 = vmatprep.subr.bf16.mxu0 0
    %1750 = vmatpush2.bf16.msra.mxu0 0
    %1751 = vmatprep.subr.bf16.mxu0 0
    %1752 = vmatpush2.bf16.msra.mxu0 0
    %1753 = vmatprep.subr.bf16.mxu0 0
    %1754 = vmatpush2.bf16.msra.mxu0 0
    %1755 = vmatprep.subr.bf16.mxu0 0
    %1756 = vmatpush2.bf16.msra.mxu0 0
    %1757 = vmatprep.subr.bf16.mxu0 0
    %1758 = vmatpush2.bf16.msra.mxu0 0
    %1759 = vmatprep.subr.bf16.mxu0 0
    %1760 = vmatpush2.bf16.msra.mxu0 0
    %1761 = vmatprep.subr.bf16.mxu0 0
    %1762 = vmatpush2.bf16.msra.mxu0 0
    %1763 = vmatprep.subr.bf16.mxu0 0
    %1764 = vmatpush2.bf16.msra.mxu0 0
    %1765 = vmatprep.mubr.bf16.mxu0 0
    %1766 = vmatmul.mubr.bf16.gmra.mxu0 %v1731
    %v1767 = vpop.f32.mrf.mxu0
    %v1768 = vadd.f32 0.0, %v1767
    %v1769 = vpop.f32.mrf.mxu0
    %v1770 = vpop.f32.mrf.mxu0
    %v1771 = vpop.f32.mrf.mxu0
    %1772 = vdwg.mxu0
    %v1774 = vsel %vm824, %v1617, 0
    %1776 = vmatprep.subr.bf16.mxu0 0
    %1777 = vmatpush1.bf16.msra.mxu0 0
    %1778 = vmatprep.subr.bf16.mxu0 0
    %1779 = vmatpush1.bf16.msra.mxu0 0
    %1780 = vmatprep.subr.bf16.mxu0 0
    %1781 = vmatpush1.bf16.msra.mxu0 0
    %1782 = vmatprep.subr.bf16.mxu0 0
    %1783 = vmatpush1.bf16.msra.mxu0 0
    %1784 = vmatprep.subr.bf16.mxu0 0
    %1785 = vmatpush1.bf16.msra.mxu0 0
    %1786 = vmatprep.subr.bf16.mxu0 0
    %1787 = vmatpush1.bf16.msra.mxu0 0
    %1788 = vmatprep.subr.bf16.mxu0 0
    %1789 = vmatpush1.bf16.msra.mxu0 %v1119
    %1790 = vmatprep.subr.bf16.mxu0 0
    %1791 = vmatpush1.bf16.msra.mxu0 %v1118
    %1792 = vmatprep.subr.bf16.mxu0 0
    %1793 = vmatpush2.bf16.msra.mxu0 0
    %1794 = vmatprep.subr.bf16.mxu0 0
    %1795 = vmatpush2.bf16.msra.mxu0 0
    %1796 = vmatprep.subr.bf16.mxu0 0
    %1797 = vmatpush2.bf16.msra.mxu0 0
    %1798 = vmatprep.subr.bf16.mxu0 0
    %1799 = vmatpush2.bf16.msra.mxu0 0
    %1800 = vmatprep.subr.bf16.mxu0 0
    %1801 = vmatpush2.bf16.msra.mxu0 0
    %1802 = vmatprep.subr.bf16.mxu0 0
    %1803 = vmatpush2.bf16.msra.mxu0 0
    %1804 = vmatprep.subr.bf16.mxu0 0
    %1805 = vmatpush2.bf16.msra.mxu0 0
    %1806 = vmatprep.subr.bf16.mxu0 0
    %1807 = vmatpush2.bf16.msra.mxu0 0
    %1808 = vmatprep.mubr.bf16.mxu0 0
    %1809 = vmatmul.mubr.bf16.gmra.mxu0 %v1774
    %v1810 = vpop.f32.mrf.mxu0
    %v1811 = vadd.f32 %v1768, %v1810
    %v1812 = vpop.f32.mrf.mxu0
    %v1813 = vpop.f32.mrf.mxu0
    %v1814 = vpop.f32.mrf.mxu0
    %1815 = vdwg.mxu0
    %1816 = vrot.lane.b32.xlu0 %v1509, 64
    %v1817 = vpop.permute.xlu0 %1816
    %1818 = vrot.lane.b32.xlu0 %v1510, 64
    %v1819 = vpop.permute.xlu0 %1818
    %v1821 = vsel %vm824, %v1817, 0
    %v1824 = vsel %vm824, %v1819, 0
    %1826 = vmatprep.subr.bf16.mxu0 0
    %1827 = vmatpush1.bf16.xpose.msra.mxu0 0
    %1828 = vmatprep.subr.bf16.mxu0 0
    %1829 = vmatpush1.bf16.xpose.msra.mxu0 0
    %1830 = vmatprep.subr.bf16.mxu0 0
    %1831 = vmatpush1.bf16.xpose.msra.mxu0 0
    %1832 = vmatprep.subr.bf16.mxu0 0
    %1833 = vmatpush1.bf16.xpose.msra.mxu0 0
    %1834 = vmatprep.subr.bf16.mxu0 0
    %1835 = vmatpush1.bf16.xpose.msra.mxu0 0
    %1836 = vmatprep.subr.bf16.mxu0 0
    %1837 = vmatpush1.bf16.xpose.msra.mxu0 0
    %1838 = vmatprep.subr.bf16.mxu0 0
    %1839 = vmatpush1.bf16.xpose.msra.mxu0 0
    %1840 = vmatprep.subr.bf16.mxu0 0
    %1841 = vmatpush1.bf16.xpose.msra.mxu0 %v1824
    %1842 = vmatprep.subr.bf16.mxu0 0
    %1843 = vmatpush2.bf16.xpose.msra.mxu0 0
    %1844 = vmatprep.subr.bf16.mxu0 0
    %1845 = vmatpush2.bf16.xpose.msra.mxu0 0
    %1846 = vmatprep.subr.bf16.mxu0 0
    %1847 = vmatpush2.bf16.xpose.msra.mxu0 0
    %1848 = vmatprep.subr.bf16.mxu0 0
    %1849 = vmatpush2.bf16.xpose.msra.mxu0 0
    %1850 = vmatprep.subr.bf16.mxu0 0
    %1851 = vmatpush2.bf16.xpose.msra.mxu0 0
    %1852 = vmatprep.subr.bf16.mxu0 0
    %1853 = vmatpush2.bf16.xpose.msra.mxu0 0
    %1854 = vmatprep.subr.bf16.mxu0 0
    %1855 = vmatpush2.bf16.xpose.msra.mxu0 0
    %1856 = vmatprep.subr.bf16.mxu0 0
    %1857 = vmatpush2.bf16.xpose.msra.mxu0 0
    %1858 = vmatprep.mubr.bf16.mxu0 0
    %1859 = vmatmul.mubr.bf16.gmra.mxu0 %v1821
    %v1860 = vpop.f32.mrf.mxu0
    %v1861 = vadd.f32 0.0, %v1860
    %v1862 = vpop.f32.mrf.mxu0
    %v1863 = vpop.f32.mrf.mxu0
    %v1864 = vpop.f32.mrf.mxu0
    %1865 = vdwg.mxu0
    %v1866 = vsel %vm517, %v1861, -1e+30
    %v1867 = vsel %vm872, %v1866, -inf
    %1868 = vmax.xlane.f32.xlu0 %v1867
    %v1869 = vpop.xlane.xlu0 %1868
    %v1870 = vsub.f32 %v1866, %v1869
    %v1871 = vmul.f32 %v1870, 1.442695
    %v1872 = vpow.pop %v1871
    %v1873 = vsel %vm872, %v1872, 0.0
    %1874 = vadd.xlane.f32.xlu0 %v1873
    %v1875 = vpop.xlane.xlu0 %1874
    %v1876 = vrcp.pop %v1875
    %v1877 = vmul.f32 %v1872, %v1876
    %v1878 = vpack.c.bf16 %v1877, %v1877
    %1879 = vrot.lane.b32.xlu0 %v1570, 64
    %v1880 = vpop.permute.xlu0 %1879
    %v1882 = vsel %vm872, %v1878, 0
    %v1885 = vsel %vm500, %v1880, 0
    %1887 = vmatprep.subr.bf16.mxu0 0
    %1888 = vmatpush1.bf16.msra.mxu0 0
    %1889 = vmatprep.subr.bf16.mxu0 0
    %1890 = vmatpush1.bf16.msra.mxu0 0
    %1891 = vmatprep.subr.bf16.mxu0 0
    %1892 = vmatpush1.bf16.msra.mxu0 0
    %1893 = vmatprep.subr.bf16.mxu0 0
    %1894 = vmatpush1.bf16.msra.mxu0 0
    %1895 = vmatprep.subr.bf16.mxu0 0
    %1896 = vmatpush1.bf16.msra.mxu0 0
    %1897 = vmatprep.subr.bf16.mxu0 0
    %1898 = vmatpush1.bf16.msra.mxu0 0
    %1899 = vmatprep.subr.bf16.mxu0 0
    %1900 = vmatpush1.bf16.msra.mxu0 0
    %1901 = vmatprep.subr.bf16.mxu0 0
    %1902 = vmatpush1.bf16.msra.mxu0 %v1885
    %1903 = vmatprep.subr.bf16.mxu0 0
    %1904 = vmatpush2.bf16.msra.mxu0 0
    %1905 = vmatprep.subr.bf16.mxu0 0
    %1906 = vmatpush2.bf16.msra.mxu0 0
    %1907 = vmatprep.subr.bf16.mxu0 0
    %1908 = vmatpush2.bf16.msra.mxu0 0
    %1909 = vmatprep.subr.bf16.mxu0 0
    %1910 = vmatpush2.bf16.msra.mxu0 0
    %1911 = vmatprep.subr.bf16.mxu0 0
    %1912 = vmatpush2.bf16.msra.mxu0 0
    %1913 = vmatprep.subr.bf16.mxu0 0
    %1914 = vmatpush2.bf16.msra.mxu0 0
    %1915 = vmatprep.subr.bf16.mxu0 0
    %1916 = vmatpush2.bf16.msra.mxu0 0
    %1917 = vmatprep.subr.bf16.mxu0 0
    %1918 = vmatpush2.bf16.msra.mxu0 0
    %1919 = vmatprep.mubr.bf16.mxu0 0
    %1920 = vmatmul.mubr.bf16.gmra.mxu0 %v1882
    %v1921 = vpop.f32.mrf.mxu0
    %v1922 = vadd.f32 0.0, %v1921
    %v1923 = vpop.f32.mrf.mxu0
    %v1924 = vpop.f32.mrf.mxu0
    %v1925 = vpop.f32.mrf.mxu0
    %1926 = vdwg.mxu0
    %v1927 = vpack.c.bf16 %v1922, %v1922
    %v1929 = vsel %vm824, %v1927, 0
    %1931 = vmatprep.subr.bf16.mxu0 0
    %1932 = vmatpush1.bf16.msra.mxu0 0
    %1933 = vmatprep.subr.bf16.mxu0 0
    %1934 = vmatpush1.bf16.msra.mxu0 0
    %1935 = vmatprep.subr.bf16.mxu0 0
    %1936 = vmatpush1.bf16.msra.mxu0 0
    %1937 = vmatprep.subr.bf16.mxu0 0
    %1938 = vmatpush1.bf16.msra.mxu0 0
    %1939 = vmatprep.subr.bf16.mxu0 0
    %1940 = vmatpush1.bf16.msra.mxu0 0
    %1941 = vmatprep.subr.bf16.mxu0 0
    %1942 = vmatpush1.bf16.msra.mxu0 0
    %1943 = vmatprep.subr.bf16.mxu0 0
    %1944 = vmatpush1.bf16.msra.mxu0 %v1290
    %1945 = vmatprep.subr.bf16.mxu0 0
    %1946 = vmatpush1.bf16.msra.mxu0 %v1289
    %1947 = vmatprep.subr.bf16.mxu0 0
    %1948 = vmatpush2.bf16.msra.mxu0 0
    %1949 = vmatprep.subr.bf16.mxu0 0
    %1950 = vmatpush2.bf16.msra.mxu0 0
    %1951 = vmatprep.subr.bf16.mxu0 0
    %1952 = vmatpush2.bf16.msra.mxu0 0
    %1953 = vmatprep.subr.bf16.mxu0 0
    %1954 = vmatpush2.bf16.msra.mxu0 0
    %1955 = vmatprep.subr.bf16.mxu0 0
    %1956 = vmatpush2.bf16.msra.mxu0 0
    %1957 = vmatprep.subr.bf16.mxu0 0
    %1958 = vmatpush2.bf16.msra.mxu0 0
    %1959 = vmatprep.subr.bf16.mxu0 0
    %1960 = vmatpush2.bf16.msra.mxu0 0
    %1961 = vmatprep.subr.bf16.mxu0 0
    %1962 = vmatpush2.bf16.msra.mxu0 0
    %1963 = vmatprep.mubr.bf16.mxu0 0
    %1964 = vmatmul.mubr.bf16.gmra.mxu0 %v1929
    %v1965 = vpop.f32.mrf.mxu0
    %v1966 = vadd.f32 0.0, %v1965
    %v1967 = vpop.f32.mrf.mxu0
    %v1968 = vpop.f32.mrf.mxu0
    %v1969 = vpop.f32.mrf.mxu0
    %1970 = vdwg.mxu0
    %v1971 = vadd.f32 %v1811, %v1966
    %1972 = vrot.lane.b32.xlu0 %v1509, 32
    %v1973 = vpop.permute.xlu0 %1972
    %1974 = vrot.lane.b32.xlu0 %v1510, 32
    %v1975 = vpop.permute.xlu0 %1974
    %v1977 = vsel %vm824, %v1973, 0
    %v1980 = vsel %vm824, %v1975, 0
    %1982 = vmatprep.subr.bf16.mxu0 0
    %1983 = vmatpush1.bf16.xpose.msra.mxu0 0
    %1984 = vmatprep.subr.bf16.mxu0 0
    %1985 = vmatpush1.bf16.xpose.msra.mxu0 0
    %1986 = vmatprep.subr.bf16.mxu0 0
    %1987 = vmatpush1.bf16.xpose.msra.mxu0 0
    %1988 = vmatprep.subr.bf16.mxu0 0
    %1989 = vmatpush1.bf16.xpose.msra.mxu0 0
    %1990 = vmatprep.subr.bf16.mxu0 0
    %1991 = vmatpush1.bf16.xpose.msra.mxu0 0
    %1992 = vmatprep.subr.bf16.mxu0 0
    %1993 = vmatpush1.bf16.xpose.msra.mxu0 0
    %1994 = vmatprep.subr.bf16.mxu0 0
    %1995 = vmatpush1.bf16.xpose.msra.mxu0 0
    %1996 = vmatprep.subr.bf16.mxu0 0
    %1997 = vmatpush1.bf16.xpose.msra.mxu0 %v1980
    %1998 = vmatprep.subr.bf16.mxu0 0
    %1999 = vmatpush2.bf16.xpose.msra.mxu0 0
    %2000 = vmatprep.subr.bf16.mxu0 0
    %2001 = vmatpush2.bf16.xpose.msra.mxu0 0
    %2002 = vmatprep.subr.bf16.mxu0 0
    %2003 = vmatpush2.bf16.xpose.msra.mxu0 0
    %2004 = vmatprep.subr.bf16.mxu0 0
    %2005 = vmatpush2.bf16.xpose.msra.mxu0 0
    %2006 = vmatprep.subr.bf16.mxu0 0
    %2007 = vmatpush2.bf16.xpose.msra.mxu0 0
    %2008 = vmatprep.subr.bf16.mxu0 0
    %2009 = vmatpush2.bf16.xpose.msra.mxu0 0
    %2010 = vmatprep.subr.bf16.mxu0 0
    %2011 = vmatpush2.bf16.xpose.msra.mxu0 0
    %2012 = vmatprep.subr.bf16.mxu0 0
    %2013 = vmatpush2.bf16.xpose.msra.mxu0 0
    %2014 = vmatprep.mubr.bf16.mxu0 0
    %2015 = vmatmul.mubr.bf16.gmra.mxu0 %v1977
    %v2016 = vpop.f32.mrf.mxu0
    %v2017 = vadd.f32 0.0, %v2016
    %v2018 = vpop.f32.mrf.mxu0
    %v2019 = vpop.f32.mrf.mxu0
    %v2020 = vpop.f32.mrf.mxu0
    %2021 = vdwg.mxu0
    %v2022 = vsel %vm517, %v2017, -1e+30
    %v2023 = vsel %vm872, %v2022, -inf
    %2024 = vmax.xlane.f32.xlu0 %v2023
    %v2025 = vpop.xlane.xlu0 %2024
    %v2026 = vsub.f32 %v2022, %v2025
    %v2027 = vmul.f32 %v2026, 1.442695
    %v2028 = vpow.pop %v2027
    %v2029 = vsel %vm872, %v2028, 0.0
    %2030 = vadd.xlane.f32.xlu0 %v2029
    %v2031 = vpop.xlane.xlu0 %2030
    %v2032 = vrcp.pop %v2031
    %v2033 = vmul.f32 %v2028, %v2032
    %v2034 = vpack.c.bf16 %v2033, %v2033
    %2035 = vrot.lane.b32.xlu0 %v1570, 32
    %v2036 = vpop.permute.xlu0 %2035
    %v2038 = vsel %vm872, %v2034, 0
    %v2041 = vsel %vm500, %v2036, 0
    %2043 = vmatprep.subr.bf16.mxu0 0
    %2044 = vmatpush1.bf16.msra.mxu0 0
    %2045 = vmatprep.subr.bf16.mxu0 0
    %2046 = vmatpush1.bf16.msra.mxu0 0
    %2047 = vmatprep.subr.bf16.mxu0 0
    %2048 = vmatpush1.bf16.msra.mxu0 0
    %2049 = vmatprep.subr.bf16.mxu0 0
    %2050 = vmatpush1.bf16.msra.mxu0 0
    %2051 = vmatprep.subr.bf16.mxu0 0
    %2052 = vmatpush1.bf16.msra.mxu0 0
    %2053 = vmatprep.subr.bf16.mxu0 0
    %2054 = vmatpush1.bf16.msra.mxu0 0
    %2055 = vmatprep.subr.bf16.mxu0 0
    %2056 = vmatpush1.bf16.msra.mxu0 0
    %2057 = vmatprep.subr.bf16.mxu0 0
    %2058 = vmatpush1.bf16.msra.mxu0 %v2041
    %2059 = vmatprep.subr.bf16.mxu0 0
    %2060 = vmatpush2.bf16.msra.mxu0 0
    %2061 = vmatprep.subr.bf16.mxu0 0
    %2062 = vmatpush2.bf16.msra.mxu0 0
    %2063 = vmatprep.subr.bf16.mxu0 0
    %2064 = vmatpush2.bf16.msra.mxu0 0
    %2065 = vmatprep.subr.bf16.mxu0 0
    %2066 = vmatpush2.bf16.msra.mxu0 0
    %2067 = vmatprep.subr.bf16.mxu0 0
    %2068 = vmatpush2.bf16.msra.mxu0 0
    %2069 = vmatprep.subr.bf16.mxu0 0
    %2070 = vmatpush2.bf16.msra.mxu0 0
    %2071 = vmatprep.subr.bf16.mxu0 0
    %2072 = vmatpush2.bf16.msra.mxu0 0
    %2073 = vmatprep.subr.bf16.mxu0 0
    %2074 = vmatpush2.bf16.msra.mxu0 0
    %2075 = vmatprep.mubr.bf16.mxu0 0
    %2076 = vmatmul.mubr.bf16.gmra.mxu0 %v2038
    %v2077 = vpop.f32.mrf.mxu0
    %v2078 = vadd.f32 0.0, %v2077
    %v2079 = vpop.f32.mrf.mxu0
    %v2080 = vpop.f32.mrf.mxu0
    %v2081 = vpop.f32.mrf.mxu0
    %2082 = vdwg.mxu0
    %v2083 = vpack.c.bf16 %v2078, %v2078
    %v2085 = vsel %vm824, %v2083, 0
    %2087 = vmatprep.subr.bf16.mxu0 0
    %2088 = vmatpush1.bf16.msra.mxu0 0
    %2089 = vmatprep.subr.bf16.mxu0 0
    %2090 = vmatpush1.bf16.msra.mxu0 0
    %2091 = vmatprep.subr.bf16.mxu0 0
    %2092 = vmatpush1.bf16.msra.mxu0 0
    %2093 = vmatprep.subr.bf16.mxu0 0
    %2094 = vmatpush1.bf16.msra.mxu0 0
    %2095 = vmatprep.subr.bf16.mxu0 0
    %2096 = vmatpush1.bf16.msra.mxu0 0
    %2097 = vmatprep.subr.bf16.mxu0 0
    %2098 = vmatpush1.bf16.msra.mxu0 0
    %2099 = vmatprep.subr.bf16.mxu0 0
    %2100 = vmatpush1.bf16.msra.mxu0 %v1462
    %2101 = vmatprep.subr.bf16.mxu0 0
    %2102 = vmatpush1.bf16.msra.mxu0 %v1461
    %2103 = vmatprep.subr.bf16.mxu0 0
    %2104 = vmatpush2.bf16.msra.mxu0 0
    %2105 = vmatprep.subr.bf16.mxu0 0
    %2106 = vmatpush2.bf16.msra.mxu0 0
    %2107 = vmatprep.subr.bf16.mxu0 0
    %2108 = vmatpush2.bf16.msra.mxu0 0
    %2109 = vmatprep.subr.bf16.mxu0 0
    %2110 = vmatpush2.bf16.msra.mxu0 0
    %2111 = vmatprep.subr.bf16.mxu0 0
    %2112 = vmatpush2.bf16.msra.mxu0 0
    %2113 = vmatprep.subr.bf16.mxu0 0
    %2114 = vmatpush2.bf16.msra.mxu0 0
    %2115 = vmatprep.subr.bf16.mxu0 0
    %2116 = vmatpush2.bf16.msra.mxu0 0
    %2117 = vmatprep.subr.bf16.mxu0 0
    %2118 = vmatpush2.bf16.msra.mxu0 0
    %2119 = vmatprep.mubr.bf16.mxu0 0
    %2120 = vmatmul.mubr.bf16.gmra.mxu0 %v2085
    %v2121 = vpop.f32.mrf.mxu0
    %v2122 = vadd.f32 0.0, %v2121
    %v2123 = vpop.f32.mrf.mxu0
    %v2124 = vpop.f32.mrf.mxu0
    %v2125 = vpop.f32.mrf.mxu0
    %2126 = vdwg.mxu0
    %v2127 = vadd.f32 %v1971, %v2122
    %v2128 = vadd.f32 %v512, %v1508
    %v2129 = vadd.f32 %v514, %v2127
    %v2130 = vld [vmem:[%s21] sm:$0x1]
    %v2132 = vlaneseq
    %v2133 = vshrl.u32 %v2132, 7
    %v2134 = vsub.s32 0, %v2133
    %v2135 = vrot.slane %v2130, %v2134
    %v2137 = vadd.f32 %v2128, %v2135
    %v2138 = vadd.f32 %v2129, %v2135
    %v2139 = vld [vmem:[%s23] sm:$0x1]
    %v2140 = vld [vmem:[%s25] sm:$0x1]
    %2141 = vadd.xlane.f32.xlu0 %v2137
    %v2142 = vpop.xlane.xlu0 %2141
    %2143 = vadd.xlane.f32.xlu0 %v2138
    %v2144 = vpop.xlane.xlu0 %2143
    %v2145 = vmul.f32 %v2142, %v524
    %v2146 = vmul.f32 %v2144, %v524
    %v2147 = vsub.f32 %v2137, %v2145
    %v2148 = vsub.f32 %v2138, %v2146
    %v2149 = vmul.f32 %v2147, %v2147
    %v2150 = vmul.f32 %v2148, %v2148
    %2151 = vadd.xlane.f32.xlu0 %v2149
    %v2152 = vpop.xlane.xlu0 %2151
    %2153 = vadd.xlane.f32.xlu0 %v2150
    %v2154 = vpop.xlane.xlu0 %2153
    %v2155 = vmul.f32 %v2152, %v524
    %v2156 = vmul.f32 %v2154, %v524
    %v2157 = vadd.f32 %v2155, 1e-06
    %v2158 = vadd.f32 %v2156, 1e-06
    %v2159 = vrsqrt.pop %v2157
    %v2160 = vrsqrt.pop %v2158
    %v2161 = vmul.f32 %v2147, %v2159
    %v2162 = vmul.f32 %v2148, %v2160
    %v2164 = vlaneseq
    %v2165 = vshrl.u32 %v2164, 7
    %v2166 = vsub.s32 0, %v2165
    %v2167 = vrot.slane %v2139, %v2166
    %v2169 = vmul.f32 %v2161, %v2167
    %v2170 = vmul.f32 %v2162, %v2167
    %v2172 = vlaneseq
    %v2173 = vshrl.u32 %v2172, 7
    %v2174 = vsub.s32 0, %v2173
    %v2175 = vrot.slane %v2140, %v2174
    %v2177 = vadd.f32 %v2169, %v2175
    %v2178 = vadd.f32 %v2170, %v2175
    %v2179 = vpack.c.bf16 %v2178, %v2177
    %v2180 = vld [vmem:[#allocation17] sm:$0xff]
    %v2181 = vld [vmem:[#allocation17 + $0x8] sm:$0xff]
    %v2182 = vld [vmem:[#allocation17 + $0x10] sm:$0xff]
    %v2183 = vld [vmem:[#allocation17 + $0x18] sm:$0xff]
    %v2184 = vld [vmem:[#allocation17 + $0x20] sm:$0xff]
    %v2185 = vld [vmem:[#allocation17 + $0x28] sm:$0xff]
    %v2186 = vld [vmem:[#allocation17 + $0x30] sm:$0xff]
    %v2187 = vld [vmem:[#allocation17 + $0x38] sm:$0xff]
    %v2188 = vld [vmem:[#allocation17 + $0x40] sm:$0xff]
    %v2189 = vld [vmem:[#allocation17 + $0x48] sm:$0xff]
    %v2190 = vld [vmem:[#allocation17 + $0x50] sm:$0xff]
    %v2191 = vld [vmem:[#allocation17 + $0x58] sm:$0xff]
    %v2192 = vld [vmem:[#allocation17 + $0x60] sm:$0xff]
    %v2193 = vld [vmem:[#allocation17 + $0x68] sm:$0xff]
    %v2194 = vld [vmem:[#allocation17 + $0x70] sm:$0xff]
    %v2195 = vld [vmem:[#allocation17 + $0x78] sm:$0xff]
    %v2196 = vld [vmem:[#allocation17 + $0x80] sm:$0xff]
    %v2197 = vld [vmem:[#allocation17 + $0x88] sm:$0xff]
    %v2198 = vld [vmem:[#allocation17 + $0x90] sm:$0xff]
    %v2199 = vld [vmem:[#allocation17 + $0x98] sm:$0xff]
    %v2200 = vld [vmem:[#allocation17 + $0xa0] sm:$0xff]
    %v2201 = vld [vmem:[#allocation17 + $0xa8] sm:$0xff]
    %v2202 = vld [vmem:[#allocation17 + $0xb0] sm:$0xff]
    %v2203 = vld [vmem:[#allocation17 + $0xb8] sm:$0xff]
    %v2204 = vld [vmem:[#allocation17 + $0xc0] sm:$0xff]
    %v2205 = vld [vmem:[#allocation17 + $0xc8] sm:$0xff]
    %v2206 = vld [vmem:[#allocation17 + $0xd0] sm:$0xff]
    %v2207 = vld [vmem:[#allocation17 + $0xd8] sm:$0xff]
    %v2208 = vld [vmem:[#allocation17 + $0xe0] sm:$0xff]
    %v2209 = vld [vmem:[#allocation17 + $0xe8] sm:$0xff]
    %v2210 = vld [vmem:[#allocation17 + $0xf0] sm:$0xff]
    %v2211 = vld [vmem:[#allocation17 + $0xf8] sm:$0xff]
    %v2212 = vld [vmem:[%s29] sm:$0xf]
    %v2214 = vlaneseq
    %v2215 = vshrl.u32 %v2214, 7
    %v2216 = vsub.s32 0, %v2215
    %v2217 = vrot.slane %v2212, %v2216
    %v2218 = vlaneseq
    %v2219 = vshrl.u32 %v2218, 7
    %v2220 = vsub.s32 1, %v2219
    %v2221 = vrot.slane %v2212, %v2220
    %v2222 = vlaneseq
    %v2223 = vshrl.u32 %v2222, 7
    %v2224 = vsub.s32 2, %v2223
    %v2225 = vrot.slane %v2212, %v2224
    %v2226 = vlaneseq
    %v2227 = vshrl.u32 %v2226, 7
    %v2228 = vsub.s32 3, %v2227
    %v2229 = vrot.slane %v2212, %v2228
    %v2266 = vunpack.c.l.b16 %v2180
    %v2267 = vunpack.c.h.b16 %v2180
    %v2268 = vunpack.c.l.b16 %v2181
    %v2269 = vunpack.c.h.b16 %v2181
    %v2270 = vunpack.c.l.b16 %v2182
    %v2271 = vunpack.c.h.b16 %v2182
    %v2272 = vunpack.c.l.b16 %v2183
    %v2273 = vunpack.c.h.b16 %v2183
    %v2274 = vunpack.c.l.b16 %v2184
    %v2275 = vunpack.c.h.b16 %v2184
    %v2276 = vunpack.c.l.b16 %v2185
    %v2277 = vunpack.c.h.b16 %v2185
    %v2278 = vunpack.c.l.b16 %v2186
    %v2279 = vunpack.c.h.b16 %v2186
    %v2280 = vunpack.c.l.b16 %v2187
    %v2281 = vunpack.c.h.b16 %v2187
    %v2282 = vunpack.c.l.b16 %v2188
    %v2283 = vunpack.c.h.b16 %v2188
    %v2284 = vunpack.c.l.b16 %v2189
    %v2285 = vunpack.c.h.b16 %v2189
    %v2286 = vunpack.c.l.b16 %v2190
    %v2287 = vunpack.c.h.b16 %v2190
    %v2288 = vunpack.c.l.b16 %v2191
    %v2289 = vunpack.c.h.b16 %v2191
    %v2290 = vunpack.c.l.b16 %v2192
    %v2291 = vunpack.c.h.b16 %v2192
    %v2292 = vunpack.c.l.b16 %v2193
    %v2293 = vunpack.c.h.b16 %v2193
    %v2294 = vunpack.c.l.b16 %v2194
    %v2295 = vunpack.c.h.b16 %v2194
    %v2296 = vunpack.c.l.b16 %v2195
    %v2297 = vunpack.c.h.b16 %v2195
    %v2298 = vunpack.c.l.b16 %v2196
    %v2299 = vunpack.c.h.b16 %v2196
    %v2300 = vunpack.c.l.b16 %v2197
    %v2301 = vunpack.c.h.b16 %v2197
    %v2302 = vunpack.c.l.b16 %v2198
    %v2303 = vunpack.c.h.b16 %v2198
    %v2304 = vunpack.c.l.b16 %v2199
    %v2305 = vunpack.c.h.b16 %v2199
    %v2306 = vunpack.c.l.b16 %v2200
    %v2307 = vunpack.c.h.b16 %v2200
    %v2308 = vunpack.c.l.b16 %v2201
    %v2309 = vunpack.c.h.b16 %v2201
    %v2310 = vunpack.c.l.b16 %v2202
    %v2311 = vunpack.c.h.b16 %v2202
    %v2312 = vunpack.c.l.b16 %v2203
    %v2313 = vunpack.c.h.b16 %v2203
    %v2314 = vunpack.c.l.b16 %v2204
    %v2315 = vunpack.c.h.b16 %v2204
    %v2316 = vunpack.c.l.b16 %v2205
    %v2317 = vunpack.c.h.b16 %v2205
    %v2318 = vunpack.c.l.b16 %v2206
    %v2319 = vunpack.c.h.b16 %v2206
    %v2320 = vunpack.c.l.b16 %v2207
    %v2321 = vunpack.c.h.b16 %v2207
    %v2322 = vunpack.c.l.b16 %v2208
    %v2323 = vunpack.c.h.b16 %v2208
    %v2324 = vunpack.c.l.b16 %v2209
    %v2325 = vunpack.c.h.b16 %v2209
    %v2326 = vunpack.c.l.b16 %v2210
    %v2327 = vunpack.c.h.b16 %v2210
    %v2328 = vunpack.c.l.b16 %v2211
    %v2329 = vunpack.c.h.b16 %v2211
    %v2330 = vpack.c.b16 %v2270, %v2266
    %v2331 = vpack.c.b16 %v2271, %v2267
    %v2332 = vpack.c.b16 %v2272, %v2268
    %v2333 = vpack.c.b16 %v2273, %v2269
    %v2334 = vpack.c.b16 %v2278, %v2274
    %v2335 = vpack.c.b16 %v2279, %v2275
    %v2336 = vpack.c.b16 %v2280, %v2276
    %v2337 = vpack.c.b16 %v2281, %v2277
    %v2338 = vpack.c.b16 %v2286, %v2282
    %v2339 = vpack.c.b16 %v2287, %v2283
    %v2340 = vpack.c.b16 %v2288, %v2284
    %v2341 = vpack.c.b16 %v2289, %v2285
    %v2342 = vpack.c.b16 %v2294, %v2290
    %v2343 = vpack.c.b16 %v2295, %v2291
    %v2344 = vpack.c.b16 %v2296, %v2292
    %v2345 = vpack.c.b16 %v2297, %v2293
    %v2346 = vpack.c.b16 %v2302, %v2298
    %v2347 = vpack.c.b16 %v2303, %v2299
    %v2348 = vpack.c.b16 %v2304, %v2300
    %v2349 = vpack.c.b16 %v2305, %v2301
    %v2350 = vpack.c.b16 %v2310, %v2306
    %v2351 = vpack.c.b16 %v2311, %v2307
    %v2352 = vpack.c.b16 %v2312, %v2308
    %v2353 = vpack.c.b16 %v2313, %v2309
    %v2354 = vpack.c.b16 %v2318, %v2314
    %v2355 = vpack.c.b16 %v2319, %v2315
    %v2356 = vpack.c.b16 %v2320, %v2316
    %v2357 = vpack.c.b16 %v2321, %v2317
    %v2358 = vpack.c.b16 %v2326, %v2322
    %v2359 = vpack.c.b16 %v2327, %v2323
    %v2360 = vpack.c.b16 %v2328, %v2324
    %v2361 = vpack.c.b16 %v2329, %v2325
    %2394 = vmatprep.subr.bf16.mxu0 %v2359
    %2395 = vmatpush1.bf16.msra.mxu0 %v2358
    %2396 = vmatprep.subr.bf16.mxu0 %v2355
    %2397 = vmatpush1.bf16.msra.mxu0 %v2354
    %2398 = vmatprep.subr.bf16.mxu0 %v2351
    %2399 = vmatpush1.bf16.msra.mxu0 %v2350
    %2400 = vmatprep.subr.bf16.mxu0 %v2347
    %2401 = vmatpush1.bf16.msra.mxu0 %v2346
    %2402 = vmatprep.subr.bf16.mxu0 %v2343
    %2403 = vmatpush1.bf16.msra.mxu0 %v2342
    %2404 = vmatprep.subr.bf16.mxu0 %v2339
    %2405 = vmatpush1.bf16.msra.mxu0 %v2338
    %2406 = vmatprep.subr.bf16.mxu0 %v2335
    %2407 = vmatpush1.bf16.msra.mxu0 %v2334
    %2408 = vmatprep.subr.bf16.mxu0 %v2331
    %2409 = vmatpush1.bf16.msra.mxu0 %v2330
    %2410 = vmatprep.subr.bf16.mxu0 0
    %2411 = vmatpush2.bf16.msra.mxu0 0
    %2412 = vmatprep.subr.bf16.mxu0 0
    %2413 = vmatpush2.bf16.msra.mxu0 0
    %2414 = vmatprep.subr.bf16.mxu0 0
    %2415 = vmatpush2.bf16.msra.mxu0 0
    %2416 = vmatprep.subr.bf16.mxu0 0
    %2417 = vmatpush2.bf16.msra.mxu0 0
    %2418 = vmatprep.subr.bf16.mxu0 0
    %2419 = vmatpush2.bf16.msra.mxu0 0
    %2420 = vmatprep.subr.bf16.mxu0 0
    %2421 = vmatpush2.bf16.msra.mxu0 0
    %2422 = vmatprep.subr.bf16.mxu0 0
    %2423 = vmatpush2.bf16.msra.mxu0 0
    %2424 = vmatprep.subr.bf16.mxu0 0
    %2425 = vmatpush2.bf16.msra.mxu0 0
    %2426 = vmatprep.mubr.bf16.mxu0 0
    %2427 = vmatmul.mubr.bf16.gmra.mxu0 %v2179
    %v2428 = vpop.f32.mrf.mxu0
    %v2429 = vadd.f32 %v2217, %v2428
    %v2430 = vpop.f32.mrf.mxu0
    %v2431 = vadd.f32 %v2221, %v2430
    %v2432 = vpop.f32.mrf.mxu0
    %v2433 = vadd.f32 %v2217, %v2432
    %v2434 = vpop.f32.mrf.mxu0
    %v2435 = vadd.f32 %v2221, %v2434
    %2436 = vdwg.mxu0
    %2437 = vmatprep.subr.bf16.mxu0 %v2361
    %2438 = vmatpush1.bf16.msra.mxu0 %v2360
    %2439 = vmatprep.subr.bf16.mxu0 %v2357
    %2440 = vmatpush1.bf16.msra.mxu0 %v2356
    %2441 = vmatprep.subr.bf16.mxu0 %v2353
    %2442 = vmatpush1.bf16.msra.mxu0 %v2352
    %2443 = vmatprep.subr.bf16.mxu0 %v2349
    %2444 = vmatpush1.bf16.msra.mxu0 %v2348
    %2445 = vmatprep.subr.bf16.mxu0 %v2345
    %2446 = vmatpush1.bf16.msra.mxu0 %v2344
    %2447 = vmatprep.subr.bf16.mxu0 %v2341
    %2448 = vmatpush1.bf16.msra.mxu0 %v2340
    %2449 = vmatprep.subr.bf16.mxu0 %v2337
    %2450 = vmatpush1.bf16.msra.mxu0 %v2336
    %2451 = vmatprep.subr.bf16.mxu0 %v2333
    %2452 = vmatpush1.bf16.msra.mxu0 %v2332
    %2453 = vmatprep.subr.bf16.mxu0 0
    %2454 = vmatpush2.bf16.msra.mxu0 0
    %2455 = vmatprep.subr.bf16.mxu0 0
    %2456 = vmatpush2.bf16.msra.mxu0 0
    %2457 = vmatprep.subr.bf16.mxu0 0
    %2458 = vmatpush2.bf16.msra.mxu0 0
    %2459 = vmatprep.subr.bf16.mxu0 0
    %2460 = vmatpush2.bf16.msra.mxu0 0
    %2461 = vmatprep.subr.bf16.mxu0 0
    %2462 = vmatpush2.bf16.msra.mxu0 0
    %2463 = vmatprep.subr.bf16.mxu0 0
    %2464 = vmatpush2.bf16.msra.mxu0 0
    %2465 = vmatprep.subr.bf16.mxu0 0
    %2466 = vmatpush2.bf16.msra.mxu0 0
    %2467 = vmatprep.subr.bf16.mxu0 0
    %2468 = vmatpush2.bf16.msra.mxu0 0
    %2469 = vmatprep.mubr.bf16.mxu0 0
    %2470 = vmatmul.mubr.bf16.gmra.mxu0 %v2179
    %v2471 = vpop.f32.mrf.mxu0
    %v2472 = vadd.f32 %v2225, %v2471
    %v2473 = vpop.f32.mrf.mxu0
    %v2474 = vadd.f32 %v2229, %v2473
    %v2475 = vpop.f32.mrf.mxu0
    %v2476 = vadd.f32 %v2225, %v2475
    %v2477 = vpop.f32.mrf.mxu0
    %v2478 = vadd.f32 %v2229, %v2477
    %2479 = vdwg.mxu0
    %v2480 = vmul.f32 %v2429, %v2429
    %v2481 = vmul.f32 %v2431, %v2431
    %v2482 = vmul.f32 %v2472, %v2472
    %v2483 = vmul.f32 %v2474, %v2474
    %v2484 = vmul.f32 %v2433, %v2433
    %v2485 = vmul.f32 %v2435, %v2435
    %v2486 = vmul.f32 %v2476, %v2476
    %v2487 = vmul.f32 %v2478, %v2478
    %v2488 = vmul.f32 %v2429, %v2480
    %v2489 = vmul.f32 %v2431, %v2481
    %v2490 = vmul.f32 %v2472, %v2482
    %v2491 = vmul.f32 %v2474, %v2483
    %v2492 = vmul.f32 %v2433, %v2484
    %v2493 = vmul.f32 %v2435, %v2485
    %v2494 = vmul.f32 %v2476, %v2486
    %v2495 = vmul.f32 %v2478, %v2487
    %v2496 = vmul.f32 %v2488, 0.044715
    %v2497 = vmul.f32 %v2489, 0.044715
    %v2498 = vmul.f32 %v2490, 0.044715
    %v2499 = vmul.f32 %v2491, 0.044715
    %v2500 = vmul.f32 %v2492, 0.044715
    %v2501 = vmul.f32 %v2493, 0.044715
    %v2502 = vmul.f32 %v2494, 0.044715
    %v2503 = vmul.f32 %v2495, 0.044715
    %v2504 = vadd.f32 %v2429, %v2496
    %v2505 = vadd.f32 %v2431, %v2497
    %v2506 = vadd.f32 %v2472, %v2498
    %v2507 = vadd.f32 %v2474, %v2499
    %v2508 = vadd.f32 %v2433, %v2500
    %v2509 = vadd.f32 %v2435, %v2501
    %v2510 = vadd.f32 %v2476, %v2502
    %v2511 = vadd.f32 %v2478, %v2503
    %v2512 = vmul.f32 %v2504, 0.7978846
    %v2513 = vmul.f32 %v2505, 0.7978846
    %v2514 = vmul.f32 %v2506, 0.7978846
    %v2515 = vmul.f32 %v2507, 0.7978846
    %v2516 = vmul.f32 %v2508, 0.7978846
    %v2517 = vmul.f32 %v2509, 0.7978846
    %v2518 = vmul.f32 %v2510, 0.7978846
    %v2519 = vmul.f32 %v2511, 0.7978846
    %v2520 = vtanh.pop %v2512
    %v2521 = vtanh.pop %v2513
    %v2522 = vtanh.pop %v2514
    %v2523 = vtanh.pop %v2515
    %v2524 = vtanh.pop %v2516
    %v2525 = vtanh.pop %v2517
    %v2526 = vtanh.pop %v2518
    %v2527 = vtanh.pop %v2519
    %v2528 = vadd.f32 %v2520, 1.0
    %v2529 = vadd.f32 %v2521, 1.0
    %v2530 = vadd.f32 %v2522, 1.0
    %v2531 = vadd.f32 %v2523, 1.0
    %v2532 = vadd.f32 %v2524, 1.0
    %v2533 = vadd.f32 %v2525, 1.0
    %v2534 = vadd.f32 %v2526, 1.0
    %v2535 = vadd.f32 %v2527, 1.0
    %v2536 = vmul.f32 %v2528, 0.5
    %v2537 = vmul.f32 %v2529, 0.5
    %v2538 = vmul.f32 %v2530, 0.5
    %v2539 = vmul.f32 %v2531, 0.5
    %v2540 = vmul.f32 %v2532, 0.5
    %v2541 = vmul.f32 %v2533, 0.5
    %v2542 = vmul.f32 %v2534, 0.5
    %v2543 = vmul.f32 %v2535, 0.5
    %v2544 = vmul.f32 %v2429, %v2536
    %v2545 = vmul.f32 %v2431, %v2537
    %v2546 = vmul.f32 %v2472, %v2538
    %v2547 = vmul.f32 %v2474, %v2539
    %v2548 = vmul.f32 %v2433, %v2540
    %v2549 = vmul.f32 %v2435, %v2541
    %v2550 = vmul.f32 %v2476, %v2542
    %v2551 = vmul.f32 %v2478, %v2543
    %v2552 = vpack.c.bf16 %v2548, %v2544
    %v2553 = vpack.c.bf16 %v2549, %v2545
    %v2554 = vpack.c.bf16 %v2550, %v2546
    %v2555 = vpack.c.bf16 %v2551, %v2547
    %v2556 = vld [vmem:[#allocation19] sm:$0xf]
    %v2557 = vld [vmem:[#allocation19 + $0x4] sm:$0xf]
    %v2558 = vld [vmem:[#allocation19 + $0x8] sm:$0xf]
    %v2559 = vld [vmem:[#allocation19 + $0xc] sm:$0xf]
    %v2560 = vld [vmem:[#allocation19 + $0x10] sm:$0xf]
    %v2561 = vld [vmem:[#allocation19 + $0x14] sm:$0xf]
    %v2562 = vld [vmem:[#allocation19 + $0x18] sm:$0xf]
    %v2563 = vld [vmem:[#allocation19 + $0x1c] sm:$0xf]
    %v2564 = vld [vmem:[#allocation19 + $0x20] sm:$0xf]
    %v2565 = vld [vmem:[#allocation19 + $0x24] sm:$0xf]
    %v2566 = vld [vmem:[#allocation19 + $0x28] sm:$0xf]
    %v2567 = vld [vmem:[#allocation19 + $0x2c] sm:$0xf]
    %v2568 = vld [vmem:[#allocation19 + $0x30] sm:$0xf]
    %v2569 = vld [vmem:[#allocation19 + $0x34] sm:$0xf]
    %v2570 = vld [vmem:[#allocation19 + $0x38] sm:$0xf]
    %v2571 = vld [vmem:[#allocation19 + $0x3c] sm:$0xf]
    %v2572 = vld [vmem:[#allocation19 + $0x40] sm:$0xf]
    %v2573 = vld [vmem:[#allocation19 + $0x44] sm:$0xf]
    %v2574 = vld [vmem:[#allocation19 + $0x48] sm:$0xf]
    %v2575 = vld [vmem:[#allocation19 + $0x4c] sm:$0xf]
    %v2576 = vld [vmem:[#allocation19 + $0x50] sm:$0xf]
    %v2577 = vld [vmem:[#allocation19 + $0x54] sm:$0xf]
    %v2578 = vld [vmem:[#allocation19 + $0x58] sm:$0xf]
    %v2579 = vld [vmem:[#allocation19 + $0x5c] sm:$0xf]
    %v2580 = vld [vmem:[#allocation19 + $0x60] sm:$0xf]
    %v2581 = vld [vmem:[#allocation19 + $0x64] sm:$0xf]
    %v2582 = vld [vmem:[#allocation19 + $0x68] sm:$0xf]
    %v2583 = vld [vmem:[#allocation19 + $0x6c] sm:$0xf]
    %v2584 = vld [vmem:[#allocation19 + $0x70] sm:$0xf]
    %v2585 = vld [vmem:[#allocation19 + $0x74] sm:$0xf]
    %v2586 = vld [vmem:[#allocation19 + $0x78] sm:$0xf]
    %v2587 = vld [vmem:[#allocation19 + $0x7c] sm:$0xf]
    %v2588 = vld [vmem:[#allocation19 + $0x80] sm:$0xf]
    %v2589 = vld [vmem:[#allocation19 + $0x84] sm:$0xf]
    %v2590 = vld [vmem:[#allocation19 + $0x88] sm:$0xf]
    %v2591 = vld [vmem:[#allocation19 + $0x8c] sm:$0xf]
    %v2592 = vld [vmem:[#allocation19 + $0x90] sm:$0xf]
    %v2593 = vld [vmem:[#allocation19 + $0x94] sm:$0xf]
    %v2594 = vld [vmem:[#allocation19 + $0x98] sm:$0xf]
    %v2595 = vld [vmem:[#allocation19 + $0x9c] sm:$0xf]
    %v2596 = vld [vmem:[#allocation19 + $0xa0] sm:$0xf]
    %v2597 = vld [vmem:[#allocation19 + $0xa4] sm:$0xf]
    %v2598 = vld [vmem:[#allocation19 + $0xa8] sm:$0xf]
    %v2599 = vld [vmem:[#allocation19 + $0xac] sm:$0xf]
    %v2600 = vld [vmem:[#allocation19 + $0xb0] sm:$0xf]
    %v2601 = vld [vmem:[#allocation19 + $0xb4] sm:$0xf]
    %v2602 = vld [vmem:[#allocation19 + $0xb8] sm:$0xf]
    %v2603 = vld [vmem:[#allocation19 + $0xbc] sm:$0xf]
    %v2604 = vld [vmem:[#allocation19 + $0xc0] sm:$0xf]
    %v2605 = vld [vmem:[#allocation19 + $0xc4] sm:$0xf]
    %v2606 = vld [vmem:[#allocation19 + $0xc8] sm:$0xf]
    %v2607 = vld [vmem:[#allocation19 + $0xcc] sm:$0xf]
    %v2608 = vld [vmem:[#allocation19 + $0xd0] sm:$0xf]
    %v2609 = vld [vmem:[#allocation19 + $0xd4] sm:$0xf]
    %v2610 = vld [vmem:[#allocation19 + $0xd8] sm:$0xf]
    %v2611 = vld [vmem:[#allocation19 + $0xdc] sm:$0xf]
    %v2612 = vld [vmem:[#allocation19 + $0xe0] sm:$0xf]
    %v2613 = vld [vmem:[#allocation19 + $0xe4] sm:$0xf]
    %v2614 = vld [vmem:[#allocation19 + $0xe8] sm:$0xf]
    %v2615 = vld [vmem:[#allocation19 + $0xec] sm:$0xf]
    %v2616 = vld [vmem:[#allocation19 + $0xf0] sm:$0xf]
    %v2617 = vld [vmem:[#allocation19 + $0xf4] sm:$0xf]
    %v2618 = vld [vmem:[#allocation19 + $0xf8] sm:$0xf]
    %v2619 = vld [vmem:[#allocation19 + $0xfc] sm:$0xf]
    %v2620 = vld [vmem:[%s33] sm:$0x1]
    %v2622 = vlaneseq
    %v2623 = vshrl.u32 %v2622, 7
    %v2624 = vsub.s32 0, %v2623
    %v2625 = vrot.slane %v2620, %v2624
    %v2691 = vunpack.c.l.b16 %v2556
    %v2692 = vunpack.c.l.b16 %v2557
    %v2693 = vunpack.c.l.b16 %v2558
    %v2694 = vunpack.c.l.b16 %v2559
    %v2695 = vunpack.c.l.b16 %v2560
    %v2696 = vunpack.c.l.b16 %v2561
    %v2697 = vunpack.c.l.b16 %v2562
    %v2698 = vunpack.c.l.b16 %v2563
    %v2699 = vunpack.c.l.b16 %v2564
    %v2700 = vunpack.c.l.b16 %v2565
    %v2701 = vunpack.c.l.b16 %v2566
    %v2702 = vunpack.c.l.b16 %v2567
    %v2703 = vunpack.c.l.b16 %v2568
    %v2704 = vunpack.c.l.b16 %v2569
    %v2705 = vunpack.c.l.b16 %v2570
    %v2706 = vunpack.c.l.b16 %v2571
    %v2707 = vunpack.c.l.b16 %v2572
    %v2708 = vunpack.c.l.b16 %v2573
    %v2709 = vunpack.c.l.b16 %v2574
    %v2710 = vunpack.c.l.b16 %v2575
    %v2711 = vunpack.c.l.b16 %v2576
    %v2712 = vunpack.c.l.b16 %v2577
    %v2713 = vunpack.c.l.b16 %v2578
    %v2714 = vunpack.c.l.b16 %v2579
    %v2715 = vunpack.c.l.b16 %v2580
    %v2716 = vunpack.c.l.b16 %v2581
    %v2717 = vunpack.c.l.b16 %v2582
    %v2718 = vunpack.c.l.b16 %v2583
    %v2719 = vunpack.c.l.b16 %v2584
    %v2720 = vunpack.c.l.b16 %v2585
    %v2721 = vunpack.c.l.b16 %v2586
    %v2722 = vunpack.c.l.b16 %v2587
    %v2723 = vunpack.c.l.b16 %v2588
    %v2724 = vunpack.c.l.b16 %v2589
    %v2725 = vunpack.c.l.b16 %v2590
    %v2726 = vunpack.c.l.b16 %v2591
    %v2727 = vunpack.c.l.b16 %v2592
    %v2728 = vunpack.c.l.b16 %v2593
    %v2729 = vunpack.c.l.b16 %v2594
    %v2730 = vunpack.c.l.b16 %v2595
    %v2731 = vunpack.c.l.b16 %v2596
    %v2732 = vunpack.c.l.b16 %v2597
    %v2733 = vunpack.c.l.b16 %v2598
    %v2734 = vunpack.c.l.b16 %v2599
    %v2735 = vunpack.c.l.b16 %v2600
    %v2736 = vunpack.c.l.b16 %v2601
    %v2737 = vunpack.c.l.b16 %v2602
    %v2738 = vunpack.c.l.b16 %v2603
    %v2739 = vunpack.c.l.b16 %v2604
    %v2740 = vunpack.c.l.b16 %v2605
    %v2741 = vunpack.c.l.b16 %v2606
    %v2742 = vunpack.c.l.b16 %v2607
    %v2743 = vunpack.c.l.b16 %v2608
    %v2744 = vunpack.c.l.b16 %v2609
    %v2745 = vunpack.c.l.b16 %v2610
    %v2746 = vunpack.c.l.b16 %v2611
    %v2747 = vunpack.c.l.b16 %v2612
    %v2748 = vunpack.c.l.b16 %v2613
    %v2749 = vunpack.c.l.b16 %v2614
    %v2750 = vunpack.c.l.b16 %v2615
    %v2751 = vunpack.c.l.b16 %v2616
    %v2752 = vunpack.c.l.b16 %v2617
    %v2753 = vunpack.c.l.b16 %v2618
    %v2754 = vunpack.c.l.b16 %v2619
    %v2755 = vpack.c.b16 %v2692, %v2691
    %v2756 = vpack.c.b16 %v2694, %v2693
    %v2757 = vpack.c.b16 %v2696, %v2695
    %v2758 = vpack.c.b16 %v2698, %v2697
    %v2759 = vpack.c.b16 %v2700, %v2699
    %v2760 = vpack.c.b16 %v2702, %v2701
    %v2761 = vpack.c.b16 %v2704, %v2703
    %v2762 = vpack.c.b16 %v2706, %v2705
    %v2763 = vpack.c.b16 %v2708, %v2707
    %v2764 = vpack.c.b16 %v2710, %v2709
    %v2765 = vpack.c.b16 %v2712, %v2711
    %v2766 = vpack.c.b16 %v2714, %v2713
    %v2767 = vpack.c.b16 %v2716, %v2715
    %v2768 = vpack.c.b16 %v2718, %v2717
    %v2769 = vpack.c.b16 %v2720, %v2719
    %v2770 = vpack.c.b16 %v2722, %v2721
    %v2771 = vpack.c.b16 %v2724, %v2723
    %v2772 = vpack.c.b16 %v2726, %v2725
    %v2773 = vpack.c.b16 %v2728, %v2727
    %v2774 = vpack.c.b16 %v2730, %v2729
    %v2775 = vpack.c.b16 %v2732, %v2731
    %v2776 = vpack.c.b16 %v2734, %v2733
    %v2777 = vpack.c.b16 %v2736, %v2735
    %v2778 = vpack.c.b16 %v2738, %v2737
    %v2779 = vpack.c.b16 %v2740, %v2739
    %v2780 = vpack.c.b16 %v2742, %v2741
    %v2781 = vpack.c.b16 %v2744, %v2743
    %v2782 = vpack.c.b16 %v2746, %v2745
    %v2783 = vpack.c.b16 %v2748, %v2747
    %v2784 = vpack.c.b16 %v2750, %v2749
    %v2785 = vpack.c.b16 %v2752, %v2751
    %v2786 = vpack.c.b16 %v2754, %v2753
    %2819 = vmatprep.subr.bf16.mxu0 0
    %2820 = vmatpush1.bf16.msra.mxu0 %v2762
    %2821 = vmatprep.subr.bf16.mxu0 0
    %2822 = vmatpush1.bf16.msra.mxu0 %v2761
    %2823 = vmatprep.subr.bf16.mxu0 0
    %2824 = vmatpush1.bf16.msra.mxu0 %v2760
    %2825 = vmatprep.subr.bf16.mxu0 0
    %2826 = vmatpush1.bf16.msra.mxu0 %v2759
    %2827 = vmatprep.subr.bf16.mxu0 0
    %2828 = vmatpush1.bf16.msra.mxu0 %v2758
    %2829 = vmatprep.subr.bf16.mxu0 0
    %2830 = vmatpush1.bf16.msra.mxu0 %v2757
    %2831 = vmatprep.subr.bf16.mxu0 0
    %2832 = vmatpush1.bf16.msra.mxu0 %v2756
    %2833 = vmatprep.subr.bf16.mxu0 0
    %2834 = vmatpush1.bf16.msra.mxu0 %v2755
    %2835 = vmatprep.subr.bf16.mxu0 0
    %2836 = vmatpush2.bf16.msra.mxu0 %v2770
    %2837 = vmatprep.subr.bf16.mxu0 0
    %2838 = vmatpush2.bf16.msra.mxu0 %v2769
    %2839 = vmatprep.subr.bf16.mxu0 0
    %2840 = vmatpush2.bf16.msra.mxu0 %v2768
    %2841 = vmatprep.subr.bf16.mxu0 0
    %2842 = vmatpush2.bf16.msra.mxu0 %v2767
    %2843 = vmatprep.subr.bf16.mxu0 0
    %2844 = vmatpush2.bf16.msra.mxu0 %v2766
    %2845 = vmatprep.subr.bf16.mxu0 0
    %2846 = vmatpush2.bf16.msra.mxu0 %v2765
    %2847 = vmatprep.subr.bf16.mxu0 0
    %2848 = vmatpush2.bf16.msra.mxu0 %v2764
    %2849 = vmatprep.subr.bf16.mxu0 0
    %2850 = vmatpush2.bf16.msra.mxu0 %v2763
    %2851 = vmatprep.mubr.bf16.mxu0 %v2553
    %2852 = vmatmul.mubr.bf16.gmra.mxu0 %v2552
    %v2853 = vpop.f32.mrf.mxu0
    %v2854 = vadd.f32 %v2625, %v2853
    %v2855 = vpop.f32.mrf.mxu0
    %v2856 = vpop.f32.mrf.mxu0
    %v2857 = vadd.f32 %v2625, %v2856
    %v2858 = vpop.f32.mrf.mxu0
    %2859 = vdwg.mxu0
    %2860 = vmatprep.subr.bf16.mxu0 0
    %2861 = vmatpush1.bf16.msra.mxu0 %v2778
    %2862 = vmatprep.subr.bf16.mxu0 0
    %2863 = vmatpush1.bf16.msra.mxu0 %v2777
    %2864 = vmatprep.subr.bf16.mxu0 0
    %2865 = vmatpush1.bf16.msra.mxu0 %v2776
    %2866 = vmatprep.subr.bf16.mxu0 0
    %2867 = vmatpush1.bf16.msra.mxu0 %v2775
    %2868 = vmatprep.subr.bf16.mxu0 0
    %2869 = vmatpush1.bf16.msra.mxu0 %v2774
    %2870 = vmatprep.subr.bf16.mxu0 0
    %2871 = vmatpush1.bf16.msra.mxu0 %v2773
    %2872 = vmatprep.subr.bf16.mxu0 0
    %2873 = vmatpush1.bf16.msra.mxu0 %v2772
    %2874 = vmatprep.subr.bf16.mxu0 0
    %2875 = vmatpush1.bf16.msra.mxu0 %v2771
    %2876 = vmatprep.subr.bf16.mxu0 0
    %2877 = vmatpush2.bf16.msra.mxu0 %v2786
    %2878 = vmatprep.subr.bf16.mxu0 0
    %2879 = vmatpush2.bf16.msra.mxu0 %v2785
    %2880 = vmatprep.subr.bf16.mxu0 0
    %2881 = vmatpush2.bf16.msra.mxu0 %v2784
    %2882 = vmatprep.subr.bf16.mxu0 0
    %2883 = vmatpush2.bf16.msra.mxu0 %v2783
    %2884 = vmatprep.subr.bf16.mxu0 0
    %2885 = vmatpush2.bf16.msra.mxu0 %v2782
    %2886 = vmatprep.subr.bf16.mxu0 0
    %2887 = vmatpush2.bf16.msra.mxu0 %v2781
    %2888 = vmatprep.subr.bf16.mxu0 0
    %2889 = vmatpush2.bf16.msra.mxu0 %v2780
    %2890 = vmatprep.subr.bf16.mxu0 0
    %2891 = vmatpush2.bf16.msra.mxu0 %v2779
    %2892 = vmatprep.mubr.bf16.mxu0 %v2555
    %2893 = vmatmul.mubr.bf16.gmra.mxu0 %v2554
    %v2894 = vpop.f32.mrf.mxu0
    %v2895 = vadd.f32 %v2854, %v2894
    %v2896 = vpop.f32.mrf.mxu0
    %v2897 = vpop.f32.mrf.mxu0
    %v2898 = vadd.f32 %v2857, %v2897
    %v2899 = vpop.f32.mrf.mxu0
    %2900 = vdwg.mxu0
    %v2901 = vadd.f32 %v2137, %v2895
    %v2902 = vadd.f32 %v2138, %v2898
    %v2903 = vld [vmem:[%s35] sm:$0x1]
    %v2904 = vld [vmem:[%s37] sm:$0x1]
    %2905 = vadd.xlane.f32.xlu0 %v2901
    %v2906 = vpop.xlane.xlu0 %2905
    %2907 = vadd.xlane.f32.xlu0 %v2902
    %v2908 = vpop.xlane.xlu0 %2907
    %v2909 = vmul.f32 %v2906, %v524
    %v2910 = vmul.f32 %v2908, %v524
    %v2911 = vsub.f32 %v2901, %v2909
    %v2912 = vsub.f32 %v2902, %v2910
    %v2913 = vmul.f32 %v2911, %v2911
    %v2914 = vmul.f32 %v2912, %v2912
    %2915 = vadd.xlane.f32.xlu0 %v2913
    %v2916 = vpop.xlane.xlu0 %2915
    %2917 = vadd.xlane.f32.xlu0 %v2914
    %v2918 = vpop.xlane.xlu0 %2917
    %v2919 = vmul.f32 %v2916, %v524
    %v2920 = vmul.f32 %v2918, %v524
    %v2921 = vadd.f32 %v2919, 1e-06
    %v2922 = vadd.f32 %v2920, 1e-06
    %v2923 = vrsqrt.pop %v2921
    %v2924 = vrsqrt.pop %v2922
    %v2925 = vmul.f32 %v2911, %v2923
    %v2926 = vmul.f32 %v2912, %v2924
    %v2928 = vlaneseq
    %v2929 = vshrl.u32 %v2928, 7
    %v2930 = vsub.s32 0, %v2929
    %v2931 = vrot.slane %v2903, %v2930
    %v2933 = vmul.f32 %v2925, %v2931
    %v2934 = vmul.f32 %v2926, %v2931
    %v2936 = vlaneseq
    %v2937 = vshrl.u32 %v2936, 7
    %v2938 = vsub.s32 0, %v2937
    %v2939 = vrot.slane %v2904, %v2938
    %v2941 = vadd.f32 %v2933, %v2939
    %v2942 = vadd.f32 %v2934, %v2939
    %v2943 = vpack.c.bf16 %v2942, %v2941
    %v2944 = vld [vmem:[#allocation20] sm:$0xff]
    %v2945 = vld [vmem:[#allocation20 + $0x8] sm:$0xf]
    %v2946 = vld [vmem:[#allocation20 + $0xc] sm:$0xff]
    %v2947 = vld [vmem:[#allocation20 + $0x14] sm:$0xf]
    %v2948 = vld [vmem:[#allocation20 + $0x18] sm:$0xff]
    %v2949 = vld [vmem:[#allocation20 + $0x20] sm:$0xf]
    %v2950 = vld [vmem:[#allocation20 + $0x24] sm:$0xff]
    %v2951 = vld [vmem:[#allocation20 + $0x2c] sm:$0xf]
    %v2952 = vld [vmem:[#allocation20 + $0x30] sm:$0xff]
    %v2953 = vld [vmem:[#allocation20 + $0x38] sm:$0xf]
    %v2954 = vld [vmem:[#allocation20 + $0x3c] sm:$0xff]
    %v2955 = vld [vmem:[#allocation20 + $0x44] sm:$0xf]
    %v2956 = vld [vmem:[#allocation20 + $0x48] sm:$0xff]
    %v2957 = vld [vmem:[#allocation20 + $0x50] sm:$0xf]
    %v2958 = vld [vmem:[#allocation20 + $0x54] sm:$0xff]
    %v2959 = vld [vmem:[#allocation20 + $0x5c] sm:$0xf]
    %v2960 = vld [vmem:[#allocation20 + $0x60] sm:$0xff]
    %v2961 = vld [vmem:[#allocation20 + $0x68] sm:$0xf]
    %v2962 = vld [vmem:[#allocation20 + $0x6c] sm:$0xff]
    %v2963 = vld [vmem:[#allocation20 + $0x74] sm:$0xf]
    %v2964 = vld [vmem:[#allocation20 + $0x78] sm:$0xff]
    %v2965 = vld [vmem:[#allocation20 + $0x80] sm:$0xf]
    %v2966 = vld [vmem:[#allocation20 + $0x84] sm:$0xff]
    %v2967 = vld [vmem:[#allocation20 + $0x8c] sm:$0xf]
    %v2968 = vld [vmem:[#allocation20 + $0x90] sm:$0xff]
    %v2969 = vld [vmem:[#allocation20 + $0x98] sm:$0xf]
    %v2970 = vld [vmem:[#allocation20 + $0x9c] sm:$0xff]
    %v2971 = vld [vmem:[#allocation20 + $0xa4] sm:$0xf]
    %v2972 = vld [vmem:[#allocation20 + $0xa8] sm:$0xff]
    %v2973 = vld [vmem:[#allocation20 + $0xb0] sm:$0xf]
    %v2974 = vld [vmem:[#allocation20 + $0xb4] sm:$0xff]
    %v2975 = vld [vmem:[#allocation20 + $0xbc] sm:$0xf]
    %v2976 = vld [vmem:[%s41] sm:$0x7]
    %v2978 = vlaneseq
    %v2979 = vshrl.u32 %v2978, 7
    %v2980 = vsub.s32 0, %v2979
    %v2981 = vrot.slane %v2976, %v2980
    %v2982 = vlaneseq
    %v2983 = vshrl.u32 %v2982, 7
    %v2984 = vsub.s32 1, %v2983
    %v2985 = vrot.slane %v2976, %v2984
    %v2986 = vlaneseq
    %v2987 = vshrl.u32 %v2986, 7
    %v2988 = vsub.s32 2, %v2987
    %v2989 = vrot.slane %v2976, %v2988
    %v3025 = vunpack.c.l.b16 %v2944
    %v3026 = vunpack.c.h.b16 %v2944
    %v3027 = vunpack.c.l.b16 %v2945
    %v3028 = vunpack.c.l.b16 %v2946
    %v3029 = vunpack.c.h.b16 %v2946
    %v3030 = vunpack.c.l.b16 %v2947
    %v3031 = vunpack.c.l.b16 %v2948
    %v3032 = vunpack.c.h.b16 %v2948
    %v3033 = vunpack.c.l.b16 %v2949
    %v3034 = vunpack.c.l.b16 %v2950
    %v3035 = vunpack.c.h.b16 %v2950
    %v3036 = vunpack.c.l.b16 %v2951
    %v3037 = vunpack.c.l.b16 %v2952
    %v3038 = vunpack.c.h.b16 %v2952
    %v3039 = vunpack.c.l.b16 %v2953
    %v3040 = vunpack.c.l.b16 %v2954
    %v3041 = vunpack.c.h.b16 %v2954
    %v3042 = vunpack.c.l.b16 %v2955
    %v3043 = vunpack.c.l.b16 %v2956
    %v3044 = vunpack.c.h.b16 %v2956
    %v3045 = vunpack.c.l.b16 %v2957
    %v3046 = vunpack.c.l.b16 %v2958
    %v3047 = vunpack.c.h.b16 %v2958
    %v3048 = vunpack.c.l.b16 %v2959
    %v3049 = vunpack.c.l.b16 %v2960
    %v3050 = vunpack.c.h.b16 %v2960
    %v3051 = vunpack.c.l.b16 %v2961
    %v3052 = vunpack.c.l.b16 %v2962
    %v3053 = vunpack.c.h.b16 %v2962
    %v3054 = vunpack.c.l.b16 %v2963
    %v3055 = vunpack.c.l.b16 %v2964
    %v3056 = vunpack.c.h.b16 %v2964
    %v3057 = vunpack.c.l.b16 %v2965
    %v3058 = vunpack.c.l.b16 %v2966
    %v3059 = vunpack.c.h.b16 %v2966
    %v3060 = vunpack.c.l.b16 %v2967
    %v3061 = vunpack.c.l.b16 %v2968
    %v3062 = vunpack.c.h.b16 %v2968
    %v3063 = vunpack.c.l.b16 %v2969
    %v3064 = vunpack.c.l.b16 %v2970
    %v3065 = vunpack.c.h.b16 %v2970
    %v3066 = vunpack.c.l.b16 %v2971
    %v3067 = vunpack.c.l.b16 %v2972
    %v3068 = vunpack.c.h.b16 %v2972
    %v3069 = vunpack.c.l.b16 %v2973
    %v3070 = vunpack.c.l.b16 %v2974
    %v3071 = vunpack.c.h.b16 %v2974
    %v3072 = vunpack.c.l.b16 %v2975
    %v3073 = vpack.c.b16 %v3028, %v3025
    %v3074 = vpack.c.b16 %v3029, %v3026
    %v3075 = vpack.c.b16 %v3030, %v3027
    %v3076 = vpack.c.b16 %v3034, %v3031
    %v3077 = vpack.c.b16 %v3035, %v3032
    %v3078 = vpack.c.b16 %v3036, %v3033
    %v3079 = vpack.c.b16 %v3040, %v3037
    %v3080 = vpack.c.b16 %v3041, %v3038
    %v3081 = vpack.c.b16 %v3042, %v3039
    %v3082 = vpack.c.b16 %v3046, %v3043
    %v3083 = vpack.c.b16 %v3047, %v3044
    %v3084 = vpack.c.b16 %v3048, %v3045
    %v3085 = vpack.c.b16 %v3052, %v3049
    %v3086 = vpack.c.b16 %v3053, %v3050
    %v3087 = vpack.c.b16 %v3054, %v3051
    %v3088 = vpack.c.b16 %v3058, %v3055
    %v3089 = vpack.c.b16 %v3059, %v3056
    %v3090 = vpack.c.b16 %v3060, %v3057
    %v3091 = vpack.c.b16 %v3064, %v3061
    %v3092 = vpack.c.b16 %v3065, %v3062
    %v3093 = vpack.c.b16 %v3066, %v3063
    %v3094 = vpack.c.b16 %v3070, %v3067
    %v3095 = vpack.c.b16 %v3071, %v3068
    %v3096 = vpack.c.b16 %v3072, %v3069
    %3121 = vmatprep.subr.bf16.mxu0 %v3095
    %3122 = vmatpush1.bf16.msra.mxu0 %v3094
    %3123 = vmatprep.subr.bf16.mxu0 %v3092
    %3124 = vmatpush1.bf16.msra.mxu0 %v3091
    %3125 = vmatprep.subr.bf16.mxu0 %v3089
    %3126 = vmatpush1.bf16.msra.mxu0 %v3088
    %3127 = vmatprep.subr.bf16.mxu0 %v3086
    %3128 = vmatpush1.bf16.msra.mxu0 %v3085
    %3129 = vmatprep.subr.bf16.mxu0 %v3083
    %3130 = vmatpush1.bf16.msra.mxu0 %v3082
    %3131 = vmatprep.subr.bf16.mxu0 %v3080
    %3132 = vmatpush1.bf16.msra.mxu0 %v3079
    %3133 = vmatprep.subr.bf16.mxu0 %v3077
    %3134 = vmatpush1.bf16.msra.mxu0 %v3076
    %3135 = vmatprep.subr.bf16.mxu0 %v3074
    %3136 = vmatpush1.bf16.msra.mxu0 %v3073
    %3137 = vmatprep.subr.bf16.mxu0 0
    %3138 = vmatpush2.bf16.msra.mxu0 0
    %3139 = vmatprep.subr.bf16.mxu0 0
    %3140 = vmatpush2.bf16.msra.mxu0 0
    %3141 = vmatprep.subr.bf16.mxu0 0
    %3142 = vmatpush2.bf16.msra.mxu0 0
    %3143 = vmatprep.subr.bf16.mxu0 0
    %3144 = vmatpush2.bf16.msra.mxu0 0
    %3145 = vmatprep.subr.bf16.mxu0 0
    %3146 = vmatpush2.bf16.msra.mxu0 0
    %3147 = vmatprep.subr.bf16.mxu0 0
    %3148 = vmatpush2.bf16.msra.mxu0 0
    %3149 = vmatprep.subr.bf16.mxu0 0
    %3150 = vmatpush2.bf16.msra.mxu0 0
    %3151 = vmatprep.subr.bf16.mxu0 0
    %3152 = vmatpush2.bf16.msra.mxu0 0
    %3153 = vmatprep.mubr.bf16.mxu0 0
    %3154 = vmatmul.mubr.bf16.gmra.mxu0 %v2943
    %v3155 = vpop.f32.mrf.mxu0
    %v3156 = vadd.f32 %v2981, %v3155
    %v3157 = vpop.f32.mrf.mxu0
    %v3158 = vadd.f32 %v2985, %v3157
    %v3159 = vpop.f32.mrf.mxu0
    %v3160 = vadd.f32 %v2981, %v3159
    %v3161 = vpop.f32.mrf.mxu0
    %v3162 = vadd.f32 %v2985, %v3161
    %3163 = vdwg.mxu0
    %3164 = vmatprep.subr.bf16.mxu0 0
    %3165 = vmatpush1.bf16.msra.mxu0 %v3096
    %3166 = vmatprep.subr.bf16.mxu0 0
    %3167 = vmatpush1.bf16.msra.mxu0 %v3093
    %3168 = vmatprep.subr.bf16.mxu0 0
    %3169 = vmatpush1.bf16.msra.mxu0 %v3090
    %3170 = vmatprep.subr.bf16.mxu0 0
    %3171 = vmatpush1.bf16.msra.mxu0 %v3087
    %3172 = vmatprep.subr.bf16.mxu0 0
    %3173 = vmatpush1.bf16.msra.mxu0 %v3084
    %3174 = vmatprep.subr.bf16.mxu0 0
    %3175 = vmatpush1.bf16.msra.mxu0 %v3081
    %3176 = vmatprep.subr.bf16.mxu0 0
    %3177 = vmatpush1.bf16.msra.mxu0 %v3078
    %3178 = vmatprep.subr.bf16.mxu0 0
    %3179 = vmatpush1.bf16.msra.mxu0 %v3075
    %3180 = vmatprep.subr.bf16.mxu0 0
    %3181 = vmatpush2.bf16.msra.mxu0 0
    %3182 = vmatprep.subr.bf16.mxu0 0
    %3183 = vmatpush2.bf16.msra.mxu0 0
    %3184 = vmatprep.subr.bf16.mxu0 0
    %3185 = vmatpush2.bf16.msra.mxu0 0
    %3186 = vmatprep.subr.bf16.mxu0 0
    %3187 = vmatpush2.bf16.msra.mxu0 0
    %3188 = vmatprep.subr.bf16.mxu0 0
    %3189 = vmatpush2.bf16.msra.mxu0 0
    %3190 = vmatprep.subr.bf16.mxu0 0
    %3191 = vmatpush2.bf16.msra.mxu0 0
    %3192 = vmatprep.subr.bf16.mxu0 0
    %3193 = vmatpush2.bf16.msra.mxu0 0
    %3194 = vmatprep.subr.bf16.mxu0 0
    %3195 = vmatpush2.bf16.msra.mxu0 0
    %3196 = vmatprep.mubr.bf16.mxu0 0
    %3197 = vmatmul.mubr.bf16.gmra.mxu0 %v2943
    %v3198 = vpop.f32.mrf.mxu0
    %v3199 = vadd.f32 %v2989, %v3198
    %v3200 = vpop.f32.mrf.mxu0
    %v3201 = vpop.f32.mrf.mxu0
    %v3202 = vadd.f32 %v2989, %v3201
    %v3203 = vpop.f32.mrf.mxu0
    %3204 = vdwg.mxu0
    %v3205 = vpack.c.bf16 %v3160, %v3156
    %v3206 = vpack.c.bf16 %v3162, %v3158
    %v3207 = vpack.c.bf16 %v3202, %v3199
    %v3209 = vsel %vm824, %v3205, 0
    %v3212 = vsel %vm824, %v3206, 0
    %3214 = vmatprep.subr.bf16.mxu0 0
    %3215 = vmatpush1.bf16.xpose.msra.mxu0 0
    %3216 = vmatprep.subr.bf16.mxu0 0
    %3217 = vmatpush1.bf16.xpose.msra.mxu0 0
    %3218 = vmatprep.subr.bf16.mxu0 0
    %3219 = vmatpush1.bf16.xpose.msra.mxu0 0
    %3220 = vmatprep.subr.bf16.mxu0 0
    %3221 = vmatpush1.bf16.xpose.msra.mxu0 0
    %3222 = vmatprep.subr.bf16.mxu0 0
    %3223 = vmatpush1.bf16.xpose.msra.mxu0 0
    %3224 = vmatprep.subr.bf16.mxu0 0
    %3225 = vmatpush1.bf16.xpose.msra.mxu0 0
    %3226 = vmatprep.subr.bf16.mxu0 0
    %3227 = vmatpush1.bf16.xpose.msra.mxu0 0
    %3228 = vmatprep.subr.bf16.mxu0 0
    %3229 = vmatpush1.bf16.xpose.msra.mxu0 %v3212
    %3230 = vmatprep.subr.bf16.mxu0 0
    %3231 = vmatpush2.bf16.xpose.msra.mxu0 0
    %3232 = vmatprep.subr.bf16.mxu0 0
    %3233 = vmatpush2.bf16.xpose.msra.mxu0 0
    %3234 = vmatprep.subr.bf16.mxu0 0
    %3235 = vmatpush2.bf16.xpose.msra.mxu0 0
    %3236 = vmatprep.subr.bf16.mxu0 0
    %3237 = vmatpush2.bf16.xpose.msra.mxu0 0
    %3238 = vmatprep.subr.bf16.mxu0 0
    %3239 = vmatpush2.bf16.xpose.msra.mxu0 0
    %3240 = vmatprep.subr.bf16.mxu0 0
    %3241 = vmatpush2.bf16.xpose.msra.mxu0 0
    %3242 = vmatprep.subr.bf16.mxu0 0
    %3243 = vmatpush2.bf16.xpose.msra.mxu0 0
    %3244 = vmatprep.subr.bf16.mxu0 0
    %3245 = vmatpush2.bf16.xpose.msra.mxu0 0
    %3246 = vmatprep.mubr.bf16.mxu0 0
    %3247 = vmatmul.mubr.bf16.gmra.mxu0 %v3209
    %v3248 = vpop.f32.mrf.mxu0
    %v3249 = vadd.f32 0.0, %v3248
    %v3250 = vpop.f32.mrf.mxu0
    %v3251 = vpop.f32.mrf.mxu0
    %v3252 = vpop.f32.mrf.mxu0
    %3253 = vdwg.mxu0
    %v3254 = vsel %vm517, %v3249, -1e+30
    %v3255 = vsel %vm872, %v3254, -inf
    %3256 = vmax.xlane.f32.xlu0 %v3255
    %v3257 = vpop.xlane.xlu0 %3256
    %v3258 = vsub.f32 %v3254, %v3257
    %v3259 = vmul.f32 %v3258, 1.442695
    %v3260 = vpow.pop %v3259
    %v3261 = vsel %vm872, %v3260, 0.0
    %3262 = vadd.xlane.f32.xlu0 %v3261
    %v3263 = vpop.xlane.xlu0 %3262
    %v3264 = vrcp.pop %v3263
    %v3265 = vmul.f32 %v3260, %v3264
    %v3266 = vpack.c.bf16 %v3265, %v3265
    %v3268 = vsel %vm872, %v3266, 0
    %v3271 = vsel %vm500, %v3207, 0
    %3273 = vmatprep.subr.bf16.mxu0 0
    %3274 = vmatpush1.bf16.msra.mxu0 0
    %3275 = vmatprep.subr.bf16.mxu0 0
    %3276 = vmatpush1.bf16.msra.mxu0 0
    %3277 = vmatprep.subr.bf16.mxu0 0
    %3278 = vmatpush1.bf16.msra.mxu0 0
    %3279 = vmatprep.subr.bf16.mxu0 0
    %3280 = vmatpush1.bf16.msra.mxu0 0
    %3281 = vmatprep.subr.bf16.mxu0 0
    %3282 = vmatpush1.bf16.msra.mxu0 0
    %3283 = vmatprep.subr.bf16.mxu0 0
    %3284 = vmatpush1.bf16.msra.mxu0 0
    %3285 = vmatprep.subr.bf16.mxu0 0
    %3286 = vmatpush1.bf16.msra.mxu0 0
    %3287 = vmatprep.subr.bf16.mxu0 0
    %3288 = vmatpush1.bf16.msra.mxu0 %v3271
    %3289 = vmatprep.subr.bf16.mxu0 0
    %3290 = vmatpush2.bf16.msra.mxu0 0
    %3291 = vmatprep.subr.bf16.mxu0 0
    %3292 = vmatpush2.bf16.msra.mxu0 0
    %3293 = vmatprep.subr.bf16.mxu0 0
    %3294 = vmatpush2.bf16.msra.mxu0 0
    %3295 = vmatprep.subr.bf16.mxu0 0
    %3296 = vmatpush2.bf16.msra.mxu0 0
    %3297 = vmatprep.subr.bf16.mxu0 0
    %3298 = vmatpush2.bf16.msra.mxu0 0
    %3299 = vmatprep.subr.bf16.mxu0 0
    %3300 = vmatpush2.bf16.msra.mxu0 0
    %3301 = vmatprep.subr.bf16.mxu0 0
    %3302 = vmatpush2.bf16.msra.mxu0 0
    %3303 = vmatprep.subr.bf16.mxu0 0
    %3304 = vmatpush2.bf16.msra.mxu0 0
    %3305 = vmatprep.mubr.bf16.mxu0 0
    %3306 = vmatmul.mubr.bf16.gmra.mxu0 %v3268
    %v3307 = vpop.f32.mrf.mxu0
    %v3308 = vadd.f32 0.0, %v3307
    %v3309 = vpop.f32.mrf.mxu0
    %v3310 = vpop.f32.mrf.mxu0
    %v3311 = vpop.f32.mrf.mxu0
    %3312 = vdwg.mxu0
    %v3313 = vpack.c.bf16 %v3308, %v3308
    %v3314 = vld [vmem:[#allocation22] sm:$0xf]
    %v3315 = vld [vmem:[#allocation22 + $0x4] sm:$0xf]
    %v3316 = vld [vmem:[#allocation22 + $0x8] sm:$0xf]
    %v3317 = vld [vmem:[#allocation22 + $0xc] sm:$0xf]
    %3319 = vrot.lane.b32.xlu0 %v3205, 96
    %v3320 = vpop.permute.xlu0 %3319
    %3322 = vrot.lane.b32.xlu0 %v3206, 96
    %v3323 = vpop.permute.xlu0 %3322
    %v3325 = vsel %vm824, %v3320, 0
    %v3328 = vsel %vm824, %v3323, 0
    %3330 = vmatprep.subr.bf16.mxu0 0
    %3331 = vmatpush1.bf16.xpose.msra.mxu0 0
    %3332 = vmatprep.subr.bf16.mxu0 0
    %3333 = vmatpush1.bf16.xpose.msra.mxu0 0
    %3334 = vmatprep.subr.bf16.mxu0 0
    %3335 = vmatpush1.bf16.xpose.msra.mxu0 0
    %3336 = vmatprep.subr.bf16.mxu0 0
    %3337 = vmatpush1.bf16.xpose.msra.mxu0 0
    %3338 = vmatprep.subr.bf16.mxu0 0
    %3339 = vmatpush1.bf16.xpose.msra.mxu0 0
    %3340 = vmatprep.subr.bf16.mxu0 0
    %3341 = vmatpush1.bf16.xpose.msra.mxu0 0
    %3342 = vmatprep.subr.bf16.mxu0 0
    %3343 = vmatpush1.bf16.xpose.msra.mxu0 0
    %3344 = vmatprep.subr.bf16.mxu0 0
    %3345 = vmatpush1.bf16.xpose.msra.mxu0 %v3328
    %3346 = vmatprep.subr.bf16.mxu0 0
    %3347 = vmatpush2.bf16.xpose.msra.mxu0 0
    %3348 = vmatprep.subr.bf16.mxu0 0
    %3349 = vmatpush2.bf16.xpose.msra.mxu0 0
    %3350 = vmatprep.subr.bf16.mxu0 0
    %3351 = vmatpush2.bf16.xpose.msra.mxu0 0
    %3352 = vmatprep.subr.bf16.mxu0 0
    %3353 = vmatpush2.bf16.xpose.msra.mxu0 0
    %3354 = vmatprep.subr.bf16.mxu0 0
    %3355 = vmatpush2.bf16.xpose.msra.mxu0 0
    %3356 = vmatprep.subr.bf16.mxu0 0
    %3357 = vmatpush2.bf16.xpose.msra.mxu0 0
    %3358 = vmatprep.subr.bf16.mxu0 0
    %3359 = vmatpush2.bf16.xpose.msra.mxu0 0
    %3360 = vmatprep.subr.bf16.mxu0 0
    %3361 = vmatpush2.bf16.xpose.msra.mxu0 0
    %3362 = vmatprep.mubr.bf16.mxu0 0
    %3363 = vmatmul.mubr.bf16.gmra.mxu0 %v3325
    %v3364 = vpop.f32.mrf.mxu0
    %v3365 = vadd.f32 0.0, %v3364
    %v3366 = vpop.f32.mrf.mxu0
    %v3367 = vpop.f32.mrf.mxu0
    %v3368 = vpop.f32.mrf.mxu0
    %3369 = vdwg.mxu0
    %v3370 = vsel %vm517, %v3365, -1e+30
    %v3371 = vsel %vm872, %v3370, -inf
    %3372 = vmax.xlane.f32.xlu0 %v3371
    %v3373 = vpop.xlane.xlu0 %3372
    %v3374 = vsub.f32 %v3370, %v3373
    %v3375 = vmul.f32 %v3374, 1.442695
    %v3376 = vpow.pop %v3375
    %v3377 = vsel %vm872, %v3376, 0.0
    %3378 = vadd.xlane.f32.xlu0 %v3377
    %v3379 = vpop.xlane.xlu0 %3378
    %v3380 = vrcp.pop %v3379
    %v3381 = vmul.f32 %v3376, %v3380
    %v3382 = vpack.c.bf16 %v3381, %v3381
    %3384 = vrot.lane.b32.xlu0 %v3207, 96
    %v3385 = vpop.permute.xlu0 %3384
    %v3387 = vsel %vm872, %v3382, 0
    %v3390 = vsel %vm500, %v3385, 0
    %3392 = vmatprep.subr.bf16.mxu0 0
    %3393 = vmatpush1.bf16.msra.mxu0 0
    %3394 = vmatprep.subr.bf16.mxu0 0
    %3395 = vmatpush1.bf16.msra.mxu0 0
    %3396 = vmatprep.subr.bf16.mxu0 0
    %3397 = vmatpush1.bf16.msra.mxu0 0
    %3398 = vmatprep.subr.bf16.mxu0 0
    %3399 = vmatpush1.bf16.msra.mxu0 0
    %3400 = vmatprep.subr.bf16.mxu0 0
    %3401 = vmatpush1.bf16.msra.mxu0 0
    %3402 = vmatprep.subr.bf16.mxu0 0
    %3403 = vmatpush1.bf16.msra.mxu0 0
    %3404 = vmatprep.subr.bf16.mxu0 0
    %3405 = vmatpush1.bf16.msra.mxu0 0
    %3406 = vmatprep.subr.bf16.mxu0 0
    %3407 = vmatpush1.bf16.msra.mxu0 %v3390
    %3408 = vmatprep.subr.bf16.mxu0 0
    %3409 = vmatpush2.bf16.msra.mxu0 0
    %3410 = vmatprep.subr.bf16.mxu0 0
    %3411 = vmatpush2.bf16.msra.mxu0 0
    %3412 = vmatprep.subr.bf16.mxu0 0
    %3413 = vmatpush2.bf16.msra.mxu0 0
    %3414 = vmatprep.subr.bf16.mxu0 0
    %3415 = vmatpush2.bf16.msra.mxu0 0
    %3416 = vmatprep.subr.bf16.mxu0 0
    %3417 = vmatpush2.bf16.msra.mxu0 0
    %3418 = vmatprep.subr.bf16.mxu0 0
    %3419 = vmatpush2.bf16.msra.mxu0 0
    %3420 = vmatprep.subr.bf16.mxu0 0
    %3421 = vmatpush2.bf16.msra.mxu0 0
    %3422 = vmatprep.subr.bf16.mxu0 0
    %3423 = vmatpush2.bf16.msra.mxu0 0
    %3424 = vmatprep.mubr.bf16.mxu0 0
    %3425 = vmatmul.mubr.bf16.gmra.mxu0 %v3387
    %v3426 = vpop.f32.mrf.mxu0
    %v3427 = vadd.f32 0.0, %v3426
    %v3428 = vpop.f32.mrf.mxu0
    %v3429 = vpop.f32.mrf.mxu0
    %v3430 = vpop.f32.mrf.mxu0
    %3431 = vdwg.mxu0
    %v3432 = vpack.c.bf16 %v3427, %v3427
    %v3433 = vld [vmem:[#allocation22 + $0x10] sm:$0xf]
    %v3434 = vld [vmem:[#allocation22 + $0x14] sm:$0xf]
    %v3435 = vld [vmem:[#allocation22 + $0x18] sm:$0xf]
    %v3436 = vld [vmem:[#allocation22 + $0x1c] sm:$0xf]
    %v3441 = vunpack.c.l.b16 %v3433
    %v3442 = vunpack.c.l.b16 %v3434
    %v3443 = vunpack.c.l.b16 %v3435
    %v3444 = vunpack.c.l.b16 %v3436
    %v3445 = vpack.c.b16 %v3442, %v3441
    %v3446 = vpack.c.b16 %v3444, %v3443
    %v3450 = vsel %vm824, %v3432, 0
    %3452 = vmatprep.subr.bf16.mxu0 0
    %3453 = vmatpush1.bf16.msra.mxu0 0
    %3454 = vmatprep.subr.bf16.mxu0 0
    %3455 = vmatpush1.bf16.msra.mxu0 0
    %3456 = vmatprep.subr.bf16.mxu0 0
    %3457 = vmatpush1.bf16.msra.mxu0 0
    %3458 = vmatprep.subr.bf16.mxu0 0
    %3459 = vmatpush1.bf16.msra.mxu0 0
    %3460 = vmatprep.subr.bf16.mxu0 0
    %3461 = vmatpush1.bf16.msra.mxu0 0
    %3462 = vmatprep.subr.bf16.mxu0 0
    %3463 = vmatpush1.bf16.msra.mxu0 0
    %3464 = vmatprep.subr.bf16.mxu0 0
    %3465 = vmatpush1.bf16.msra.mxu0 %v3446
    %3466 = vmatprep.subr.bf16.mxu0 0
    %3467 = vmatpush1.bf16.msra.mxu0 %v3445
    %3468 = vmatprep.subr.bf16.mxu0 0
    %3469 = vmatpush2.bf16.msra.mxu0 0
    %3470 = vmatprep.subr.bf16.mxu0 0
    %3471 = vmatpush2.bf16.msra.mxu0 0
    %3472 = vmatprep.subr.bf16.mxu0 0
    %3473 = vmatpush2.bf16.msra.mxu0 0
    %3474 = vmatprep.subr.bf16.mxu0 0
    %3475 = vmatpush2.bf16.msra.mxu0 0
    %3476 = vmatprep.subr.bf16.mxu0 0
    %3477 = vmatpush2.bf16.msra.mxu0 0
    %3478 = vmatprep.subr.bf16.mxu0 0
    %3479 = vmatpush2.bf16.msra.mxu0 0
    %3480 = vmatprep.subr.bf16.mxu0 0
    %3481 = vmatpush2.bf16.msra.mxu0 0
    %3482 = vmatprep.subr.bf16.mxu0 0
    %3483 = vmatpush2.bf16.msra.mxu0 0
    %3484 = vmatprep.mubr.bf16.mxu0 0
    %3485 = vmatmul.mubr.bf16.gmra.mxu0 %v3450
    %v3486 = vpop.f32.mrf.mxu0
    %v3487 = vadd.f32 0.0, %v3486
    %v3488 = vpop.f32.mrf.mxu0
    %v3489 = vpop.f32.mrf.mxu0
    %v3490 = vpop.f32.mrf.mxu0
    %3491 = vdwg.mxu0
    %v3496 = vunpack.c.l.b16 %v3314
    %v3497 = vunpack.c.l.b16 %v3315
    %v3498 = vunpack.c.l.b16 %v3316
    %v3499 = vunpack.c.l.b16 %v3317
    %v3500 = vpack.c.b16 %v3497, %v3496
    %v3501 = vpack.c.b16 %v3499, %v3498
    %v3505 = vsel %vm824, %v3313, 0
    %3507 = vmatprep.subr.bf16.mxu0 0
    %3508 = vmatpush1.bf16.msra.mxu0 0
    %3509 = vmatprep.subr.bf16.mxu0 0
    %3510 = vmatpush1.bf16.msra.mxu0 0
    %3511 = vmatprep.subr.bf16.mxu0 0
    %3512 = vmatpush1.bf16.msra.mxu0 0
    %3513 = vmatprep.subr.bf16.mxu0 0
    %3514 = vmatpush1.bf16.msra.mxu0 0
    %3515 = vmatprep.subr.bf16.mxu0 0
    %3516 = vmatpush1.bf16.msra.mxu0 0
    %3517 = vmatprep.subr.bf16.mxu0 0
    %3518 = vmatpush1.bf16.msra.mxu0 0
    %3519 = vmatprep.subr.bf16.mxu0 0
    %3520 = vmatpush1.bf16.msra.mxu0 %v3501
    %3521 = vmatprep.subr.bf16.mxu0 0
    %3522 = vmatpush1.bf16.msra.mxu0 %v3500
    %3523 = vmatprep.subr.bf16.mxu0 0
    %3524 = vmatpush2.bf16.msra.mxu0 0
    %3525 = vmatprep.subr.bf16.mxu0 0
    %3526 = vmatpush2.bf16.msra.mxu0 0
    %3527 = vmatprep.subr.bf16.mxu0 0
    %3528 = vmatpush2.bf16.msra.mxu0 0
    %3529 = vmatprep.subr.bf16.mxu0 0
    %3530 = vmatpush2.bf16.msra.mxu0 0
    %3531 = vmatprep.subr.bf16.mxu0 0
    %3532 = vmatpush2.bf16.msra.mxu0 0
    %3533 = vmatprep.subr.bf16.mxu0 0
    %3534 = vmatpush2.bf16.msra.mxu0 0
    %3535 = vmatprep.subr.bf16.mxu0 0
    %3536 = vmatpush2.bf16.msra.mxu0 0
    %3537 = vmatprep.subr.bf16.mxu0 0
    %3538 = vmatpush2.bf16.msra.mxu0 0
    %3539 = vmatprep.mubr.bf16.mxu0 0
    %3540 = vmatmul.mubr.bf16.gmra.mxu0 %v3505
    %v3541 = vpop.f32.mrf.mxu0
    %v3542 = vadd.f32 %v3487, %v3541
    %v3543 = vpop.f32.mrf.mxu0
    %v3544 = vpop.f32.mrf.mxu0
    %v3545 = vpop.f32.mrf.mxu0
    %3546 = vdwg.mxu0
    %3547 = vrot.lane.b32.xlu0 %v3205, 64
    %v3548 = vpop.permute.xlu0 %3547
    %3549 = vrot.lane.b32.xlu0 %v3206, 64
    %v3550 = vpop.permute.xlu0 %3549
    %v3552 = vsel %vm824, %v3548, 0
    %v3555 = vsel %vm824, %v3550, 0
    %3557 = vmatprep.subr.bf16.mxu0 0
    %3558 = vmatpush1.bf16.xpose.msra.mxu0 0
    %3559 = vmatprep.subr.bf16.mxu0 0
    %3560 = vmatpush1.bf16.xpose.msra.mxu0 0
    %3561 = vmatprep.subr.bf16.mxu0 0
    %3562 = vmatpush1.bf16.xpose.msra.mxu0 0
    %3563 = vmatprep.subr.bf16.mxu0 0
    %3564 = vmatpush1.bf16.xpose.msra.mxu0 0
    %3565 = vmatprep.subr.bf16.mxu0 0
    %3566 = vmatpush1.bf16.xpose.msra.mxu0 0
    %3567 = vmatprep.subr.bf16.mxu0 0
    %3568 = vmatpush1.bf16.xpose.msra.mxu0 0
    %3569 = vmatprep.subr.bf16.mxu0 0
    %3570 = vmatpush1.bf16.xpose.msra.mxu0 0
    %3571 = vmatprep.subr.bf16.mxu0 0
    %3572 = vmatpush1.bf16.xpose.msra.mxu0 %v3555
    %3573 = vmatprep.subr.bf16.mxu0 0
    %3574 = vmatpush2.bf16.xpose.msra.mxu0 0
    %3575 = vmatprep.subr.bf16.mxu0 0
    %3576 = vmatpush2.bf16.xpose.msra.mxu0 0
    %3577 = vmatprep.subr.bf16.mxu0 0
    %3578 = vmatpush2.bf16.xpose.msra.mxu0 0
    %3579 = vmatprep.subr.bf16.mxu0 0
    %3580 = vmatpush2.bf16.xpose.msra.mxu0 0
    %3581 = vmatprep.subr.bf16.mxu0 0
    %3582 = vmatpush2.bf16.xpose.msra.mxu0 0
    %3583 = vmatprep.subr.bf16.mxu0 0
    %3584 = vmatpush2.bf16.xpose.msra.mxu0 0
    %3585 = vmatprep.subr.bf16.mxu0 0
    %3586 = vmatpush2.bf16.xpose.msra.mxu0 0
    %3587 = vmatprep.subr.bf16.mxu0 0
    %3588 = vmatpush2.bf16.xpose.msra.mxu0 0
    %3589 = vmatprep.mubr.bf16.mxu0 0
    %3590 = vmatmul.mubr.bf16.gmra.mxu0 %v3552
    %v3591 = vpop.f32.mrf.mxu0
    %v3592 = vadd.f32 0.0, %v3591
    %v3593 = vpop.f32.mrf.mxu0
    %v3594 = vpop.f32.mrf.mxu0
    %v3595 = vpop.f32.mrf.mxu0
    %3596 = vdwg.mxu0
    %v3597 = vsel %vm517, %v3592, -1e+30
    %v3598 = vsel %vm872, %v3597, -inf
    %3599 = vmax.xlane.f32.xlu0 %v3598
    %v3600 = vpop.xlane.xlu0 %3599
    %v3601 = vsub.f32 %v3597, %v3600
    %v3602 = vmul.f32 %v3601, 1.442695
    %v3603 = vpow.pop %v3602
    %v3604 = vsel %vm872, %v3603, 0.0
    %3605 = vadd.xlane.f32.xlu0 %v3604
    %v3606 = vpop.xlane.xlu0 %3605
    %v3607 = vrcp.pop %v3606
    %v3608 = vmul.f32 %v3603, %v3607
    %v3609 = vpack.c.bf16 %v3608, %v3608
    %3610 = vrot.lane.b32.xlu0 %v3207, 64
    %v3611 = vpop.permute.xlu0 %3610
    %v3613 = vsel %vm872, %v3609, 0
    %v3616 = vsel %vm500, %v3611, 0
    %3618 = vmatprep.subr.bf16.mxu0 0
    %3619 = vmatpush1.bf16.msra.mxu0 0
    %3620 = vmatprep.subr.bf16.mxu0 0
    %3621 = vmatpush1.bf16.msra.mxu0 0
    %3622 = vmatprep.subr.bf16.mxu0 0
    %3623 = vmatpush1.bf16.msra.mxu0 0
    %3624 = vmatprep.subr.bf16.mxu0 0
    %3625 = vmatpush1.bf16.msra.mxu0 0
    %3626 = vmatprep.subr.bf16.mxu0 0
    %3627 = vmatpush1.bf16.msra.mxu0 0
    %3628 = vmatprep.subr.bf16.mxu0 0
    %3629 = vmatpush1.bf16.msra.mxu0 0
    %3630 = vmatprep.subr.bf16.mxu0 0
    %3631 = vmatpush1.bf16.msra.mxu0 0
    %3632 = vmatprep.subr.bf16.mxu0 0
    %3633 = vmatpush1.bf16.msra.mxu0 %v3616
    %3634 = vmatprep.subr.bf16.mxu0 0
    %3635 = vmatpush2.bf16.msra.mxu0 0
    %3636 = vmatprep.subr.bf16.mxu0 0
    %3637 = vmatpush2.bf16.msra.mxu0 0
    %3638 = vmatprep.subr.bf16.mxu0 0
    %3639 = vmatpush2.bf16.msra.mxu0 0
    %3640 = vmatprep.subr.bf16.mxu0 0
    %3641 = vmatpush2.bf16.msra.mxu0 0
    %3642 = vmatprep.subr.bf16.mxu0 0
    %3643 = vmatpush2.bf16.msra.mxu0 0
    %3644 = vmatprep.subr.bf16.mxu0 0
    %3645 = vmatpush2.bf16.msra.mxu0 0
    %3646 = vmatprep.subr.bf16.mxu0 0
    %3647 = vmatpush2.bf16.msra.mxu0 0
    %3648 = vmatprep.subr.bf16.mxu0 0
    %3649 = vmatpush2.bf16.msra.mxu0 0
    %3650 = vmatprep.mubr.bf16.mxu0 0
    %3651 = vmatmul.mubr.bf16.gmra.mxu0 %v3613
    %v3652 = vpop.f32.mrf.mxu0
    %v3653 = vadd.f32 0.0, %v3652
    %v3654 = vpop.f32.mrf.mxu0
    %v3655 = vpop.f32.mrf.mxu0
    %v3656 = vpop.f32.mrf.mxu0
    %3657 = vdwg.mxu0
    %v3658 = vpack.c.bf16 %v3653, %v3653
    %v3659 = vld [vmem:[#allocation22 + $0x20] sm:$0xf]
    %v3660 = vld [vmem:[#allocation22 + $0x24] sm:$0xf]
    %v3661 = vld [vmem:[#allocation22 + $0x28] sm:$0xf]
    %v3662 = vld [vmem:[#allocation22 + $0x2c] sm:$0xf]
    %v3667 = vunpack.c.l.b16 %v3659
    %v3668 = vunpack.c.l.b16 %v3660
    %v3669 = vunpack.c.l.b16 %v3661
    %v3670 = vunpack.c.l.b16 %v3662
    %v3671 = vpack.c.b16 %v3668, %v3667
    %v3672 = vpack.c.b16 %v3670, %v3669
    %v3676 = vsel %vm824, %v3658, 0
    %3678 = vmatprep.subr.bf16.mxu0 0
    %3679 = vmatpush1.bf16.msra.mxu0 0
    %3680 = vmatprep.subr.bf16.mxu0 0
    %3681 = vmatpush1.bf16.msra.mxu0 0
    %3682 = vmatprep.subr.bf16.mxu0 0
    %3683 = vmatpush1.bf16.msra.mxu0 0
    %3684 = vmatprep.subr.bf16.mxu0 0
    %3685 = vmatpush1.bf16.msra.mxu0 0
    %3686 = vmatprep.subr.bf16.mxu0 0
    %3687 = vmatpush1.bf16.msra.mxu0 0
    %3688 = vmatprep.subr.bf16.mxu0 0
    %3689 = vmatpush1.bf16.msra.mxu0 0
    %3690 = vmatprep.subr.bf16.mxu0 0
    %3691 = vmatpush1.bf16.msra.mxu0 %v3672
    %3692 = vmatprep.subr.bf16.mxu0 0
    %3693 = vmatpush1.bf16.msra.mxu0 %v3671
    %3694 = vmatprep.subr.bf16.mxu0 0
    %3695 = vmatpush2.bf16.msra.mxu0 0
    %3696 = vmatprep.subr.bf16.mxu0 0
    %3697 = vmatpush2.bf16.msra.mxu0 0
    %3698 = vmatprep.subr.bf16.mxu0 0
    %3699 = vmatpush2.bf16.msra.mxu0 0
    %3700 = vmatprep.subr.bf16.mxu0 0
    %3701 = vmatpush2.bf16.msra.mxu0 0
    %3702 = vmatprep.subr.bf16.mxu0 0
    %3703 = vmatpush2.bf16.msra.mxu0 0
    %3704 = vmatprep.subr.bf16.mxu0 0
    %3705 = vmatpush2.bf16.msra.mxu0 0
    %3706 = vmatprep.subr.bf16.mxu0 0
    %3707 = vmatpush2.bf16.msra.mxu0 0
    %3708 = vmatprep.subr.bf16.mxu0 0
    %3709 = vmatpush2.bf16.msra.mxu0 0
    %3710 = vmatprep.mubr.bf16.mxu0 0
    %3711 = vmatmul.mubr.bf16.gmra.mxu0 %v3676
    %v3712 = vpop.f32.mrf.mxu0
    %v3713 = vadd.f32 0.0, %v3712
    %v3714 = vpop.f32.mrf.mxu0
    %v3715 = vpop.f32.mrf.mxu0
    %v3716 = vpop.f32.mrf.mxu0
    %3717 = vdwg.mxu0
    %v3718 = vadd.f32 %v3542, %v3713
    %3719 = vrot.lane.b32.xlu0 %v3205, 32
    %v3720 = vpop.permute.xlu0 %3719
    %3721 = vrot.lane.b32.xlu0 %v3206, 32
    %v3722 = vpop.permute.xlu0 %3721
    %v3724 = vsel %vm824, %v3720, 0
    %v3727 = vsel %vm824, %v3722, 0
    %3729 = vmatprep.subr.bf16.mxu0 0
    %3730 = vmatpush1.bf16.xpose.msra.mxu0 0
    %3731 = vmatprep.subr.bf16.mxu0 0
    %3732 = vmatpush1.bf16.xpose.msra.mxu0 0
    %3733 = vmatprep.subr.bf16.mxu0 0
    %3734 = vmatpush1.bf16.xpose.msra.mxu0 0
    %3735 = vmatprep.subr.bf16.mxu0 0
    %3736 = vmatpush1.bf16.xpose.msra.mxu0 0
    %3737 = vmatprep.subr.bf16.mxu0 0
    %3738 = vmatpush1.bf16.xpose.msra.mxu0 0
    %3739 = vmatprep.subr.bf16.mxu0 0
    %3740 = vmatpush1.bf16.xpose.msra.mxu0 0
    %3741 = vmatprep.subr.bf16.mxu0 0
    %3742 = vmatpush1.bf16.xpose.msra.mxu0 0
    %3743 = vmatprep.subr.bf16.mxu0 0
    %3744 = vmatpush1.bf16.xpose.msra.mxu0 %v3727
    %3745 = vmatprep.subr.bf16.mxu0 0
    %3746 = vmatpush2.bf16.xpose.msra.mxu0 0
    %3747 = vmatprep.subr.bf16.mxu0 0
    %3748 = vmatpush2.bf16.xpose.msra.mxu0 0
    %3749 = vmatprep.subr.bf16.mxu0 0
    %3750 = vmatpush2.bf16.xpose.msra.mxu0 0
    %3751 = vmatprep.subr.bf16.mxu0 0
    %3752 = vmatpush2.bf16.xpose.msra.mxu0 0
    %3753 = vmatprep.subr.bf16.mxu0 0
    %3754 = vmatpush2.bf16.xpose.msra.mxu0 0
    %3755 = vmatprep.subr.bf16.mxu0 0
    %3756 = vmatpush2.bf16.xpose.msra.mxu0 0
    %3757 = vmatprep.subr.bf16.mxu0 0
    %3758 = vmatpush2.bf16.xpose.msra.mxu0 0
    %3759 = vmatprep.subr.bf16.mxu0 0
    %3760 = vmatpush2.bf16.xpose.msra.mxu0 0
    %3761 = vmatprep.mubr.bf16.mxu0 0
    %3762 = vmatmul.mubr.bf16.gmra.mxu0 %v3724
    %v3763 = vpop.f32.mrf.mxu0
    %v3764 = vadd.f32 0.0, %v3763
    %v3765 = vpop.f32.mrf.mxu0
    %v3766 = vpop.f32.mrf.mxu0
    %v3767 = vpop.f32.mrf.mxu0
    %3768 = vdwg.mxu0
    %v3769 = vsel %vm517, %v3764, -1e+30
    %v3770 = vsel %vm872, %v3769, -inf
    %3771 = vmax.xlane.f32.xlu0 %v3770
    %v3772 = vpop.xlane.xlu0 %3771
    %v3773 = vsub.f32 %v3769, %v3772
    %v3774 = vmul.f32 %v3773, 1.442695
    %v3775 = vpow.pop %v3774
    %v3776 = vsel %vm872, %v3775, 0.0
    %3777 = vadd.xlane.f32.xlu0 %v3776
    %v3778 = vpop.xlane.xlu0 %3777
    %v3779 = vrcp.pop %v3778
    %v3780 = vmul.f32 %v3775, %v3779
    %v3781 = vpack.c.bf16 %v3780, %v3780
    %3782 = vrot.lane.b32.xlu0 %v3207, 32
    %v3783 = vpop.permute.xlu0 %3782
    %v3785 = vsel %vm872, %v3781, 0
    %v3788 = vsel %vm500, %v3783, 0
    %3790 = vmatprep.subr.bf16.mxu0 0
    %3791 = vmatpush1.bf16.msra.mxu0 0
    %3792 = vmatprep.subr.bf16.mxu0 0
    %3793 = vmatpush1.bf16.msra.mxu0 0
    %3794 = vmatprep.subr.bf16.mxu0 0
    %3795 = vmatpush1.bf16.msra.mxu0 0
    %3796 = vmatprep.subr.bf16.mxu0 0
    %3797 = vmatpush1.bf16.msra.mxu0 0
    %3798 = vmatprep.subr.bf16.mxu0 0
    %3799 = vmatpush1.bf16.msra.mxu0 0
    %3800 = vmatprep.subr.bf16.mxu0 0
    %3801 = vmatpush1.bf16.msra.mxu0 0
    %3802 = vmatprep.subr.bf16.mxu0 0
    %3803 = vmatpush1.bf16.msra.mxu0 0
    %3804 = vmatprep.subr.bf16.mxu0 0
    %3805 = vmatpush1.bf16.msra.mxu0 %v3788
    %3806 = vmatprep.subr.bf16.mxu0 0
    %3807 = vmatpush2.bf16.msra.mxu0 0
    %3808 = vmatprep.subr.bf16.mxu0 0
    %3809 = vmatpush2.bf16.msra.mxu0 0
    %3810 = vmatprep.subr.bf16.mxu0 0
    %3811 = vmatpush2.bf16.msra.mxu0 0
    %3812 = vmatprep.subr.bf16.mxu0 0
    %3813 = vmatpush2.bf16.msra.mxu0 0
    %3814 = vmatprep.subr.bf16.mxu0 0
    %3815 = vmatpush2.bf16.msra.mxu0 0
    %3816 = vmatprep.subr.bf16.mxu0 0
    %3817 = vmatpush2.bf16.msra.mxu0 0
    %3818 = vmatprep.subr.bf16.mxu0 0
    %3819 = vmatpush2.bf16.msra.mxu0 0
    %3820 = vmatprep.subr.bf16.mxu0 0
    %3821 = vmatpush2.bf16.msra.mxu0 0
    %3822 = vmatprep.mubr.bf16.mxu0 0
    %3823 = vmatmul.mubr.bf16.gmra.mxu0 %v3785
    %v3824 = vpop.f32.mrf.mxu0
    %v3825 = vadd.f32 0.0, %v3824
    %v3826 = vpop.f32.mrf.mxu0
    %v3827 = vpop.f32.mrf.mxu0
    %v3828 = vpop.f32.mrf.mxu0
    %3829 = vdwg.mxu0
    %v3830 = vpack.c.bf16 %v3825, %v3825
    %v3831 = vld [vmem:[#allocation22 + $0x30] sm:$0xf]
    %v3832 = vld [vmem:[#allocation22 + $0x34] sm:$0xf]
    %v3833 = vld [vmem:[#allocation22 + $0x38] sm:$0xf]
    %v3834 = vld [vmem:[#allocation22 + $0x3c] sm:$0xf]
    %v3839 = vunpack.c.l.b16 %v3831
    %v3840 = vunpack.c.l.b16 %v3832
    %v3841 = vunpack.c.l.b16 %v3833
    %v3842 = vunpack.c.l.b16 %v3834
    %v3843 = vpack.c.b16 %v3840, %v3839
    %v3844 = vpack.c.b16 %v3842, %v3841
    %v3848 = vsel %vm824, %v3830, 0
    %3850 = vmatprep.subr.bf16.mxu0 0
    %3851 = vmatpush1.bf16.msra.mxu0 0
    %3852 = vmatprep.subr.bf16.mxu0 0
    %3853 = vmatpush1.bf16.msra.mxu0 0
    %3854 = vmatprep.subr.bf16.mxu0 0
    %3855 = vmatpush1.bf16.msra.mxu0 0
    %3856 = vmatprep.subr.bf16.mxu0 0
    %3857 = vmatpush1.bf16.msra.mxu0 0
    %3858 = vmatprep.subr.bf16.mxu0 0
    %3859 = vmatpush1.bf16.msra.mxu0 0
    %3860 = vmatprep.subr.bf16.mxu0 0
    %3861 = vmatpush1.bf16.msra.mxu0 0
    %3862 = vmatprep.subr.bf16.mxu0 0
    %3863 = vmatpush1.bf16.msra.mxu0 %v3844
    %3864 = vmatprep.subr.bf16.mxu0 0
    %3865 = vmatpush1.bf16.msra.mxu0 %v3843
    %3866 = vmatprep.subr.bf16.mxu0 0
    %3867 = vmatpush2.bf16.msra.mxu0 0
    %3868 = vmatprep.subr.bf16.mxu0 0
    %3869 = vmatpush2.bf16.msra.mxu0 0
    %3870 = vmatprep.subr.bf16.mxu0 0
    %3871 = vmatpush2.bf16.msra.mxu0 0
    %3872 = vmatprep.subr.bf16.mxu0 0
    %3873 = vmatpush2.bf16.msra.mxu0 0
    %3874 = vmatprep.subr.bf16.mxu0 0
    %3875 = vmatpush2.bf16.msra.mxu0 0
    %3876 = vmatprep.subr.bf16.mxu0 0
    %3877 = vmatpush2.bf16.msra.mxu0 0
    %3878 = vmatprep.subr.bf16.mxu0 0
    %3879 = vmatpush2.bf16.msra.mxu0 0
    %3880 = vmatprep.subr.bf16.mxu0 0
    %3881 = vmatpush2.bf16.msra.mxu0 0
    %3882 = vmatprep.mubr.bf16.mxu0 0
    %3883 = vmatmul.mubr.bf16.gmra.mxu0 %v3848
    %v3884 = vpop.f32.mrf.mxu0
    %v3885 = vadd.f32 0.0, %v3884
    %v3886 = vpop.f32.mrf.mxu0
    %v3887 = vpop.f32.mrf.mxu0
    %v3888 = vpop.f32.mrf.mxu0
    %3889 = vdwg.mxu0
    %v3890 = vadd.f32 %v3718, %v3885
    %v3891 = vrot.slane %v3205, 4
    %v3892 = vrot.slane %v3206, 4
    %v3894 = vsel %vm824, %v3891, 0
    %v3897 = vsel %vm824, %v3892, 0
    %3899 = vmatprep.subr.bf16.mxu0 0
    %3900 = vmatpush1.bf16.xpose.msra.mxu0 0
    %3901 = vmatprep.subr.bf16.mxu0 0
    %3902 = vmatpush1.bf16.xpose.msra.mxu0 0
    %3903 = vmatprep.subr.bf16.mxu0 0
    %3904 = vmatpush1.bf16.xpose.msra.mxu0 0
    %3905 = vmatprep.subr.bf16.mxu0 0
    %3906 = vmatpush1.bf16.xpose.msra.mxu0 0
    %3907 = vmatprep.subr.bf16.mxu0 0
    %3908 = vmatpush1.bf16.xpose.msra.mxu0 0
    %3909 = vmatprep.subr.bf16.mxu0 0
    %3910 = vmatpush1.bf16.xpose.msra.mxu0 0
    %3911 = vmatprep.subr.bf16.mxu0 0
    %3912 = vmatpush1.bf16.xpose.msra.mxu0 0
    %3913 = vmatprep.subr.bf16.mxu0 0
    %3914 = vmatpush1.bf16.xpose.msra.mxu0 %v3897
    %3915 = vmatprep.subr.bf16.mxu0 0
    %3916 = vmatpush2.bf16.xpose.msra.mxu0 0
    %3917 = vmatprep.subr.bf16.mxu0 0
    %3918 = vmatpush2.bf16.xpose.msra.mxu0 0
    %3919 = vmatprep.subr.bf16.mxu0 0
    %3920 = vmatpush2.bf16.xpose.msra.mxu0 0
    %3921 = vmatprep.subr.bf16.mxu0 0
    %3922 = vmatpush2.bf16.xpose.msra.mxu0 0
    %3923 = vmatprep.subr.bf16.mxu0 0
    %3924 = vmatpush2.bf16.xpose.msra.mxu0 0
    %3925 = vmatprep.subr.bf16.mxu0 0
    %3926 = vmatpush2.bf16.xpose.msra.mxu0 0
    %3927 = vmatprep.subr.bf16.mxu0 0
    %3928 = vmatpush2.bf16.xpose.msra.mxu0 0
    %3929 = vmatprep.subr.bf16.mxu0 0
    %3930 = vmatpush2.bf16.xpose.msra.mxu0 0
    %3931 = vmatprep.mubr.bf16.mxu0 0
    %3932 = vmatmul.mubr.bf16.gmra.mxu0 %v3894
    %v3933 = vpop.f32.mrf.mxu0
    %v3934 = vadd.f32 0.0, %v3933
    %v3935 = vpop.f32.mrf.mxu0
    %v3936 = vpop.f32.mrf.mxu0
    %v3937 = vpop.f32.mrf.mxu0
    %3938 = vdwg.mxu0
    %v3939 = vsel %vm517, %v3934, -1e+30
    %v3940 = vsel %vm872, %v3939, -inf
    %3941 = vmax.xlane.f32.xlu0 %v3940
    %v3942 = vpop.xlane.xlu0 %3941
    %v3943 = vsub.f32 %v3939, %v3942
    %v3944 = vmul.f32 %v3943, 1.442695
    %v3945 = vpow.pop %v3944
    %v3946 = vsel %vm872, %v3945, 0.0
    %3947 = vadd.xlane.f32.xlu0 %v3946
    %v3948 = vpop.xlane.xlu0 %3947
    %v3949 = vrcp.pop %v3948
    %v3950 = vmul.f32 %v3945, %v3949
    %v3951 = vpack.c.bf16 %v3950, %v3950
    %v3952 = vrot.slane %v3207, 4
    %v3954 = vsel %vm872, %v3951, 0
    %v3957 = vsel %vm500, %v3952, 0
    %3959 = vmatprep.subr.bf16.mxu0 0
    %3960 = vmatpush1.bf16.msra.mxu0 0
    %3961 = vmatprep.subr.bf16.mxu0 0
    %3962 = vmatpush1.bf16.msra.mxu0 0
    %3963 = vmatprep.subr.bf16.mxu0 0
    %3964 = vmatpush1.bf16.msra.mxu0 0
    %3965 = vmatprep.subr.bf16.mxu0 0
    %3966 = vmatpush1.bf16.msra.mxu0 0
    %3967 = vmatprep.subr.bf16.mxu0 0
    %3968 = vmatpush1.bf16.msra.mxu0 0
    %3969 = vmatprep.subr.bf16.mxu0 0
    %3970 = vmatpush1.bf16.msra.mxu0 0
    %3971 = vmatprep.subr.bf16.mxu0 0
    %3972 = vmatpush1.bf16.msra.mxu0 0
    %3973 = vmatprep.subr.bf16.mxu0 0
    %3974 = vmatpush1.bf16.msra.mxu0 %v3957
    %3975 = vmatprep.subr.bf16.mxu0 0
    %3976 = vmatpush2.bf16.msra.mxu0 0
    %3977 = vmatprep.subr.bf16.mxu0 0
    %3978 = vmatpush2.bf16.msra.mxu0 0
    %3979 = vmatprep.subr.bf16.mxu0 0
    %3980 = vmatpush2.bf16.msra.mxu0 0
    %3981 = vmatprep.subr.bf16.mxu0 0
    %3982 = vmatpush2.bf16.msra.mxu0 0
    %3983 = vmatprep.subr.bf16.mxu0 0
    %3984 = vmatpush2.bf16.msra.mxu0 0
    %3985 = vmatprep.subr.bf16.mxu0 0
    %3986 = vmatpush2.bf16.msra.mxu0 0
    %3987 = vmatprep.subr.bf16.mxu0 0
    %3988 = vmatpush2.bf16.msra.mxu0 0
    %3989 = vmatprep.subr.bf16.mxu0 0
    %3990 = vmatpush2.bf16.msra.mxu0 0
    %3991 = vmatprep.mubr.bf16.mxu0 0
    %3992 = vmatmul.mubr.bf16.gmra.mxu0 %v3954
    %v3993 = vpop.f32.mrf.mxu0
    %v3994 = vadd.f32 0.0, %v3993
    %v3995 = vpop.f32.mrf.mxu0
    %v3996 = vpop.f32.mrf.mxu0
    %v3997 = vpop.f32.mrf.mxu0
    %3998 = vdwg.mxu0
    %v3999 = vpack.c.bf16 %v3994, %v3994
    %4000 = vrot.lane.b32.xlu0 %v3891, 96
    %v4001 = vpop.permute.xlu0 %4000
    %4002 = vrot.lane.b32.xlu0 %v3892, 96
    %v4003 = vpop.permute.xlu0 %4002
    %v4005 = vsel %vm824, %v4001, 0
    %v4008 = vsel %vm824, %v4003, 0
    %4010 = vmatprep.subr.bf16.mxu0 0
    %4011 = vmatpush1.bf16.xpose.msra.mxu0 0
    %4012 = vmatprep.subr.bf16.mxu0 0
    %4013 = vmatpush1.bf16.xpose.msra.mxu0 0
    %4014 = vmatprep.subr.bf16.mxu0 0
    %4015 = vmatpush1.bf16.xpose.msra.mxu0 0
    %4016 = vmatprep.subr.bf16.mxu0 0
    %4017 = vmatpush1.bf16.xpose.msra.mxu0 0
    %4018 = vmatprep.subr.bf16.mxu0 0
    %4019 = vmatpush1.bf16.xpose.msra.mxu0 0
    %4020 = vmatprep.subr.bf16.mxu0 0
    %4021 = vmatpush1.bf16.xpose.msra.mxu0 0
    %4022 = vmatprep.subr.bf16.mxu0 0
    %4023 = vmatpush1.bf16.xpose.msra.mxu0 0
    %4024 = vmatprep.subr.bf16.mxu0 0
    %4025 = vmatpush1.bf16.xpose.msra.mxu0 %v4008
    %4026 = vmatprep.subr.bf16.mxu0 0
    %4027 = vmatpush2.bf16.xpose.msra.mxu0 0
    %4028 = vmatprep.subr.bf16.mxu0 0
    %4029 = vmatpush2.bf16.xpose.msra.mxu0 0
    %4030 = vmatprep.subr.bf16.mxu0 0
    %4031 = vmatpush2.bf16.xpose.msra.mxu0 0
    %4032 = vmatprep.subr.bf16.mxu0 0
    %4033 = vmatpush2.bf16.xpose.msra.mxu0 0
    %4034 = vmatprep.subr.bf16.mxu0 0
    %4035 = vmatpush2.bf16.xpose.msra.mxu0 0
    %4036 = vmatprep.subr.bf16.mxu0 0
    %4037 = vmatpush2.bf16.xpose.msra.mxu0 0
    %4038 = vmatprep.subr.bf16.mxu0 0
    %4039 = vmatpush2.bf16.xpose.msra.mxu0 0
    %4040 = vmatprep.subr.bf16.mxu0 0
    %4041 = vmatpush2.bf16.xpose.msra.mxu0 0
    %4042 = vmatprep.mubr.bf16.mxu0 0
    %4043 = vmatmul.mubr.bf16.gmra.mxu0 %v4005
    %v4044 = vpop.f32.mrf.mxu0
    %v4045 = vadd.f32 0.0, %v4044
    %v4046 = vpop.f32.mrf.mxu0
    %v4047 = vpop.f32.mrf.mxu0
    %v4048 = vpop.f32.mrf.mxu0
    %4049 = vdwg.mxu0
    %v4050 = vsel %vm517, %v4045, -1e+30
    %v4051 = vsel %vm872, %v4050, -inf
    %4052 = vmax.xlane.f32.xlu0 %v4051
    %v4053 = vpop.xlane.xlu0 %4052
    %v4054 = vsub.f32 %v4050, %v4053
    %v4055 = vmul.f32 %v4054, 1.442695
    %v4056 = vpow.pop %v4055
    %v4057 = vsel %vm872, %v4056, 0.0
    %4058 = vadd.xlane.f32.xlu0 %v4057
    %v4059 = vpop.xlane.xlu0 %4058
    %v4060 = vrcp.pop %v4059
    %v4061 = vmul.f32 %v4056, %v4060
    %v4062 = vpack.c.bf16 %v4061, %v4061
    %4063 = vrot.lane.b32.xlu0 %v3952, 96
    %v4064 = vpop.permute.xlu0 %4063
    %v4066 = vsel %vm872, %v4062, 0
    %v4069 = vsel %vm500, %v4064, 0
    %4071 = vmatprep.subr.bf16.mxu0 0
    %4072 = vmatpush1.bf16.msra.mxu0 0
    %4073 = vmatprep.subr.bf16.mxu0 0
    %4074 = vmatpush1.bf16.msra.mxu0 0
    %4075 = vmatprep.subr.bf16.mxu0 0
    %4076 = vmatpush1.bf16.msra.mxu0 0
    %4077 = vmatprep.subr.bf16.mxu0 0
    %4078 = vmatpush1.bf16.msra.mxu0 0
    %4079 = vmatprep.subr.bf16.mxu0 0
    %4080 = vmatpush1.bf16.msra.mxu0 0
    %4081 = vmatprep.subr.bf16.mxu0 0
    %4082 = vmatpush1.bf16.msra.mxu0 0
    %4083 = vmatprep.subr.bf16.mxu0 0
    %4084 = vmatpush1.bf16.msra.mxu0 0
    %4085 = vmatprep.subr.bf16.mxu0 0
    %4086 = vmatpush1.bf16.msra.mxu0 %v4069
    %4087 = vmatprep.subr.bf16.mxu0 0
    %4088 = vmatpush2.bf16.msra.mxu0 0
    %4089 = vmatprep.subr.bf16.mxu0 0
    %4090 = vmatpush2.bf16.msra.mxu0 0
    %4091 = vmatprep.subr.bf16.mxu0 0
    %4092 = vmatpush2.bf16.msra.mxu0 0
    %4093 = vmatprep.subr.bf16.mxu0 0
    %4094 = vmatpush2.bf16.msra.mxu0 0
    %4095 = vmatprep.subr.bf16.mxu0 0
    %4096 = vmatpush2.bf16.msra.mxu0 0
    %4097 = vmatprep.subr.bf16.mxu0 0
    %4098 = vmatpush2.bf16.msra.mxu0 0
    %4099 = vmatprep.subr.bf16.mxu0 0
    %4100 = vmatpush2.bf16.msra.mxu0 0
    %4101 = vmatprep.subr.bf16.mxu0 0
    %4102 = vmatpush2.bf16.msra.mxu0 0
    %4103 = vmatprep.mubr.bf16.mxu0 0
    %4104 = vmatmul.mubr.bf16.gmra.mxu0 %v4066
    %v4105 = vpop.f32.mrf.mxu0
    %v4106 = vadd.f32 0.0, %v4105
    %v4107 = vpop.f32.mrf.mxu0
    %v4108 = vpop.f32.mrf.mxu0
    %v4109 = vpop.f32.mrf.mxu0
    %4110 = vdwg.mxu0
    %v4111 = vpack.c.bf16 %v4106, %v4106
    %v4113 = vsel %vm824, %v4111, 0
    %4115 = vmatprep.subr.bf16.mxu0 0
    %4116 = vmatpush1.bf16.msra.mxu0 0
    %4117 = vmatprep.subr.bf16.mxu0 0
    %4118 = vmatpush1.bf16.msra.mxu0 0
    %4119 = vmatprep.subr.bf16.mxu0 0
    %4120 = vmatpush1.bf16.msra.mxu0 0
    %4121 = vmatprep.subr.bf16.mxu0 0
    %4122 = vmatpush1.bf16.msra.mxu0 0
    %4123 = vmatprep.subr.bf16.mxu0 0
    %4124 = vmatpush1.bf16.msra.mxu0 0
    %4125 = vmatprep.subr.bf16.mxu0 0
    %4126 = vmatpush1.bf16.msra.mxu0 0
    %4127 = vmatprep.subr.bf16.mxu0 0
    %4128 = vmatpush1.bf16.msra.mxu0 %v3446
    %4129 = vmatprep.subr.bf16.mxu0 0
    %4130 = vmatpush1.bf16.msra.mxu0 %v3445
    %4131 = vmatprep.subr.bf16.mxu0 0
    %4132 = vmatpush2.bf16.msra.mxu0 0
    %4133 = vmatprep.subr.bf16.mxu0 0
    %4134 = vmatpush2.bf16.msra.mxu0 0
    %4135 = vmatprep.subr.bf16.mxu0 0
    %4136 = vmatpush2.bf16.msra.mxu0 0
    %4137 = vmatprep.subr.bf16.mxu0 0
    %4138 = vmatpush2.bf16.msra.mxu0 0
    %4139 = vmatprep.subr.bf16.mxu0 0
    %4140 = vmatpush2.bf16.msra.mxu0 0
    %4141 = vmatprep.subr.bf16.mxu0 0
    %4142 = vmatpush2.bf16.msra.mxu0 0
    %4143 = vmatprep.subr.bf16.mxu0 0
    %4144 = vmatpush2.bf16.msra.mxu0 0
    %4145 = vmatprep.subr.bf16.mxu0 0
    %4146 = vmatpush2.bf16.msra.mxu0 0
    %4147 = vmatprep.mubr.bf16.mxu0 0
    %4148 = vmatmul.mubr.bf16.gmra.mxu0 %v4113
    %v4149 = vpop.f32.mrf.mxu0
    %v4150 = vadd.f32 0.0, %v4149
    %v4151 = vpop.f32.mrf.mxu0
    %v4152 = vpop.f32.mrf.mxu0
    %v4153 = vpop.f32.mrf.mxu0
    %4154 = vdwg.mxu0
    %v4156 = vsel %vm824, %v3999, 0
    %4158 = vmatprep.subr.bf16.mxu0 0
    %4159 = vmatpush1.bf16.msra.mxu0 0
    %4160 = vmatprep.subr.bf16.mxu0 0
    %4161 = vmatpush1.bf16.msra.mxu0 0
    %4162 = vmatprep.subr.bf16.mxu0 0
    %4163 = vmatpush1.bf16.msra.mxu0 0
    %4164 = vmatprep.subr.bf16.mxu0 0
    %4165 = vmatpush1.bf16.msra.mxu0 0
    %4166 = vmatprep.subr.bf16.mxu0 0
    %4167 = vmatpush1.bf16.msra.mxu0 0
    %4168 = vmatprep.subr.bf16.mxu0 0
    %4169 = vmatpush1.bf16.msra.mxu0 0
    %4170 = vmatprep.subr.bf16.mxu0 0
    %4171 = vmatpush1.bf16.msra.mxu0 %v3501
    %4172 = vmatprep.subr.bf16.mxu0 0
    %4173 = vmatpush1.bf16.msra.mxu0 %v3500
    %4174 = vmatprep.subr.bf16.mxu0 0
    %4175 = vmatpush2.bf16.msra.mxu0 0
    %4176 = vmatprep.subr.bf16.mxu0 0
    %4177 = vmatpush2.bf16.msra.mxu0 0
    %4178 = vmatprep.subr.bf16.mxu0 0
    %4179 = vmatpush2.bf16.msra.mxu0 0
    %4180 = vmatprep.subr.bf16.mxu0 0
    %4181 = vmatpush2.bf16.msra.mxu0 0
    %4182 = vmatprep.subr.bf16.mxu0 0
    %4183 = vmatpush2.bf16.msra.mxu0 0
    %4184 = vmatprep.subr.bf16.mxu0 0
    %4185 = vmatpush2.bf16.msra.mxu0 0
    %4186 = vmatprep.subr.bf16.mxu0 0
    %4187 = vmatpush2.bf16.msra.mxu0 0
    %4188 = vmatprep.subr.bf16.mxu0 0
    %4189 = vmatpush2.bf16.msra.mxu0 0
    %4190 = vmatprep.mubr.bf16.mxu0 0
    %4191 = vmatmul.mubr.bf16.gmra.mxu0 %v4156
    %v4192 = vpop.f32.mrf.mxu0
    %v4193 = vadd.f32 %v4150, %v4192
    %v4194 = vpop.f32.mrf.mxu0
    %v4195 = vpop.f32.mrf.mxu0
    %v4196 = vpop.f32.mrf.mxu0
    %4197 = vdwg.mxu0
    %4198 = vrot.lane.b32.xlu0 %v3891, 64
    %v4199 = vpop.permute.xlu0 %4198
    %4200 = vrot.lane.b32.xlu0 %v3892, 64
    %v4201 = vpop.permute.xlu0 %4200
    %v4203 = vsel %vm824, %v4199, 0
    %v4206 = vsel %vm824, %v4201, 0
    %4208 = vmatprep.subr.bf16.mxu0 0
    %4209 = vmatpush1.bf16.xpose.msra.mxu0 0
    %4210 = vmatprep.subr.bf16.mxu0 0
    %4211 = vmatpush1.bf16.xpose.msra.mxu0 0
    %4212 = vmatprep.subr.bf16.mxu0 0
    %4213 = vmatpush1.bf16.xpose.msra.mxu0 0
    %4214 = vmatprep.subr.bf16.mxu0 0
    %4215 = vmatpush1.bf16.xpose.msra.mxu0 0
    %4216 = vmatprep.subr.bf16.mxu0 0
    %4217 = vmatpush1.bf16.xpose.msra.mxu0 0
    %4218 = vmatprep.subr.bf16.mxu0 0
    %4219 = vmatpush1.bf16.xpose.msra.mxu0 0
    %4220 = vmatprep.subr.bf16.mxu0 0
    %4221 = vmatpush1.bf16.xpose.msra.mxu0 0
    %4222 = vmatprep.subr.bf16.mxu0 0
    %4223 = vmatpush1.bf16.xpose.msra.mxu0 %v4206
    %4224 = vmatprep.subr.bf16.mxu0 0
    %4225 = vmatpush2.bf16.xpose.msra.mxu0 0
    %4226 = vmatprep.subr.bf16.mxu0 0
    %4227 = vmatpush2.bf16.xpose.msra.mxu0 0
    %4228 = vmatprep.subr.bf16.mxu0 0
    %4229 = vmatpush2.bf16.xpose.msra.mxu0 0
    %4230 = vmatprep.subr.bf16.mxu0 0
    %4231 = vmatpush2.bf16.xpose.msra.mxu0 0
    %4232 = vmatprep.subr.bf16.mxu0 0
    %4233 = vmatpush2.bf16.xpose.msra.mxu0 0
    %4234 = vmatprep.subr.bf16.mxu0 0
    %4235 = vmatpush2.bf16.xpose.msra.mxu0 0
    %4236 = vmatprep.subr.bf16.mxu0 0
    %4237 = vmatpush2.bf16.xpose.msra.mxu0 0
    %4238 = vmatprep.subr.bf16.mxu0 0
    %4239 = vmatpush2.bf16.xpose.msra.mxu0 0
    %4240 = vmatprep.mubr.bf16.mxu0 0
    %4241 = vmatmul.mubr.bf16.gmra.mxu0 %v4203
    %v4242 = vpop.f32.mrf.mxu0
    %v4243 = vadd.f32 0.0, %v4242
    %v4244 = vpop.f32.mrf.mxu0
    %v4245 = vpop.f32.mrf.mxu0
    %v4246 = vpop.f32.mrf.mxu0
    %4247 = vdwg.mxu0
    %v4248 = vsel %vm517, %v4243, -1e+30
    %v4249 = vsel %vm872, %v4248, -inf
    %4250 = vmax.xlane.f32.xlu0 %v4249
    %v4251 = vpop.xlane.xlu0 %4250
    %v4252 = vsub.f32 %v4248, %v4251
    %v4253 = vmul.f32 %v4252, 1.442695
    %v4254 = vpow.pop %v4253
    %v4255 = vsel %vm872, %v4254, 0.0
    %4256 = vadd.xlane.f32.xlu0 %v4255
    %v4257 = vpop.xlane.xlu0 %4256
    %v4258 = vrcp.pop %v4257
    %v4259 = vmul.f32 %v4254, %v4258
    %v4260 = vpack.c.bf16 %v4259, %v4259
    %4261 = vrot.lane.b32.xlu0 %v3952, 64
    %v4262 = vpop.permute.xlu0 %4261
    %v4264 = vsel %vm872, %v4260, 0
    %v4267 = vsel %vm500, %v4262, 0
    %4269 = vmatprep.subr.bf16.mxu0 0
    %4270 = vmatpush1.bf16.msra.mxu0 0
    %4271 = vmatprep.subr.bf16.mxu0 0
    %4272 = vmatpush1.bf16.msra.mxu0 0
    %4273 = vmatprep.subr.bf16.mxu0 0
    %4274 = vmatpush1.bf16.msra.mxu0 0
    %4275 = vmatprep.subr.bf16.mxu0 0
    %4276 = vmatpush1.bf16.msra.mxu0 0
    %4277 = vmatprep.subr.bf16.mxu0 0
    %4278 = vmatpush1.bf16.msra.mxu0 0
    %4279 = vmatprep.subr.bf16.mxu0 0
    %4280 = vmatpush1.bf16.msra.mxu0 0
    %4281 = vmatprep.subr.bf16.mxu0 0
    %4282 = vmatpush1.bf16.msra.mxu0 0
    %4283 = vmatprep.subr.bf16.mxu0 0
    %4284 = vmatpush1.bf16.msra.mxu0 %v4267
    %4285 = vmatprep.subr.bf16.mxu0 0
    %4286 = vmatpush2.bf16.msra.mxu0 0
    %4287 = vmatprep.subr.bf16.mxu0 0
    %4288 = vmatpush2.bf16.msra.mxu0 0
    %4289 = vmatprep.subr.bf16.mxu0 0
    %4290 = vmatpush2.bf16.msra.mxu0 0
    %4291 = vmatprep.subr.bf16.mxu0 0
    %4292 = vmatpush2.bf16.msra.mxu0 0
    %4293 = vmatprep.subr.bf16.mxu0 0
    %4294 = vmatpush2.bf16.msra.mxu0 0
    %4295 = vmatprep.subr.bf16.mxu0 0
    %4296 = vmatpush2.bf16.msra.mxu0 0
    %4297 = vmatprep.subr.bf16.mxu0 0
    %4298 = vmatpush2.bf16.msra.mxu0 0
    %4299 = vmatprep.subr.bf16.mxu0 0
    %4300 = vmatpush2.bf16.msra.mxu0 0
    %4301 = vmatprep.mubr.bf16.mxu0 0
    %4302 = vmatmul.mubr.bf16.gmra.mxu0 %v4264
    %v4303 = vpop.f32.mrf.mxu0
    %v4304 = vadd.f32 0.0, %v4303
    %v4305 = vpop.f32.mrf.mxu0
    %v4306 = vpop.f32.mrf.mxu0
    %v4307 = vpop.f32.mrf.mxu0
    %4308 = vdwg.mxu0
    %v4309 = vpack.c.bf16 %v4304, %v4304
    %v4311 = vsel %vm824, %v4309, 0
    %4313 = vmatprep.subr.bf16.mxu0 0
    %4314 = vmatpush1.bf16.msra.mxu0 0
    %4315 = vmatprep.subr.bf16.mxu0 0
    %4316 = vmatpush1.bf16.msra.mxu0 0
    %4317 = vmatprep.subr.bf16.mxu0 0
    %4318 = vmatpush1.bf16.msra.mxu0 0
    %4319 = vmatprep.subr.bf16.mxu0 0
    %4320 = vmatpush1.bf16.msra.mxu0 0
    %4321 = vmatprep.subr.bf16.mxu0 0
    %4322 = vmatpush1.bf16.msra.mxu0 0
    %4323 = vmatprep.subr.bf16.mxu0 0
    %4324 = vmatpush1.bf16.msra.mxu0 0
    %4325 = vmatprep.subr.bf16.mxu0 0
    %4326 = vmatpush1.bf16.msra.mxu0 %v3672
    %4327 = vmatprep.subr.bf16.mxu0 0
    %4328 = vmatpush1.bf16.msra.mxu0 %v3671
    %4329 = vmatprep.subr.bf16.mxu0 0
    %4330 = vmatpush2.bf16.msra.mxu0 0
    %4331 = vmatprep.subr.bf16.mxu0 0
    %4332 = vmatpush2.bf16.msra.mxu0 0
    %4333 = vmatprep.subr.bf16.mxu0 0
    %4334 = vmatpush2.bf16.msra.mxu0 0
    %4335 = vmatprep.subr.bf16.mxu0 0
    %4336 = vmatpush2.bf16.msra.mxu0 0
    %4337 = vmatprep.subr.bf16.mxu0 0
    %4338 = vmatpush2.bf16.msra.mxu0 0
    %4339 = vmatprep.subr.bf16.mxu0 0
    %4340 = vmatpush2.bf16.msra.mxu0 0
    %4341 = vmatprep.subr.bf16.mxu0 0
    %4342 = vmatpush2.bf16.msra.mxu0 0
    %4343 = vmatprep.subr.bf16.mxu0 0
    %4344 = vmatpush2.bf16.msra.mxu0 0
    %4345 = vmatprep.mubr.bf16.mxu0 0
    %4346 = vmatmul.mubr.bf16.gmra.mxu0 %v4311
    %v4347 = vpop.f32.mrf.mxu0
    %v4348 = vadd.f32 0.0, %v4347
    %v4349 = vpop.f32.mrf.mxu0
    %v4350 = vpop.f32.mrf.mxu0
    %v4351 = vpop.f32.mrf.mxu0
    %4352 = vdwg.mxu0
    %v4353 = vadd.f32 %v4193, %v4348
    %4354 = vrot.lane.b32.xlu0 %v3891, 32
    %v4355 = vpop.permute.xlu0 %4354
    %4356 = vrot.lane.b32.xlu0 %v3892, 32
    %v4357 = vpop.permute.xlu0 %4356
    %v4359 = vsel %vm824, %v4355, 0
    %v4362 = vsel %vm824, %v4357, 0
    %4364 = vmatprep.subr.bf16.mxu0 0
    %4365 = vmatpush1.bf16.xpose.msra.mxu0 0
    %4366 = vmatprep.subr.bf16.mxu0 0
    %4367 = vmatpush1.bf16.xpose.msra.mxu0 0
    %4368 = vmatprep.subr.bf16.mxu0 0
    %4369 = vmatpush1.bf16.xpose.msra.mxu0 0
    %4370 = vmatprep.subr.bf16.mxu0 0
    %4371 = vmatpush1.bf16.xpose.msra.mxu0 0
    %4372 = vmatprep.subr.bf16.mxu0 0
    %4373 = vmatpush1.bf16.xpose.msra.mxu0 0
    %4374 = vmatprep.subr.bf16.mxu0 0
    %4375 = vmatpush1.bf16.xpose.msra.mxu0 0
    %4376 = vmatprep.subr.bf16.mxu0 0
    %4377 = vmatpush1.bf16.xpose.msra.mxu0 0
    %4378 = vmatprep.subr.bf16.mxu0 0
    %4379 = vmatpush1.bf16.xpose.msra.mxu0 %v4362
    %4380 = vmatprep.subr.bf16.mxu0 0
    %4381 = vmatpush2.bf16.xpose.msra.mxu0 0
    %4382 = vmatprep.subr.bf16.mxu0 0
    %4383 = vmatpush2.bf16.xpose.msra.mxu0 0
    %4384 = vmatprep.subr.bf16.mxu0 0
    %4385 = vmatpush2.bf16.xpose.msra.mxu0 0
    %4386 = vmatprep.subr.bf16.mxu0 0
    %4387 = vmatpush2.bf16.xpose.msra.mxu0 0
    %4388 = vmatprep.subr.bf16.mxu0 0
    %4389 = vmatpush2.bf16.xpose.msra.mxu0 0
    %4390 = vmatprep.subr.bf16.mxu0 0
    %4391 = vmatpush2.bf16.xpose.msra.mxu0 0
    %4392 = vmatprep.subr.bf16.mxu0 0
    %4393 = vmatpush2.bf16.xpose.msra.mxu0 0
    %4394 = vmatprep.subr.bf16.mxu0 0
    %4395 = vmatpush2.bf16.xpose.msra.mxu0 0
    %4396 = vmatprep.mubr.bf16.mxu0 0
    %4397 = vmatmul.mubr.bf16.gmra.mxu0 %v4359
    %v4398 = vpop.f32.mrf.mxu0
    %v4399 = vadd.f32 0.0, %v4398
    %v4400 = vpop.f32.mrf.mxu0
    %v4401 = vpop.f32.mrf.mxu0
    %v4402 = vpop.f32.mrf.mxu0
    %4403 = vdwg.mxu0
    %v4404 = vsel %vm517, %v4399, -1e+30
    %v4405 = vsel %vm872, %v4404, -inf
    %4406 = vmax.xlane.f32.xlu0 %v4405
    %v4407 = vpop.xlane.xlu0 %4406
    %v4408 = vsub.f32 %v4404, %v4407
    %v4409 = vmul.f32 %v4408, 1.442695
    %v4410 = vpow.pop %v4409
    %v4411 = vsel %vm872, %v4410, 0.0
    %4412 = vadd.xlane.f32.xlu0 %v4411
    %v4413 = vpop.xlane.xlu0 %4412
    %v4414 = vrcp.pop %v4413
    %v4415 = vmul.f32 %v4410, %v4414
    %v4416 = vpack.c.bf16 %v4415, %v4415
    %4417 = vrot.lane.b32.xlu0 %v3952, 32
    %v4418 = vpop.permute.xlu0 %4417
    %v4420 = vsel %vm872, %v4416, 0
    %v4423 = vsel %vm500, %v4418, 0
    %4425 = vmatprep.subr.bf16.mxu0 0
    %4426 = vmatpush1.bf16.msra.mxu0 0
    %4427 = vmatprep.subr.bf16.mxu0 0
    %4428 = vmatpush1.bf16.msra.mxu0 0
    %4429 = vmatprep.subr.bf16.mxu0 0
    %4430 = vmatpush1.bf16.msra.mxu0 0
    %4431 = vmatprep.subr.bf16.mxu0 0
    %4432 = vmatpush1.bf16.msra.mxu0 0
    %4433 = vmatprep.subr.bf16.mxu0 0
    %4434 = vmatpush1.bf16.msra.mxu0 0
    %4435 = vmatprep.subr.bf16.mxu0 0
    %4436 = vmatpush1.bf16.msra.mxu0 0
    %4437 = vmatprep.subr.bf16.mxu0 0
    %4438 = vmatpush1.bf16.msra.mxu0 0
    %4439 = vmatprep.subr.bf16.mxu0 0
    %4440 = vmatpush1.bf16.msra.mxu0 %v4423
    %4441 = vmatprep.subr.bf16.mxu0 0
    %4442 = vmatpush2.bf16.msra.mxu0 0
    %4443 = vmatprep.subr.bf16.mxu0 0
    %4444 = vmatpush2.bf16.msra.mxu0 0
    %4445 = vmatprep.subr.bf16.mxu0 0
    %4446 = vmatpush2.bf16.msra.mxu0 0
    %4447 = vmatprep.subr.bf16.mxu0 0
    %4448 = vmatpush2.bf16.msra.mxu0 0
    %4449 = vmatprep.subr.bf16.mxu0 0
    %4450 = vmatpush2.bf16.msra.mxu0 0
    %4451 = vmatprep.subr.bf16.mxu0 0
    %4452 = vmatpush2.bf16.msra.mxu0 0
    %4453 = vmatprep.subr.bf16.mxu0 0
    %4454 = vmatpush2.bf16.msra.mxu0 0
    %4455 = vmatprep.subr.bf16.mxu0 0
    %4456 = vmatpush2.bf16.msra.mxu0 0
    %4457 = vmatprep.mubr.bf16.mxu0 0
    %4458 = vmatmul.mubr.bf16.gmra.mxu0 %v4420
    %v4459 = vpop.f32.mrf.mxu0
    %v4460 = vadd.f32 0.0, %v4459
    %v4461 = vpop.f32.mrf.mxu0
    %v4462 = vpop.f32.mrf.mxu0
    %v4463 = vpop.f32.mrf.mxu0
    %4464 = vdwg.mxu0
    %v4465 = vpack.c.bf16 %v4460, %v4460
    %v4467 = vsel %vm824, %v4465, 0
    %4469 = vmatprep.subr.bf16.mxu0 0
    %4470 = vmatpush1.bf16.msra.mxu0 0
    %4471 = vmatprep.subr.bf16.mxu0 0
    %4472 = vmatpush1.bf16.msra.mxu0 0
    %4473 = vmatprep.subr.bf16.mxu0 0
    %4474 = vmatpush1.bf16.msra.mxu0 0
    %4475 = vmatprep.subr.bf16.mxu0 0
    %4476 = vmatpush1.bf16.msra.mxu0 0
    %4477 = vmatprep.subr.bf16.mxu0 0
    %4478 = vmatpush1.bf16.msra.mxu0 0
    %4479 = vmatprep.subr.bf16.mxu0 0
    %4480 = vmatpush1.bf16.msra.mxu0 0
    %4481 = vmatprep.subr.bf16.mxu0 0
    %4482 = vmatpush1.bf16.msra.mxu0 %v3844
    %4483 = vmatprep.subr.bf16.mxu0 0
    %4484 = vmatpush1.bf16.msra.mxu0 %v3843
    %4485 = vmatprep.subr.bf16.mxu0 0
    %4486 = vmatpush2.bf16.msra.mxu0 0
    %4487 = vmatprep.subr.bf16.mxu0 0
    %4488 = vmatpush2.bf16.msra.mxu0 0
    %4489 = vmatprep.subr.bf16.mxu0 0
    %4490 = vmatpush2.bf16.msra.mxu0 0
    %4491 = vmatprep.subr.bf16.mxu0 0
    %4492 = vmatpush2.bf16.msra.mxu0 0
    %4493 = vmatprep.subr.bf16.mxu0 0
    %4494 = vmatpush2.bf16.msra.mxu0 0
    %4495 = vmatprep.subr.bf16.mxu0 0
    %4496 = vmatpush2.bf16.msra.mxu0 0
    %4497 = vmatprep.subr.bf16.mxu0 0
    %4498 = vmatpush2.bf16.msra.mxu0 0
    %4499 = vmatprep.subr.bf16.mxu0 0
    %4500 = vmatpush2.bf16.msra.mxu0 0
    %4501 = vmatprep.mubr.bf16.mxu0 0
    %4502 = vmatmul.mubr.bf16.gmra.mxu0 %v4467
    %v4503 = vpop.f32.mrf.mxu0
    %v4504 = vadd.f32 0.0, %v4503
    %v4505 = vpop.f32.mrf.mxu0
    %v4506 = vpop.f32.mrf.mxu0
    %v4507 = vpop.f32.mrf.mxu0
    %4508 = vdwg.mxu0
    %v4509 = vadd.f32 %v4353, %v4504
    %v4510 = vadd.f32 %v2901, %v3890
    %v4511 = vadd.f32 %v2902, %v4509
    %v4512 = vld [vmem:[%s45] sm:$0x1]
    %v4514 = vlaneseq
    %v4515 = vshrl.u32 %v4514, 7
    %v4516 = vsub.s32 0, %v4515
    %v4517 = vrot.slane %v4512, %v4516
    %v4519 = vadd.f32 %v4510, %v4517
    %v4520 = vadd.f32 %v4511, %v4517
    %v4521 = vld [vmem:[%s47] sm:$0x1]
    %v4522 = vld [vmem:[%s49] sm:$0x1]
    %4523 = vadd.xlane.f32.xlu0 %v4519
    %v4524 = vpop.xlane.xlu0 %4523
    %4525 = vadd.xlane.f32.xlu0 %v4520
    %v4526 = vpop.xlane.xlu0 %4525
    %v4527 = vmul.f32 %v4524, %v524
    %v4528 = vmul.f32 %v4526, %v524
    %v4529 = vsub.f32 %v4519, %v4527
    %v4530 = vsub.f32 %v4520, %v4528
    %v4531 = vmul.f32 %v4529, %v4529
    %v4532 = vmul.f32 %v4530, %v4530
    %4533 = vadd.xlane.f32.xlu0 %v4531
    %v4534 = vpop.xlane.xlu0 %4533
    %4535 = vadd.xlane.f32.xlu0 %v4532
    %v4536 = vpop.xlane.xlu0 %4535
    %v4537 = vmul.f32 %v4534, %v524
    %v4538 = vmul.f32 %v4536, %v524
    %v4539 = vadd.f32 %v4537, 1e-06
    %v4540 = vadd.f32 %v4538, 1e-06
    %v4541 = vrsqrt.pop %v4539
    %v4542 = vrsqrt.pop %v4540
    %v4543 = vmul.f32 %v4529, %v4541
    %v4544 = vmul.f32 %v4530, %v4542
    %v4546 = vlaneseq
    %v4547 = vshrl.u32 %v4546, 7
    %v4548 = vsub.s32 0, %v4547
    %v4549 = vrot.slane %v4521, %v4548
    %v4551 = vmul.f32 %v4543, %v4549
    %v4552 = vmul.f32 %v4544, %v4549
    %v4554 = vlaneseq
    %v4555 = vshrl.u32 %v4554, 7
    %v4556 = vsub.s32 0, %v4555
    %v4557 = vrot.slane %v4522, %v4556
    %v4559 = vadd.f32 %v4551, %v4557
    %v4560 = vadd.f32 %v4552, %v4557
    %v4561 = vpack.c.bf16 %v4560, %v4559
    %v4562 = vld [vmem:[#allocation23] sm:$0xff]
    %v4563 = vld [vmem:[#allocation23 + $0x8] sm:$0xff]
    %v4564 = vld [vmem:[#allocation23 + $0x10] sm:$0xff]
    %v4565 = vld [vmem:[#allocation23 + $0x18] sm:$0xff]
    %v4566 = vld [vmem:[#allocation23 + $0x20] sm:$0xff]
    %v4567 = vld [vmem:[#allocation23 + $0x28] sm:$0xff]
    %v4568 = vld [vmem:[#allocation23 + $0x30] sm:$0xff]
    %v4569 = vld [vmem:[#allocation23 + $0x38] sm:$0xff]
    %v4570 = vld [vmem:[#allocation23 + $0x40] sm:$0xff]
    %v4571 = vld [vmem:[#allocation23 + $0x48] sm:$0xff]
    %v4572 = vld [vmem:[#allocation23 + $0x50] sm:$0xff]
    %v4573 = vld [vmem:[#allocation23 + $0x58] sm:$0xff]
    %v4574 = vld [vmem:[#allocation23 + $0x60] sm:$0xff]
    %v4575 = vld [vmem:[#allocation23 + $0x68] sm:$0xff]
    %v4576 = vld [vmem:[#allocation23 + $0x70] sm:$0xff]
    %v4577 = vld [vmem:[#allocation23 + $0x78] sm:$0xff]
    %v4578 = vld [vmem:[#allocation23 + $0x80] sm:$0xff]
    %v4579 = vld [vmem:[#allocation23 + $0x88] sm:$0xff]
    %v4580 = vld [vmem:[#allocation23 + $0x90] sm:$0xff]
    %v4581 = vld [vmem:[#allocation23 + $0x98] sm:$0xff]
    %v4582 = vld [vmem:[#allocation23 + $0xa0] sm:$0xff]
    %v4583 = vld [vmem:[#allocation23 + $0xa8] sm:$0xff]
    %v4584 = vld [vmem:[#allocation23 + $0xb0] sm:$0xff]
    %v4585 = vld [vmem:[#allocation23 + $0xb8] sm:$0xff]
    %v4586 = vld [vmem:[#allocation23 + $0xc0] sm:$0xff]
    %v4587 = vld [vmem:[#allocation23 + $0xc8] sm:$0xff]
    %v4588 = vld [vmem:[#allocation23 + $0xd0] sm:$0xff]
    %v4589 = vld [vmem:[#allocation23 + $0xd8] sm:$0xff]
    %v4590 = vld [vmem:[#allocation23 + $0xe0] sm:$0xff]
    %v4591 = vld [vmem:[#allocation23 + $0xe8] sm:$0xff]
    %v4592 = vld [vmem:[#allocation23 + $0xf0] sm:$0xff]
    %v4593 = vld [vmem:[#allocation23 + $0xf8] sm:$0xff]
    %v4594 = vld [vmem:[%s53] sm:$0xf]
    %v4596 = vlaneseq
    %v4597 = vshrl.u32 %v4596, 7
    %v4598 = vsub.s32 0, %v4597
    %v4599 = vrot.slane %v4594, %v4598
    %v4600 = vlaneseq
    %v4601 = vshrl.u32 %v4600, 7
    %v4602 = vsub.s32 1, %v4601
    %v4603 = vrot.slane %v4594, %v4602
    %v4604 = vlaneseq
    %v4605 = vshrl.u32 %v4604, 7
    %v4606 = vsub.s32 2, %v4605
    %v4607 = vrot.slane %v4594, %v4606
    %v4608 = vlaneseq
    %v4609 = vshrl.u32 %v4608, 7
    %v4610 = vsub.s32 3, %v4609
    %v4611 = vrot.slane %v4594, %v4610
    %v4648 = vunpack.c.l.b16 %v4562
    %v4649 = vunpack.c.h.b16 %v4562
    %v4650 = vunpack.c.l.b16 %v4563
    %v4651 = vunpack.c.h.b16 %v4563
    %v4652 = vunpack.c.l.b16 %v4564
    %v4653 = vunpack.c.h.b16 %v4564
    %v4654 = vunpack.c.l.b16 %v4565
    %v4655 = vunpack.c.h.b16 %v4565
    %v4656 = vunpack.c.l.b16 %v4566
    %v4657 = vunpack.c.h.b16 %v4566
    %v4658 = vunpack.c.l.b16 %v4567
    %v4659 = vunpack.c.h.b16 %v4567
    %v4660 = vunpack.c.l.b16 %v4568
    %v4661 = vunpack.c.h.b16 %v4568
    %v4662 = vunpack.c.l.b16 %v4569
    %v4663 = vunpack.c.h.b16 %v4569
    %v4664 = vunpack.c.l.b16 %v4570
    %v4665 = vunpack.c.h.b16 %v4570
    %v4666 = vunpack.c.l.b16 %v4571
    %v4667 = vunpack.c.h.b16 %v4571
    %v4668 = vunpack.c.l.b16 %v4572
    %v4669 = vunpack.c.h.b16 %v4572
    %v4670 = vunpack.c.l.b16 %v4573
    %v4671 = vunpack.c.h.b16 %v4573
    %v4672 = vunpack.c.l.b16 %v4574
    %v4673 = vunpack.c.h.b16 %v4574
    %v4674 = vunpack.c.l.b16 %v4575
    %v4675 = vunpack.c.h.b16 %v4575
    %v4676 = vunpack.c.l.b16 %v4576
    %v4677 = vunpack.c.h.b16 %v4576
    %v4678 = vunpack.c.l.b16 %v4577
    %v4679 = vunpack.c.h.b16 %v4577
    %v4680 = vunpack.c.l.b16 %v4578
    %v4681 = vunpack.c.h.b16 %v4578
    %v4682 = vunpack.c.l.b16 %v4579
    %v4683 = vunpack.c.h.b16 %v4579
    %v4684 = vunpack.c.l.b16 %v4580
    %v4685 = vunpack.c.h.b16 %v4580
    %v4686 = vunpack.c.l.b16 %v4581
    %v4687 = vunpack.c.h.b16 %v4581
    %v4688 = vunpack.c.l.b16 %v4582
    %v4689 = vunpack.c.h.b16 %v4582
    %v4690 = vunpack.c.l.b16 %v4583
    %v4691 = vunpack.c.h.b16 %v4583
    %v4692 = vunpack.c.l.b16 %v4584
    %v4693 = vunpack.c.h.b16 %v4584
    %v4694 = vunpack.c.l.b16 %v4585
    %v4695 = vunpack.c.h.b16 %v4585
    %v4696 = vunpack.c.l.b16 %v4586
    %v4697 = vunpack.c.h.b16 %v4586
    %v4698 = vunpack.c.l.b16 %v4587
    %v4699 = vunpack.c.h.b16 %v4587
    %v4700 = vunpack.c.l.b16 %v4588
    %v4701 = vunpack.c.h.b16 %v4588
    %v4702 = vunpack.c.l.b16 %v4589
    %v4703 = vunpack.c.h.b16 %v4589
    %v4704 = vunpack.c.l.b16 %v4590
    %v4705 = vunpack.c.h.b16 %v4590
    %v4706 = vunpack.c.l.b16 %v4591
    %v4707 = vunpack.c.h.b16 %v4591
    %v4708 = vunpack.c.l.b16 %v4592
    %v4709 = vunpack.c.h.b16 %v4592
    %v4710 = vunpack.c.l.b16 %v4593
    %v4711 = vunpack.c.h.b16 %v4593
    %v4712 = vpack.c.b16 %v4652, %v4648
    %v4713 = vpack.c.b16 %v4653, %v4649
    %v4714 = vpack.c.b16 %v4654, %v4650
    %v4715 = vpack.c.b16 %v4655, %v4651
    %v4716 = vpack.c.b16 %v4660, %v4656
    %v4717 = vpack.c.b16 %v4661, %v4657
    %v4718 = vpack.c.b16 %v4662, %v4658
    %v4719 = vpack.c.b16 %v4663, %v4659
    %v4720 = vpack.c.b16 %v4668, %v4664
    %v4721 = vpack.c.b16 %v4669, %v4665
    %v4722 = vpack.c.b16 %v4670, %v4666
    %v4723 = vpack.c.b16 %v4671, %v4667
    %v4724 = vpack.c.b16 %v4676, %v4672
    %v4725 = vpack.c.b16 %v4677, %v4673
    %v4726 = vpack.c.b16 %v4678, %v4674
    %v4727 = vpack.c.b16 %v4679, %v4675
    %v4728 = vpack.c.b16 %v4684, %v4680
    %v4729 = vpack.c.b16 %v4685, %v4681
    %v4730 = vpack.c.b16 %v4686, %v4682
    %v4731 = vpack.c.b16 %v4687, %v4683
    %v4732 = vpack.c.b16 %v4692, %v4688
    %v4733 = vpack.c.b16 %v4693, %v4689
    %v4734 = vpack.c.b16 %v4694, %v4690
    %v4735 = vpack.c.b16 %v4695, %v4691
    %v4736 = vpack.c.b16 %v4700, %v4696
    %v4737 = vpack.c.b16 %v4701, %v4697
    %v4738 = vpack.c.b16 %v4702, %v4698
    %v4739 = vpack.c.b16 %v4703, %v4699
    %v4740 = vpack.c.b16 %v4708, %v4704
    %v4741 = vpack.c.b16 %v4709, %v4705
    %v4742 = vpack.c.b16 %v4710, %v4706
    %v4743 = vpack.c.b16 %v4711, %v4707
    %4776 = vmatprep.subr.bf16.mxu0 %v4741
    %4777 = vmatpush1.bf16.msra.mxu0 %v4740
    %4778 = vmatprep.subr.bf16.mxu0 %v4737
    %4779 = vmatpush1.bf16.msra.mxu0 %v4736
    %4780 = vmatprep.subr.bf16.mxu0 %v4733
    %4781 = vmatpush1.bf16.msra.mxu0 %v4732
    %4782 = vmatprep.subr.bf16.mxu0 %v4729
    %4783 = vmatpush1.bf16.msra.mxu0 %v4728
    %4784 = vmatprep.subr.bf16.mxu0 %v4725
    %4785 = vmatpush1.bf16.msra.mxu0 %v4724
    %4786 = vmatprep.subr.bf16.mxu0 %v4721
    %4787 = vmatpush1.bf16.msra.mxu0 %v4720
    %4788 = vmatprep.subr.bf16.mxu0 %v4717
    %4789 = vmatpush1.bf16.msra.mxu0 %v4716
    %4790 = vmatprep.subr.bf16.mxu0 %v4713
    %4791 = vmatpush1.bf16.msra.mxu0 %v4712
    %4792 = vmatprep.subr.bf16.mxu0 0
    %4793 = vmatpush2.bf16.msra.mxu0 0
    %4794 = vmatprep.subr.bf16.mxu0 0
    %4795 = vmatpush2.bf16.msra.mxu0 0
    %4796 = vmatprep.subr.bf16.mxu0 0
    %4797 = vmatpush2.bf16.msra.mxu0 0
    %4798 = vmatprep.subr.bf16.mxu0 0
    %4799 = vmatpush2.bf16.msra.mxu0 0
    %4800 = vmatprep.subr.bf16.mxu0 0
    %4801 = vmatpush2.bf16.msra.mxu0 0
    %4802 = vmatprep.subr.bf16.mxu0 0
    %4803 = vmatpush2.bf16.msra.mxu0 0
    %4804 = vmatprep.subr.bf16.mxu0 0
    %4805 = vmatpush2.bf16.msra.mxu0 0
    %4806 = vmatprep.subr.bf16.mxu0 0
    %4807 = vmatpush2.bf16.msra.mxu0 0
    %4808 = vmatprep.mubr.bf16.mxu0 0
    %4809 = vmatmul.mubr.bf16.gmra.mxu0 %v4561
    %v4810 = vpop.f32.mrf.mxu0
    %v4811 = vadd.f32 %v4599, %v4810
    %v4812 = vpop.f32.mrf.mxu0
    %v4813 = vadd.f32 %v4603, %v4812
    %v4814 = vpop.f32.mrf.mxu0
    %v4815 = vadd.f32 %v4599, %v4814
    %v4816 = vpop.f32.mrf.mxu0
    %v4817 = vadd.f32 %v4603, %v4816
    %4818 = vdwg.mxu0
    %4819 = vmatprep.subr.bf16.mxu0 %v4743
    %4820 = vmatpush1.bf16.msra.mxu0 %v4742
    %4821 = vmatprep.subr.bf16.mxu0 %v4739
    %4822 = vmatpush1.bf16.msra.mxu0 %v4738
    %4823 = vmatprep.subr.bf16.mxu0 %v4735
    %4824 = vmatpush1.bf16.msra.mxu0 %v4734
    %4825 = vmatprep.subr.bf16.mxu0 %v4731
    %4826 = vmatpush1.bf16.msra.mxu0 %v4730
    %4827 = vmatprep.subr.bf16.mxu0 %v4727
    %4828 = vmatpush1.bf16.msra.mxu0 %v4726
    %4829 = vmatprep.subr.bf16.mxu0 %v4723
    %4830 = vmatpush1.bf16.msra.mxu0 %v4722
    %4831 = vmatprep.subr.bf16.mxu0 %v4719
    %4832 = vmatpush1.bf16.msra.mxu0 %v4718
    %4833 = vmatprep.subr.bf16.mxu0 %v4715
    %4834 = vmatpush1.bf16.msra.mxu0 %v4714
    %4835 = vmatprep.subr.bf16.mxu0 0
    %4836 = vmatpush2.bf16.msra.mxu0 0
    %4837 = vmatprep.subr.bf16.mxu0 0
    %4838 = vmatpush2.bf16.msra.mxu0 0
    %4839 = vmatprep.subr.bf16.mxu0 0
    %4840 = vmatpush2.bf16.msra.mxu0 0
    %4841 = vmatprep.subr.bf16.mxu0 0
    %4842 = vmatpush2.bf16.msra.mxu0 0
    %4843 = vmatprep.subr.bf16.mxu0 0
    %4844 = vmatpush2.bf16.msra.mxu0 0
    %4845 = vmatprep.subr.bf16.mxu0 0
    %4846 = vmatpush2.bf16.msra.mxu0 0
    %4847 = vmatprep.subr.bf16.mxu0 0
    %4848 = vmatpush2.bf16.msra.mxu0 0
    %4849 = vmatprep.subr.bf16.mxu0 0
    %4850 = vmatpush2.bf16.msra.mxu0 0
    %4851 = vmatprep.mubr.bf16.mxu0 0
    %4852 = vmatmul.mubr.bf16.gmra.mxu0 %v4561
    %v4853 = vpop.f32.mrf.mxu0
    %v4854 = vadd.f32 %v4607, %v4853
    %v4855 = vpop.f32.mrf.mxu0
    %v4856 = vadd.f32 %v4611, %v4855
    %v4857 = vpop.f32.mrf.mxu0
    %v4858 = vadd.f32 %v4607, %v4857
    %v4859 = vpop.f32.mrf.mxu0
    %v4860 = vadd.f32 %v4611, %v4859
    %4861 = vdwg.mxu0
    %v4862 = vmul.f32 %v4811, %v4811
    %v4863 = vmul.f32 %v4813, %v4813
    %v4864 = vmul.f32 %v4854, %v4854
    %v4865 = vmul.f32 %v4856, %v4856
    %v4866 = vmul.f32 %v4815, %v4815
    %v4867 = vmul.f32 %v4817, %v4817
    %v4868 = vmul.f32 %v4858, %v4858
    %v4869 = vmul.f32 %v4860, %v4860
    %v4870 = vmul.f32 %v4811, %v4862
    %v4871 = vmul.f32 %v4813, %v4863
    %v4872 = vmul.f32 %v4854, %v4864
    %v4873 = vmul.f32 %v4856, %v4865
    %v4874 = vmul.f32 %v4815, %v4866
    %v4875 = vmul.f32 %v4817, %v4867
    %v4876 = vmul.f32 %v4858, %v4868
    %v4877 = vmul.f32 %v4860, %v4869
    %v4878 = vmul.f32 %v4870, 0.044715
    %v4879 = vmul.f32 %v4871, 0.044715
    %v4880 = vmul.f32 %v4872, 0.044715
    %v4881 = vmul.f32 %v4873, 0.044715
    %v4882 = vmul.f32 %v4874, 0.044715
    %v4883 = vmul.f32 %v4875, 0.044715
    %v4884 = vmul.f32 %v4876, 0.044715
    %v4885 = vmul.f32 %v4877, 0.044715
    %v4886 = vadd.f32 %v4811, %v4878
    %v4887 = vadd.f32 %v4813, %v4879
    %v4888 = vadd.f32 %v4854, %v4880
    %v4889 = vadd.f32 %v4856, %v4881
    %v4890 = vadd.f32 %v4815, %v4882
    %v4891 = vadd.f32 %v4817, %v4883
    %v4892 = vadd.f32 %v4858, %v4884
    %v4893 = vadd.f32 %v4860, %v4885
    %v4894 = vmul.f32 %v4886, 0.7978846
    %v4895 = vmul.f32 %v4887, 0.7978846
    %v4896 = vmul.f32 %v4888, 0.7978846
    %v4897 = vmul.f32 %v4889, 0.7978846
    %v4898 = vmul.f32 %v4890, 0.7978846
    %v4899 = vmul.f32 %v4891, 0.7978846
    %v4900 = vmul.f32 %v4892, 0.7978846
    %v4901 = vmul.f32 %v4893, 0.7978846
    %v4902 = vtanh.pop %v4894
    %v4903 = vtanh.pop %v4895
    %v4904 = vtanh.pop %v4896
    %v4905 = vtanh.pop %v4897
    %v4906 = vtanh.pop %v4898
    %v4907 = vtanh.pop %v4899
    %v4908 = vtanh.pop %v4900
    %v4909 = vtanh.pop %v4901
    %v4910 = vadd.f32 %v4902, 1.0
    %v4911 = vadd.f32 %v4903, 1.0
    %v4912 = vadd.f32 %v4904, 1.0
    %v4913 = vadd.f32 %v4905, 1.0
    %v4914 = vadd.f32 %v4906, 1.0
    %v4915 = vadd.f32 %v4907, 1.0
    %v4916 = vadd.f32 %v4908, 1.0
    %v4917 = vadd.f32 %v4909, 1.0
    %v4918 = vmul.f32 %v4910, 0.5
    %v4919 = vmul.f32 %v4911, 0.5
    %v4920 = vmul.f32 %v4912, 0.5
    %v4921 = vmul.f32 %v4913, 0.5
    %v4922 = vmul.f32 %v4914, 0.5
    %v4923 = vmul.f32 %v4915, 0.5
    %v4924 = vmul.f32 %v4916, 0.5
    %v4925 = vmul.f32 %v4917, 0.5
    %v4926 = vmul.f32 %v4811, %v4918
    %v4927 = vmul.f32 %v4813, %v4919
    %v4928 = vmul.f32 %v4854, %v4920
    %v4929 = vmul.f32 %v4856, %v4921
    %v4930 = vmul.f32 %v4815, %v4922
    %v4931 = vmul.f32 %v4817, %v4923
    %v4932 = vmul.f32 %v4858, %v4924
    %v4933 = vmul.f32 %v4860, %v4925
    %v4934 = vpack.c.bf16 %v4930, %v4926
    %v4935 = vpack.c.bf16 %v4931, %v4927
    %v4936 = vpack.c.bf16 %v4932, %v4928
    %v4937 = vpack.c.bf16 %v4933, %v4929
    %v4938 = vld [vmem:[#allocation25] sm:$0xf]
    %v4939 = vld [vmem:[#allocation25 + $0x4] sm:$0xf]
    %v4940 = vld [vmem:[#allocation25 + $0x8] sm:$0xf]
    %v4941 = vld [vmem:[#allocation25 + $0xc] sm:$0xf]
    %v4942 = vld [vmem:[#allocation25 + $0x10] sm:$0xf]
    %v4943 = vld [vmem:[#allocation25 + $0x14] sm:$0xf]
    %v4944 = vld [vmem:[#allocation25 + $0x18] sm:$0xf]
    %v4945 = vld [vmem:[#allocation25 + $0x1c] sm:$0xf]
    %v4946 = vld [vmem:[#allocation25 + $0x20] sm:$0xf]
    %v4947 = vld [vmem:[#allocation25 + $0x24] sm:$0xf]
    %v4948 = vld [vmem:[#allocation25 + $0x28] sm:$0xf]
    %v4949 = vld [vmem:[#allocation25 + $0x2c] sm:$0xf]
    %v4950 = vld [vmem:[#allocation25 + $0x30] sm:$0xf]
    %v4951 = vld [vmem:[#allocation25 + $0x34] sm:$0xf]
    %v4952 = vld [vmem:[#allocation25 + $0x38] sm:$0xf]
    %v4953 = vld [vmem:[#allocation25 + $0x3c] sm:$0xf]
    %v4954 = vld [vmem:[#allocation25 + $0x40] sm:$0xf]
    %v4955 = vld [vmem:[#allocation25 + $0x44] sm:$0xf]
    %v4956 = vld [vmem:[#allocation25 + $0x48] sm:$0xf]
    %v4957 = vld [vmem:[#allocation25 + $0x4c] sm:$0xf]
    %v4958 = vld [vmem:[#allocation25 + $0x50] sm:$0xf]
    %v4959 = vld [vmem:[#allocation25 + $0x54] sm:$0xf]
    %v4960 = vld [vmem:[#allocation25 + $0x58] sm:$0xf]
    %v4961 = vld [vmem:[#allocation25 + $0x5c] sm:$0xf]
    %v4962 = vld [vmem:[#allocation25 + $0x60] sm:$0xf]
    %v4963 = vld [vmem:[#allocation25 + $0x64] sm:$0xf]
    %v4964 = vld [vmem:[#allocation25 + $0x68] sm:$0xf]
    %v4965 = vld [vmem:[#allocation25 + $0x6c] sm:$0xf]
    %v4966 = vld [vmem:[#allocation25 + $0x70] sm:$0xf]
    %v4967 = vld [vmem:[#allocation25 + $0x74] sm:$0xf]
    %v4968 = vld [vmem:[#allocation25 + $0x78] sm:$0xf]
    %v4969 = vld [vmem:[#allocation25 + $0x7c] sm:$0xf]
    %v4970 = vld [vmem:[#allocation25 + $0x80] sm:$0xf]
    %v4971 = vld [vmem:[#allocation25 + $0x84] sm:$0xf]
    %v4972 = vld [vmem:[#allocation25 + $0x88] sm:$0xf]
    %v4973 = vld [vmem:[#allocation25 + $0x8c] sm:$0xf]
    %v4974 = vld [vmem:[#allocation25 + $0x90] sm:$0xf]
    %v4975 = vld [vmem:[#allocation25 + $0x94] sm:$0xf]
    %v4976 = vld [vmem:[#allocation25 + $0x98] sm:$0xf]
    %v4977 = vld [vmem:[#allocation25 + $0x9c] sm:$0xf]
    %v4978 = vld [vmem:[#allocation25 + $0xa0] sm:$0xf]
    %v4979 = vld [vmem:[#allocation25 + $0xa4] sm:$0xf]
    %v4980 = vld [vmem:[#allocation25 + $0xa8] sm:$0xf]
    %v4981 = vld [vmem:[#allocation25 + $0xac] sm:$0xf]
    %v4982 = vld [vmem:[#allocation25 + $0xb0] sm:$0xf]
    %v4983 = vld [vmem:[#allocation25 + $0xb4] sm:$0xf]
    %v4984 = vld [vmem:[#allocation25 + $0xb8] sm:$0xf]
    %v4985 = vld [vmem:[#allocation25 + $0xbc] sm:$0xf]
    %v4986 = vld [vmem:[#allocation25 + $0xc0] sm:$0xf]
    %v4987 = vld [vmem:[#allocation25 + $0xc4] sm:$0xf]
    %v4988 = vld [vmem:[#allocation25 + $0xc8] sm:$0xf]
    %v4989 = vld [vmem:[#allocation25 + $0xcc] sm:$0xf]
    %v4990 = vld [vmem:[#allocation25 + $0xd0] sm:$0xf]
    %v4991 = vld [vmem:[#allocation25 + $0xd4] sm:$0xf]
    %v4992 = vld [vmem:[#allocation25 + $0xd8] sm:$0xf]
    %v4993 = vld [vmem:[#allocation25 + $0xdc] sm:$0xf]
    %v4994 = vld [vmem:[#allocation25 + $0xe0] sm:$0xf]
    %v4995 = vld [vmem:[#allocation25 + $0xe4] sm:$0xf]
    %v4996 = vld [vmem:[#allocation25 + $0xe8] sm:$0xf]
    %v4997 = vld [vmem:[#allocation25 + $0xec] sm:$0xf]
    %v4998 = vld [vmem:[#allocation25 + $0xf0] sm:$0xf]
    %v4999 = vld [vmem:[#allocation25 + $0xf4] sm:$0xf]
    %v5000 = vld [vmem:[#allocation25 + $0xf8] sm:$0xf]
    %v5001 = vld [vmem:[#allocation25 + $0xfc] sm:$0xf]
    %v5002 = vld [vmem:[%s57] sm:$0x1]
    %v5004 = vlaneseq
    %v5005 = vshrl.u32 %v5004, 7
    %v5006 = vsub.s32 0, %v5005
    %v5007 = vrot.slane %v5002, %v5006
    %v5073 = vunpack.c.l.b16 %v4938
    %v5074 = vunpack.c.l.b16 %v4939
    %v5075 = vunpack.c.l.b16 %v4940
    %v5076 = vunpack.c.l.b16 %v4941
    %v5077 = vunpack.c.l.b16 %v4942
    %v5078 = vunpack.c.l.b16 %v4943
    %v5079 = vunpack.c.l.b16 %v4944
    %v5080 = vunpack.c.l.b16 %v4945
    %v5081 = vunpack.c.l.b16 %v4946
    %v5082 = vunpack.c.l.b16 %v4947
    %v5083 = vunpack.c.l.b16 %v4948
    %v5084 = vunpack.c.l.b16 %v4949
    %v5085 = vunpack.c.l.b16 %v4950
    %v5086 = vunpack.c.l.b16 %v4951
    %v5087 = vunpack.c.l.b16 %v4952
    %v5088 = vunpack.c.l.b16 %v4953
    %v5089 = vunpack.c.l.b16 %v4954
    %v5090 = vunpack.c.l.b16 %v4955
    %v5091 = vunpack.c.l.b16 %v4956
    %v5092 = vunpack.c.l.b16 %v4957
    %v5093 = vunpack.c.l.b16 %v4958
    %v5094 = vunpack.c.l.b16 %v4959
    %v5095 = vunpack.c.l.b16 %v4960
    %v5096 = vunpack.c.l.b16 %v4961
    %v5097 = vunpack.c.l.b16 %v4962
    %v5098 = vunpack.c.l.b16 %v4963
    %v5099 = vunpack.c.l.b16 %v4964
    %v5100 = vunpack.c.l.b16 %v4965
    %v5101 = vunpack.c.l.b16 %v4966
    %v5102 = vunpack.c.l.b16 %v4967
    %v5103 = vunpack.c.l.b16 %v4968
    %v5104 = vunpack.c.l.b16 %v4969
    %v5105 = vunpack.c.l.b16 %v4970
    %v5106 = vunpack.c.l.b16 %v4971
    %v5107 = vunpack.c.l.b16 %v4972
    %v5108 = vunpack.c.l.b16 %v4973
    %v5109 = vunpack.c.l.b16 %v4974
    %v5110 = vunpack.c.l.b16 %v4975
    %v5111 = vunpack.c.l.b16 %v4976
    %v5112 = vunpack.c.l.b16 %v4977
    %v5113 = vunpack.c.l.b16 %v4978
    %v5114 = vunpack.c.l.b16 %v4979
    %v5115 = vunpack.c.l.b16 %v4980
    %v5116 = vunpack.c.l.b16 %v4981
    %v5117 = vunpack.c.l.b16 %v4982
    %v5118 = vunpack.c.l.b16 %v4983
    %v5119 = vunpack.c.l.b16 %v4984
    %v5120 = vunpack.c.l.b16 %v4985
    %v5121 = vunpack.c.l.b16 %v4986
    %v5122 = vunpack.c.l.b16 %v4987
    %v5123 = vunpack.c.l.b16 %v4988
    %v5124 = vunpack.c.l.b16 %v4989
    %v5125 = vunpack.c.l.b16 %v4990
    %v5126 = vunpack.c.l.b16 %v4991
    %v5127 = vunpack.c.l.b16 %v4992
    %v5128 = vunpack.c.l.b16 %v4993
    %v5129 = vunpack.c.l.b16 %v4994
    %v5130 = vunpack.c.l.b16 %v4995
    %v5131 = vunpack.c.l.b16 %v4996
    %v5132 = vunpack.c.l.b16 %v4997
    %v5133 = vunpack.c.l.b16 %v4998
    %v5134 = vunpack.c.l.b16 %v4999
    %v5135 = vunpack.c.l.b16 %v5000
    %v5136 = vunpack.c.l.b16 %v5001
    %v5137 = vpack.c.b16 %v5074, %v5073
    %v5138 = vpack.c.b16 %v5076, %v5075
    %v5139 = vpack.c.b16 %v5078, %v5077
    %v5140 = vpack.c.b16 %v5080, %v5079
    %v5141 = vpack.c.b16 %v5082, %v5081
    %v5142 = vpack.c.b16 %v5084, %v5083
    %v5143 = vpack.c.b16 %v5086, %v5085
    %v5144 = vpack.c.b16 %v5088, %v5087
    %v5145 = vpack.c.b16 %v5090, %v5089
    %v5146 = vpack.c.b16 %v5092, %v5091
    %v5147 = vpack.c.b16 %v5094, %v5093
    %v5148 = vpack.c.b16 %v5096, %v5095
    %v5149 = vpack.c.b16 %v5098, %v5097
    %v5150 = vpack.c.b16 %v5100, %v5099
    %v5151 = vpack.c.b16 %v5102, %v5101
    %v5152 = vpack.c.b16 %v5104, %v5103
    %v5153 = vpack.c.b16 %v5106, %v5105
    %v5154 = vpack.c.b16 %v5108, %v5107
    %v5155 = vpack.c.b16 %v5110, %v5109
    %v5156 = vpack.c.b16 %v5112, %v5111
    %v5157 = vpack.c.b16 %v5114, %v5113
    %v5158 = vpack.c.b16 %v5116, %v5115
    %v5159 = vpack.c.b16 %v5118, %v5117
    %v5160 = vpack.c.b16 %v5120, %v5119
    %v5161 = vpack.c.b16 %v5122, %v5121
    %v5162 = vpack.c.b16 %v5124, %v5123
    %v5163 = vpack.c.b16 %v5126, %v5125
    %v5164 = vpack.c.b16 %v5128, %v5127
    %v5165 = vpack.c.b16 %v5130, %v5129
    %v5166 = vpack.c.b16 %v5132, %v5131
    %v5167 = vpack.c.b16 %v5134, %v5133
    %v5168 = vpack.c.b16 %v5136, %v5135
    %5201 = vmatprep.subr.bf16.mxu0 0
    %5202 = vmatpush1.bf16.msra.mxu0 %v5144
    %5203 = vmatprep.subr.bf16.mxu0 0
    %5204 = vmatpush1.bf16.msra.mxu0 %v5143
    %5205 = vmatprep.subr.bf16.mxu0 0
    %5206 = vmatpush1.bf16.msra.mxu0 %v5142
    %5207 = vmatprep.subr.bf16.mxu0 0
    %5208 = vmatpush1.bf16.msra.mxu0 %v5141
    %5209 = vmatprep.subr.bf16.mxu0 0
    %5210 = vmatpush1.bf16.msra.mxu0 %v5140
    %5211 = vmatprep.subr.bf16.mxu0 0
    %5212 = vmatpush1.bf16.msra.mxu0 %v5139
    %5213 = vmatprep.subr.bf16.mxu0 0
    %5214 = vmatpush1.bf16.msra.mxu0 %v5138
    %5215 = vmatprep.subr.bf16.mxu0 0
    %5216 = vmatpush1.bf16.msra.mxu0 %v5137
    %5217 = vmatprep.subr.bf16.mxu0 0
    %5218 = vmatpush2.bf16.msra.mxu0 %v5152
    %5219 = vmatprep.subr.bf16.mxu0 0
    %5220 = vmatpush2.bf16.msra.mxu0 %v5151
    %5221 = vmatprep.subr.bf16.mxu0 0
    %5222 = vmatpush2.bf16.msra.mxu0 %v5150
    %5223 = vmatprep.subr.bf16.mxu0 0
    %5224 = vmatpush2.bf16.msra.mxu0 %v5149
    %5225 = vmatprep.subr.bf16.mxu0 0
    %5226 = vmatpush2.bf16.msra.mxu0 %v5148
    %5227 = vmatprep.subr.bf16.mxu0 0
    %5228 = vmatpush2.bf16.msra.mxu0 %v5147
    %5229 = vmatprep.subr.bf16.mxu0 0
    %5230 = vmatpush2.bf16.msra.mxu0 %v5146
    %5231 = vmatprep.subr.bf16.mxu0 0
    %5232 = vmatpush2.bf16.msra.mxu0 %v5145
    %5233 = vmatprep.mubr.bf16.mxu0 %v4935
    %5234 = vmatmul.mubr.bf16.gmra.mxu0 %v4934
    %v5235 = vpop.f32.mrf.mxu0
    %v5236 = vadd.f32 %v5007, %v5235
    %v5237 = vpop.f32.mrf.mxu0
    %v5238 = vpop.f32.mrf.mxu0
    %v5239 = vadd.f32 %v5007, %v5238
    %v5240 = vpop.f32.mrf.mxu0
    %5241 = vdwg.mxu0
    %5242 = vmatprep.subr.bf16.mxu0 0
    %5243 = vmatpush1.bf16.msra.mxu0 %v5160
    %5244 = vmatprep.subr.bf16.mxu0 0
    %5245 = vmatpush1.bf16.msra.mxu0 %v5159
    %5246 = vmatprep.subr.bf16.mxu0 0
    %5247 = vmatpush1.bf16.msra.mxu0 %v5158
    %5248 = vmatprep.subr.bf16.mxu0 0
    %5249 = vmatpush1.bf16.msra.mxu0 %v5157
    %5250 = vmatprep.subr.bf16.mxu0 0
    %5251 = vmatpush1.bf16.msra.mxu0 %v5156
    %5252 = vmatprep.subr.bf16.mxu0 0
    %5253 = vmatpush1.bf16.msra.mxu0 %v5155
    %5254 = vmatprep.subr.bf16.mxu0 0
    %5255 = vmatpush1.bf16.msra.mxu0 %v5154
    %5256 = vmatprep.subr.bf16.mxu0 0
    %5257 = vmatpush1.bf16.msra.mxu0 %v5153
    %5258 = vmatprep.subr.bf16.mxu0 0
    %5259 = vmatpush2.bf16.msra.mxu0 %v5168
    %5260 = vmatprep.subr.bf16.mxu0 0
    %5261 = vmatpush2.bf16.msra.mxu0 %v5167
    %5262 = vmatprep.subr.bf16.mxu0 0
    %5263 = vmatpush2.bf16.msra.mxu0 %v5166
    %5264 = vmatprep.subr.bf16.mxu0 0
    %5265 = vmatpush2.bf16.msra.mxu0 %v5165
    %5266 = vmatprep.subr.bf16.mxu0 0
    %5267 = vmatpush2.bf16.msra.mxu0 %v5164
    %5268 = vmatprep.subr.bf16.mxu0 0
    %5269 = vmatpush2.bf16.msra.mxu0 %v5163
    %5270 = vmatprep.subr.bf16.mxu0 0
    %5271 = vmatpush2.bf16.msra.mxu0 %v5162
    %5272 = vmatprep.subr.bf16.mxu0 0
    %5273 = vmatpush2.bf16.msra.mxu0 %v5161
    %5274 = vmatprep.mubr.bf16.mxu0 %v4937
    %5275 = vmatmul.mubr.bf16.gmra.mxu0 %v4936
    %v5276 = vpop.f32.mrf.mxu0
    %v5277 = vadd.f32 %v5236, %v5276
    %v5278 = vpop.f32.mrf.mxu0
    %v5279 = vpop.f32.mrf.mxu0
    %v5280 = vadd.f32 %v5239, %v5279
    %v5281 = vpop.f32.mrf.mxu0
    %5282 = vdwg.mxu0
    %v5283 = vadd.f32 %v4519, %v5277
    %v5284 = vadd.f32 %v4520, %v5280
    %v5285 = vld [vmem:[%s59] sm:$0x1]
    %v5286 = vld [vmem:[%s61] sm:$0x1]
    %5287 = vadd.xlane.f32.xlu0 %v5283
    %v5288 = vpop.xlane.xlu0 %5287
    %5289 = vadd.xlane.f32.xlu0 %v5284
    %v5290 = vpop.xlane.xlu0 %5289
    %v5291 = vmul.f32 %v5288, %v524
    %v5292 = vmul.f32 %v5290, %v524
    %v5293 = vsub.f32 %v5283, %v5291
    %v5294 = vsub.f32 %v5284, %v5292
    %v5295 = vmul.f32 %v5293, %v5293
    %v5296 = vmul.f32 %v5294, %v5294
    %5297 = vadd.xlane.f32.xlu0 %v5295
    %v5298 = vpop.xlane.xlu0 %5297
    %5299 = vadd.xlane.f32.xlu0 %v5296
    %v5300 = vpop.xlane.xlu0 %5299
    %v5301 = vmul.f32 %v5298, %v524
    %v5302 = vmul.f32 %v5300, %v524
    %v5303 = vadd.f32 %v5301, 1e-06
    %v5304 = vadd.f32 %v5302, 1e-06
    %v5305 = vrsqrt.pop %v5303
    %v5306 = vrsqrt.pop %v5304
    %v5307 = vmul.f32 %v5293, %v5305
    %v5308 = vmul.f32 %v5294, %v5306
    %v5310 = vlaneseq
    %v5311 = vshrl.u32 %v5310, 7
    %v5312 = vsub.s32 0, %v5311
    %v5313 = vrot.slane %v5285, %v5312
    %v5315 = vmul.f32 %v5307, %v5313
    %v5316 = vmul.f32 %v5308, %v5313
    %v5318 = vlaneseq
    %v5319 = vshrl.u32 %v5318, 7
    %v5320 = vsub.s32 0, %v5319
    %v5321 = vrot.slane %v5286, %v5320
    %v5323 = vadd.f32 %v5315, %v5321
    %v5324 = vadd.f32 %v5316, %v5321
    %v5325 = vpack.c.bf16 %v5324, %v5323
    %v5326 = vld [vmem:[#allocation26] sm:$0xf]
    %v5327 = vld [vmem:[#allocation26 + $0x4] sm:$0xf]
    %v5328 = vld [vmem:[#allocation26 + $0x8] sm:$0xf]
    %v5329 = vld [vmem:[#allocation26 + $0xc] sm:$0xf]
    %v5330 = vld [vmem:[#allocation26 + $0x10] sm:$0xf]
    %v5331 = vld [vmem:[#allocation26 + $0x14] sm:$0xf]
    %v5332 = vld [vmem:[#allocation26 + $0x18] sm:$0xf]
    %v5333 = vld [vmem:[#allocation26 + $0x1c] sm:$0xf]
    %v5334 = vld [vmem:[#allocation26 + $0x20] sm:$0xf]
    %v5335 = vld [vmem:[#allocation26 + $0x24] sm:$0xf]
    %v5336 = vld [vmem:[#allocation26 + $0x28] sm:$0xf]
    %v5337 = vld [vmem:[#allocation26 + $0x2c] sm:$0xf]
    %v5338 = vld [vmem:[#allocation26 + $0x30] sm:$0xf]
    %v5339 = vld [vmem:[#allocation26 + $0x34] sm:$0xf]
    %v5340 = vld [vmem:[#allocation26 + $0x38] sm:$0xf]
    %v5341 = vld [vmem:[#allocation26 + $0x3c] sm:$0xf]
    %v5342 = vld [vmem:[%s65] sm:$0x1]
    %v5344 = vlaneseq
    %v5345 = vshrl.u32 %v5344, 7
    %v5346 = vsub.s32 0, %v5345
    %v5347 = vrot.slane %v5342, %v5346
    %v5365 = vunpack.c.l.b16 %v5326
    %v5366 = vunpack.c.l.b16 %v5327
    %v5367 = vunpack.c.l.b16 %v5328
    %v5368 = vunpack.c.l.b16 %v5329
    %v5369 = vunpack.c.l.b16 %v5330
    %v5370 = vunpack.c.l.b16 %v5331
    %v5371 = vunpack.c.l.b16 %v5332
    %v5372 = vunpack.c.l.b16 %v5333
    %v5373 = vunpack.c.l.b16 %v5334
    %v5374 = vunpack.c.l.b16 %v5335
    %v5375 = vunpack.c.l.b16 %v5336
    %v5376 = vunpack.c.l.b16 %v5337
    %v5377 = vunpack.c.l.b16 %v5338
    %v5378 = vunpack.c.l.b16 %v5339
    %v5379 = vunpack.c.l.b16 %v5340
    %v5380 = vunpack.c.l.b16 %v5341
    %v5381 = vpack.c.b16 %v5366, %v5365
    %v5382 = vpack.c.b16 %v5368, %v5367
    %v5383 = vpack.c.b16 %v5370, %v5369
    %v5384 = vpack.c.b16 %v5372, %v5371
    %v5385 = vpack.c.b16 %v5374, %v5373
    %v5386 = vpack.c.b16 %v5376, %v5375
    %v5387 = vpack.c.b16 %v5378, %v5377
    %v5388 = vpack.c.b16 %v5380, %v5379
    %5397 = vmatprep.subr.bf16.mxu0 0
    %5398 = vmatpush1.bf16.msra.mxu0 %v5388
    %5399 = vmatprep.subr.bf16.mxu0 0
    %5400 = vmatpush1.bf16.msra.mxu0 %v5387
    %5401 = vmatprep.subr.bf16.mxu0 0
    %5402 = vmatpush1.bf16.msra.mxu0 %v5386
    %5403 = vmatprep.subr.bf16.mxu0 0
    %5404 = vmatpush1.bf16.msra.mxu0 %v5385
    %5405 = vmatprep.subr.bf16.mxu0 0
    %5406 = vmatpush1.bf16.msra.mxu0 %v5384
    %5407 = vmatprep.subr.bf16.mxu0 0
    %5408 = vmatpush1.bf16.msra.mxu0 %v5383
    %5409 = vmatprep.subr.bf16.mxu0 0
    %5410 = vmatpush1.bf16.msra.mxu0 %v5382
    %5411 = vmatprep.subr.bf16.mxu0 0
    %5412 = vmatpush1.bf16.msra.mxu0 %v5381
    %5413 = vmatprep.subr.bf16.mxu0 0
    %5414 = vmatpush2.bf16.msra.mxu0 0
    %5415 = vmatprep.subr.bf16.mxu0 0
    %5416 = vmatpush2.bf16.msra.mxu0 0
    %5417 = vmatprep.subr.bf16.mxu0 0
    %5418 = vmatpush2.bf16.msra.mxu0 0
    %5419 = vmatprep.subr.bf16.mxu0 0
    %5420 = vmatpush2.bf16.msra.mxu0 0
    %5421 = vmatprep.subr.bf16.mxu0 0
    %5422 = vmatpush2.bf16.msra.mxu0 0
    %5423 = vmatprep.subr.bf16.mxu0 0
    %5424 = vmatpush2.bf16.msra.mxu0 0
    %5425 = vmatprep.subr.bf16.mxu0 0
    %5426 = vmatpush2.bf16.msra.mxu0 0
    %5427 = vmatprep.subr.bf16.mxu0 0
    %5428 = vmatpush2.bf16.msra.mxu0 0
    %5429 = vmatprep.mubr.bf16.mxu0 0
    %5430 = vmatmul.mubr.bf16.gmra.mxu0 %v5325
    %v5431 = vpop.f32.mrf.mxu0
    %v5432 = vadd.f32 %v5347, %v5431
    %v5433 = vpop.f32.mrf.mxu0
    %v5434 = vpop.f32.mrf.mxu0
    %v5435 = vadd.f32 %v5347, %v5434
    %v5436 = vpop.f32.mrf.mxu0
    %5437 = vdwg.mxu0
    %5438 = vst [vmem:[#allocation28] sm:$0xff] %v5432
    %5439 = vst [vmem:[#allocation28 + $0x8] sm:$0xff] %v5435
    // Predicated region
    $region198: #{tpu_custom_call.1} parent=1 // pred_check
      _
    $region199: #{tpu_custom_call.1} parent=1 // pred_check_branch
      %5441 = sbr.rel (0) target = $region201
    $region200: #{tpu_custom_call.1} parent=1 // pred_region
      %s5443 = ssub.s32 256, 256
      %5444 = vsyncadd [#allocation4], %s5443
      %s5445 = sshll.u32 [#allocation28], 4
      %s5446 = int_to_ptr.vmem [resolvable:$true] %s5445
      %5451 = dma.vmem_to_hbm [thread:$0]  %s5446, 256, %s67, [#allocation4], 128, 128, 8
    $region201: #{tpu_custom_call.1} parent=1 // pred_fallthru
      _
    // Predicated region
    $region202: #{tpu_custom_call.1} parent=1 // pred_check
      _
    $region203: #{tpu_custom_call.1} parent=1 // pred_check_branch
      %5453 = sbr.rel (0) target = $region205
    $region204: #{tpu_custom_call.1} parent=1 // pred_region
      %5454 = dma.done [#allocation4], 256
    $region205: #{tpu_custom_call.1} parent=1 // pred_fallthru
      _
    %5455 = vsyncpa [#allocation3], 1
    %5456 = vsyncpa [#allocation6], 1
    %5457 = vsyncpa [#allocation9], 1
    %5458 = vsyncpa [#allocation12], 1
    %5459 = vsyncpa [#allocation15], 1
    %5460 = vsyncpa [#allocation18], 1
    %5461 = vsyncpa [#allocation21], 1
    %5462 = vsyncpa [#allocation24], 1
    %5463 = vsyncpa [#allocation27], 1
    %5464 = vsyncpa [#allocation4], 1

</llo_original>
